<compile_context>
chip_gen: v5e
topology: v5e:2x2
jax: 0.10.0
libtpu: 0.0.40
codegen_flags: <defaults>
</compile_context>

<pallas_src>
import jax
import jax.numpy as jnp
from jax import lax
from jax.experimental import pallas as pl
from jax.experimental.pallas import tpu as pltpu

EPS = 1e-5


def _gelayer_kernel(xp_ref, xres_ref, w1_ref, g1_ref, b1_ref,
                    w2t_ref, g2_ref, b2_ref, w3_ref, g3_ref, b3_ref,
                    out_ref, patch_ref, pad_ref):
    N, Hp, Wp, Cin = xp_ref.shape
    H, W = Hp - 2, Wp - 2
    Mid = pad_ref.shape[-1]
    P = N * H * W
    inv_p = 1.0 / float(P)

    def bn_affine(acc, gamma, beta, axis):
        # training-mode BatchNorm2d(affine=False): batch stats (biased var) in
        # ONE pass over acc, then the module's affine, fused as acc*scale+shift.
        s = jnp.sum(acc, axis=axis, keepdims=True)
        ss = jnp.sum(acc * acc, axis=axis, keepdims=True)
        mean = s * inv_p
        var = jnp.maximum(ss * inv_p - mean * mean, 0.0)
        scale = gamma * lax.rsqrt(var + EPS)
        return acc * scale + (beta - mean * scale)

    xp = xp_ref[...]  # (N, H+2, W+2, Cin), zero-padded by the wrapper

    # ---- 9-tap patch matrix (P, 9*Cin), built once ---------------------------
    for t in range(9):
        ky, kx = t // 3, t % 3
        patch_ref[:, t * Cin:(t + 1) * Cin] = (
            xp[:, ky:ky + H, kx:kx + W, :].reshape(P, Cin))

    # ---- conv1: single MXU matmul (K = 9*Cin), output pre-replicated to Mid --
    acc1 = jnp.dot(patch_ref[...], w1_ref[...],
                   preferred_element_type=jnp.float32)            # (P, Mid)
    y1 = jnp.maximum(bn_affine(acc1, g1_ref[...], b1_ref[...], 0), 0.0)

    # ---- stash y1 into a zero-BORDERED scratch for the depthwise 3x3 ---------
    pad_ref[:, 0:1, :, :] = jnp.zeros((N, 1, Wp, Mid), jnp.float32)
    pad_ref[:, Hp - 1:Hp, :, :] = jnp.zeros((N, 1, Wp, Mid), jnp.float32)
    pad_ref[:, 1:H + 1, 0:1, :] = jnp.zeros((N, H, 1, Mid), jnp.float32)
    pad_ref[:, 1:H + 1, Wp - 1:Wp, :] = jnp.zeros((N, H, 1, Mid), jnp.float32)
    pad_ref[:, 1:H + 1, 1:W + 1, :] = y1.reshape(N, H, W, Mid)

    # ---- depthwise 3x3 (groups=Cin) as 9 VPU FMAs -----------------------------
    w2t = w2t_ref[...]                                            # (9, 1, Mid)
    acc2 = jnp.zeros((P, Mid), jnp.float32)
    for t in range(9):
        ky, kx = t // 3, t % 3
        shifted = pad_ref[:, ky:ky + H, kx:kx + W, :].reshape(P, Mid)
        acc2 = acc2 + shifted * w2t[t]
    y2 = jnp.maximum(bn_affine(acc2, g2_ref[...], b2_ref[...], 0), 0.0)

    # ---- conv2 (1x1, Mid->Cout) in transposed orientation: (Cout, P) ----------
    # NT matmul so the result is already lane-dense (minor dim = P).
    acc3t = lax.dot_general(w3_ref[...], y2, (((1,), (1,)), ((), ())),
                            preferred_element_type=jnp.float32)    # (Cout, P)
    y3t = bn_affine(acc3t, g3_ref[...], b3_ref[...], 1)

    # residual (passed pre-transposed as (Cout, P)) + final ReLU, dense store
    out_ref[...] = jnp.maximum(y3t + xres_ref[...], 0.0)


def init_params(key, in_chan, out_chan, exp_ratio=6):
    mid = in_chan * exp_ratio
    ks = jax.random.split(key, 9)
    p = {}
    p["w1"] = 0.2 * jax.random.normal(ks[0], (in_chan, in_chan, 3, 3), jnp.float32)  # OIHW
    p["g1"] = 1.0 + 0.1 * jax.random.normal(ks[1], (in_chan,), jnp.float32)
    p["b1"] = 0.1 * jax.random.normal(ks[2], (in_chan,), jnp.float32)
    p["w2"] = 0.2 * jax.random.normal(ks[3], (mid, 1, 3, 3), jnp.float32)             # grouped OIHW
    p["g2"] = 1.0 + 0.1 * jax.random.normal(ks[4], (mid,), jnp.float32)
    p["b2"] = 0.1 * jax.random.normal(ks[5], (mid,), jnp.float32)
    p["w3"] = 0.2 * jax.random.normal(ks[6], (out_chan, mid, 1, 1), jnp.float32)      # OIHW 1x1
    p["g3"] = 1.0 + 0.1 * jax.random.normal(ks[7], (out_chan,), jnp.float32)
    p["b3"] = 0.1 * jax.random.normal(ks[8], (out_chan,), jnp.float32)
    return p


def gelayer_s1_forward(x_nchw, p, exp_ratio=6):
    N, Cin, H, W = x_nchw.shape
    Mid = p["w2"].shape[0]
    Cout = p["w3"].shape[0]
    assert Cout == Cin, "GELayerS1 residual add requires out_chan == in_chan"
    assert Mid == Cin * exp_ratio
    P = N * H * W

    x = jnp.transpose(x_nchw, (0, 2, 3, 1)).astype(jnp.float32)            # NHWC
    xp = jnp.pad(x, ((0, 0), (1, 1), (1, 1), (0, 0)))                      # (N,H+2,W+2,Cin)
    # residual, pre-laid-out channel-major so the kernel's last stage is lane-dense
    xres = jnp.transpose(x_nchw, (1, 0, 2, 3)).reshape(Cin, P).astype(jnp.float32)

    # conv1 OIHW -> (9*Cin, Cin) rows in (tap-major, in-channel-minor) order to
    # match the kernel's patch matrix; replicate output columns so column m of
    # acc1 carries conv1 channel m // exp_ratio (the grouped conv's input order).
    rep = jnp.arange(Mid) // exp_ratio                                     # (Mid,)
    w1k = jnp.transpose(p["w1"], (2, 3, 1, 0)).reshape(9 * Cin, Cin)[:, rep]
    g1 = p["g1"][rep].reshape(1, Mid)
    b1 = p["b1"][rep].reshape(1, Mid)

    # depthwise weights as per-tap, per-output-channel scalars: (9, 1, Mid)
    w2t = jnp.transpose(p["w2"].reshape(Mid, 9), (1, 0)).reshape(9, 1, Mid)
    g2 = p["g2"].reshape(1, Mid)
    b2 = p["b2"].reshape(1, Mid)

    # 1x1 conv kept as (Cout, Mid) for the NT (transposed-output) matmul
    w3c = p["w3"][:, :, 0, 0]                                              # (Cout, Mid)
    g3 = p["g3"].reshape(Cout, 1)
    b3 = p["b3"].reshape(Cout, 1)

    fp32 = 4
    vmem_need = fp32 * (xp.size + xres.size + w1k.size + w2t.size + w3c.size
                        + P * 9 * Cin                       # patch scratch
                        + N * (H + 2) * (W + 2) * Mid       # padded scratch
                        + 6 * P * Mid                       # live (P, Mid) temps
                        + 4 * P * Cout)                     # conv2 / output temps
    vmem_limit = int(min(max(4 * vmem_need, 32 << 20), 48 << 20))

    flops = (2 * P * (9 * Cin) * Mid          # conv1 matmul
             + 2 * 9 * P * Mid                # depthwise FMAs
             + 2 * P * Mid * Cout             # 1x1 conv
             + 10 * P * (2 * Mid + Cout))     # BN / affine / ReLU / residual
    bytes_accessed = fp32 * (xp.size + xres.size + P * Cout
                             + w1k.size + w2t.size + w3c.size
                             + 4 * (2 * Mid + Cout))

    out_t = pl.pallas_call(
        _gelayer_kernel,
        out_shape=jax.ShapeDtypeStruct((Cout, P), jnp.float32),
        in_specs=[pl.BlockSpec(memory_space=pltpu.MemorySpace.VMEM)] * 11,
        out_specs=pl.BlockSpec(memory_space=pltpu.MemorySpace.VMEM),
        scratch_shapes=[pltpu.VMEM((P, 9 * Cin), jnp.float32),
                        pltpu.VMEM((N, H + 2, W + 2, Mid), jnp.float32)],
        compiler_params=pltpu.CompilerParams(vmem_limit_bytes=vmem_limit),
        cost_estimate=pl.CostEstimate(flops=int(flops),
                                      transcendentals=int(2 * Mid + Cout),
                                      bytes_accessed=int(bytes_accessed)),
    )(xp, xres, w1k, g1, b1, w2t, g2, b2, w3c, g3, b3)

    out = out_t.reshape(Cout, N, H, W)
    return jnp.transpose(out, (1, 0, 2, 3))                                # NCHW


# ---------------- pure-JAX reference (for correctness check) ----------------
def _bn_affine_ref(y, gamma, beta):
    mean = jnp.mean(y, axis=(0, 1, 2), keepdims=True)
    var = jnp.mean((y - mean) ** 2, axis=(0, 1, 2), keepdims=True)
    return (y - mean) * lax.rsqrt(var + EPS) * gamma.reshape(1, 1, 1, -1) + beta.reshape(1, 1, 1, -1)


def gelayer_s1_ref(x_nchw, p):
    x = jnp.transpose(x_nchw, (0, 2, 3, 1)).astype(jnp.float32)
    dn = ("NHWC", "HWIO", "NHWC")
    Cin = x.shape[-1]
    w1 = jnp.transpose(p["w1"], (2, 3, 1, 0))
    y = lax.conv_general_dilated(x, w1, (1, 1), ((1, 1), (1, 1)), dimension_numbers=dn)
    y = jnp.maximum(_bn_affine_ref(y, p["g1"], p["b1"]), 0.0)
    w2 = jnp.transpose(p["w2"], (2, 3, 1, 0))
    y = lax.conv_general_dilated(y, w2, (1, 1), ((1, 1), (1, 1)),
                                 dimension_numbers=dn, feature_group_count=Cin)
    y = jnp.maximum(_bn_affine_ref(y, p["g2"], p["b2"]), 0.0)
    w3 = jnp.transpose(p["w3"], (2, 3, 1, 0))
    y = lax.conv_general_dilated(y, w3, (1, 1), ((0, 0), (0, 0)), dimension_numbers=dn)
    y = _bn_affine_ref(y, p["g3"], p["b3"])
    y = jnp.maximum(y + x, 0.0)
    return jnp.transpose(y, (0, 3, 1, 2))


if __name__ == "__main__":
    key = jax.random.PRNGKey(0)
    kx, kp = jax.random.split(key)
    in_chan = out_chan = 4          # residual add requires out_chan == in_chan
    exp_ratio = 6                   # mid_chan = 24
    N, H, W = 2, 16, 16

    x = jax.random.normal(kx, (N, in_chan, H, W), jnp.float32)
    params = init_params(kp, in_chan, out_chan, exp_ratio)

    out = gelayer_s1_forward(x, params, exp_ratio)
    out = jax.block_until_ready(out)

    ref = gelayer_s1_ref(x, params)
    assert out.shape == (N, out_chan, H, W)
    max_err = float(jnp.max(jnp.abs(out - ref)))
    assert jnp.allclose(out, ref, atol=1e-3, rtol=1e-3), f"max err {max_err}"
    print("KERNEL_OK")
</pallas_src>

<mosaic_0001>
module attributes {stable_mosaic.version = 11 : i64} {
  func.func @_gelayer_kernel(%arg0: memref<2x18x18x4xf32, #tpu.memory_space<vmem>>, %arg1: memref<4x512xf32, #tpu.memory_space<vmem>>, %arg2: memref<36x24xf32, #tpu.memory_space<vmem>>, %arg3: memref<1x24xf32, #tpu.memory_space<vmem>>, %arg4: memref<1x24xf32, #tpu.memory_space<vmem>>, %arg5: memref<9x1x24xf32, #tpu.memory_space<vmem>>, %arg6: memref<1x24xf32, #tpu.memory_space<vmem>>, %arg7: memref<1x24xf32, #tpu.memory_space<vmem>>, %arg8: memref<4x24xf32, #tpu.memory_space<vmem>>, %arg9: memref<4x1xf32, #tpu.memory_space<vmem>>, %arg10: memref<4x1xf32, #tpu.memory_space<vmem>>, %arg11: memref<4x512xf32, #tpu.memory_space<vmem>>, %arg12: memref<512x36xf32, #tpu.memory_space<vmem>>, %arg13: memref<2x18x18x24xf32, #tpu.memory_space<vmem>>) attributes {dimension_semantics = [], scalar_prefetch = 0 : i64, scratch_operands = 2 : i64, tpu.core_type = #tpu.core_type<tc>} {
    %c0 = arith.constant 0 : index
    %c0_0 = arith.constant 0 : index
    %c0_1 = arith.constant 0 : index
    %c0_2 = arith.constant 0 : index
    %0 = vector.load %arg0[%c0, %c0_0, %c0_1, %c0_2] : memref<2x18x18x4xf32, #tpu.memory_space<vmem>>, vector<2x18x18x4xf32>
    %1 = vector.extract_strided_slice %0 {offsets = [0, 0, 0, 0], sizes = [2, 16, 16, 4], strides = [1, 1, 1, 1]} : vector<2x18x18x4xf32> to vector<2x16x16x4xf32>
    %2 = vector.shape_cast %1 : vector<2x16x16x4xf32> to vector<512x4xf32>
    %c0_3 = arith.constant 0 : index
    %c0_4 = arith.constant 0 : index
    %3 = vector.load %arg12[%c0_3, %c0_4] : memref<512x36xf32, #tpu.memory_space<vmem>>, vector<512x4xf32>
    tpu.vector_store %arg12[%c0_3, %c0_4], %2 {strides = array<i32>} : memref<512x36xf32, #tpu.memory_space<vmem>>, vector<512x4xf32>,
    %4 = vector.extract_strided_slice %0 {offsets = [0, 0, 1, 0], sizes = [2, 16, 16, 4], strides = [1, 1, 1, 1]} : vector<2x18x18x4xf32> to vector<2x16x16x4xf32>
    %5 = vector.shape_cast %4 : vector<2x16x16x4xf32> to vector<512x4xf32>
    %c0_5 = arith.constant 0 : index
    %c4 = arith.constant 4 : index
    %6 = vector.load %arg12[%c0_5, %c4] : memref<512x36xf32, #tpu.memory_space<vmem>>, vector<512x4xf32>
    tpu.vector_store %arg12[%c0_5, %c4], %5 {strides = array<i32>} : memref<512x36xf32, #tpu.memory_space<vmem>>, vector<512x4xf32>,
    %7 = vector.extract_strided_slice %0 {offsets = [0, 0, 2, 0], sizes = [2, 16, 16, 4], strides = [1, 1, 1, 1]} : vector<2x18x18x4xf32> to vector<2x16x16x4xf32>
    %8 = vector.shape_cast %7 : vector<2x16x16x4xf32> to vector<512x4xf32>
    %c0_6 = arith.constant 0 : index
    %c8 = arith.constant 8 : index
    %9 = vector.load %arg12[%c0_6, %c8] : memref<512x36xf32, #tpu.memory_space<vmem>>, vector<512x4xf32>
    tpu.vector_store %arg12[%c0_6, %c8], %8 {strides = array<i32>} : memref<512x36xf32, #tpu.memory_space<vmem>>, vector<512x4xf32>,
    %10 = vector.extract_strided_slice %0 {offsets = [0, 1, 0, 0], sizes = [2, 16, 16, 4], strides = [1, 1, 1, 1]} : vector<2x18x18x4xf32> to vector<2x16x16x4xf32>
    %11 = vector.shape_cast %10 : vector<2x16x16x4xf32> to vector<512x4xf32>
    %c0_7 = arith.constant 0 : index
    %c12 = arith.constant 12 : index
    %12 = vector.load %arg12[%c0_7, %c12] : memref<512x36xf32, #tpu.memory_space<vmem>>, vector<512x4xf32>
    tpu.vector_store %arg12[%c0_7, %c12], %11 {strides = array<i32>} : memref<512x36xf32, #tpu.memory_space<vmem>>, vector<512x4xf32>,
    %13 = vector.extract_strided_slice %0 {offsets = [0, 1, 1, 0], sizes = [2, 16, 16, 4], strides = [1, 1, 1, 1]} : vector<2x18x18x4xf32> to vector<2x16x16x4xf32>
    %14 = vector.shape_cast %13 : vector<2x16x16x4xf32> to vector<512x4xf32>
    %c0_8 = arith.constant 0 : index
    %c16 = arith.constant 16 : index
    %15 = vector.load %arg12[%c0_8, %c16] : memref<512x36xf32, #tpu.memory_space<vmem>>, vector<512x4xf32>
    tpu.vector_store %arg12[%c0_8, %c16], %14 {strides = array<i32>} : memref<512x36xf32, #tpu.memory_space<vmem>>, vector<512x4xf32>,
    %16 = vector.extract_strided_slice %0 {offsets = [0, 1, 2, 0], sizes = [2, 16, 16, 4], strides = [1, 1, 1, 1]} : vector<2x18x18x4xf32> to vector<2x16x16x4xf32>
    %17 = vector.shape_cast %16 : vector<2x16x16x4xf32> to vector<512x4xf32>
    %c0_9 = arith.constant 0 : index
    %c20 = arith.constant 20 : index
    %18 = vector.load %arg12[%c0_9, %c20] : memref<512x36xf32, #tpu.memory_space<vmem>>, vector<512x4xf32>
    tpu.vector_store %arg12[%c0_9, %c20], %17 {strides = array<i32>} : memref<512x36xf32, #tpu.memory_space<vmem>>, vector<512x4xf32>,
    %19 = vector.extract_strided_slice %0 {offsets = [0, 2, 0, 0], sizes = [2, 16, 16, 4], strides = [1, 1, 1, 1]} : vector<2x18x18x4xf32> to vector<2x16x16x4xf32>
    %20 = vector.shape_cast %19 : vector<2x16x16x4xf32> to vector<512x4xf32>
    %c0_10 = arith.constant 0 : index
    %c24 = arith.constant 24 : index
    %21 = vector.load %arg12[%c0_10, %c24] : memref<512x36xf32, #tpu.memory_space<vmem>>, vector<512x4xf32>
    tpu.vector_store %arg12[%c0_10, %c24], %20 {strides = array<i32>} : memref<512x36xf32, #tpu.memory_space<vmem>>, vector<512x4xf32>,
    %22 = vector.extract_strided_slice %0 {offsets = [0, 2, 1, 0], sizes = [2, 16, 16, 4], strides = [1, 1, 1, 1]} : vector<2x18x18x4xf32> to vector<2x16x16x4xf32>
    %23 = vector.shape_cast %22 : vector<2x16x16x4xf32> to vector<512x4xf32>
    %c0_11 = arith.constant 0 : index
    %c28 = arith.constant 28 : index
    %24 = vector.load %arg12[%c0_11, %c28] : memref<512x36xf32, #tpu.memory_space<vmem>>, vector<512x4xf32>
    tpu.vector_store %arg12[%c0_11, %c28], %23 {strides = array<i32>} : memref<512x36xf32, #tpu.memory_space<vmem>>, vector<512x4xf32>,
    %25 = vector.extract_strided_slice %0 {offsets = [0, 2, 2, 0], sizes = [2, 16, 16, 4], strides = [1, 1, 1, 1]} : vector<2x18x18x4xf32> to vector<2x16x16x4xf32>
    %26 = vector.shape_cast %25 : vector<2x16x16x4xf32> to vector<512x4xf32>
    %c0_12 = arith.constant 0 : index
    %c32 = arith.constant 32 : index
    %27 = vector.load %arg12[%c0_12, %c32] : memref<512x36xf32, #tpu.memory_space<vmem>>, vector<512x4xf32>
    tpu.vector_store %arg12[%c0_12, %c32], %26 {strides = array<i32>} : memref<512x36xf32, #tpu.memory_space<vmem>>, vector<512x4xf32>,
    %c0_13 = arith.constant 0 : index
    %c0_14 = arith.constant 0 : index
    %28 = vector.load %arg12[%c0_13, %c0_14] : memref<512x36xf32, #tpu.memory_space<vmem>>, vector<512x36xf32>
    %c0_15 = arith.constant 0 : index
    %c0_16 = arith.constant 0 : index
    %29 = vector.load %arg2[%c0_15, %c0_16] : memref<36x24xf32, #tpu.memory_space<vmem>>, vector<36x24xf32>
    %cst = arith.constant dense<0.000000e+00> : vector<512x24xf32>
    %30 = tpu.matmul %28, %29, %cst {dimension_numbers = #tpu.dot_dimension_numbers<[1], [0], [0], [1], [0, 0, 1, 1], [], []>} : vector<512x36xf32>, vector<36x24xf32>, vector<512x24xf32> -> vector<512x24xf32>
    %c0_17 = arith.constant 0 : index
    %c0_18 = arith.constant 0 : index
    %31 = vector.load %arg3[%c0_17, %c0_18] : memref<1x24xf32, #tpu.memory_space<vmem>>, vector<1x24xf32>
    %c0_19 = arith.constant 0 : index
    %c0_20 = arith.constant 0 : index
    %32 = vector.load %arg4[%c0_19, %c0_20] : memref<1x24xf32, #tpu.memory_space<vmem>>, vector<1x24xf32>
    %cst_21 = arith.constant dense<0.000000e+00> : vector<24xf32>
    %33 = vector.multi_reduction <add>, %30, %cst_21 [0] : vector<512x24xf32> to vector<24xf32>
    %34 = vector.shape_cast %33 : vector<24xf32> to vector<1x24xf32>
    %35 = arith.mulf %30, %30 : vector<512x24xf32>
    %cst_22 = arith.constant dense<0.000000e+00> : vector<24xf32>
    %36 = vector.multi_reduction <add>, %35, %cst_22 [0] : vector<512x24xf32> to vector<24xf32>
    %37 = vector.shape_cast %36 : vector<24xf32> to vector<1x24xf32>
    %cst_23 = arith.constant 0.001953125 : f32
    %38 = vector.broadcast %cst_23 : f32 to vector<1x24xf32>
    %39 = arith.mulf %34, %38 : vector<1x24xf32>
    %cst_24 = arith.constant 0.001953125 : f32
    %40 = vector.broadcast %cst_24 : f32 to vector<1x24xf32>
    %41 = arith.mulf %37, %40 : vector<1x24xf32>
    %42 = arith.mulf %39, %39 : vector<1x24xf32>
    %43 = arith.subf %41, %42 : vector<1x24xf32>
    %cst_25 = arith.constant 0.000000e+00 : f32
    %44 = vector.broadcast %cst_25 : f32 to vector<1x24xf32>
    %45 = arith.maximumf %43, %44 : vector<1x24xf32>
    %cst_26 = arith.constant 9.99999974E-6 : f32
    %46 = vector.broadcast %cst_26 : f32 to vector<1x24xf32>
    %47 = arith.addf %45, %46 : vector<1x24xf32>
    %48 = math.rsqrt %47 : vector<1x24xf32>
    %49 = arith.mulf %31, %48 : vector<1x24xf32>
    %50 = vector.broadcast %49 : vector<1x24xf32> to vector<512x24xf32>
    %51 = arith.mulf %30, %50 : vector<512x24xf32>
    %52 = arith.mulf %39, %49 : vector<1x24xf32>
    %53 = arith.subf %32, %52 : vector<1x24xf32>
    %54 = vector.broadcast %53 : vector<1x24xf32> to vector<512x24xf32>
    %55 = arith.addf %51, %54 : vector<512x24xf32>
    %cst_27 = arith.constant 0.000000e+00 : f32
    %56 = vector.broadcast %cst_27 : f32 to vector<512x24xf32>
    %57 = arith.maximumf %55, %56 : vector<512x24xf32>
    %cst_28 = arith.constant 0.000000e+00 : f32
    %58 = vector.broadcast %cst_28 : f32 to vector<2x1x18x24xf32>
    %c0_29 = arith.constant 0 : index
    %c0_30 = arith.constant 0 : index
    %c0_31 = arith.constant 0 : index
    %c0_32 = arith.constant 0 : index
    %59 = vector.load %arg13[%c0_29, %c0_30, %c0_31, %c0_32] : memref<2x18x18x24xf32, #tpu.memory_space<vmem>>, vector<2x1x18x24xf32>
    tpu.vector_store %arg13[%c0_29, %c0_30, %c0_31, %c0_32], %58 {strides = array<i32>} : memref<2x18x18x24xf32, #tpu.memory_space<vmem>>, vector<2x1x18x24xf32>,
    %cst_33 = arith.constant 0.000000e+00 : f32
    %60 = vector.broadcast %cst_33 : f32 to vector<2x1x18x24xf32>
    %c0_34 = arith.constant 0 : index
    %c17 = arith.constant 17 : index
    %c0_35 = arith.constant 0 : index
    %c0_36 = arith.constant 0 : index
    %61 = vector.load %arg13[%c0_34, %c17, %c0_35, %c0_36] : memref<2x18x18x24xf32, #tpu.memory_space<vmem>>, vector<2x1x18x24xf32>
    tpu.vector_store %arg13[%c0_34, %c17, %c0_35, %c0_36], %60 {strides = array<i32>} : memref<2x18x18x24xf32, #tpu.memory_space<vmem>>, vector<2x1x18x24xf32>,
    %cst_37 = arith.constant 0.000000e+00 : f32
    %62 = vector.broadcast %cst_37 : f32 to vector<2x16x1x24xf32>
    %c0_38 = arith.constant 0 : index
    %c1 = arith.constant 1 : index
    %c0_39 = arith.constant 0 : index
    %c0_40 = arith.constant 0 : index
    %63 = vector.load %arg13[%c0_38, %c1, %c0_39, %c0_40] : memref<2x18x18x24xf32, #tpu.memory_space<vmem>>, vector<2x16x1x24xf32>
    tpu.vector_store %arg13[%c0_38, %c1, %c0_39, %c0_40], %62 {strides = array<i32>} : memref<2x18x18x24xf32, #tpu.memory_space<vmem>>, vector<2x16x1x24xf32>,
    %cst_41 = arith.constant 0.000000e+00 : f32
    %64 = vector.broadcast %cst_41 : f32 to vector<2x16x1x24xf32>
    %c0_42 = arith.constant 0 : index
    %c1_43 = arith.constant 1 : index
    %c17_44 = arith.constant 17 : index
    %c0_45 = arith.constant 0 : index
    %65 = vector.load %arg13[%c0_42, %c1_43, %c17_44, %c0_45] : memref<2x18x18x24xf32, #tpu.memory_space<vmem>>, vector<2x16x1x24xf32>
    tpu.vector_store %arg13[%c0_42, %c1_43, %c17_44, %c0_45], %64 {strides = array<i32>} : memref<2x18x18x24xf32, #tpu.memory_space<vmem>>, vector<2x16x1x24xf32>,
    %66 = vector.shape_cast %57 : vector<512x24xf32> to vector<2x16x16x24xf32>
    %c0_46 = arith.constant 0 : index
    %c1_47 = arith.constant 1 : index
    %c1_48 = arith.constant 1 : index
    %c0_49 = arith.constant 0 : index
    %67 = vector.load %arg13[%c0_46, %c1_47, %c1_48, %c0_49] : memref<2x18x18x24xf32, #tpu.memory_space<vmem>>, vector<2x16x16x24xf32>
    tpu.vector_store %arg13[%c0_46, %c1_47, %c1_48, %c0_49], %66 {strides = array<i32>} : memref<2x18x18x24xf32, #tpu.memory_space<vmem>>, vector<2x16x16x24xf32>,
    %c0_50 = arith.constant 0 : index
    %c0_51 = arith.constant 0 : index
    %c0_52 = arith.constant 0 : index
    %68 = vector.load %arg5[%c0_50, %c0_51, %c0_52] : memref<9x1x24xf32, #tpu.memory_space<vmem>>, vector<9x1x24xf32>
    %cst_53 = arith.constant 0.000000e+00 : f32
    %69 = vector.broadcast %cst_53 : f32 to vector<512x24xf32>
    %c0_54 = arith.constant 0 : index
    %c0_55 = arith.constant 0 : index
    %c0_56 = arith.constant 0 : index
    %c0_57 = arith.constant 0 : index
    %70 = vector.load %arg13[%c0_54, %c0_55, %c0_56, %c0_57] : memref<2x18x18x24xf32, #tpu.memory_space<vmem>>, vector<2x16x16x24xf32>
    %71 = vector.shape_cast %70 : vector<2x16x16x24xf32> to vector<512x24xf32>
    %72 = vector.extract_strided_slice %68 {offsets = [0, 0, 0], sizes = [1, 1, 24], strides = [1, 1, 1]} : vector<9x1x24xf32> to vector<1x1x24xf32>
    %73 = vector.shape_cast %72 : vector<1x1x24xf32> to vector<1x24xf32>
    %74 = vector.broadcast %73 : vector<1x24xf32> to vector<512x24xf32>
    %75 = arith.mulf %71, %74 : vector<512x24xf32>
    %76 = arith.addf %69, %75 : vector<512x24xf32>
    %c0_58 = arith.constant 0 : index
    %c0_59 = arith.constant 0 : index
    %c1_60 = arith.constant 1 : index
    %c0_61 = arith.constant 0 : index
    %77 = vector.load %arg13[%c0_58, %c0_59, %c1_60, %c0_61] : memref<2x18x18x24xf32, #tpu.memory_space<vmem>>, vector<2x16x16x24xf32>
    %78 = vector.shape_cast %77 : vector<2x16x16x24xf32> to vector<512x24xf32>
    %79 = vector.extract_strided_slice %68 {offsets = [1, 0, 0], sizes = [1, 1, 24], strides = [1, 1, 1]} : vector<9x1x24xf32> to vector<1x1x24xf32>
    %80 = vector.shape_cast %79 : vector<1x1x24xf32> to vector<1x24xf32>
    %81 = vector.broadcast %80 : vector<1x24xf32> to vector<512x24xf32>
    %82 = arith.mulf %78, %81 : vector<512x24xf32>
    %83 = arith.addf %76, %82 : vector<512x24xf32>
    %c0_62 = arith.constant 0 : index
    %c0_63 = arith.constant 0 : index
    %c2 = arith.constant 2 : index
    %c0_64 = arith.constant 0 : index
    %84 = vector.load %arg13[%c0_62, %c0_63, %c2, %c0_64] : memref<2x18x18x24xf32, #tpu.memory_space<vmem>>, vector<2x16x16x24xf32>
    %85 = vector.shape_cast %84 : vector<2x16x16x24xf32> to vector<512x24xf32>
    %86 = vector.extract_strided_slice %68 {offsets = [2, 0, 0], sizes = [1, 1, 24], strides = [1, 1, 1]} : vector<9x1x24xf32> to vector<1x1x24xf32>
    %87 = vector.shape_cast %86 : vector<1x1x24xf32> to vector<1x24xf32>
    %88 = vector.broadcast %87 : vector<1x24xf32> to vector<512x24xf32>
    %89 = arith.mulf %85, %88 : vector<512x24xf32>
    %90 = arith.addf %83, %89 : vector<512x24xf32>
    %c0_65 = arith.constant 0 : index
    %c1_66 = arith.constant 1 : index
    %c0_67 = arith.constant 0 : index
    %c0_68 = arith.constant 0 : index
    %91 = vector.load %arg13[%c0_65, %c1_66, %c0_67, %c0_68] : memref<2x18x18x24xf32, #tpu.memory_space<vmem>>, vector<2x16x16x24xf32>
    %92 = vector.shape_cast %91 : vector<2x16x16x24xf32> to vector<512x24xf32>
    %93 = vector.extract_strided_slice %68 {offsets = [3, 0, 0], sizes = [1, 1, 24], strides = [1, 1, 1]} : vector<9x1x24xf32> to vector<1x1x24xf32>
    %94 = vector.shape_cast %93 : vector<1x1x24xf32> to vector<1x24xf32>
    %95 = vector.broadcast %94 : vector<1x24xf32> to vector<512x24xf32>
    %96 = arith.mulf %92, %95 : vector<512x24xf32>
    %97 = arith.addf %90, %96 : vector<512x24xf32>
    %c0_69 = arith.constant 0 : index
    %c1_70 = arith.constant 1 : index
    %c1_71 = arith.constant 1 : index
    %c0_72 = arith.constant 0 : index
    %98 = vector.load %arg13[%c0_69, %c1_70, %c1_71, %c0_72] : memref<2x18x18x24xf32, #tpu.memory_space<vmem>>, vector<2x16x16x24xf32>
    %99 = vector.shape_cast %98 : vector<2x16x16x24xf32> to vector<512x24xf32>
    %100 = vector.extract_strided_slice %68 {offsets = [4, 0, 0], sizes = [1, 1, 24], strides = [1, 1, 1]} : vector<9x1x24xf32> to vector<1x1x24xf32>
    %101 = vector.shape_cast %100 : vector<1x1x24xf32> to vector<1x24xf32>
    %102 = vector.broadcast %101 : vector<1x24xf32> to vector<512x24xf32>
    %103 = arith.mulf %99, %102 : vector<512x24xf32>
    %104 = arith.addf %97, %103 : vector<512x24xf32>
    %c0_73 = arith.constant 0 : index
    %c1_74 = arith.constant 1 : index
    %c2_75 = arith.constant 2 : index
    %c0_76 = arith.constant 0 : index
    %105 = vector.load %arg13[%c0_73, %c1_74, %c2_75, %c0_76] : memref<2x18x18x24xf32, #tpu.memory_space<vmem>>, vector<2x16x16x24xf32>
    %106 = vector.shape_cast %105 : vector<2x16x16x24xf32> to vector<512x24xf32>
    %107 = vector.extract_strided_slice %68 {offsets = [5, 0, 0], sizes = [1, 1, 24], strides = [1, 1, 1]} : vector<9x1x24xf32> to vector<1x1x24xf32>
    %108 = vector.shape_cast %107 : vector<1x1x24xf32> to vector<1x24xf32>
    %109 = vector.broadcast %108 : vector<1x24xf32> to vector<512x24xf32>
    %110 = arith.mulf %106, %109 : vector<512x24xf32>
    %111 = arith.addf %104, %110 : vector<512x24xf32>
    %c0_77 = arith.constant 0 : index
    %c2_78 = arith.constant 2 : index
    %c0_79 = arith.constant 0 : index
    %c0_80 = arith.constant 0 : index
    %112 = vector.load %arg13[%c0_77, %c2_78, %c0_79, %c0_80] : memref<2x18x18x24xf32, #tpu.memory_space<vmem>>, vector<2x16x16x24xf32>
    %113 = vector.shape_cast %112 : vector<2x16x16x24xf32> to vector<512x24xf32>
    %114 = vector.extract_strided_slice %68 {offsets = [6, 0, 0], sizes = [1, 1, 24], strides = [1, 1, 1]} : vector<9x1x24xf32> to vector<1x1x24xf32>
    %115 = vector.shape_cast %114 : vector<1x1x24xf32> to vector<1x24xf32>
    %116 = vector.broadcast %115 : vector<1x24xf32> to vector<512x24xf32>
    %117 = arith.mulf %113, %116 : vector<512x24xf32>
    %118 = arith.addf %111, %117 : vector<512x24xf32>
    %c0_81 = arith.constant 0 : index
    %c2_82 = arith.constant 2 : index
    %c1_83 = arith.constant 1 : index
    %c0_84 = arith.constant 0 : index
    %119 = vector.load %arg13[%c0_81, %c2_82, %c1_83, %c0_84] : memref<2x18x18x24xf32, #tpu.memory_space<vmem>>, vector<2x16x16x24xf32>
    %120 = vector.shape_cast %119 : vector<2x16x16x24xf32> to vector<512x24xf32>
    %121 = vector.extract_strided_slice %68 {offsets = [7, 0, 0], sizes = [1, 1, 24], strides = [1, 1, 1]} : vector<9x1x24xf32> to vector<1x1x24xf32>
    %122 = vector.shape_cast %121 : vector<1x1x24xf32> to vector<1x24xf32>
    %123 = vector.broadcast %122 : vector<1x24xf32> to vector<512x24xf32>
    %124 = arith.mulf %120, %123 : vector<512x24xf32>
    %125 = arith.addf %118, %124 : vector<512x24xf32>
    %c0_85 = arith.constant 0 : index
    %c2_86 = arith.constant 2 : index
    %c2_87 = arith.constant 2 : index
    %c0_88 = arith.constant 0 : index
    %126 = vector.load %arg13[%c0_85, %c2_86, %c2_87, %c0_88] : memref<2x18x18x24xf32, #tpu.memory_space<vmem>>, vector<2x16x16x24xf32>
    %127 = vector.shape_cast %126 : vector<2x16x16x24xf32> to vector<512x24xf32>
    %128 = vector.extract_strided_slice %68 {offsets = [8, 0, 0], sizes = [1, 1, 24], strides = [1, 1, 1]} : vector<9x1x24xf32> to vector<1x1x24xf32>
    %129 = vector.shape_cast %128 : vector<1x1x24xf32> to vector<1x24xf32>
    %130 = vector.broadcast %129 : vector<1x24xf32> to vector<512x24xf32>
    %131 = arith.mulf %127, %130 : vector<512x24xf32>
    %132 = arith.addf %125, %131 : vector<512x24xf32>
    %c0_89 = arith.constant 0 : index
    %c0_90 = arith.constant 0 : index
    %133 = vector.load %arg6[%c0_89, %c0_90] : memref<1x24xf32, #tpu.memory_space<vmem>>, vector<1x24xf32>
    %c0_91 = arith.constant 0 : index
    %c0_92 = arith.constant 0 : index
    %134 = vector.load %arg7[%c0_91, %c0_92] : memref<1x24xf32, #tpu.memory_space<vmem>>, vector<1x24xf32>
    %cst_93 = arith.constant dense<0.000000e+00> : vector<24xf32>
    %135 = vector.multi_reduction <add>, %132, %cst_93 [0] : vector<512x24xf32> to vector<24xf32>
    %136 = vector.shape_cast %135 : vector<24xf32> to vector<1x24xf32>
    %137 = arith.mulf %132, %132 : vector<512x24xf32>
    %cst_94 = arith.constant dense<0.000000e+00> : vector<24xf32>
    %138 = vector.multi_reduction <add>, %137, %cst_94 [0] : vector<512x24xf32> to vector<24xf32>
    %139 = vector.shape_cast %138 : vector<24xf32> to vector<1x24xf32>
    %cst_95 = arith.constant 0.001953125 : f32
    %140 = vector.broadcast %cst_95 : f32 to vector<1x24xf32>
    %141 = arith.mulf %136, %140 : vector<1x24xf32>
    %cst_96 = arith.constant 0.001953125 : f32
    %142 = vector.broadcast %cst_96 : f32 to vector<1x24xf32>
    %143 = arith.mulf %139, %142 : vector<1x24xf32>
    %144 = arith.mulf %141, %141 : vector<1x24xf32>
    %145 = arith.subf %143, %144 : vector<1x24xf32>
    %cst_97 = arith.constant 0.000000e+00 : f32
    %146 = vector.broadcast %cst_97 : f32 to vector<1x24xf32>
    %147 = arith.maximumf %145, %146 : vector<1x24xf32>
    %cst_98 = arith.constant 9.99999974E-6 : f32
    %148 = vector.broadcast %cst_98 : f32 to vector<1x24xf32>
    %149 = arith.addf %147, %148 : vector<1x24xf32>
    %150 = math.rsqrt %149 : vector<1x24xf32>
    %151 = arith.mulf %133, %150 : vector<1x24xf32>
    %152 = vector.broadcast %151 : vector<1x24xf32> to vector<512x24xf32>
    %153 = arith.mulf %132, %152 : vector<512x24xf32>
    %154 = arith.mulf %141, %151 : vector<1x24xf32>
    %155 = arith.subf %134, %154 : vector<1x24xf32>
    %156 = vector.broadcast %155 : vector<1x24xf32> to vector<512x24xf32>
    %157 = arith.addf %153, %156 : vector<512x24xf32>
    %cst_99 = arith.constant 0.000000e+00 : f32
    %158 = vector.broadcast %cst_99 : f32 to vector<512x24xf32>
    %159 = arith.maximumf %157, %158 : vector<512x24xf32>
    %c0_100 = arith.constant 0 : index
    %c0_101 = arith.constant 0 : index
    %160 = vector.load %arg8[%c0_100, %c0_101] : memref<4x24xf32, #tpu.memory_space<vmem>>, vector<4x24xf32>
    %cst_102 = arith.constant dense<0.000000e+00> : vector<4x512xf32>
    %161 = tpu.matmul %160, %159, %cst_102 {dimension_numbers = #tpu.dot_dimension_numbers<[1], [1], [0], [0], [0, 0, 1, 0], [], []>} : vector<4x24xf32>, vector<512x24xf32>, vector<4x512xf32> -> vector<4x512xf32>
    %c0_103 = arith.constant 0 : index
    %c0_104 = arith.constant 0 : index
    %162 = vector.load %arg9[%c0_103, %c0_104] : memref<4x1xf32, #tpu.memory_space<vmem>>, vector<4x1xf32>
    %c0_105 = arith.constant 0 : index
    %c0_106 = arith.constant 0 : index
    %163 = vector.load %arg10[%c0_105, %c0_106] : memref<4x1xf32, #tpu.memory_space<vmem>>, vector<4x1xf32>
    %cst_107 = arith.constant dense<0.000000e+00> : vector<4xf32>
    %164 = vector.multi_reduction <add>, %161, %cst_107 [1] : vector<4x512xf32> to vector<4xf32>
    %165 = vector.shape_cast %164 : vector<4xf32> to vector<4x1xf32>
    %166 = arith.mulf %161, %161 : vector<4x512xf32>
    %cst_108 = arith.constant dense<0.000000e+00> : vector<4xf32>
    %167 = vector.multi_reduction <add>, %166, %cst_108 [1] : vector<4x512xf32> to vector<4xf32>
    %168 = vector.shape_cast %167 : vector<4xf32> to vector<4x1xf32>
    %cst_109 = arith.constant 0.001953125 : f32
    %169 = vector.broadcast %cst_109 : f32 to vector<4x1xf32>
    %170 = arith.mulf %165, %169 : vector<4x1xf32>
    %cst_110 = arith.constant 0.001953125 : f32
    %171 = vector.broadcast %cst_110 : f32 to vector<4x1xf32>
    %172 = arith.mulf %168, %171 : vector<4x1xf32>
    %173 = arith.mulf %170, %170 : vector<4x1xf32>
    %174 = arith.subf %172, %173 : vector<4x1xf32>
    %cst_111 = arith.constant 0.000000e+00 : f32
    %175 = vector.broadcast %cst_111 : f32 to vector<4x1xf32>
    %176 = arith.maximumf %174, %175 : vector<4x1xf32>
    %cst_112 = arith.constant 9.99999974E-6 : f32
    %177 = vector.broadcast %cst_112 : f32 to vector<4x1xf32>
    %178 = arith.addf %176, %177 : vector<4x1xf32>
    %179 = math.rsqrt %178 : vector<4x1xf32>
    %180 = arith.mulf %162, %179 : vector<4x1xf32>
    %181 = vector.broadcast %180 : vector<4x1xf32> to vector<4x512xf32>
    %182 = arith.mulf %161, %181 : vector<4x512xf32>
    %183 = arith.mulf %170, %180 : vector<4x1xf32>
    %184 = arith.subf %163, %183 : vector<4x1xf32>
    %185 = vector.broadcast %184 : vector<4x1xf32> to vector<4x512xf32>
    %186 = arith.addf %182, %185 : vector<4x512xf32>
    %c0_113 = arith.constant 0 : index
    %c0_114 = arith.constant 0 : index
    %187 = vector.load %arg1[%c0_113, %c0_114] : memref<4x512xf32, #tpu.memory_space<vmem>>, vector<4x512xf32>
    %188 = arith.addf %186, %187 : vector<4x512xf32>
    %cst_115 = arith.constant 0.000000e+00 : f32
    %189 = vector.broadcast %cst_115 : f32 to vector<4x512xf32>
    %190 = arith.maximumf %188, %189 : vector<4x512xf32>
    %c0_116 = arith.constant 0 : index
    %c0_117 = arith.constant 0 : index
    %191 = vector.load %arg11[%c0_116, %c0_117] : memref<4x512xf32, #tpu.memory_space<vmem>>, vector<4x512xf32>
    tpu.vector_store %arg11[%c0_116, %c0_117], %190 {strides = array<i32>} : memref<4x512xf32, #tpu.memory_space<vmem>>, vector<4x512xf32>,
    return
  }
}

</mosaic_0001>

<llo_original>
// kernel: tpu_custom_call.1
$region0: #{tpu_custom_call.1}
  #allocation0 [shape = 'u32[]', space=smem, size = 0x4, offset = 0x4, fixed_abs, tag = 'smem constant byte address 0x4 - core index']
  #allocation1 [shape = 'u32[72,128]{1,0:T(1,128)}', space=vmem, size = 0x9000, scoped, tag = 'internal scratch']
  #allocation2 [shape = 'f32[512,36]{1,0:T(8,128)}', space=vmem, size = 0x40000, scoped, tag = 'scratch operand']
  #allocation3 [shape = 'f32[2,18,18,24]{3,2,1,0:T(8,128)}', space=vmem, size = 0x6c000, scoped, tag = 'scratch operand']
  %s0 = inlined_call_operand.vmem [shape: f32[2,18,18,4], index: 0, kind: input, shape index: {}]
  %s1 = inlined_call_operand.vmem [shape: f32[4,512], index: 1, kind: input, shape index: {}]
  %s2 = inlined_call_operand.vmem [shape: f32[36,24], index: 2, kind: input, shape index: {}]
  %s3 = inlined_call_operand.vmem [shape: f32[1,24], index: 3, kind: input, shape index: {}]
  %s4 = inlined_call_operand.vmem [shape: f32[1,24], index: 4, kind: input, shape index: {}]
  %s5 = inlined_call_operand.vmem [shape: f32[9,1,24], index: 5, kind: input, shape index: {}]
  %s6 = inlined_call_operand.vmem [shape: f32[1,24], index: 6, kind: input, shape index: {}]
  %s7 = inlined_call_operand.vmem [shape: f32[1,24], index: 7, kind: input, shape index: {}]
  %s8 = inlined_call_operand.vmem [shape: f32[4,24], index: 8, kind: input, shape index: {}]
  %s9 = inlined_call_operand.vmem [shape: f32[4,1], index: 9, kind: input, shape index: {}]
  %s10 = inlined_call_operand.vmem [shape: f32[4,1], index: 10, kind: input, shape index: {}]
  %s11 = inlined_call_operand.hbm [shape: f32[4,512], index: 11, kind: output, shape index: {}]
  %s12 = sld [smem:[#allocation0]]
  $region54: #{tpu_custom_call.1} parent=0
    _
  %s14 = ssub.s32 1, %s12
  %s15 = scalar_select 0, %s14, %s12
  $region1: #{tpu_custom_call.1} parent=0
    #allocation4 [shape = 'u8[8192]{0}', space=vmem, size = 0x2000, scoped, tag = 'output window, operand 0, single buffered']
    #allocation5 [shape = 's32[1]{0}', space=sflag, size = 0x4, scoped, tag = 'scoped memory for tpu_custom_call.1']
    %16 = vsyncpa [#allocation5], 0
    // Predicated region
    $region2: #{tpu_custom_call.1} parent=1 // pred_check
      _
    $region3: #{tpu_custom_call.1} parent=1 // pred_check_branch
      %18 = sbr.rel (0) target = $region5
    $region4: #{tpu_custom_call.1} parent=1 // pred_region
      _
    $region5: #{tpu_custom_call.1} parent=1 // pred_fallthru
      _
    // Predicated region
    $region6: #{tpu_custom_call.1} parent=1 // pred_check
      _
    $region7: #{tpu_custom_call.1} parent=1 // pred_check_branch
      %20 = sbr.rel (0) target = $region9
    $region8: #{tpu_custom_call.1} parent=1 // pred_region
      _
    $region9: #{tpu_custom_call.1} parent=1 // pred_fallthru
      _
    // Predicated region
    $region10: #{tpu_custom_call.1} parent=1 // pred_check
      _
    $region11: #{tpu_custom_call.1} parent=1 // pred_check_branch
      %22 = sbr.rel (0) target = $region13
    $region12: #{tpu_custom_call.1} parent=1 // pred_region
      _
    $region13: #{tpu_custom_call.1} parent=1 // pred_fallthru
      _
    // Predicated region
    $region14: #{tpu_custom_call.1} parent=1 // pred_check
      _
    $region15: #{tpu_custom_call.1} parent=1 // pred_check_branch
      %24 = sbr.rel (0) target = $region17
    $region16: #{tpu_custom_call.1} parent=1 // pred_region
      _
    $region17: #{tpu_custom_call.1} parent=1 // pred_fallthru
      _
    // Predicated region
    $region18: #{tpu_custom_call.1} parent=1 // pred_check
      _
    $region19: #{tpu_custom_call.1} parent=1 // pred_check_branch
      %26 = sbr.rel (0) target = $region21
    $region20: #{tpu_custom_call.1} parent=1 // pred_region
      _
    $region21: #{tpu_custom_call.1} parent=1 // pred_fallthru
      _
    // Predicated region
    $region22: #{tpu_custom_call.1} parent=1 // pred_check
      _
    $region23: #{tpu_custom_call.1} parent=1 // pred_check_branch
      %28 = sbr.rel (0) target = $region25
    $region24: #{tpu_custom_call.1} parent=1 // pred_region
      _
    $region25: #{tpu_custom_call.1} parent=1 // pred_fallthru
      _
    // Predicated region
    $region26: #{tpu_custom_call.1} parent=1 // pred_check
      _
    $region27: #{tpu_custom_call.1} parent=1 // pred_check_branch
      %30 = sbr.rel (0) target = $region29
    $region28: #{tpu_custom_call.1} parent=1 // pred_region
      _
    $region29: #{tpu_custom_call.1} parent=1 // pred_fallthru
      _
    // Predicated region
    $region30: #{tpu_custom_call.1} parent=1 // pred_check
      _
    $region31: #{tpu_custom_call.1} parent=1 // pred_check_branch
      %32 = sbr.rel (0) target = $region33
    $region32: #{tpu_custom_call.1} parent=1 // pred_region
      _
    $region33: #{tpu_custom_call.1} parent=1 // pred_fallthru
      _
    // Predicated region
    $region34: #{tpu_custom_call.1} parent=1 // pred_check
      _
    $region35: #{tpu_custom_call.1} parent=1 // pred_check_branch
      %34 = sbr.rel (0) target = $region37
    $region36: #{tpu_custom_call.1} parent=1 // pred_region
      _
    $region37: #{tpu_custom_call.1} parent=1 // pred_fallthru
      _
    // Predicated region
    $region38: #{tpu_custom_call.1} parent=1 // pred_check
      _
    $region39: #{tpu_custom_call.1} parent=1 // pred_check_branch
      %36 = sbr.rel (0) target = $region41
    $region40: #{tpu_custom_call.1} parent=1 // pred_region
      _
    $region41: #{tpu_custom_call.1} parent=1 // pred_fallthru
      _
    // Predicated region
    $region42: #{tpu_custom_call.1} parent=1 // pred_check
      _
    $region43: #{tpu_custom_call.1} parent=1 // pred_check_branch
      %38 = sbr.rel (0) target = $region45
    $region44: #{tpu_custom_call.1} parent=1 // pred_region
      _
    $region45: #{tpu_custom_call.1} parent=1 // pred_fallthru
      _
    %v39 = vld [vmem:[%s0] sm:$0xff]
    %v40 = vld [vmem:[%s0 + $0x8] sm:$0xff]
    %v41 = vld [vmem:[%s0 + $0x10] sm:$0x3]
    %v42 = vld [vmem:[%s0 + $0x18] sm:$0xff]
    %v43 = vld [vmem:[%s0 + $0x20] sm:$0xff]
    %v44 = vld [vmem:[%s0 + $0x28] sm:$0x3]
    %v45 = vld [vmem:[%s0 + $0x30] sm:$0xff]
    %v46 = vld [vmem:[%s0 + $0x38] sm:$0xff]
    %v47 = vld [vmem:[%s0 + $0x40] sm:$0x3]
    %v48 = vld [vmem:[%s0 + $0x48] sm:$0xff]
    %v49 = vld [vmem:[%s0 + $0x50] sm:$0xff]
    %v50 = vld [vmem:[%s0 + $0x58] sm:$0x3]
    %v51 = vld [vmem:[%s0 + $0x60] sm:$0xff]
    %v52 = vld [vmem:[%s0 + $0x68] sm:$0xff]
    %v53 = vld [vmem:[%s0 + $0x70] sm:$0x3]
    %v54 = vld [vmem:[%s0 + $0x78] sm:$0xff]
    %v55 = vld [vmem:[%s0 + $0x80] sm:$0xff]
    %v56 = vld [vmem:[%s0 + $0x88] sm:$0x3]
    %v57 = vld [vmem:[%s0 + $0x90] sm:$0xff]
    %v58 = vld [vmem:[%s0 + $0x98] sm:$0xff]
    %v59 = vld [vmem:[%s0 + $0xa0] sm:$0x3]
    %v60 = vld [vmem:[%s0 + $0xa8] sm:$0xff]
    %v61 = vld [vmem:[%s0 + $0xb0] sm:$0xff]
    %v62 = vld [vmem:[%s0 + $0xb8] sm:$0x3]
    %v63 = vld [vmem:[%s0 + $0xc0] sm:$0xff]
    %v64 = vld [vmem:[%s0 + $0xc8] sm:$0xff]
    %v65 = vld [vmem:[%s0 + $0xd0] sm:$0x3]
    %v66 = vld [vmem:[%s0 + $0xd8] sm:$0xff]
    %v67 = vld [vmem:[%s0 + $0xe0] sm:$0xff]
    %v68 = vld [vmem:[%s0 + $0xe8] sm:$0x3]
    %v69 = vld [vmem:[%s0 + $0xf0] sm:$0xff]
    %v70 = vld [vmem:[%s0 + $0xf8] sm:$0xff]
    %v71 = vld [vmem:[%s0 + $0x100] sm:$0x3]
    %v72 = vld [vmem:[%s0 + $0x108] sm:$0xff]
    %v73 = vld [vmem:[%s0 + $0x110] sm:$0xff]
    %v74 = vld [vmem:[%s0 + $0x118] sm:$0x3]
    %v75 = vld [vmem:[%s0 + $0x120] sm:$0xff]
    %v76 = vld [vmem:[%s0 + $0x128] sm:$0xff]
    %v77 = vld [vmem:[%s0 + $0x130] sm:$0x3]
    %v78 = vld [vmem:[%s0 + $0x138] sm:$0xff]
    %v79 = vld [vmem:[%s0 + $0x140] sm:$0xff]
    %v80 = vld [vmem:[%s0 + $0x148] sm:$0x3]
    %v81 = vld [vmem:[%s0 + $0x150] sm:$0xff]
    %v82 = vld [vmem:[%s0 + $0x158] sm:$0xff]
    %v83 = vld [vmem:[%s0 + $0x160] sm:$0x3]
    %v84 = vld [vmem:[%s0 + $0x168] sm:$0xff]
    %v85 = vld [vmem:[%s0 + $0x170] sm:$0xff]
    %v86 = vld [vmem:[%s0 + $0x178] sm:$0x3]
    %v87 = vld [vmem:[%s0 + $0x180] sm:$0xff]
    %v88 = vld [vmem:[%s0 + $0x188] sm:$0xff]
    %v89 = vld [vmem:[%s0 + $0x190] sm:$0x3]
    %v90 = vld [vmem:[%s0 + $0x198] sm:$0xff]
    %v91 = vld [vmem:[%s0 + $0x1a0] sm:$0xff]
    %v92 = vld [vmem:[%s0 + $0x1a8] sm:$0x3]
    %v93 = vld [vmem:[%s0 + $0x1b0] sm:$0xff]
    %v94 = vld [vmem:[%s0 + $0x1b8] sm:$0xff]
    %v95 = vld [vmem:[%s0 + $0x1c0] sm:$0x3]
    %v96 = vld [vmem:[%s0 + $0x1c8] sm:$0xff]
    %v97 = vld [vmem:[%s0 + $0x1d0] sm:$0xff]
    %v98 = vld [vmem:[%s0 + $0x1d8] sm:$0x3]
    %v99 = vld [vmem:[%s0 + $0x1e0] sm:$0xff]
    %v100 = vld [vmem:[%s0 + $0x1e8] sm:$0xff]
    %v101 = vld [vmem:[%s0 + $0x1f0] sm:$0x3]
    %v102 = vld [vmem:[%s0 + $0x1f8] sm:$0xff]
    %v103 = vld [vmem:[%s0 + $0x200] sm:$0xff]
    %v104 = vld [vmem:[%s0 + $0x208] sm:$0x3]
    %v105 = vld [vmem:[%s0 + $0x210] sm:$0xff]
    %v106 = vld [vmem:[%s0 + $0x218] sm:$0xff]
    %v107 = vld [vmem:[%s0 + $0x220] sm:$0x3]
    %v108 = vld [vmem:[%s0 + $0x228] sm:$0xff]
    %v109 = vld [vmem:[%s0 + $0x230] sm:$0xff]
    %v110 = vld [vmem:[%s0 + $0x238] sm:$0x3]
    %v111 = vld [vmem:[%s0 + $0x240] sm:$0xff]
    %v112 = vld [vmem:[%s0 + $0x248] sm:$0xff]
    %v113 = vld [vmem:[%s0 + $0x250] sm:$0x3]
    %v114 = vld [vmem:[%s0 + $0x258] sm:$0xff]
    %v115 = vld [vmem:[%s0 + $0x260] sm:$0xff]
    %v116 = vld [vmem:[%s0 + $0x268] sm:$0x3]
    %v117 = vld [vmem:[%s0 + $0x270] sm:$0xff]
    %v118 = vld [vmem:[%s0 + $0x278] sm:$0xff]
    %v119 = vld [vmem:[%s0 + $0x280] sm:$0x3]
    %v120 = vld [vmem:[%s0 + $0x288] sm:$0xff]
    %v121 = vld [vmem:[%s0 + $0x290] sm:$0xff]
    %v122 = vld [vmem:[%s0 + $0x298] sm:$0x3]
    %v123 = vld [vmem:[%s0 + $0x2a0] sm:$0xff]
    %v124 = vld [vmem:[%s0 + $0x2a8] sm:$0xff]
    %v125 = vld [vmem:[%s0 + $0x2b0] sm:$0x3]
    %v126 = vld [vmem:[%s0 + $0x2b8] sm:$0xff]
    %v127 = vld [vmem:[%s0 + $0x2c0] sm:$0xff]
    %v128 = vld [vmem:[%s0 + $0x2c8] sm:$0x3]
    %v129 = vld [vmem:[%s0 + $0x2d0] sm:$0xff]
    %v130 = vld [vmem:[%s0 + $0x2d8] sm:$0xff]
    %v131 = vld [vmem:[%s0 + $0x2e0] sm:$0x3]
    %v132 = vld [vmem:[%s0 + $0x2e8] sm:$0xff]
    %v133 = vld [vmem:[%s0 + $0x2f0] sm:$0xff]
    %v134 = vld [vmem:[%s0 + $0x2f8] sm:$0x3]
    %v135 = vld [vmem:[%s0 + $0x300] sm:$0xff]
    %v136 = vld [vmem:[%s0 + $0x308] sm:$0xff]
    %v137 = vld [vmem:[%s0 + $0x310] sm:$0x3]
    %v138 = vld [vmem:[%s0 + $0x318] sm:$0xff]
    %v139 = vld [vmem:[%s0 + $0x320] sm:$0xff]
    %v140 = vld [vmem:[%s0 + $0x328] sm:$0x3]
    %v141 = vld [vmem:[%s0 + $0x330] sm:$0xff]
    %v142 = vld [vmem:[%s0 + $0x338] sm:$0xff]
    %v143 = vld [vmem:[%s0 + $0x340] sm:$0x3]
    %v144 = vld [vmem:[%s0 + $0x348] sm:$0xff]
    %v145 = vld [vmem:[%s0 + $0x350] sm:$0xff]
    %v146 = vld [vmem:[%s0 + $0x358] sm:$0x3]
    %vm147 = vcmask 31744
    %148 = vst.msk [vmem:[#allocation2] sm:$0xff] %vm147, %v39
    %149 = vst.msk [vmem:[#allocation2 + $0x8] sm:$0xff] %vm147, %v40
    %150 = vst.msk [vmem:[#allocation2 + $0x10] sm:$0xff] %vm147, %v42
    %151 = vst.msk [vmem:[#allocation2 + $0x18] sm:$0xff] %vm147, %v43
    %152 = vst.msk [vmem:[#allocation2 + $0x20] sm:$0xff] %vm147, %v45
    %153 = vst.msk [vmem:[#allocation2 + $0x28] sm:$0xff] %vm147, %v46
    %154 = vst.msk [vmem:[#allocation2 + $0x30] sm:$0xff] %vm147, %v48
    %155 = vst.msk [vmem:[#allocation2 + $0x38] sm:$0xff] %vm147, %v49
    %156 = vst.msk [vmem:[#allocation2 + $0x40] sm:$0xff] %vm147, %v51
    %157 = vst.msk [vmem:[#allocation2 + $0x48] sm:$0xff] %vm147, %v52
    %158 = vst.msk [vmem:[#allocation2 + $0x50] sm:$0xff] %vm147, %v54
    %159 = vst.msk [vmem:[#allocation2 + $0x58] sm:$0xff] %vm147, %v55
    %160 = vst.msk [vmem:[#allocation2 + $0x60] sm:$0xff] %vm147, %v57
    %161 = vst.msk [vmem:[#allocation2 + $0x68] sm:$0xff] %vm147, %v58
    %162 = vst.msk [vmem:[#allocation2 + $0x70] sm:$0xff] %vm147, %v60
    %163 = vst.msk [vmem:[#allocation2 + $0x78] sm:$0xff] %vm147, %v61
    %164 = vst.msk [vmem:[#allocation2 + $0x80] sm:$0xff] %vm147, %v63
    %165 = vst.msk [vmem:[#allocation2 + $0x88] sm:$0xff] %vm147, %v64
    %166 = vst.msk [vmem:[#allocation2 + $0x90] sm:$0xff] %vm147, %v66
    %167 = vst.msk [vmem:[#allocation2 + $0x98] sm:$0xff] %vm147, %v67
    %168 = vst.msk [vmem:[#allocation2 + $0xa0] sm:$0xff] %vm147, %v69
    %169 = vst.msk [vmem:[#allocation2 + $0xa8] sm:$0xff] %vm147, %v70
    %170 = vst.msk [vmem:[#allocation2 + $0xb0] sm:$0xff] %vm147, %v72
    %171 = vst.msk [vmem:[#allocation2 + $0xb8] sm:$0xff] %vm147, %v73
    %172 = vst.msk [vmem:[#allocation2 + $0xc0] sm:$0xff] %vm147, %v75
    %173 = vst.msk [vmem:[#allocation2 + $0xc8] sm:$0xff] %vm147, %v76
    %174 = vst.msk [vmem:[#allocation2 + $0xd0] sm:$0xff] %vm147, %v78
    %175 = vst.msk [vmem:[#allocation2 + $0xd8] sm:$0xff] %vm147, %v79
    %176 = vst.msk [vmem:[#allocation2 + $0xe0] sm:$0xff] %vm147, %v81
    %177 = vst.msk [vmem:[#allocation2 + $0xe8] sm:$0xff] %vm147, %v82
    %178 = vst.msk [vmem:[#allocation2 + $0xf0] sm:$0xff] %vm147, %v84
    %179 = vst.msk [vmem:[#allocation2 + $0xf8] sm:$0xff] %vm147, %v85
    %180 = vst.msk [vmem:[#allocation2 + $0x100] sm:$0xff] %vm147, %v93
    %181 = vst.msk [vmem:[#allocation2 + $0x108] sm:$0xff] %vm147, %v94
    %182 = vst.msk [vmem:[#allocation2 + $0x110] sm:$0xff] %vm147, %v96
    %183 = vst.msk [vmem:[#allocation2 + $0x118] sm:$0xff] %vm147, %v97
    %184 = vst.msk [vmem:[#allocation2 + $0x120] sm:$0xff] %vm147, %v99
    %185 = vst.msk [vmem:[#allocation2 + $0x128] sm:$0xff] %vm147, %v100
    %186 = vst.msk [vmem:[#allocation2 + $0x130] sm:$0xff] %vm147, %v102
    %187 = vst.msk [vmem:[#allocation2 + $0x138] sm:$0xff] %vm147, %v103
    %188 = vst.msk [vmem:[#allocation2 + $0x140] sm:$0xff] %vm147, %v105
    %189 = vst.msk [vmem:[#allocation2 + $0x148] sm:$0xff] %vm147, %v106
    %190 = vst.msk [vmem:[#allocation2 + $0x150] sm:$0xff] %vm147, %v108
    %191 = vst.msk [vmem:[#allocation2 + $0x158] sm:$0xff] %vm147, %v109
    %192 = vst.msk [vmem:[#allocation2 + $0x160] sm:$0xff] %vm147, %v111
    %193 = vst.msk [vmem:[#allocation2 + $0x168] sm:$0xff] %vm147, %v112
    %194 = vst.msk [vmem:[#allocation2 + $0x170] sm:$0xff] %vm147, %v114
    %195 = vst.msk [vmem:[#allocation2 + $0x178] sm:$0xff] %vm147, %v115
    %196 = vst.msk [vmem:[#allocation2 + $0x180] sm:$0xff] %vm147, %v117
    %197 = vst.msk [vmem:[#allocation2 + $0x188] sm:$0xff] %vm147, %v118
    %198 = vst.msk [vmem:[#allocation2 + $0x190] sm:$0xff] %vm147, %v120
    %199 = vst.msk [vmem:[#allocation2 + $0x198] sm:$0xff] %vm147, %v121
    %200 = vst.msk [vmem:[#allocation2 + $0x1a0] sm:$0xff] %vm147, %v123
    %201 = vst.msk [vmem:[#allocation2 + $0x1a8] sm:$0xff] %vm147, %v124
    %202 = vst.msk [vmem:[#allocation2 + $0x1b0] sm:$0xff] %vm147, %v126
    %203 = vst.msk [vmem:[#allocation2 + $0x1b8] sm:$0xff] %vm147, %v127
    %204 = vst.msk [vmem:[#allocation2 + $0x1c0] sm:$0xff] %vm147, %v129
    %205 = vst.msk [vmem:[#allocation2 + $0x1c8] sm:$0xff] %vm147, %v130
    %206 = vst.msk [vmem:[#allocation2 + $0x1d0] sm:$0xff] %vm147, %v132
    %207 = vst.msk [vmem:[#allocation2 + $0x1d8] sm:$0xff] %vm147, %v133
    %208 = vst.msk [vmem:[#allocation2 + $0x1e0] sm:$0xff] %vm147, %v135
    %209 = vst.msk [vmem:[#allocation2 + $0x1e8] sm:$0xff] %vm147, %v136
    %210 = vst.msk [vmem:[#allocation2 + $0x1f0] sm:$0xff] %vm147, %v138
    %211 = vst.msk [vmem:[#allocation2 + $0x1f8] sm:$0xff] %vm147, %v139
    %vm308 = vcmask 1046528
    %v309 = vrot.slane %v39, 1
    %v310 = vrot.slane %v40, 1
    %v311 = vsel %vm308, %v309, %v310
    %v312 = vrot.slane %v41, 1
    %v313 = vsel %vm308, %v310, %v312
    %v314 = vrot.slane %v42, 1
    %v315 = vrot.slane %v43, 1
    %v316 = vsel %vm308, %v314, %v315
    %v317 = vrot.slane %v44, 1
    %v318 = vsel %vm308, %v315, %v317
    %v319 = vrot.slane %v45, 1
    %v320 = vrot.slane %v46, 1
    %v321 = vsel %vm308, %v319, %v320
    %v322 = vrot.slane %v47, 1
    %v323 = vsel %vm308, %v320, %v322
    %v324 = vrot.slane %v48, 1
    %v325 = vrot.slane %v49, 1
    %v326 = vsel %vm308, %v324, %v325
    %v327 = vrot.slane %v50, 1
    %v328 = vsel %vm308, %v325, %v327
    %v329 = vrot.slane %v51, 1
    %v330 = vrot.slane %v52, 1
    %v331 = vsel %vm308, %v329, %v330
    %v332 = vrot.slane %v53, 1
    %v333 = vsel %vm308, %v330, %v332
    %v334 = vrot.slane %v54, 1
    %v335 = vrot.slane %v55, 1
    %v336 = vsel %vm308, %v334, %v335
    %v337 = vrot.slane %v56, 1
    %v338 = vsel %vm308, %v335, %v337
    %v339 = vrot.slane %v57, 1
    %v340 = vrot.slane %v58, 1
    %v341 = vsel %vm308, %v339, %v340
    %v342 = vrot.slane %v59, 1
    %v343 = vsel %vm308, %v340, %v342
    %v344 = vrot.slane %v60, 1
    %v345 = vrot.slane %v61, 1
    %v346 = vsel %vm308, %v344, %v345
    %v347 = vrot.slane %v62, 1
    %v348 = vsel %vm308, %v345, %v347
    %v349 = vrot.slane %v63, 1
    %v350 = vrot.slane %v64, 1
    %v351 = vsel %vm308, %v349, %v350
    %v352 = vrot.slane %v65, 1
    %v353 = vsel %vm308, %v350, %v352
    %v354 = vrot.slane %v66, 1
    %v355 = vrot.slane %v67, 1
    %v356 = vsel %vm308, %v354, %v355
    %v357 = vrot.slane %v68, 1
    %v358 = vsel %vm308, %v355, %v357
    %v359 = vrot.slane %v69, 1
    %v360 = vrot.slane %v70, 1
    %v361 = vsel %vm308, %v359, %v360
    %v362 = vrot.slane %v71, 1
    %v363 = vsel %vm308, %v360, %v362
    %v364 = vrot.slane %v72, 1
    %v365 = vrot.slane %v73, 1
    %v366 = vsel %vm308, %v364, %v365
    %v367 = vrot.slane %v74, 1
    %v368 = vsel %vm308, %v365, %v367
    %v369 = vrot.slane %v75, 1
    %v370 = vrot.slane %v76, 1
    %v371 = vsel %vm308, %v369, %v370
    %v372 = vrot.slane %v77, 1
    %v373 = vsel %vm308, %v370, %v372
    %v374 = vrot.slane %v78, 1
    %v375 = vrot.slane %v79, 1
    %v376 = vsel %vm308, %v374, %v375
    %v377 = vrot.slane %v80, 1
    %v378 = vsel %vm308, %v375, %v377
    %v379 = vrot.slane %v81, 1
    %v380 = vrot.slane %v82, 1
    %v381 = vsel %vm308, %v379, %v380
    %v382 = vrot.slane %v83, 1
    %v383 = vsel %vm308, %v380, %v382
    %v384 = vrot.slane %v84, 1
    %v385 = vrot.slane %v85, 1
    %v386 = vsel %vm308, %v384, %v385
    %v387 = vrot.slane %v86, 1
    %v388 = vsel %vm308, %v385, %v387
    %v389 = vrot.slane %v93, 1
    %v390 = vrot.slane %v94, 1
    %v391 = vsel %vm308, %v389, %v390
    %v392 = vrot.slane %v95, 1
    %v393 = vsel %vm308, %v390, %v392
    %v394 = vrot.slane %v96, 1
    %v395 = vrot.slane %v97, 1
    %v396 = vsel %vm308, %v394, %v395
    %v397 = vrot.slane %v98, 1
    %v398 = vsel %vm308, %v395, %v397
    %v399 = vrot.slane %v99, 1
    %v400 = vrot.slane %v100, 1
    %v401 = vsel %vm308, %v399, %v400
    %v402 = vrot.slane %v101, 1
    %v403 = vsel %vm308, %v400, %v402
    %v404 = vrot.slane %v102, 1
    %v405 = vrot.slane %v103, 1
    %v406 = vsel %vm308, %v404, %v405
    %v407 = vrot.slane %v104, 1
    %v408 = vsel %vm308, %v405, %v407
    %v409 = vrot.slane %v105, 1
    %v410 = vrot.slane %v106, 1
    %v411 = vsel %vm308, %v409, %v410
    %v412 = vrot.slane %v107, 1
    %v413 = vsel %vm308, %v410, %v412
    %v414 = vrot.slane %v108, 1
    %v415 = vrot.slane %v109, 1
    %v416 = vsel %vm308, %v414, %v415
    %v417 = vrot.slane %v110, 1
    %v418 = vsel %vm308, %v415, %v417
    %v419 = vrot.slane %v111, 1
    %v420 = vrot.slane %v112, 1
    %v421 = vsel %vm308, %v419, %v420
    %v422 = vrot.slane %v113, 1
    %v423 = vsel %vm308, %v420, %v422
    %v424 = vrot.slane %v114, 1
    %v425 = vrot.slane %v115, 1
    %v426 = vsel %vm308, %v424, %v425
    %v427 = vrot.slane %v116, 1
    %v428 = vsel %vm308, %v425, %v427
    %v429 = vrot.slane %v117, 1
    %v430 = vrot.slane %v118, 1
    %v431 = vsel %vm308, %v429, %v430
    %v432 = vrot.slane %v119, 1
    %v433 = vsel %vm308, %v430, %v432
    %v434 = vrot.slane %v120, 1
    %v435 = vrot.slane %v121, 1
    %v436 = vsel %vm308, %v434, %v435
    %v437 = vrot.slane %v122, 1
    %v438 = vsel %vm308, %v435, %v437
    %v439 = vrot.slane %v123, 1
    %v440 = vrot.slane %v124, 1
    %v441 = vsel %vm308, %v439, %v440
    %v442 = vrot.slane %v125, 1
    %v443 = vsel %vm308, %v440, %v442
    %v444 = vrot.slane %v126, 1
    %v445 = vrot.slane %v127, 1
    %v446 = vsel %vm308, %v444, %v445
    %v447 = vrot.slane %v128, 1
    %v448 = vsel %vm308, %v445, %v447
    %v449 = vrot.slane %v129, 1
    %v450 = vrot.slane %v130, 1
    %v451 = vsel %vm308, %v449, %v450
    %v452 = vrot.slane %v131, 1
    %v453 = vsel %vm308, %v450, %v452
    %v454 = vrot.slane %v132, 1
    %v455 = vrot.slane %v133, 1
    %v456 = vsel %vm308, %v454, %v455
    %v457 = vrot.slane %v134, 1
    %v458 = vsel %vm308, %v455, %v457
    %v459 = vrot.slane %v135, 1
    %v460 = vrot.slane %v136, 1
    %v461 = vsel %vm308, %v459, %v460
    %v462 = vrot.slane %v137, 1
    %v463 = vsel %vm308, %v460, %v462
    %v464 = vrot.slane %v138, 1
    %v465 = vrot.slane %v139, 1
    %v466 = vsel %vm308, %v464, %v465
    %v467 = vrot.slane %v140, 1
    %v468 = vsel %vm308, %v465, %v467
    %469 = vrot.lane.b32.xlu0 %v311, 4
    %v470 = vpop.permute.xlu0 %469
    %471 = vrot.lane.b32.xlu0 %v313, 4
    %v472 = vpop.permute.xlu0 %471
    %473 = vrot.lane.b32.xlu0 %v316, 4
    %v474 = vpop.permute.xlu0 %473
    %475 = vrot.lane.b32.xlu0 %v318, 4
    %v476 = vpop.permute.xlu0 %475
    %477 = vrot.lane.b32.xlu0 %v321, 4
    %v478 = vpop.permute.xlu0 %477
    %479 = vrot.lane.b32.xlu0 %v323, 4
    %v480 = vpop.permute.xlu0 %479
    %481 = vrot.lane.b32.xlu0 %v326, 4
    %v482 = vpop.permute.xlu0 %481
    %483 = vrot.lane.b32.xlu0 %v328, 4
    %v484 = vpop.permute.xlu0 %483
    %485 = vrot.lane.b32.xlu0 %v331, 4
    %v486 = vpop.permute.xlu0 %485
    %487 = vrot.lane.b32.xlu0 %v333, 4
    %v488 = vpop.permute.xlu0 %487
    %489 = vrot.lane.b32.xlu0 %v336, 4
    %v490 = vpop.permute.xlu0 %489
    %491 = vrot.lane.b32.xlu0 %v338, 4
    %v492 = vpop.permute.xlu0 %491
    %493 = vrot.lane.b32.xlu0 %v341, 4
    %v494 = vpop.permute.xlu0 %493
    %495 = vrot.lane.b32.xlu0 %v343, 4
    %v496 = vpop.permute.xlu0 %495
    %497 = vrot.lane.b32.xlu0 %v346, 4
    %v498 = vpop.permute.xlu0 %497
    %499 = vrot.lane.b32.xlu0 %v348, 4
    %v500 = vpop.permute.xlu0 %499
    %501 = vrot.lane.b32.xlu0 %v351, 4
    %v502 = vpop.permute.xlu0 %501
    %503 = vrot.lane.b32.xlu0 %v353, 4
    %v504 = vpop.permute.xlu0 %503
    %505 = vrot.lane.b32.xlu0 %v356, 4
    %v506 = vpop.permute.xlu0 %505
    %507 = vrot.lane.b32.xlu0 %v358, 4
    %v508 = vpop.permute.xlu0 %507
    %509 = vrot.lane.b32.xlu0 %v361, 4
    %v510 = vpop.permute.xlu0 %509
    %511 = vrot.lane.b32.xlu0 %v363, 4
    %v512 = vpop.permute.xlu0 %511
    %513 = vrot.lane.b32.xlu0 %v366, 4
    %v514 = vpop.permute.xlu0 %513
    %515 = vrot.lane.b32.xlu0 %v368, 4
    %v516 = vpop.permute.xlu0 %515
    %517 = vrot.lane.b32.xlu0 %v371, 4
    %v518 = vpop.permute.xlu0 %517
    %519 = vrot.lane.b32.xlu0 %v373, 4
    %v520 = vpop.permute.xlu0 %519
    %521 = vrot.lane.b32.xlu0 %v376, 4
    %v522 = vpop.permute.xlu0 %521
    %523 = vrot.lane.b32.xlu0 %v378, 4
    %v524 = vpop.permute.xlu0 %523
    %525 = vrot.lane.b32.xlu0 %v381, 4
    %v526 = vpop.permute.xlu0 %525
    %527 = vrot.lane.b32.xlu0 %v383, 4
    %v528 = vpop.permute.xlu0 %527
    %529 = vrot.lane.b32.xlu0 %v386, 4
    %v530 = vpop.permute.xlu0 %529
    %531 = vrot.lane.b32.xlu0 %v388, 4
    %v532 = vpop.permute.xlu0 %531
    %533 = vrot.lane.b32.xlu0 %v391, 4
    %v534 = vpop.permute.xlu0 %533
    %535 = vrot.lane.b32.xlu0 %v393, 4
    %v536 = vpop.permute.xlu0 %535
    %537 = vrot.lane.b32.xlu0 %v396, 4
    %v538 = vpop.permute.xlu0 %537
    %539 = vrot.lane.b32.xlu0 %v398, 4
    %v540 = vpop.permute.xlu0 %539
    %541 = vrot.lane.b32.xlu0 %v401, 4
    %v542 = vpop.permute.xlu0 %541
    %543 = vrot.lane.b32.xlu0 %v403, 4
    %v544 = vpop.permute.xlu0 %543
    %545 = vrot.lane.b32.xlu0 %v406, 4
    %v546 = vpop.permute.xlu0 %545
    %547 = vrot.lane.b32.xlu0 %v408, 4
    %v548 = vpop.permute.xlu0 %547
    %549 = vrot.lane.b32.xlu0 %v411, 4
    %v550 = vpop.permute.xlu0 %549
    %551 = vrot.lane.b32.xlu0 %v413, 4
    %v552 = vpop.permute.xlu0 %551
    %553 = vrot.lane.b32.xlu0 %v416, 4
    %v554 = vpop.permute.xlu0 %553
    %555 = vrot.lane.b32.xlu0 %v418, 4
    %v556 = vpop.permute.xlu0 %555
    %557 = vrot.lane.b32.xlu0 %v421, 4
    %v558 = vpop.permute.xlu0 %557
    %559 = vrot.lane.b32.xlu0 %v423, 4
    %v560 = vpop.permute.xlu0 %559
    %561 = vrot.lane.b32.xlu0 %v426, 4
    %v562 = vpop.permute.xlu0 %561
    %563 = vrot.lane.b32.xlu0 %v428, 4
    %v564 = vpop.permute.xlu0 %563
    %565 = vrot.lane.b32.xlu0 %v431, 4
    %v566 = vpop.permute.xlu0 %565
    %567 = vrot.lane.b32.xlu0 %v433, 4
    %v568 = vpop.permute.xlu0 %567
    %569 = vrot.lane.b32.xlu0 %v436, 4
    %v570 = vpop.permute.xlu0 %569
    %571 = vrot.lane.b32.xlu0 %v438, 4
    %v572 = vpop.permute.xlu0 %571
    %573 = vrot.lane.b32.xlu0 %v441, 4
    %v574 = vpop.permute.xlu0 %573
    %575 = vrot.lane.b32.xlu0 %v443, 4
    %v576 = vpop.permute.xlu0 %575
    %577 = vrot.lane.b32.xlu0 %v446, 4
    %v578 = vpop.permute.xlu0 %577
    %579 = vrot.lane.b32.xlu0 %v448, 4
    %v580 = vpop.permute.xlu0 %579
    %581 = vrot.lane.b32.xlu0 %v451, 4
    %v582 = vpop.permute.xlu0 %581
    %583 = vrot.lane.b32.xlu0 %v453, 4
    %v584 = vpop.permute.xlu0 %583
    %585 = vrot.lane.b32.xlu0 %v456, 4
    %v586 = vpop.permute.xlu0 %585
    %587 = vrot.lane.b32.xlu0 %v458, 4
    %v588 = vpop.permute.xlu0 %587
    %589 = vrot.lane.b32.xlu0 %v461, 4
    %v590 = vpop.permute.xlu0 %589
    %591 = vrot.lane.b32.xlu0 %v463, 4
    %v592 = vpop.permute.xlu0 %591
    %593 = vrot.lane.b32.xlu0 %v466, 4
    %v594 = vpop.permute.xlu0 %593
    %595 = vrot.lane.b32.xlu0 %v468, 4
    %v596 = vpop.permute.xlu0 %595
    %vm661 = vcmask 64544
    %662 = vst.msk [vmem:[#allocation2] sm:$0xff] %vm661, %v470
    %663 = vst.msk [vmem:[#allocation2 + $0x8] sm:$0xff] %vm661, %v472
    %664 = vst.msk [vmem:[#allocation2 + $0x10] sm:$0xff] %vm661, %v474
    %665 = vst.msk [vmem:[#allocation2 + $0x18] sm:$0xff] %vm661, %v476
    %666 = vst.msk [vmem:[#allocation2 + $0x20] sm:$0xff] %vm661, %v478
    %667 = vst.msk [vmem:[#allocation2 + $0x28] sm:$0xff] %vm661, %v480
    %668 = vst.msk [vmem:[#allocation2 + $0x30] sm:$0xff] %vm661, %v482
    %669 = vst.msk [vmem:[#allocation2 + $0x38] sm:$0xff] %vm661, %v484
    %670 = vst.msk [vmem:[#allocation2 + $0x40] sm:$0xff] %vm661, %v486
    %671 = vst.msk [vmem:[#allocation2 + $0x48] sm:$0xff] %vm661, %v488
    %672 = vst.msk [vmem:[#allocation2 + $0x50] sm:$0xff] %vm661, %v490
    %673 = vst.msk [vmem:[#allocation2 + $0x58] sm:$0xff] %vm661, %v492
    %674 = vst.msk [vmem:[#allocation2 + $0x60] sm:$0xff] %vm661, %v494
    %675 = vst.msk [vmem:[#allocation2 + $0x68] sm:$0xff] %vm661, %v496
    %676 = vst.msk [vmem:[#allocation2 + $0x70] sm:$0xff] %vm661, %v498
    %677 = vst.msk [vmem:[#allocation2 + $0x78] sm:$0xff] %vm661, %v500
    %678 = vst.msk [vmem:[#allocation2 + $0x80] sm:$0xff] %vm661, %v502
    %679 = vst.msk [vmem:[#allocation2 + $0x88] sm:$0xff] %vm661, %v504
    %680 = vst.msk [vmem:[#allocation2 + $0x90] sm:$0xff] %vm661, %v506
    %681 = vst.msk [vmem:[#allocation2 + $0x98] sm:$0xff] %vm661, %v508
    %682 = vst.msk [vmem:[#allocation2 + $0xa0] sm:$0xff] %vm661, %v510
    %683 = vst.msk [vmem:[#allocation2 + $0xa8] sm:$0xff] %vm661, %v512
    %684 = vst.msk [vmem:[#allocation2 + $0xb0] sm:$0xff] %vm661, %v514
    %685 = vst.msk [vmem:[#allocation2 + $0xb8] sm:$0xff] %vm661, %v516
    %686 = vst.msk [vmem:[#allocation2 + $0xc0] sm:$0xff] %vm661, %v518
    %687 = vst.msk [vmem:[#allocation2 + $0xc8] sm:$0xff] %vm661, %v520
    %688 = vst.msk [vmem:[#allocation2 + $0xd0] sm:$0xff] %vm661, %v522
    %689 = vst.msk [vmem:[#allocation2 + $0xd8] sm:$0xff] %vm661, %v524
    %690 = vst.msk [vmem:[#allocation2 + $0xe0] sm:$0xff] %vm661, %v526
    %691 = vst.msk [vmem:[#allocation2 + $0xe8] sm:$0xff] %vm661, %v528
    %692 = vst.msk [vmem:[#allocation2 + $0xf0] sm:$0xff] %vm661, %v530
    %693 = vst.msk [vmem:[#allocation2 + $0xf8] sm:$0xff] %vm661, %v532
    %694 = vst.msk [vmem:[#allocation2 + $0x100] sm:$0xff] %vm661, %v534
    %695 = vst.msk [vmem:[#allocation2 + $0x108] sm:$0xff] %vm661, %v536
    %696 = vst.msk [vmem:[#allocation2 + $0x110] sm:$0xff] %vm661, %v538
    %697 = vst.msk [vmem:[#allocation2 + $0x118] sm:$0xff] %vm661, %v540
    %698 = vst.msk [vmem:[#allocation2 + $0x120] sm:$0xff] %vm661, %v542
    %699 = vst.msk [vmem:[#allocation2 + $0x128] sm:$0xff] %vm661, %v544
    %700 = vst.msk [vmem:[#allocation2 + $0x130] sm:$0xff] %vm661, %v546
    %701 = vst.msk [vmem:[#allocation2 + $0x138] sm:$0xff] %vm661, %v548
    %702 = vst.msk [vmem:[#allocation2 + $0x140] sm:$0xff] %vm661, %v550
    %703 = vst.msk [vmem:[#allocation2 + $0x148] sm:$0xff] %vm661, %v552
    %704 = vst.msk [vmem:[#allocation2 + $0x150] sm:$0xff] %vm661, %v554
    %705 = vst.msk [vmem:[#allocation2 + $0x158] sm:$0xff] %vm661, %v556
    %706 = vst.msk [vmem:[#allocation2 + $0x160] sm:$0xff] %vm661, %v558
    %707 = vst.msk [vmem:[#allocation2 + $0x168] sm:$0xff] %vm661, %v560
    %708 = vst.msk [vmem:[#allocation2 + $0x170] sm:$0xff] %vm661, %v562
    %709 = vst.msk [vmem:[#allocation2 + $0x178] sm:$0xff] %vm661, %v564
    %710 = vst.msk [vmem:[#allocation2 + $0x180] sm:$0xff] %vm661, %v566
    %711 = vst.msk [vmem:[#allocation2 + $0x188] sm:$0xff] %vm661, %v568
    %712 = vst.msk [vmem:[#allocation2 + $0x190] sm:$0xff] %vm661, %v570
    %713 = vst.msk [vmem:[#allocation2 + $0x198] sm:$0xff] %vm661, %v572
    %714 = vst.msk [vmem:[#allocation2 + $0x1a0] sm:$0xff] %vm661, %v574
    %715 = vst.msk [vmem:[#allocation2 + $0x1a8] sm:$0xff] %vm661, %v576
    %716 = vst.msk [vmem:[#allocation2 + $0x1b0] sm:$0xff] %vm661, %v578
    %717 = vst.msk [vmem:[#allocation2 + $0x1b8] sm:$0xff] %vm661, %v580
    %718 = vst.msk [vmem:[#allocation2 + $0x1c0] sm:$0xff] %vm661, %v582
    %719 = vst.msk [vmem:[#allocation2 + $0x1c8] sm:$0xff] %vm661, %v584
    %720 = vst.msk [vmem:[#allocation2 + $0x1d0] sm:$0xff] %vm661, %v586
    %721 = vst.msk [vmem:[#allocation2 + $0x1d8] sm:$0xff] %vm661, %v588
    %722 = vst.msk [vmem:[#allocation2 + $0x1e0] sm:$0xff] %vm661, %v590
    %723 = vst.msk [vmem:[#allocation2 + $0x1e8] sm:$0xff] %vm661, %v592
    %724 = vst.msk [vmem:[#allocation2 + $0x1f0] sm:$0xff] %vm661, %v594
    %725 = vst.msk [vmem:[#allocation2 + $0x1f8] sm:$0xff] %vm661, %v596
    %vm726 = vcmask 1045504
    %v727 = vrot.slane %v39, 2
    %v728 = vrot.slane %v40, 2
    %v729 = vsel %vm726, %v727, %v728
    %v730 = vrot.slane %v41, 2
    %v731 = vsel %vm726, %v728, %v730
    %v732 = vrot.slane %v42, 2
    %v733 = vrot.slane %v43, 2
    %v734 = vsel %vm726, %v732, %v733
    %v735 = vrot.slane %v44, 2
    %v736 = vsel %vm726, %v733, %v735
    %v737 = vrot.slane %v45, 2
    %v738 = vrot.slane %v46, 2
    %v739 = vsel %vm726, %v737, %v738
    %v740 = vrot.slane %v47, 2
    %v741 = vsel %vm726, %v738, %v740
    %v742 = vrot.slane %v48, 2
    %v743 = vrot.slane %v49, 2
    %v744 = vsel %vm726, %v742, %v743
    %v745 = vrot.slane %v50, 2
    %v746 = vsel %vm726, %v743, %v745
    %v747 = vrot.slane %v51, 2
    %v748 = vrot.slane %v52, 2
    %v749 = vsel %vm726, %v747, %v748
    %v750 = vrot.slane %v53, 2
    %v751 = vsel %vm726, %v748, %v750
    %v752 = vrot.slane %v54, 2
    %v753 = vrot.slane %v55, 2
    %v754 = vsel %vm726, %v752, %v753
    %v755 = vrot.slane %v56, 2
    %v756 = vsel %vm726, %v753, %v755
    %v757 = vrot.slane %v57, 2
    %v758 = vrot.slane %v58, 2
    %v759 = vsel %vm726, %v757, %v758
    %v760 = vrot.slane %v59, 2
    %v761 = vsel %vm726, %v758, %v760
    %v762 = vrot.slane %v60, 2
    %v763 = vrot.slane %v61, 2
    %v764 = vsel %vm726, %v762, %v763
    %v765 = vrot.slane %v62, 2
    %v766 = vsel %vm726, %v763, %v765
    %v767 = vrot.slane %v63, 2
    %v768 = vrot.slane %v64, 2
    %v769 = vsel %vm726, %v767, %v768
    %v770 = vrot.slane %v65, 2
    %v771 = vsel %vm726, %v768, %v770
    %v772 = vrot.slane %v66, 2
    %v773 = vrot.slane %v67, 2
    %v774 = vsel %vm726, %v772, %v773
    %v775 = vrot.slane %v68, 2
    %v776 = vsel %vm726, %v773, %v775
    %v777 = vrot.slane %v69, 2
    %v778 = vrot.slane %v70, 2
    %v779 = vsel %vm726, %v777, %v778
    %v780 = vrot.slane %v71, 2
    %v781 = vsel %vm726, %v778, %v780
    %v782 = vrot.slane %v72, 2
    %v783 = vrot.slane %v73, 2
    %v784 = vsel %vm726, %v782, %v783
    %v785 = vrot.slane %v74, 2
    %v786 = vsel %vm726, %v783, %v785
    %v787 = vrot.slane %v75, 2
    %v788 = vrot.slane %v76, 2
    %v789 = vsel %vm726, %v787, %v788
    %v790 = vrot.slane %v77, 2
    %v791 = vsel %vm726, %v788, %v790
    %v792 = vrot.slane %v78, 2
    %v793 = vrot.slane %v79, 2
    %v794 = vsel %vm726, %v792, %v793
    %v795 = vrot.slane %v80, 2
    %v796 = vsel %vm726, %v793, %v795
    %v797 = vrot.slane %v81, 2
    %v798 = vrot.slane %v82, 2
    %v799 = vsel %vm726, %v797, %v798
    %v800 = vrot.slane %v83, 2
    %v801 = vsel %vm726, %v798, %v800
    %v802 = vrot.slane %v84, 2
    %v803 = vrot.slane %v85, 2
    %v804 = vsel %vm726, %v802, %v803
    %v805 = vrot.slane %v86, 2
    %v806 = vsel %vm726, %v803, %v805
    %v807 = vrot.slane %v93, 2
    %v808 = vrot.slane %v94, 2
    %v809 = vsel %vm726, %v807, %v808
    %v810 = vrot.slane %v95, 2
    %v811 = vsel %vm726, %v808, %v810
    %v812 = vrot.slane %v96, 2
    %v813 = vrot.slane %v97, 2
    %v814 = vsel %vm726, %v812, %v813
    %v815 = vrot.slane %v98, 2
    %v816 = vsel %vm726, %v813, %v815
    %v817 = vrot.slane %v99, 2
    %v818 = vrot.slane %v100, 2
    %v819 = vsel %vm726, %v817, %v818
    %v820 = vrot.slane %v101, 2
    %v821 = vsel %vm726, %v818, %v820
    %v822 = vrot.slane %v102, 2
    %v823 = vrot.slane %v103, 2
    %v824 = vsel %vm726, %v822, %v823
    %v825 = vrot.slane %v104, 2
    %v826 = vsel %vm726, %v823, %v825
    %v827 = vrot.slane %v105, 2
    %v828 = vrot.slane %v106, 2
    %v829 = vsel %vm726, %v827, %v828
    %v830 = vrot.slane %v107, 2
    %v831 = vsel %vm726, %v828, %v830
    %v832 = vrot.slane %v108, 2
    %v833 = vrot.slane %v109, 2
    %v834 = vsel %vm726, %v832, %v833
    %v835 = vrot.slane %v110, 2
    %v836 = vsel %vm726, %v833, %v835
    %v837 = vrot.slane %v111, 2
    %v838 = vrot.slane %v112, 2
    %v839 = vsel %vm726, %v837, %v838
    %v840 = vrot.slane %v113, 2
    %v841 = vsel %vm726, %v838, %v840
    %v842 = vrot.slane %v114, 2
    %v843 = vrot.slane %v115, 2
    %v844 = vsel %vm726, %v842, %v843
    %v845 = vrot.slane %v116, 2
    %v846 = vsel %vm726, %v843, %v845
    %v847 = vrot.slane %v117, 2
    %v848 = vrot.slane %v118, 2
    %v849 = vsel %vm726, %v847, %v848
    %v850 = vrot.slane %v119, 2
    %v851 = vsel %vm726, %v848, %v850
    %v852 = vrot.slane %v120, 2
    %v853 = vrot.slane %v121, 2
    %v854 = vsel %vm726, %v852, %v853
    %v855 = vrot.slane %v122, 2
    %v856 = vsel %vm726, %v853, %v855
    %v857 = vrot.slane %v123, 2
    %v858 = vrot.slane %v124, 2
    %v859 = vsel %vm726, %v857, %v858
    %v860 = vrot.slane %v125, 2
    %v861 = vsel %vm726, %v858, %v860
    %v862 = vrot.slane %v126, 2
    %v863 = vrot.slane %v127, 2
    %v864 = vsel %vm726, %v862, %v863
    %v865 = vrot.slane %v128, 2
    %v866 = vsel %vm726, %v863, %v865
    %v867 = vrot.slane %v129, 2
    %v868 = vrot.slane %v130, 2
    %v869 = vsel %vm726, %v867, %v868
    %v870 = vrot.slane %v131, 2
    %v871 = vsel %vm726, %v868, %v870
    %v872 = vrot.slane %v132, 2
    %v873 = vrot.slane %v133, 2
    %v874 = vsel %vm726, %v872, %v873
    %v875 = vrot.slane %v134, 2
    %v876 = vsel %vm726, %v873, %v875
    %v877 = vrot.slane %v135, 2
    %v878 = vrot.slane %v136, 2
    %v879 = vsel %vm726, %v877, %v878
    %v880 = vrot.slane %v137, 2
    %v881 = vsel %vm726, %v878, %v880
    %v882 = vrot.slane %v138, 2
    %v883 = vrot.slane %v139, 2
    %v884 = vsel %vm726, %v882, %v883
    %v885 = vrot.slane %v140, 2
    %v886 = vsel %vm726, %v883, %v885
    %887 = vrot.lane.b32.xlu0 %v729, 8
    %v888 = vpop.permute.xlu0 %887
    %889 = vrot.lane.b32.xlu0 %v731, 8
    %v890 = vpop.permute.xlu0 %889
    %891 = vrot.lane.b32.xlu0 %v734, 8
    %v892 = vpop.permute.xlu0 %891
    %893 = vrot.lane.b32.xlu0 %v736, 8
    %v894 = vpop.permute.xlu0 %893
    %895 = vrot.lane.b32.xlu0 %v739, 8
    %v896 = vpop.permute.xlu0 %895
    %897 = vrot.lane.b32.xlu0 %v741, 8
    %v898 = vpop.permute.xlu0 %897
    %899 = vrot.lane.b32.xlu0 %v744, 8
    %v900 = vpop.permute.xlu0 %899
    %901 = vrot.lane.b32.xlu0 %v746, 8
    %v902 = vpop.permute.xlu0 %901
    %903 = vrot.lane.b32.xlu0 %v749, 8
    %v904 = vpop.permute.xlu0 %903
    %905 = vrot.lane.b32.xlu0 %v751, 8
    %v906 = vpop.permute.xlu0 %905
    %907 = vrot.lane.b32.xlu0 %v754, 8
    %v908 = vpop.permute.xlu0 %907
    %909 = vrot.lane.b32.xlu0 %v756, 8
    %v910 = vpop.permute.xlu0 %909
    %911 = vrot.lane.b32.xlu0 %v759, 8
    %v912 = vpop.permute.xlu0 %911
    %913 = vrot.lane.b32.xlu0 %v761, 8
    %v914 = vpop.permute.xlu0 %913
    %915 = vrot.lane.b32.xlu0 %v764, 8
    %v916 = vpop.permute.xlu0 %915
    %917 = vrot.lane.b32.xlu0 %v766, 8
    %v918 = vpop.permute.xlu0 %917
    %919 = vrot.lane.b32.xlu0 %v769, 8
    %v920 = vpop.permute.xlu0 %919
    %921 = vrot.lane.b32.xlu0 %v771, 8
    %v922 = vpop.permute.xlu0 %921
    %923 = vrot.lane.b32.xlu0 %v774, 8
    %v924 = vpop.permute.xlu0 %923
    %925 = vrot.lane.b32.xlu0 %v776, 8
    %v926 = vpop.permute.xlu0 %925
    %927 = vrot.lane.b32.xlu0 %v779, 8
    %v928 = vpop.permute.xlu0 %927
    %929 = vrot.lane.b32.xlu0 %v781, 8
    %v930 = vpop.permute.xlu0 %929
    %931 = vrot.lane.b32.xlu0 %v784, 8
    %v932 = vpop.permute.xlu0 %931
    %933 = vrot.lane.b32.xlu0 %v786, 8
    %v934 = vpop.permute.xlu0 %933
    %935 = vrot.lane.b32.xlu0 %v789, 8
    %v936 = vpop.permute.xlu0 %935
    %937 = vrot.lane.b32.xlu0 %v791, 8
    %v938 = vpop.permute.xlu0 %937
    %939 = vrot.lane.b32.xlu0 %v794, 8
    %v940 = vpop.permute.xlu0 %939
    %941 = vrot.lane.b32.xlu0 %v796, 8
    %v942 = vpop.permute.xlu0 %941
    %943 = vrot.lane.b32.xlu0 %v799, 8
    %v944 = vpop.permute.xlu0 %943
    %945 = vrot.lane.b32.xlu0 %v801, 8
    %v946 = vpop.permute.xlu0 %945
    %947 = vrot.lane.b32.xlu0 %v804, 8
    %v948 = vpop.permute.xlu0 %947
    %949 = vrot.lane.b32.xlu0 %v806, 8
    %v950 = vpop.permute.xlu0 %949
    %951 = vrot.lane.b32.xlu0 %v809, 8
    %v952 = vpop.permute.xlu0 %951
    %953 = vrot.lane.b32.xlu0 %v811, 8
    %v954 = vpop.permute.xlu0 %953
    %955 = vrot.lane.b32.xlu0 %v814, 8
    %v956 = vpop.permute.xlu0 %955
    %957 = vrot.lane.b32.xlu0 %v816, 8
    %v958 = vpop.permute.xlu0 %957
    %959 = vrot.lane.b32.xlu0 %v819, 8
    %v960 = vpop.permute.xlu0 %959
    %961 = vrot.lane.b32.xlu0 %v821, 8
    %v962 = vpop.permute.xlu0 %961
    %963 = vrot.lane.b32.xlu0 %v824, 8
    %v964 = vpop.permute.xlu0 %963
    %965 = vrot.lane.b32.xlu0 %v826, 8
    %v966 = vpop.permute.xlu0 %965
    %967 = vrot.lane.b32.xlu0 %v829, 8
    %v968 = vpop.permute.xlu0 %967
    %969 = vrot.lane.b32.xlu0 %v831, 8
    %v970 = vpop.permute.xlu0 %969
    %971 = vrot.lane.b32.xlu0 %v834, 8
    %v972 = vpop.permute.xlu0 %971
    %973 = vrot.lane.b32.xlu0 %v836, 8
    %v974 = vpop.permute.xlu0 %973
    %975 = vrot.lane.b32.xlu0 %v839, 8
    %v976 = vpop.permute.xlu0 %975
    %977 = vrot.lane.b32.xlu0 %v841, 8
    %v978 = vpop.permute.xlu0 %977
    %979 = vrot.lane.b32.xlu0 %v844, 8
    %v980 = vpop.permute.xlu0 %979
    %981 = vrot.lane.b32.xlu0 %v846, 8
    %v982 = vpop.permute.xlu0 %981
    %983 = vrot.lane.b32.xlu0 %v849, 8
    %v984 = vpop.permute.xlu0 %983
    %985 = vrot.lane.b32.xlu0 %v851, 8
    %v986 = vpop.permute.xlu0 %985
    %987 = vrot.lane.b32.xlu0 %v854, 8
    %v988 = vpop.permute.xlu0 %987
    %989 = vrot.lane.b32.xlu0 %v856, 8
    %v990 = vpop.permute.xlu0 %989
    %991 = vrot.lane.b32.xlu0 %v859, 8
    %v992 = vpop.permute.xlu0 %991
    %993 = vrot.lane.b32.xlu0 %v861, 8
    %v994 = vpop.permute.xlu0 %993
    %995 = vrot.lane.b32.xlu0 %v864, 8
    %v996 = vpop.permute.xlu0 %995
    %997 = vrot.lane.b32.xlu0 %v866, 8
    %v998 = vpop.permute.xlu0 %997
    %999 = vrot.lane.b32.xlu0 %v869, 8
    %v1000 = vpop.permute.xlu0 %999
    %1001 = vrot.lane.b32.xlu0 %v871, 8
    %v1002 = vpop.permute.xlu0 %1001
    %1003 = vrot.lane.b32.xlu0 %v874, 8
    %v1004 = vpop.permute.xlu0 %1003
    %1005 = vrot.lane.b32.xlu0 %v876, 8
    %v1006 = vpop.permute.xlu0 %1005
    %1007 = vrot.lane.b32.xlu0 %v879, 8
    %v1008 = vpop.permute.xlu0 %1007
    %1009 = vrot.lane.b32.xlu0 %v881, 8
    %v1010 = vpop.permute.xlu0 %1009
    %1011 = vrot.lane.b32.xlu0 %v884, 8
    %v1012 = vpop.permute.xlu0 %1011
    %1013 = vrot.lane.b32.xlu0 %v886, 8
    %v1014 = vpop.permute.xlu0 %1013
    %vm1079 = vcmask 97344
    %1080 = vst.msk [vmem:[#allocation2] sm:$0xff] %vm1079, %v888
    %1081 = vst.msk [vmem:[#allocation2 + $0x8] sm:$0xff] %vm1079, %v890
    %1082 = vst.msk [vmem:[#allocation2 + $0x10] sm:$0xff] %vm1079, %v892
    %1083 = vst.msk [vmem:[#allocation2 + $0x18] sm:$0xff] %vm1079, %v894
    %1084 = vst.msk [vmem:[#allocation2 + $0x20] sm:$0xff] %vm1079, %v896
    %1085 = vst.msk [vmem:[#allocation2 + $0x28] sm:$0xff] %vm1079, %v898
    %1086 = vst.msk [vmem:[#allocation2 + $0x30] sm:$0xff] %vm1079, %v900
    %1087 = vst.msk [vmem:[#allocation2 + $0x38] sm:$0xff] %vm1079, %v902
    %1088 = vst.msk [vmem:[#allocation2 + $0x40] sm:$0xff] %vm1079, %v904
    %1089 = vst.msk [vmem:[#allocation2 + $0x48] sm:$0xff] %vm1079, %v906
    %1090 = vst.msk [vmem:[#allocation2 + $0x50] sm:$0xff] %vm1079, %v908
    %1091 = vst.msk [vmem:[#allocation2 + $0x58] sm:$0xff] %vm1079, %v910
    %1092 = vst.msk [vmem:[#allocation2 + $0x60] sm:$0xff] %vm1079, %v912
    %1093 = vst.msk [vmem:[#allocation2 + $0x68] sm:$0xff] %vm1079, %v914
    %1094 = vst.msk [vmem:[#allocation2 + $0x70] sm:$0xff] %vm1079, %v916
    %1095 = vst.msk [vmem:[#allocation2 + $0x78] sm:$0xff] %vm1079, %v918
    %1096 = vst.msk [vmem:[#allocation2 + $0x80] sm:$0xff] %vm1079, %v920
    %1097 = vst.msk [vmem:[#allocation2 + $0x88] sm:$0xff] %vm1079, %v922
    %1098 = vst.msk [vmem:[#allocation2 + $0x90] sm:$0xff] %vm1079, %v924
    %1099 = vst.msk [vmem:[#allocation2 + $0x98] sm:$0xff] %vm1079, %v926
    %1100 = vst.msk [vmem:[#allocation2 + $0xa0] sm:$0xff] %vm1079, %v928
    %1101 = vst.msk [vmem:[#allocation2 + $0xa8] sm:$0xff] %vm1079, %v930
    %1102 = vst.msk [vmem:[#allocation2 + $0xb0] sm:$0xff] %vm1079, %v932
    %1103 = vst.msk [vmem:[#allocation2 + $0xb8] sm:$0xff] %vm1079, %v934
    %1104 = vst.msk [vmem:[#allocation2 + $0xc0] sm:$0xff] %vm1079, %v936
    %1105 = vst.msk [vmem:[#allocation2 + $0xc8] sm:$0xff] %vm1079, %v938
    %1106 = vst.msk [vmem:[#allocation2 + $0xd0] sm:$0xff] %vm1079, %v940
    %1107 = vst.msk [vmem:[#allocation2 + $0xd8] sm:$0xff] %vm1079, %v942
    %1108 = vst.msk [vmem:[#allocation2 + $0xe0] sm:$0xff] %vm1079, %v944
    %1109 = vst.msk [vmem:[#allocation2 + $0xe8] sm:$0xff] %vm1079, %v946
    %1110 = vst.msk [vmem:[#allocation2 + $0xf0] sm:$0xff] %vm1079, %v948
    %1111 = vst.msk [vmem:[#allocation2 + $0xf8] sm:$0xff] %vm1079, %v950
    %1112 = vst.msk [vmem:[#allocation2 + $0x100] sm:$0xff] %vm1079, %v952
    %1113 = vst.msk [vmem:[#allocation2 + $0x108] sm:$0xff] %vm1079, %v954
    %1114 = vst.msk [vmem:[#allocation2 + $0x110] sm:$0xff] %vm1079, %v956
    %1115 = vst.msk [vmem:[#allocation2 + $0x118] sm:$0xff] %vm1079, %v958
    %1116 = vst.msk [vmem:[#allocation2 + $0x120] sm:$0xff] %vm1079, %v960
    %1117 = vst.msk [vmem:[#allocation2 + $0x128] sm:$0xff] %vm1079, %v962
    %1118 = vst.msk [vmem:[#allocation2 + $0x130] sm:$0xff] %vm1079, %v964
    %1119 = vst.msk [vmem:[#allocation2 + $0x138] sm:$0xff] %vm1079, %v966
    %1120 = vst.msk [vmem:[#allocation2 + $0x140] sm:$0xff] %vm1079, %v968
    %1121 = vst.msk [vmem:[#allocation2 + $0x148] sm:$0xff] %vm1079, %v970
    %1122 = vst.msk [vmem:[#allocation2 + $0x150] sm:$0xff] %vm1079, %v972
    %1123 = vst.msk [vmem:[#allocation2 + $0x158] sm:$0xff] %vm1079, %v974
    %1124 = vst.msk [vmem:[#allocation2 + $0x160] sm:$0xff] %vm1079, %v976
    %1125 = vst.msk [vmem:[#allocation2 + $0x168] sm:$0xff] %vm1079, %v978
    %1126 = vst.msk [vmem:[#allocation2 + $0x170] sm:$0xff] %vm1079, %v980
    %1127 = vst.msk [vmem:[#allocation2 + $0x178] sm:$0xff] %vm1079, %v982
    %1128 = vst.msk [vmem:[#allocation2 + $0x180] sm:$0xff] %vm1079, %v984
    %1129 = vst.msk [vmem:[#allocation2 + $0x188] sm:$0xff] %vm1079, %v986
    %1130 = vst.msk [vmem:[#allocation2 + $0x190] sm:$0xff] %vm1079, %v988
    %1131 = vst.msk [vmem:[#allocation2 + $0x198] sm:$0xff] %vm1079, %v990
    %1132 = vst.msk [vmem:[#allocation2 + $0x1a0] sm:$0xff] %vm1079, %v992
    %1133 = vst.msk [vmem:[#allocation2 + $0x1a8] sm:$0xff] %vm1079, %v994
    %1134 = vst.msk [vmem:[#allocation2 + $0x1b0] sm:$0xff] %vm1079, %v996
    %1135 = vst.msk [vmem:[#allocation2 + $0x1b8] sm:$0xff] %vm1079, %v998
    %1136 = vst.msk [vmem:[#allocation2 + $0x1c0] sm:$0xff] %vm1079, %v1000
    %1137 = vst.msk [vmem:[#allocation2 + $0x1c8] sm:$0xff] %vm1079, %v1002
    %1138 = vst.msk [vmem:[#allocation2 + $0x1d0] sm:$0xff] %vm1079, %v1004
    %1139 = vst.msk [vmem:[#allocation2 + $0x1d8] sm:$0xff] %vm1079, %v1006
    %1140 = vst.msk [vmem:[#allocation2 + $0x1e0] sm:$0xff] %vm1079, %v1008
    %1141 = vst.msk [vmem:[#allocation2 + $0x1e8] sm:$0xff] %vm1079, %v1010
    %1142 = vst.msk [vmem:[#allocation2 + $0x1f0] sm:$0xff] %vm1079, %v1012
    %1143 = vst.msk [vmem:[#allocation2 + $0x1f8] sm:$0xff] %vm1079, %v1014
    %1148 = vrot.lane.b32.xlu0 %v42, 12
    %v1149 = vpop.permute.xlu0 %1148
    %1150 = vrot.lane.b32.xlu0 %v43, 12
    %v1151 = vpop.permute.xlu0 %1150
    %1152 = vrot.lane.b32.xlu0 %v45, 12
    %v1153 = vpop.permute.xlu0 %1152
    %1154 = vrot.lane.b32.xlu0 %v46, 12
    %v1155 = vpop.permute.xlu0 %1154
    %1156 = vrot.lane.b32.xlu0 %v48, 12
    %v1157 = vpop.permute.xlu0 %1156
    %1158 = vrot.lane.b32.xlu0 %v49, 12
    %v1159 = vpop.permute.xlu0 %1158
    %1160 = vrot.lane.b32.xlu0 %v51, 12
    %v1161 = vpop.permute.xlu0 %1160
    %1162 = vrot.lane.b32.xlu0 %v52, 12
    %v1163 = vpop.permute.xlu0 %1162
    %1164 = vrot.lane.b32.xlu0 %v54, 12
    %v1165 = vpop.permute.xlu0 %1164
    %1166 = vrot.lane.b32.xlu0 %v55, 12
    %v1167 = vpop.permute.xlu0 %1166
    %1168 = vrot.lane.b32.xlu0 %v57, 12
    %v1169 = vpop.permute.xlu0 %1168
    %1170 = vrot.lane.b32.xlu0 %v58, 12
    %v1171 = vpop.permute.xlu0 %1170
    %1172 = vrot.lane.b32.xlu0 %v60, 12
    %v1173 = vpop.permute.xlu0 %1172
    %1174 = vrot.lane.b32.xlu0 %v61, 12
    %v1175 = vpop.permute.xlu0 %1174
    %1176 = vrot.lane.b32.xlu0 %v63, 12
    %v1177 = vpop.permute.xlu0 %1176
    %1178 = vrot.lane.b32.xlu0 %v64, 12
    %v1179 = vpop.permute.xlu0 %1178
    %1180 = vrot.lane.b32.xlu0 %v66, 12
    %v1181 = vpop.permute.xlu0 %1180
    %1182 = vrot.lane.b32.xlu0 %v67, 12
    %v1183 = vpop.permute.xlu0 %1182
    %1184 = vrot.lane.b32.xlu0 %v69, 12
    %v1185 = vpop.permute.xlu0 %1184
    %1186 = vrot.lane.b32.xlu0 %v70, 12
    %v1187 = vpop.permute.xlu0 %1186
    %1188 = vrot.lane.b32.xlu0 %v72, 12
    %v1189 = vpop.permute.xlu0 %1188
    %1190 = vrot.lane.b32.xlu0 %v73, 12
    %v1191 = vpop.permute.xlu0 %1190
    %1192 = vrot.lane.b32.xlu0 %v75, 12
    %v1193 = vpop.permute.xlu0 %1192
    %1194 = vrot.lane.b32.xlu0 %v76, 12
    %v1195 = vpop.permute.xlu0 %1194
    %1196 = vrot.lane.b32.xlu0 %v78, 12
    %v1197 = vpop.permute.xlu0 %1196
    %1198 = vrot.lane.b32.xlu0 %v79, 12
    %v1199 = vpop.permute.xlu0 %1198
    %1200 = vrot.lane.b32.xlu0 %v81, 12
    %v1201 = vpop.permute.xlu0 %1200
    %1202 = vrot.lane.b32.xlu0 %v82, 12
    %v1203 = vpop.permute.xlu0 %1202
    %1204 = vrot.lane.b32.xlu0 %v84, 12
    %v1205 = vpop.permute.xlu0 %1204
    %1206 = vrot.lane.b32.xlu0 %v85, 12
    %v1207 = vpop.permute.xlu0 %1206
    %1208 = vrot.lane.b32.xlu0 %v87, 12
    %v1209 = vpop.permute.xlu0 %1208
    %1210 = vrot.lane.b32.xlu0 %v88, 12
    %v1211 = vpop.permute.xlu0 %1210
    %1212 = vrot.lane.b32.xlu0 %v96, 12
    %v1213 = vpop.permute.xlu0 %1212
    %1214 = vrot.lane.b32.xlu0 %v97, 12
    %v1215 = vpop.permute.xlu0 %1214
    %1216 = vrot.lane.b32.xlu0 %v99, 12
    %v1217 = vpop.permute.xlu0 %1216
    %1218 = vrot.lane.b32.xlu0 %v100, 12
    %v1219 = vpop.permute.xlu0 %1218
    %1220 = vrot.lane.b32.xlu0 %v102, 12
    %v1221 = vpop.permute.xlu0 %1220
    %1222 = vrot.lane.b32.xlu0 %v103, 12
    %v1223 = vpop.permute.xlu0 %1222
    %1224 = vrot.lane.b32.xlu0 %v105, 12
    %v1225 = vpop.permute.xlu0 %1224
    %1226 = vrot.lane.b32.xlu0 %v106, 12
    %v1227 = vpop.permute.xlu0 %1226
    %1228 = vrot.lane.b32.xlu0 %v108, 12
    %v1229 = vpop.permute.xlu0 %1228
    %1230 = vrot.lane.b32.xlu0 %v109, 12
    %v1231 = vpop.permute.xlu0 %1230
    %1232 = vrot.lane.b32.xlu0 %v111, 12
    %v1233 = vpop.permute.xlu0 %1232
    %1234 = vrot.lane.b32.xlu0 %v112, 12
    %v1235 = vpop.permute.xlu0 %1234
    %1236 = vrot.lane.b32.xlu0 %v114, 12
    %v1237 = vpop.permute.xlu0 %1236
    %1238 = vrot.lane.b32.xlu0 %v115, 12
    %v1239 = vpop.permute.xlu0 %1238
    %1240 = vrot.lane.b32.xlu0 %v117, 12
    %v1241 = vpop.permute.xlu0 %1240
    %1242 = vrot.lane.b32.xlu0 %v118, 12
    %v1243 = vpop.permute.xlu0 %1242
    %1244 = vrot.lane.b32.xlu0 %v120, 12
    %v1245 = vpop.permute.xlu0 %1244
    %1246 = vrot.lane.b32.xlu0 %v121, 12
    %v1247 = vpop.permute.xlu0 %1246
    %1248 = vrot.lane.b32.xlu0 %v123, 12
    %v1249 = vpop.permute.xlu0 %1248
    %1250 = vrot.lane.b32.xlu0 %v124, 12
    %v1251 = vpop.permute.xlu0 %1250
    %1252 = vrot.lane.b32.xlu0 %v126, 12
    %v1253 = vpop.permute.xlu0 %1252
    %1254 = vrot.lane.b32.xlu0 %v127, 12
    %v1255 = vpop.permute.xlu0 %1254
    %1256 = vrot.lane.b32.xlu0 %v129, 12
    %v1257 = vpop.permute.xlu0 %1256
    %1258 = vrot.lane.b32.xlu0 %v130, 12
    %v1259 = vpop.permute.xlu0 %1258
    %1260 = vrot.lane.b32.xlu0 %v132, 12
    %v1261 = vpop.permute.xlu0 %1260
    %1262 = vrot.lane.b32.xlu0 %v133, 12
    %v1263 = vpop.permute.xlu0 %1262
    %1264 = vrot.lane.b32.xlu0 %v135, 12
    %v1265 = vpop.permute.xlu0 %1264
    %1266 = vrot.lane.b32.xlu0 %v136, 12
    %v1267 = vpop.permute.xlu0 %1266
    %1268 = vrot.lane.b32.xlu0 %v138, 12
    %v1269 = vpop.permute.xlu0 %1268
    %1270 = vrot.lane.b32.xlu0 %v139, 12
    %v1271 = vpop.permute.xlu0 %1270
    %1272 = vrot.lane.b32.xlu0 %v141, 12
    %v1273 = vpop.permute.xlu0 %1272
    %1274 = vrot.lane.b32.xlu0 %v142, 12
    %v1275 = vpop.permute.xlu0 %1274
    %vm1340 = vcmask 130144
    %1341 = vst.msk [vmem:[#allocation2] sm:$0xff] %vm1340, %v1149
    %1342 = vst.msk [vmem:[#allocation2 + $0x8] sm:$0xff] %vm1340, %v1151
    %1343 = vst.msk [vmem:[#allocation2 + $0x10] sm:$0xff] %vm1340, %v1153
    %1344 = vst.msk [vmem:[#allocation2 + $0x18] sm:$0xff] %vm1340, %v1155
    %1345 = vst.msk [vmem:[#allocation2 + $0x20] sm:$0xff] %vm1340, %v1157
    %1346 = vst.msk [vmem:[#allocation2 + $0x28] sm:$0xff] %vm1340, %v1159
    %1347 = vst.msk [vmem:[#allocation2 + $0x30] sm:$0xff] %vm1340, %v1161
    %1348 = vst.msk [vmem:[#allocation2 + $0x38] sm:$0xff] %vm1340, %v1163
    %1349 = vst.msk [vmem:[#allocation2 + $0x40] sm:$0xff] %vm1340, %v1165
    %1350 = vst.msk [vmem:[#allocation2 + $0x48] sm:$0xff] %vm1340, %v1167
    %1351 = vst.msk [vmem:[#allocation2 + $0x50] sm:$0xff] %vm1340, %v1169
    %1352 = vst.msk [vmem:[#allocation2 + $0x58] sm:$0xff] %vm1340, %v1171
    %1353 = vst.msk [vmem:[#allocation2 + $0x60] sm:$0xff] %vm1340, %v1173
    %1354 = vst.msk [vmem:[#allocation2 + $0x68] sm:$0xff] %vm1340, %v1175
    %1355 = vst.msk [vmem:[#allocation2 + $0x70] sm:$0xff] %vm1340, %v1177
    %1356 = vst.msk [vmem:[#allocation2 + $0x78] sm:$0xff] %vm1340, %v1179
    %1357 = vst.msk [vmem:[#allocation2 + $0x80] sm:$0xff] %vm1340, %v1181
    %1358 = vst.msk [vmem:[#allocation2 + $0x88] sm:$0xff] %vm1340, %v1183
    %1359 = vst.msk [vmem:[#allocation2 + $0x90] sm:$0xff] %vm1340, %v1185
    %1360 = vst.msk [vmem:[#allocation2 + $0x98] sm:$0xff] %vm1340, %v1187
    %1361 = vst.msk [vmem:[#allocation2 + $0xa0] sm:$0xff] %vm1340, %v1189
    %1362 = vst.msk [vmem:[#allocation2 + $0xa8] sm:$0xff] %vm1340, %v1191
    %1363 = vst.msk [vmem:[#allocation2 + $0xb0] sm:$0xff] %vm1340, %v1193
    %1364 = vst.msk [vmem:[#allocation2 + $0xb8] sm:$0xff] %vm1340, %v1195
    %1365 = vst.msk [vmem:[#allocation2 + $0xc0] sm:$0xff] %vm1340, %v1197
    %1366 = vst.msk [vmem:[#allocation2 + $0xc8] sm:$0xff] %vm1340, %v1199
    %1367 = vst.msk [vmem:[#allocation2 + $0xd0] sm:$0xff] %vm1340, %v1201
    %1368 = vst.msk [vmem:[#allocation2 + $0xd8] sm:$0xff] %vm1340, %v1203
    %1369 = vst.msk [vmem:[#allocation2 + $0xe0] sm:$0xff] %vm1340, %v1205
    %1370 = vst.msk [vmem:[#allocation2 + $0xe8] sm:$0xff] %vm1340, %v1207
    %1371 = vst.msk [vmem:[#allocation2 + $0xf0] sm:$0xff] %vm1340, %v1209
    %1372 = vst.msk [vmem:[#allocation2 + $0xf8] sm:$0xff] %vm1340, %v1211
    %1373 = vst.msk [vmem:[#allocation2 + $0x100] sm:$0xff] %vm1340, %v1213
    %1374 = vst.msk [vmem:[#allocation2 + $0x108] sm:$0xff] %vm1340, %v1215
    %1375 = vst.msk [vmem:[#allocation2 + $0x110] sm:$0xff] %vm1340, %v1217
    %1376 = vst.msk [vmem:[#allocation2 + $0x118] sm:$0xff] %vm1340, %v1219
    %1377 = vst.msk [vmem:[#allocation2 + $0x120] sm:$0xff] %vm1340, %v1221
    %1378 = vst.msk [vmem:[#allocation2 + $0x128] sm:$0xff] %vm1340, %v1223
    %1379 = vst.msk [vmem:[#allocation2 + $0x130] sm:$0xff] %vm1340, %v1225
    %1380 = vst.msk [vmem:[#allocation2 + $0x138] sm:$0xff] %vm1340, %v1227
    %1381 = vst.msk [vmem:[#allocation2 + $0x140] sm:$0xff] %vm1340, %v1229
    %1382 = vst.msk [vmem:[#allocation2 + $0x148] sm:$0xff] %vm1340, %v1231
    %1383 = vst.msk [vmem:[#allocation2 + $0x150] sm:$0xff] %vm1340, %v1233
    %1384 = vst.msk [vmem:[#allocation2 + $0x158] sm:$0xff] %vm1340, %v1235
    %1385 = vst.msk [vmem:[#allocation2 + $0x160] sm:$0xff] %vm1340, %v1237
    %1386 = vst.msk [vmem:[#allocation2 + $0x168] sm:$0xff] %vm1340, %v1239
    %1387 = vst.msk [vmem:[#allocation2 + $0x170] sm:$0xff] %vm1340, %v1241
    %1388 = vst.msk [vmem:[#allocation2 + $0x178] sm:$0xff] %vm1340, %v1243
    %1389 = vst.msk [vmem:[#allocation2 + $0x180] sm:$0xff] %vm1340, %v1245
    %1390 = vst.msk [vmem:[#allocation2 + $0x188] sm:$0xff] %vm1340, %v1247
    %1391 = vst.msk [vmem:[#allocation2 + $0x190] sm:$0xff] %vm1340, %v1249
    %1392 = vst.msk [vmem:[#allocation2 + $0x198] sm:$0xff] %vm1340, %v1251
    %1393 = vst.msk [vmem:[#allocation2 + $0x1a0] sm:$0xff] %vm1340, %v1253
    %1394 = vst.msk [vmem:[#allocation2 + $0x1a8] sm:$0xff] %vm1340, %v1255
    %1395 = vst.msk [vmem:[#allocation2 + $0x1b0] sm:$0xff] %vm1340, %v1257
    %1396 = vst.msk [vmem:[#allocation2 + $0x1b8] sm:$0xff] %vm1340, %v1259
    %1397 = vst.msk [vmem:[#allocation2 + $0x1c0] sm:$0xff] %vm1340, %v1261
    %1398 = vst.msk [vmem:[#allocation2 + $0x1c8] sm:$0xff] %vm1340, %v1263
    %1399 = vst.msk [vmem:[#allocation2 + $0x1d0] sm:$0xff] %vm1340, %v1265
    %1400 = vst.msk [vmem:[#allocation2 + $0x1d8] sm:$0xff] %vm1340, %v1267
    %1401 = vst.msk [vmem:[#allocation2 + $0x1e0] sm:$0xff] %vm1340, %v1269
    %1402 = vst.msk [vmem:[#allocation2 + $0x1e8] sm:$0xff] %vm1340, %v1271
    %1403 = vst.msk [vmem:[#allocation2 + $0x1f0] sm:$0xff] %vm1340, %v1273
    %1404 = vst.msk [vmem:[#allocation2 + $0x1f8] sm:$0xff] %vm1340, %v1275
    %v1407 = vrot.slane %v87, 1
    %v1408 = vrot.slane %v88, 1
    %v1409 = vsel %vm308, %v1407, %v1408
    %v1410 = vrot.slane %v89, 1
    %v1411 = vsel %vm308, %v1408, %v1410
    %v1412 = vrot.slane %v141, 1
    %v1413 = vrot.slane %v142, 1
    %v1414 = vsel %vm308, %v1412, %v1413
    %v1415 = vrot.slane %v143, 1
    %v1416 = vsel %vm308, %v1413, %v1415
    %1417 = vrot.lane.b32.xlu0 %v316, 16
    %v1418 = vpop.permute.xlu0 %1417
    %1419 = vrot.lane.b32.xlu0 %v318, 16
    %v1420 = vpop.permute.xlu0 %1419
    %1421 = vrot.lane.b32.xlu0 %v321, 16
    %v1422 = vpop.permute.xlu0 %1421
    %1423 = vrot.lane.b32.xlu0 %v323, 16
    %v1424 = vpop.permute.xlu0 %1423
    %1425 = vrot.lane.b32.xlu0 %v326, 16
    %v1426 = vpop.permute.xlu0 %1425
    %1427 = vrot.lane.b32.xlu0 %v328, 16
    %v1428 = vpop.permute.xlu0 %1427
    %1429 = vrot.lane.b32.xlu0 %v331, 16
    %v1430 = vpop.permute.xlu0 %1429
    %1431 = vrot.lane.b32.xlu0 %v333, 16
    %v1432 = vpop.permute.xlu0 %1431
    %1433 = vrot.lane.b32.xlu0 %v336, 16
    %v1434 = vpop.permute.xlu0 %1433
    %1435 = vrot.lane.b32.xlu0 %v338, 16
    %v1436 = vpop.permute.xlu0 %1435
    %1437 = vrot.lane.b32.xlu0 %v341, 16
    %v1438 = vpop.permute.xlu0 %1437
    %1439 = vrot.lane.b32.xlu0 %v343, 16
    %v1440 = vpop.permute.xlu0 %1439
    %1441 = vrot.lane.b32.xlu0 %v346, 16
    %v1442 = vpop.permute.xlu0 %1441
    %1443 = vrot.lane.b32.xlu0 %v348, 16
    %v1444 = vpop.permute.xlu0 %1443
    %1445 = vrot.lane.b32.xlu0 %v351, 16
    %v1446 = vpop.permute.xlu0 %1445
    %1447 = vrot.lane.b32.xlu0 %v353, 16
    %v1448 = vpop.permute.xlu0 %1447
    %1449 = vrot.lane.b32.xlu0 %v356, 16
    %v1450 = vpop.permute.xlu0 %1449
    %1451 = vrot.lane.b32.xlu0 %v358, 16
    %v1452 = vpop.permute.xlu0 %1451
    %1453 = vrot.lane.b32.xlu0 %v361, 16
    %v1454 = vpop.permute.xlu0 %1453
    %1455 = vrot.lane.b32.xlu0 %v363, 16
    %v1456 = vpop.permute.xlu0 %1455
    %1457 = vrot.lane.b32.xlu0 %v366, 16
    %v1458 = vpop.permute.xlu0 %1457
    %1459 = vrot.lane.b32.xlu0 %v368, 16
    %v1460 = vpop.permute.xlu0 %1459
    %1461 = vrot.lane.b32.xlu0 %v371, 16
    %v1462 = vpop.permute.xlu0 %1461
    %1463 = vrot.lane.b32.xlu0 %v373, 16
    %v1464 = vpop.permute.xlu0 %1463
    %1465 = vrot.lane.b32.xlu0 %v376, 16
    %v1466 = vpop.permute.xlu0 %1465
    %1467 = vrot.lane.b32.xlu0 %v378, 16
    %v1468 = vpop.permute.xlu0 %1467
    %1469 = vrot.lane.b32.xlu0 %v381, 16
    %v1470 = vpop.permute.xlu0 %1469
    %1471 = vrot.lane.b32.xlu0 %v383, 16
    %v1472 = vpop.permute.xlu0 %1471
    %1473 = vrot.lane.b32.xlu0 %v386, 16
    %v1474 = vpop.permute.xlu0 %1473
    %1475 = vrot.lane.b32.xlu0 %v388, 16
    %v1476 = vpop.permute.xlu0 %1475
    %1477 = vrot.lane.b32.xlu0 %v1409, 16
    %v1478 = vpop.permute.xlu0 %1477
    %1479 = vrot.lane.b32.xlu0 %v1411, 16
    %v1480 = vpop.permute.xlu0 %1479
    %1481 = vrot.lane.b32.xlu0 %v396, 16
    %v1482 = vpop.permute.xlu0 %1481
    %1483 = vrot.lane.b32.xlu0 %v398, 16
    %v1484 = vpop.permute.xlu0 %1483
    %1485 = vrot.lane.b32.xlu0 %v401, 16
    %v1486 = vpop.permute.xlu0 %1485
    %1487 = vrot.lane.b32.xlu0 %v403, 16
    %v1488 = vpop.permute.xlu0 %1487
    %1489 = vrot.lane.b32.xlu0 %v406, 16
    %v1490 = vpop.permute.xlu0 %1489
    %1491 = vrot.lane.b32.xlu0 %v408, 16
    %v1492 = vpop.permute.xlu0 %1491
    %1493 = vrot.lane.b32.xlu0 %v411, 16
    %v1494 = vpop.permute.xlu0 %1493
    %1495 = vrot.lane.b32.xlu0 %v413, 16
    %v1496 = vpop.permute.xlu0 %1495
    %1497 = vrot.lane.b32.xlu0 %v416, 16
    %v1498 = vpop.permute.xlu0 %1497
    %1499 = vrot.lane.b32.xlu0 %v418, 16
    %v1500 = vpop.permute.xlu0 %1499
    %1501 = vrot.lane.b32.xlu0 %v421, 16
    %v1502 = vpop.permute.xlu0 %1501
    %1503 = vrot.lane.b32.xlu0 %v423, 16
    %v1504 = vpop.permute.xlu0 %1503
    %1505 = vrot.lane.b32.xlu0 %v426, 16
    %v1506 = vpop.permute.xlu0 %1505
    %1507 = vrot.lane.b32.xlu0 %v428, 16
    %v1508 = vpop.permute.xlu0 %1507
    %1509 = vrot.lane.b32.xlu0 %v431, 16
    %v1510 = vpop.permute.xlu0 %1509
    %1511 = vrot.lane.b32.xlu0 %v433, 16
    %v1512 = vpop.permute.xlu0 %1511
    %1513 = vrot.lane.b32.xlu0 %v436, 16
    %v1514 = vpop.permute.xlu0 %1513
    %1515 = vrot.lane.b32.xlu0 %v438, 16
    %v1516 = vpop.permute.xlu0 %1515
    %1517 = vrot.lane.b32.xlu0 %v441, 16
    %v1518 = vpop.permute.xlu0 %1517
    %1519 = vrot.lane.b32.xlu0 %v443, 16
    %v1520 = vpop.permute.xlu0 %1519
    %1521 = vrot.lane.b32.xlu0 %v446, 16
    %v1522 = vpop.permute.xlu0 %1521
    %1523 = vrot.lane.b32.xlu0 %v448, 16
    %v1524 = vpop.permute.xlu0 %1523
    %1525 = vrot.lane.b32.xlu0 %v451, 16
    %v1526 = vpop.permute.xlu0 %1525
    %1527 = vrot.lane.b32.xlu0 %v453, 16
    %v1528 = vpop.permute.xlu0 %1527
    %1529 = vrot.lane.b32.xlu0 %v456, 16
    %v1530 = vpop.permute.xlu0 %1529
    %1531 = vrot.lane.b32.xlu0 %v458, 16
    %v1532 = vpop.permute.xlu0 %1531
    %1533 = vrot.lane.b32.xlu0 %v461, 16
    %v1534 = vpop.permute.xlu0 %1533
    %1535 = vrot.lane.b32.xlu0 %v463, 16
    %v1536 = vpop.permute.xlu0 %1535
    %1537 = vrot.lane.b32.xlu0 %v466, 16
    %v1538 = vpop.permute.xlu0 %1537
    %1539 = vrot.lane.b32.xlu0 %v468, 16
    %v1540 = vpop.permute.xlu0 %1539
    %1541 = vrot.lane.b32.xlu0 %v1414, 16
    %v1542 = vpop.permute.xlu0 %1541
    %1543 = vrot.lane.b32.xlu0 %v1416, 16
    %v1544 = vpop.permute.xlu0 %1543
    %vm1609 = vcmask 162944
    %1610 = vst.msk [vmem:[#allocation2] sm:$0xff] %vm1609, %v1418
    %1611 = vst.msk [vmem:[#allocation2 + $0x8] sm:$0xff] %vm1609, %v1420
    %1612 = vst.msk [vmem:[#allocation2 + $0x10] sm:$0xff] %vm1609, %v1422
    %1613 = vst.msk [vmem:[#allocation2 + $0x18] sm:$0xff] %vm1609, %v1424
    %1614 = vst.msk [vmem:[#allocation2 + $0x20] sm:$0xff] %vm1609, %v1426
    %1615 = vst.msk [vmem:[#allocation2 + $0x28] sm:$0xff] %vm1609, %v1428
    %1616 = vst.msk [vmem:[#allocation2 + $0x30] sm:$0xff] %vm1609, %v1430
    %1617 = vst.msk [vmem:[#allocation2 + $0x38] sm:$0xff] %vm1609, %v1432
    %1618 = vst.msk [vmem:[#allocation2 + $0x40] sm:$0xff] %vm1609, %v1434
    %1619 = vst.msk [vmem:[#allocation2 + $0x48] sm:$0xff] %vm1609, %v1436
    %1620 = vst.msk [vmem:[#allocation2 + $0x50] sm:$0xff] %vm1609, %v1438
    %1621 = vst.msk [vmem:[#allocation2 + $0x58] sm:$0xff] %vm1609, %v1440
    %1622 = vst.msk [vmem:[#allocation2 + $0x60] sm:$0xff] %vm1609, %v1442
    %1623 = vst.msk [vmem:[#allocation2 + $0x68] sm:$0xff] %vm1609, %v1444
    %1624 = vst.msk [vmem:[#allocation2 + $0x70] sm:$0xff] %vm1609, %v1446
    %1625 = vst.msk [vmem:[#allocation2 + $0x78] sm:$0xff] %vm1609, %v1448
    %1626 = vst.msk [vmem:[#allocation2 + $0x80] sm:$0xff] %vm1609, %v1450
    %1627 = vst.msk [vmem:[#allocation2 + $0x88] sm:$0xff] %vm1609, %v1452
    %1628 = vst.msk [vmem:[#allocation2 + $0x90] sm:$0xff] %vm1609, %v1454
    %1629 = vst.msk [vmem:[#allocation2 + $0x98] sm:$0xff] %vm1609, %v1456
    %1630 = vst.msk [vmem:[#allocation2 + $0xa0] sm:$0xff] %vm1609, %v1458
    %1631 = vst.msk [vmem:[#allocation2 + $0xa8] sm:$0xff] %vm1609, %v1460
    %1632 = vst.msk [vmem:[#allocation2 + $0xb0] sm:$0xff] %vm1609, %v1462
    %1633 = vst.msk [vmem:[#allocation2 + $0xb8] sm:$0xff] %vm1609, %v1464
    %1634 = vst.msk [vmem:[#allocation2 + $0xc0] sm:$0xff] %vm1609, %v1466
    %1635 = vst.msk [vmem:[#allocation2 + $0xc8] sm:$0xff] %vm1609, %v1468
    %1636 = vst.msk [vmem:[#allocation2 + $0xd0] sm:$0xff] %vm1609, %v1470
    %1637 = vst.msk [vmem:[#allocation2 + $0xd8] sm:$0xff] %vm1609, %v1472
    %1638 = vst.msk [vmem:[#allocation2 + $0xe0] sm:$0xff] %vm1609, %v1474
    %1639 = vst.msk [vmem:[#allocation2 + $0xe8] sm:$0xff] %vm1609, %v1476
    %1640 = vst.msk [vmem:[#allocation2 + $0xf0] sm:$0xff] %vm1609, %v1478
    %1641 = vst.msk [vmem:[#allocation2 + $0xf8] sm:$0xff] %vm1609, %v1480
    %1642 = vst.msk [vmem:[#allocation2 + $0x100] sm:$0xff] %vm1609, %v1482
    %1643 = vst.msk [vmem:[#allocation2 + $0x108] sm:$0xff] %vm1609, %v1484
    %1644 = vst.msk [vmem:[#allocation2 + $0x110] sm:$0xff] %vm1609, %v1486
    %1645 = vst.msk [vmem:[#allocation2 + $0x118] sm:$0xff] %vm1609, %v1488
    %1646 = vst.msk [vmem:[#allocation2 + $0x120] sm:$0xff] %vm1609, %v1490
    %1647 = vst.msk [vmem:[#allocation2 + $0x128] sm:$0xff] %vm1609, %v1492
    %1648 = vst.msk [vmem:[#allocation2 + $0x130] sm:$0xff] %vm1609, %v1494
    %1649 = vst.msk [vmem:[#allocation2 + $0x138] sm:$0xff] %vm1609, %v1496
    %1650 = vst.msk [vmem:[#allocation2 + $0x140] sm:$0xff] %vm1609, %v1498
    %1651 = vst.msk [vmem:[#allocation2 + $0x148] sm:$0xff] %vm1609, %v1500
    %1652 = vst.msk [vmem:[#allocation2 + $0x150] sm:$0xff] %vm1609, %v1502
    %1653 = vst.msk [vmem:[#allocation2 + $0x158] sm:$0xff] %vm1609, %v1504
    %1654 = vst.msk [vmem:[#allocation2 + $0x160] sm:$0xff] %vm1609, %v1506
    %1655 = vst.msk [vmem:[#allocation2 + $0x168] sm:$0xff] %vm1609, %v1508
    %1656 = vst.msk [vmem:[#allocation2 + $0x170] sm:$0xff] %vm1609, %v1510
    %1657 = vst.msk [vmem:[#allocation2 + $0x178] sm:$0xff] %vm1609, %v1512
    %1658 = vst.msk [vmem:[#allocation2 + $0x180] sm:$0xff] %vm1609, %v1514
    %1659 = vst.msk [vmem:[#allocation2 + $0x188] sm:$0xff] %vm1609, %v1516
    %1660 = vst.msk [vmem:[#allocation2 + $0x190] sm:$0xff] %vm1609, %v1518
    %1661 = vst.msk [vmem:[#allocation2 + $0x198] sm:$0xff] %vm1609, %v1520
    %1662 = vst.msk [vmem:[#allocation2 + $0x1a0] sm:$0xff] %vm1609, %v1522
    %1663 = vst.msk [vmem:[#allocation2 + $0x1a8] sm:$0xff] %vm1609, %v1524
    %1664 = vst.msk [vmem:[#allocation2 + $0x1b0] sm:$0xff] %vm1609, %v1526
    %1665 = vst.msk [vmem:[#allocation2 + $0x1b8] sm:$0xff] %vm1609, %v1528
    %1666 = vst.msk [vmem:[#allocation2 + $0x1c0] sm:$0xff] %vm1609, %v1530
    %1667 = vst.msk [vmem:[#allocation2 + $0x1c8] sm:$0xff] %vm1609, %v1532
    %1668 = vst.msk [vmem:[#allocation2 + $0x1d0] sm:$0xff] %vm1609, %v1534
    %1669 = vst.msk [vmem:[#allocation2 + $0x1d8] sm:$0xff] %vm1609, %v1536
    %1670 = vst.msk [vmem:[#allocation2 + $0x1e0] sm:$0xff] %vm1609, %v1538
    %1671 = vst.msk [vmem:[#allocation2 + $0x1e8] sm:$0xff] %vm1609, %v1540
    %1672 = vst.msk [vmem:[#allocation2 + $0x1f0] sm:$0xff] %vm1609, %v1542
    %1673 = vst.msk [vmem:[#allocation2 + $0x1f8] sm:$0xff] %vm1609, %v1544
    %v1674 = vrot.slane %v87, 2
    %v1675 = vrot.slane %v88, 2
    %v1676 = vsel %vm726, %v1674, %v1675
    %v1677 = vrot.slane %v89, 2
    %v1678 = vsel %vm726, %v1675, %v1677
    %v1679 = vrot.slane %v141, 2
    %v1680 = vrot.slane %v142, 2
    %v1681 = vsel %vm726, %v1679, %v1680
    %v1682 = vrot.slane %v143, 2
    %v1683 = vsel %vm726, %v1680, %v1682
    %1684 = vrot.lane.b32.xlu0 %v734, 20
    %v1685 = vpop.permute.xlu0 %1684
    %1686 = vrot.lane.b32.xlu0 %v736, 20
    %v1687 = vpop.permute.xlu0 %1686
    %1688 = vrot.lane.b32.xlu0 %v739, 20
    %v1689 = vpop.permute.xlu0 %1688
    %1690 = vrot.lane.b32.xlu0 %v741, 20
    %v1691 = vpop.permute.xlu0 %1690
    %1692 = vrot.lane.b32.xlu0 %v744, 20
    %v1693 = vpop.permute.xlu0 %1692
    %1694 = vrot.lane.b32.xlu0 %v746, 20
    %v1695 = vpop.permute.xlu0 %1694
    %1696 = vrot.lane.b32.xlu0 %v749, 20
    %v1697 = vpop.permute.xlu0 %1696
    %1698 = vrot.lane.b32.xlu0 %v751, 20
    %v1699 = vpop.permute.xlu0 %1698
    %1700 = vrot.lane.b32.xlu0 %v754, 20
    %v1701 = vpop.permute.xlu0 %1700
    %1702 = vrot.lane.b32.xlu0 %v756, 20
    %v1703 = vpop.permute.xlu0 %1702
    %1704 = vrot.lane.b32.xlu0 %v759, 20
    %v1705 = vpop.permute.xlu0 %1704
    %1706 = vrot.lane.b32.xlu0 %v761, 20
    %v1707 = vpop.permute.xlu0 %1706
    %1708 = vrot.lane.b32.xlu0 %v764, 20
    %v1709 = vpop.permute.xlu0 %1708
    %1710 = vrot.lane.b32.xlu0 %v766, 20
    %v1711 = vpop.permute.xlu0 %1710
    %1712 = vrot.lane.b32.xlu0 %v769, 20
    %v1713 = vpop.permute.xlu0 %1712
    %1714 = vrot.lane.b32.xlu0 %v771, 20
    %v1715 = vpop.permute.xlu0 %1714
    %1716 = vrot.lane.b32.xlu0 %v774, 20
    %v1717 = vpop.permute.xlu0 %1716
    %1718 = vrot.lane.b32.xlu0 %v776, 20
    %v1719 = vpop.permute.xlu0 %1718
    %1720 = vrot.lane.b32.xlu0 %v779, 20
    %v1721 = vpop.permute.xlu0 %1720
    %1722 = vrot.lane.b32.xlu0 %v781, 20
    %v1723 = vpop.permute.xlu0 %1722
    %1724 = vrot.lane.b32.xlu0 %v784, 20
    %v1725 = vpop.permute.xlu0 %1724
    %1726 = vrot.lane.b32.xlu0 %v786, 20
    %v1727 = vpop.permute.xlu0 %1726
    %1728 = vrot.lane.b32.xlu0 %v789, 20
    %v1729 = vpop.permute.xlu0 %1728
    %1730 = vrot.lane.b32.xlu0 %v791, 20
    %v1731 = vpop.permute.xlu0 %1730
    %1732 = vrot.lane.b32.xlu0 %v794, 20
    %v1733 = vpop.permute.xlu0 %1732
    %1734 = vrot.lane.b32.xlu0 %v796, 20
    %v1735 = vpop.permute.xlu0 %1734
    %1736 = vrot.lane.b32.xlu0 %v799, 20
    %v1737 = vpop.permute.xlu0 %1736
    %1738 = vrot.lane.b32.xlu0 %v801, 20
    %v1739 = vpop.permute.xlu0 %1738
    %1740 = vrot.lane.b32.xlu0 %v804, 20
    %v1741 = vpop.permute.xlu0 %1740
    %1742 = vrot.lane.b32.xlu0 %v806, 20
    %v1743 = vpop.permute.xlu0 %1742
    %1744 = vrot.lane.b32.xlu0 %v1676, 20
    %v1745 = vpop.permute.xlu0 %1744
    %1746 = vrot.lane.b32.xlu0 %v1678, 20
    %v1747 = vpop.permute.xlu0 %1746
    %1748 = vrot.lane.b32.xlu0 %v814, 20
    %v1749 = vpop.permute.xlu0 %1748
    %1750 = vrot.lane.b32.xlu0 %v816, 20
    %v1751 = vpop.permute.xlu0 %1750
    %1752 = vrot.lane.b32.xlu0 %v819, 20
    %v1753 = vpop.permute.xlu0 %1752
    %1754 = vrot.lane.b32.xlu0 %v821, 20
    %v1755 = vpop.permute.xlu0 %1754
    %1756 = vrot.lane.b32.xlu0 %v824, 20
    %v1757 = vpop.permute.xlu0 %1756
    %1758 = vrot.lane.b32.xlu0 %v826, 20
    %v1759 = vpop.permute.xlu0 %1758
    %1760 = vrot.lane.b32.xlu0 %v829, 20
    %v1761 = vpop.permute.xlu0 %1760
    %1762 = vrot.lane.b32.xlu0 %v831, 20
    %v1763 = vpop.permute.xlu0 %1762
    %1764 = vrot.lane.b32.xlu0 %v834, 20
    %v1765 = vpop.permute.xlu0 %1764
    %1766 = vrot.lane.b32.xlu0 %v836, 20
    %v1767 = vpop.permute.xlu0 %1766
    %1768 = vrot.lane.b32.xlu0 %v839, 20
    %v1769 = vpop.permute.xlu0 %1768
    %1770 = vrot.lane.b32.xlu0 %v841, 20
    %v1771 = vpop.permute.xlu0 %1770
    %1772 = vrot.lane.b32.xlu0 %v844, 20
    %v1773 = vpop.permute.xlu0 %1772
    %1774 = vrot.lane.b32.xlu0 %v846, 20
    %v1775 = vpop.permute.xlu0 %1774
    %1776 = vrot.lane.b32.xlu0 %v849, 20
    %v1777 = vpop.permute.xlu0 %1776
    %1778 = vrot.lane.b32.xlu0 %v851, 20
    %v1779 = vpop.permute.xlu0 %1778
    %1780 = vrot.lane.b32.xlu0 %v854, 20
    %v1781 = vpop.permute.xlu0 %1780
    %1782 = vrot.lane.b32.xlu0 %v856, 20
    %v1783 = vpop.permute.xlu0 %1782
    %1784 = vrot.lane.b32.xlu0 %v859, 20
    %v1785 = vpop.permute.xlu0 %1784
    %1786 = vrot.lane.b32.xlu0 %v861, 20
    %v1787 = vpop.permute.xlu0 %1786
    %1788 = vrot.lane.b32.xlu0 %v864, 20
    %v1789 = vpop.permute.xlu0 %1788
    %1790 = vrot.lane.b32.xlu0 %v866, 20
    %v1791 = vpop.permute.xlu0 %1790
    %1792 = vrot.lane.b32.xlu0 %v869, 20
    %v1793 = vpop.permute.xlu0 %1792
    %1794 = vrot.lane.b32.xlu0 %v871, 20
    %v1795 = vpop.permute.xlu0 %1794
    %1796 = vrot.lane.b32.xlu0 %v874, 20
    %v1797 = vpop.permute.xlu0 %1796
    %1798 = vrot.lane.b32.xlu0 %v876, 20
    %v1799 = vpop.permute.xlu0 %1798
    %1800 = vrot.lane.b32.xlu0 %v879, 20
    %v1801 = vpop.permute.xlu0 %1800
    %1802 = vrot.lane.b32.xlu0 %v881, 20
    %v1803 = vpop.permute.xlu0 %1802
    %1804 = vrot.lane.b32.xlu0 %v884, 20
    %v1805 = vpop.permute.xlu0 %1804
    %1806 = vrot.lane.b32.xlu0 %v886, 20
    %v1807 = vpop.permute.xlu0 %1806
    %1808 = vrot.lane.b32.xlu0 %v1681, 20
    %v1809 = vpop.permute.xlu0 %1808
    %1810 = vrot.lane.b32.xlu0 %v1683, 20
    %v1811 = vpop.permute.xlu0 %1810
    %vm1876 = vcmask 195744
    %1877 = vst.msk [vmem:[#allocation2] sm:$0xff] %vm1876, %v1685
    %1878 = vst.msk [vmem:[#allocation2 + $0x8] sm:$0xff] %vm1876, %v1687
    %1879 = vst.msk [vmem:[#allocation2 + $0x10] sm:$0xff] %vm1876, %v1689
    %1880 = vst.msk [vmem:[#allocation2 + $0x18] sm:$0xff] %vm1876, %v1691
    %1881 = vst.msk [vmem:[#allocation2 + $0x20] sm:$0xff] %vm1876, %v1693
    %1882 = vst.msk [vmem:[#allocation2 + $0x28] sm:$0xff] %vm1876, %v1695
    %1883 = vst.msk [vmem:[#allocation2 + $0x30] sm:$0xff] %vm1876, %v1697
    %1884 = vst.msk [vmem:[#allocation2 + $0x38] sm:$0xff] %vm1876, %v1699
    %1885 = vst.msk [vmem:[#allocation2 + $0x40] sm:$0xff] %vm1876, %v1701
    %1886 = vst.msk [vmem:[#allocation2 + $0x48] sm:$0xff] %vm1876, %v1703
    %1887 = vst.msk [vmem:[#allocation2 + $0x50] sm:$0xff] %vm1876, %v1705
    %1888 = vst.msk [vmem:[#allocation2 + $0x58] sm:$0xff] %vm1876, %v1707
    %1889 = vst.msk [vmem:[#allocation2 + $0x60] sm:$0xff] %vm1876, %v1709
    %1890 = vst.msk [vmem:[#allocation2 + $0x68] sm:$0xff] %vm1876, %v1711
    %1891 = vst.msk [vmem:[#allocation2 + $0x70] sm:$0xff] %vm1876, %v1713
    %1892 = vst.msk [vmem:[#allocation2 + $0x78] sm:$0xff] %vm1876, %v1715
    %1893 = vst.msk [vmem:[#allocation2 + $0x80] sm:$0xff] %vm1876, %v1717
    %1894 = vst.msk [vmem:[#allocation2 + $0x88] sm:$0xff] %vm1876, %v1719
    %1895 = vst.msk [vmem:[#allocation2 + $0x90] sm:$0xff] %vm1876, %v1721
    %1896 = vst.msk [vmem:[#allocation2 + $0x98] sm:$0xff] %vm1876, %v1723
    %1897 = vst.msk [vmem:[#allocation2 + $0xa0] sm:$0xff] %vm1876, %v1725
    %1898 = vst.msk [vmem:[#allocation2 + $0xa8] sm:$0xff] %vm1876, %v1727
    %1899 = vst.msk [vmem:[#allocation2 + $0xb0] sm:$0xff] %vm1876, %v1729
    %1900 = vst.msk [vmem:[#allocation2 + $0xb8] sm:$0xff] %vm1876, %v1731
    %1901 = vst.msk [vmem:[#allocation2 + $0xc0] sm:$0xff] %vm1876, %v1733
    %1902 = vst.msk [vmem:[#allocation2 + $0xc8] sm:$0xff] %vm1876, %v1735
    %1903 = vst.msk [vmem:[#allocation2 + $0xd0] sm:$0xff] %vm1876, %v1737
    %1904 = vst.msk [vmem:[#allocation2 + $0xd8] sm:$0xff] %vm1876, %v1739
    %1905 = vst.msk [vmem:[#allocation2 + $0xe0] sm:$0xff] %vm1876, %v1741
    %1906 = vst.msk [vmem:[#allocation2 + $0xe8] sm:$0xff] %vm1876, %v1743
    %1907 = vst.msk [vmem:[#allocation2 + $0xf0] sm:$0xff] %vm1876, %v1745
    %1908 = vst.msk [vmem:[#allocation2 + $0xf8] sm:$0xff] %vm1876, %v1747
    %1909 = vst.msk [vmem:[#allocation2 + $0x100] sm:$0xff] %vm1876, %v1749
    %1910 = vst.msk [vmem:[#allocation2 + $0x108] sm:$0xff] %vm1876, %v1751
    %1911 = vst.msk [vmem:[#allocation2 + $0x110] sm:$0xff] %vm1876, %v1753
    %1912 = vst.msk [vmem:[#allocation2 + $0x118] sm:$0xff] %vm1876, %v1755
    %1913 = vst.msk [vmem:[#allocation2 + $0x120] sm:$0xff] %vm1876, %v1757
    %1914 = vst.msk [vmem:[#allocation2 + $0x128] sm:$0xff] %vm1876, %v1759
    %1915 = vst.msk [vmem:[#allocation2 + $0x130] sm:$0xff] %vm1876, %v1761
    %1916 = vst.msk [vmem:[#allocation2 + $0x138] sm:$0xff] %vm1876, %v1763
    %1917 = vst.msk [vmem:[#allocation2 + $0x140] sm:$0xff] %vm1876, %v1765
    %1918 = vst.msk [vmem:[#allocation2 + $0x148] sm:$0xff] %vm1876, %v1767
    %1919 = vst.msk [vmem:[#allocation2 + $0x150] sm:$0xff] %vm1876, %v1769
    %1920 = vst.msk [vmem:[#allocation2 + $0x158] sm:$0xff] %vm1876, %v1771
    %1921 = vst.msk [vmem:[#allocation2 + $0x160] sm:$0xff] %vm1876, %v1773
    %1922 = vst.msk [vmem:[#allocation2 + $0x168] sm:$0xff] %vm1876, %v1775
    %1923 = vst.msk [vmem:[#allocation2 + $0x170] sm:$0xff] %vm1876, %v1777
    %1924 = vst.msk [vmem:[#allocation2 + $0x178] sm:$0xff] %vm1876, %v1779
    %1925 = vst.msk [vmem:[#allocation2 + $0x180] sm:$0xff] %vm1876, %v1781
    %1926 = vst.msk [vmem:[#allocation2 + $0x188] sm:$0xff] %vm1876, %v1783
    %1927 = vst.msk [vmem:[#allocation2 + $0x190] sm:$0xff] %vm1876, %v1785
    %1928 = vst.msk [vmem:[#allocation2 + $0x198] sm:$0xff] %vm1876, %v1787
    %1929 = vst.msk [vmem:[#allocation2 + $0x1a0] sm:$0xff] %vm1876, %v1789
    %1930 = vst.msk [vmem:[#allocation2 + $0x1a8] sm:$0xff] %vm1876, %v1791
    %1931 = vst.msk [vmem:[#allocation2 + $0x1b0] sm:$0xff] %vm1876, %v1793
    %1932 = vst.msk [vmem:[#allocation2 + $0x1b8] sm:$0xff] %vm1876, %v1795
    %1933 = vst.msk [vmem:[#allocation2 + $0x1c0] sm:$0xff] %vm1876, %v1797
    %1934 = vst.msk [vmem:[#allocation2 + $0x1c8] sm:$0xff] %vm1876, %v1799
    %1935 = vst.msk [vmem:[#allocation2 + $0x1d0] sm:$0xff] %vm1876, %v1801
    %1936 = vst.msk [vmem:[#allocation2 + $0x1d8] sm:$0xff] %vm1876, %v1803
    %1937 = vst.msk [vmem:[#allocation2 + $0x1e0] sm:$0xff] %vm1876, %v1805
    %1938 = vst.msk [vmem:[#allocation2 + $0x1e8] sm:$0xff] %vm1876, %v1807
    %1939 = vst.msk [vmem:[#allocation2 + $0x1f0] sm:$0xff] %vm1876, %v1809
    %1940 = vst.msk [vmem:[#allocation2 + $0x1f8] sm:$0xff] %vm1876, %v1811
    %1945 = vrot.lane.b32.xlu0 %v45, 24
    %v1946 = vpop.permute.xlu0 %1945
    %1947 = vrot.lane.b32.xlu0 %v46, 24
    %v1948 = vpop.permute.xlu0 %1947
    %1949 = vrot.lane.b32.xlu0 %v48, 24
    %v1950 = vpop.permute.xlu0 %1949
    %1951 = vrot.lane.b32.xlu0 %v49, 24
    %v1952 = vpop.permute.xlu0 %1951
    %1953 = vrot.lane.b32.xlu0 %v51, 24
    %v1954 = vpop.permute.xlu0 %1953
    %1955 = vrot.lane.b32.xlu0 %v52, 24
    %v1956 = vpop.permute.xlu0 %1955
    %1957 = vrot.lane.b32.xlu0 %v54, 24
    %v1958 = vpop.permute.xlu0 %1957
    %1959 = vrot.lane.b32.xlu0 %v55, 24
    %v1960 = vpop.permute.xlu0 %1959
    %1961 = vrot.lane.b32.xlu0 %v57, 24
    %v1962 = vpop.permute.xlu0 %1961
    %1963 = vrot.lane.b32.xlu0 %v58, 24
    %v1964 = vpop.permute.xlu0 %1963
    %1965 = vrot.lane.b32.xlu0 %v60, 24
    %v1966 = vpop.permute.xlu0 %1965
    %1967 = vrot.lane.b32.xlu0 %v61, 24
    %v1968 = vpop.permute.xlu0 %1967
    %1969 = vrot.lane.b32.xlu0 %v63, 24
    %v1970 = vpop.permute.xlu0 %1969
    %1971 = vrot.lane.b32.xlu0 %v64, 24
    %v1972 = vpop.permute.xlu0 %1971
    %1973 = vrot.lane.b32.xlu0 %v66, 24
    %v1974 = vpop.permute.xlu0 %1973
    %1975 = vrot.lane.b32.xlu0 %v67, 24
    %v1976 = vpop.permute.xlu0 %1975
    %1977 = vrot.lane.b32.xlu0 %v69, 24
    %v1978 = vpop.permute.xlu0 %1977
    %1979 = vrot.lane.b32.xlu0 %v70, 24
    %v1980 = vpop.permute.xlu0 %1979
    %1981 = vrot.lane.b32.xlu0 %v72, 24
    %v1982 = vpop.permute.xlu0 %1981
    %1983 = vrot.lane.b32.xlu0 %v73, 24
    %v1984 = vpop.permute.xlu0 %1983
    %1985 = vrot.lane.b32.xlu0 %v75, 24
    %v1986 = vpop.permute.xlu0 %1985
    %1987 = vrot.lane.b32.xlu0 %v76, 24
    %v1988 = vpop.permute.xlu0 %1987
    %1989 = vrot.lane.b32.xlu0 %v78, 24
    %v1990 = vpop.permute.xlu0 %1989
    %1991 = vrot.lane.b32.xlu0 %v79, 24
    %v1992 = vpop.permute.xlu0 %1991
    %1993 = vrot.lane.b32.xlu0 %v81, 24
    %v1994 = vpop.permute.xlu0 %1993
    %1995 = vrot.lane.b32.xlu0 %v82, 24
    %v1996 = vpop.permute.xlu0 %1995
    %1997 = vrot.lane.b32.xlu0 %v84, 24
    %v1998 = vpop.permute.xlu0 %1997
    %1999 = vrot.lane.b32.xlu0 %v85, 24
    %v2000 = vpop.permute.xlu0 %1999
    %2001 = vrot.lane.b32.xlu0 %v87, 24
    %v2002 = vpop.permute.xlu0 %2001
    %2003 = vrot.lane.b32.xlu0 %v88, 24
    %v2004 = vpop.permute.xlu0 %2003
    %2005 = vrot.lane.b32.xlu0 %v90, 24
    %v2006 = vpop.permute.xlu0 %2005
    %2007 = vrot.lane.b32.xlu0 %v91, 24
    %v2008 = vpop.permute.xlu0 %2007
    %2009 = vrot.lane.b32.xlu0 %v99, 24
    %v2010 = vpop.permute.xlu0 %2009
    %2011 = vrot.lane.b32.xlu0 %v100, 24
    %v2012 = vpop.permute.xlu0 %2011
    %2013 = vrot.lane.b32.xlu0 %v102, 24
    %v2014 = vpop.permute.xlu0 %2013
    %2015 = vrot.lane.b32.xlu0 %v103, 24
    %v2016 = vpop.permute.xlu0 %2015
    %2017 = vrot.lane.b32.xlu0 %v105, 24
    %v2018 = vpop.permute.xlu0 %2017
    %2019 = vrot.lane.b32.xlu0 %v106, 24
    %v2020 = vpop.permute.xlu0 %2019
    %2021 = vrot.lane.b32.xlu0 %v108, 24
    %v2022 = vpop.permute.xlu0 %2021
    %2023 = vrot.lane.b32.xlu0 %v109, 24
    %v2024 = vpop.permute.xlu0 %2023
    %2025 = vrot.lane.b32.xlu0 %v111, 24
    %v2026 = vpop.permute.xlu0 %2025
    %2027 = vrot.lane.b32.xlu0 %v112, 24
    %v2028 = vpop.permute.xlu0 %2027
    %2029 = vrot.lane.b32.xlu0 %v114, 24
    %v2030 = vpop.permute.xlu0 %2029
    %2031 = vrot.lane.b32.xlu0 %v115, 24
    %v2032 = vpop.permute.xlu0 %2031
    %2033 = vrot.lane.b32.xlu0 %v117, 24
    %v2034 = vpop.permute.xlu0 %2033
    %2035 = vrot.lane.b32.xlu0 %v118, 24
    %v2036 = vpop.permute.xlu0 %2035
    %2037 = vrot.lane.b32.xlu0 %v120, 24
    %v2038 = vpop.permute.xlu0 %2037
    %2039 = vrot.lane.b32.xlu0 %v121, 24
    %v2040 = vpop.permute.xlu0 %2039
    %2041 = vrot.lane.b32.xlu0 %v123, 24
    %v2042 = vpop.permute.xlu0 %2041
    %2043 = vrot.lane.b32.xlu0 %v124, 24
    %v2044 = vpop.permute.xlu0 %2043
    %2045 = vrot.lane.b32.xlu0 %v126, 24
    %v2046 = vpop.permute.xlu0 %2045
    %2047 = vrot.lane.b32.xlu0 %v127, 24
    %v2048 = vpop.permute.xlu0 %2047
    %2049 = vrot.lane.b32.xlu0 %v129, 24
    %v2050 = vpop.permute.xlu0 %2049
    %2051 = vrot.lane.b32.xlu0 %v130, 24
    %v2052 = vpop.permute.xlu0 %2051
    %2053 = vrot.lane.b32.xlu0 %v132, 24
    %v2054 = vpop.permute.xlu0 %2053
    %2055 = vrot.lane.b32.xlu0 %v133, 24
    %v2056 = vpop.permute.xlu0 %2055
    %2057 = vrot.lane.b32.xlu0 %v135, 24
    %v2058 = vpop.permute.xlu0 %2057
    %2059 = vrot.lane.b32.xlu0 %v136, 24
    %v2060 = vpop.permute.xlu0 %2059
    %2061 = vrot.lane.b32.xlu0 %v138, 24
    %v2062 = vpop.permute.xlu0 %2061
    %2063 = vrot.lane.b32.xlu0 %v139, 24
    %v2064 = vpop.permute.xlu0 %2063
    %2065 = vrot.lane.b32.xlu0 %v141, 24
    %v2066 = vpop.permute.xlu0 %2065
    %2067 = vrot.lane.b32.xlu0 %v142, 24
    %v2068 = vpop.permute.xlu0 %2067
    %2069 = vrot.lane.b32.xlu0 %v144, 24
    %v2070 = vpop.permute.xlu0 %2069
    %2071 = vrot.lane.b32.xlu0 %v145, 24
    %v2072 = vpop.permute.xlu0 %2071
    %vm2137 = vcmask 228544
    %2138 = vst.msk [vmem:[#allocation2] sm:$0xff] %vm2137, %v1946
    %2139 = vst.msk [vmem:[#allocation2 + $0x8] sm:$0xff] %vm2137, %v1948
    %2140 = vst.msk [vmem:[#allocation2 + $0x10] sm:$0xff] %vm2137, %v1950
    %2141 = vst.msk [vmem:[#allocation2 + $0x18] sm:$0xff] %vm2137, %v1952
    %2142 = vst.msk [vmem:[#allocation2 + $0x20] sm:$0xff] %vm2137, %v1954
    %2143 = vst.msk [vmem:[#allocation2 + $0x28] sm:$0xff] %vm2137, %v1956
    %2144 = vst.msk [vmem:[#allocation2 + $0x30] sm:$0xff] %vm2137, %v1958
    %2145 = vst.msk [vmem:[#allocation2 + $0x38] sm:$0xff] %vm2137, %v1960
    %2146 = vst.msk [vmem:[#allocation2 + $0x40] sm:$0xff] %vm2137, %v1962
    %2147 = vst.msk [vmem:[#allocation2 + $0x48] sm:$0xff] %vm2137, %v1964
    %2148 = vst.msk [vmem:[#allocation2 + $0x50] sm:$0xff] %vm2137, %v1966
    %2149 = vst.msk [vmem:[#allocation2 + $0x58] sm:$0xff] %vm2137, %v1968
    %2150 = vst.msk [vmem:[#allocation2 + $0x60] sm:$0xff] %vm2137, %v1970
    %2151 = vst.msk [vmem:[#allocation2 + $0x68] sm:$0xff] %vm2137, %v1972
    %2152 = vst.msk [vmem:[#allocation2 + $0x70] sm:$0xff] %vm2137, %v1974
    %2153 = vst.msk [vmem:[#allocation2 + $0x78] sm:$0xff] %vm2137, %v1976
    %2154 = vst.msk [vmem:[#allocation2 + $0x80] sm:$0xff] %vm2137, %v1978
    %2155 = vst.msk [vmem:[#allocation2 + $0x88] sm:$0xff] %vm2137, %v1980
    %2156 = vst.msk [vmem:[#allocation2 + $0x90] sm:$0xff] %vm2137, %v1982
    %2157 = vst.msk [vmem:[#allocation2 + $0x98] sm:$0xff] %vm2137, %v1984
    %2158 = vst.msk [vmem:[#allocation2 + $0xa0] sm:$0xff] %vm2137, %v1986
    %2159 = vst.msk [vmem:[#allocation2 + $0xa8] sm:$0xff] %vm2137, %v1988
    %2160 = vst.msk [vmem:[#allocation2 + $0xb0] sm:$0xff] %vm2137, %v1990
    %2161 = vst.msk [vmem:[#allocation2 + $0xb8] sm:$0xff] %vm2137, %v1992
    %2162 = vst.msk [vmem:[#allocation2 + $0xc0] sm:$0xff] %vm2137, %v1994
    %2163 = vst.msk [vmem:[#allocation2 + $0xc8] sm:$0xff] %vm2137, %v1996
    %2164 = vst.msk [vmem:[#allocation2 + $0xd0] sm:$0xff] %vm2137, %v1998
    %2165 = vst.msk [vmem:[#allocation2 + $0xd8] sm:$0xff] %vm2137, %v2000
    %2166 = vst.msk [vmem:[#allocation2 + $0xe0] sm:$0xff] %vm2137, %v2002
    %2167 = vst.msk [vmem:[#allocation2 + $0xe8] sm:$0xff] %vm2137, %v2004
    %2168 = vst.msk [vmem:[#allocation2 + $0xf0] sm:$0xff] %vm2137, %v2006
    %2169 = vst.msk [vmem:[#allocation2 + $0xf8] sm:$0xff] %vm2137, %v2008
    %2170 = vst.msk [vmem:[#allocation2 + $0x100] sm:$0xff] %vm2137, %v2010
    %2171 = vst.msk [vmem:[#allocation2 + $0x108] sm:$0xff] %vm2137, %v2012
    %2172 = vst.msk [vmem:[#allocation2 + $0x110] sm:$0xff] %vm2137, %v2014
    %2173 = vst.msk [vmem:[#allocation2 + $0x118] sm:$0xff] %vm2137, %v2016
    %2174 = vst.msk [vmem:[#allocation2 + $0x120] sm:$0xff] %vm2137, %v2018
    %2175 = vst.msk [vmem:[#allocation2 + $0x128] sm:$0xff] %vm2137, %v2020
    %2176 = vst.msk [vmem:[#allocation2 + $0x130] sm:$0xff] %vm2137, %v2022
    %2177 = vst.msk [vmem:[#allocation2 + $0x138] sm:$0xff] %vm2137, %v2024
    %2178 = vst.msk [vmem:[#allocation2 + $0x140] sm:$0xff] %vm2137, %v2026
    %2179 = vst.msk [vmem:[#allocation2 + $0x148] sm:$0xff] %vm2137, %v2028
    %2180 = vst.msk [vmem:[#allocation2 + $0x150] sm:$0xff] %vm2137, %v2030
    %2181 = vst.msk [vmem:[#allocation2 + $0x158] sm:$0xff] %vm2137, %v2032
    %2182 = vst.msk [vmem:[#allocation2 + $0x160] sm:$0xff] %vm2137, %v2034
    %2183 = vst.msk [vmem:[#allocation2 + $0x168] sm:$0xff] %vm2137, %v2036
    %2184 = vst.msk [vmem:[#allocation2 + $0x170] sm:$0xff] %vm2137, %v2038
    %2185 = vst.msk [vmem:[#allocation2 + $0x178] sm:$0xff] %vm2137, %v2040
    %2186 = vst.msk [vmem:[#allocation2 + $0x180] sm:$0xff] %vm2137, %v2042
    %2187 = vst.msk [vmem:[#allocation2 + $0x188] sm:$0xff] %vm2137, %v2044
    %2188 = vst.msk [vmem:[#allocation2 + $0x190] sm:$0xff] %vm2137, %v2046
    %2189 = vst.msk [vmem:[#allocation2 + $0x198] sm:$0xff] %vm2137, %v2048
    %2190 = vst.msk [vmem:[#allocation2 + $0x1a0] sm:$0xff] %vm2137, %v2050
    %2191 = vst.msk [vmem:[#allocation2 + $0x1a8] sm:$0xff] %vm2137, %v2052
    %2192 = vst.msk [vmem:[#allocation2 + $0x1b0] sm:$0xff] %vm2137, %v2054
    %2193 = vst.msk [vmem:[#allocation2 + $0x1b8] sm:$0xff] %vm2137, %v2056
    %2194 = vst.msk [vmem:[#allocation2 + $0x1c0] sm:$0xff] %vm2137, %v2058
    %2195 = vst.msk [vmem:[#allocation2 + $0x1c8] sm:$0xff] %vm2137, %v2060
    %2196 = vst.msk [vmem:[#allocation2 + $0x1d0] sm:$0xff] %vm2137, %v2062
    %2197 = vst.msk [vmem:[#allocation2 + $0x1d8] sm:$0xff] %vm2137, %v2064
    %2198 = vst.msk [vmem:[#allocation2 + $0x1e0] sm:$0xff] %vm2137, %v2066
    %2199 = vst.msk [vmem:[#allocation2 + $0x1e8] sm:$0xff] %vm2137, %v2068
    %2200 = vst.msk [vmem:[#allocation2 + $0x1f0] sm:$0xff] %vm2137, %v2070
    %2201 = vst.msk [vmem:[#allocation2 + $0x1f8] sm:$0xff] %vm2137, %v2072
    %v2204 = vrot.slane %v90, 1
    %v2205 = vrot.slane %v91, 1
    %v2206 = vsel %vm308, %v2204, %v2205
    %v2207 = vrot.slane %v92, 1
    %v2208 = vsel %vm308, %v2205, %v2207
    %v2209 = vrot.slane %v144, 1
    %v2210 = vrot.slane %v145, 1
    %v2211 = vsel %vm308, %v2209, %v2210
    %v2212 = vrot.slane %v146, 1
    %v2213 = vsel %vm308, %v2210, %v2212
    %2214 = vrot.lane.b32.xlu0 %v321, 28
    %v2215 = vpop.permute.xlu0 %2214
    %2216 = vrot.lane.b32.xlu0 %v323, 28
    %v2217 = vpop.permute.xlu0 %2216
    %2218 = vrot.lane.b32.xlu0 %v326, 28
    %v2219 = vpop.permute.xlu0 %2218
    %2220 = vrot.lane.b32.xlu0 %v328, 28
    %v2221 = vpop.permute.xlu0 %2220
    %2222 = vrot.lane.b32.xlu0 %v331, 28
    %v2223 = vpop.permute.xlu0 %2222
    %2224 = vrot.lane.b32.xlu0 %v333, 28
    %v2225 = vpop.permute.xlu0 %2224
    %2226 = vrot.lane.b32.xlu0 %v336, 28
    %v2227 = vpop.permute.xlu0 %2226
    %2228 = vrot.lane.b32.xlu0 %v338, 28
    %v2229 = vpop.permute.xlu0 %2228
    %2230 = vrot.lane.b32.xlu0 %v341, 28
    %v2231 = vpop.permute.xlu0 %2230
    %2232 = vrot.lane.b32.xlu0 %v343, 28
    %v2233 = vpop.permute.xlu0 %2232
    %2234 = vrot.lane.b32.xlu0 %v346, 28
    %v2235 = vpop.permute.xlu0 %2234
    %2236 = vrot.lane.b32.xlu0 %v348, 28
    %v2237 = vpop.permute.xlu0 %2236
    %2238 = vrot.lane.b32.xlu0 %v351, 28
    %v2239 = vpop.permute.xlu0 %2238
    %2240 = vrot.lane.b32.xlu0 %v353, 28
    %v2241 = vpop.permute.xlu0 %2240
    %2242 = vrot.lane.b32.xlu0 %v356, 28
    %v2243 = vpop.permute.xlu0 %2242
    %2244 = vrot.lane.b32.xlu0 %v358, 28
    %v2245 = vpop.permute.xlu0 %2244
    %2246 = vrot.lane.b32.xlu0 %v361, 28
    %v2247 = vpop.permute.xlu0 %2246
    %2248 = vrot.lane.b32.xlu0 %v363, 28
    %v2249 = vpop.permute.xlu0 %2248
    %2250 = vrot.lane.b32.xlu0 %v366, 28
    %v2251 = vpop.permute.xlu0 %2250
    %2252 = vrot.lane.b32.xlu0 %v368, 28
    %v2253 = vpop.permute.xlu0 %2252
    %2254 = vrot.lane.b32.xlu0 %v371, 28
    %v2255 = vpop.permute.xlu0 %2254
    %2256 = vrot.lane.b32.xlu0 %v373, 28
    %v2257 = vpop.permute.xlu0 %2256
    %2258 = vrot.lane.b32.xlu0 %v376, 28
    %v2259 = vpop.permute.xlu0 %2258
    %2260 = vrot.lane.b32.xlu0 %v378, 28
    %v2261 = vpop.permute.xlu0 %2260
    %2262 = vrot.lane.b32.xlu0 %v381, 28
    %v2263 = vpop.permute.xlu0 %2262
    %2264 = vrot.lane.b32.xlu0 %v383, 28
    %v2265 = vpop.permute.xlu0 %2264
    %2266 = vrot.lane.b32.xlu0 %v386, 28
    %v2267 = vpop.permute.xlu0 %2266
    %2268 = vrot.lane.b32.xlu0 %v388, 28
    %v2269 = vpop.permute.xlu0 %2268
    %2270 = vrot.lane.b32.xlu0 %v1409, 28
    %v2271 = vpop.permute.xlu0 %2270
    %2272 = vrot.lane.b32.xlu0 %v1411, 28
    %v2273 = vpop.permute.xlu0 %2272
    %2274 = vrot.lane.b32.xlu0 %v2206, 28
    %v2275 = vpop.permute.xlu0 %2274
    %2276 = vrot.lane.b32.xlu0 %v2208, 28
    %v2277 = vpop.permute.xlu0 %2276
    %2278 = vrot.lane.b32.xlu0 %v401, 28
    %v2279 = vpop.permute.xlu0 %2278
    %2280 = vrot.lane.b32.xlu0 %v403, 28
    %v2281 = vpop.permute.xlu0 %2280
    %2282 = vrot.lane.b32.xlu0 %v406, 28
    %v2283 = vpop.permute.xlu0 %2282
    %2284 = vrot.lane.b32.xlu0 %v408, 28
    %v2285 = vpop.permute.xlu0 %2284
    %2286 = vrot.lane.b32.xlu0 %v411, 28
    %v2287 = vpop.permute.xlu0 %2286
    %2288 = vrot.lane.b32.xlu0 %v413, 28
    %v2289 = vpop.permute.xlu0 %2288
    %2290 = vrot.lane.b32.xlu0 %v416, 28
    %v2291 = vpop.permute.xlu0 %2290
    %2292 = vrot.lane.b32.xlu0 %v418, 28
    %v2293 = vpop.permute.xlu0 %2292
    %2294 = vrot.lane.b32.xlu0 %v421, 28
    %v2295 = vpop.permute.xlu0 %2294
    %2296 = vrot.lane.b32.xlu0 %v423, 28
    %v2297 = vpop.permute.xlu0 %2296
    %2298 = vrot.lane.b32.xlu0 %v426, 28
    %v2299 = vpop.permute.xlu0 %2298
    %2300 = vrot.lane.b32.xlu0 %v428, 28
    %v2301 = vpop.permute.xlu0 %2300
    %2302 = vrot.lane.b32.xlu0 %v431, 28
    %v2303 = vpop.permute.xlu0 %2302
    %2304 = vrot.lane.b32.xlu0 %v433, 28
    %v2305 = vpop.permute.xlu0 %2304
    %2306 = vrot.lane.b32.xlu0 %v436, 28
    %v2307 = vpop.permute.xlu0 %2306
    %2308 = vrot.lane.b32.xlu0 %v438, 28
    %v2309 = vpop.permute.xlu0 %2308
    %2310 = vrot.lane.b32.xlu0 %v441, 28
    %v2311 = vpop.permute.xlu0 %2310
    %2312 = vrot.lane.b32.xlu0 %v443, 28
    %v2313 = vpop.permute.xlu0 %2312
    %2314 = vrot.lane.b32.xlu0 %v446, 28
    %v2315 = vpop.permute.xlu0 %2314
    %2316 = vrot.lane.b32.xlu0 %v448, 28
    %v2317 = vpop.permute.xlu0 %2316
    %2318 = vrot.lane.b32.xlu0 %v451, 28
    %v2319 = vpop.permute.xlu0 %2318
    %2320 = vrot.lane.b32.xlu0 %v453, 28
    %v2321 = vpop.permute.xlu0 %2320
    %2322 = vrot.lane.b32.xlu0 %v456, 28
    %v2323 = vpop.permute.xlu0 %2322
    %2324 = vrot.lane.b32.xlu0 %v458, 28
    %v2325 = vpop.permute.xlu0 %2324
    %2326 = vrot.lane.b32.xlu0 %v461, 28
    %v2327 = vpop.permute.xlu0 %2326
    %2328 = vrot.lane.b32.xlu0 %v463, 28
    %v2329 = vpop.permute.xlu0 %2328
    %2330 = vrot.lane.b32.xlu0 %v466, 28
    %v2331 = vpop.permute.xlu0 %2330
    %2332 = vrot.lane.b32.xlu0 %v468, 28
    %v2333 = vpop.permute.xlu0 %2332
    %2334 = vrot.lane.b32.xlu0 %v1414, 28
    %v2335 = vpop.permute.xlu0 %2334
    %2336 = vrot.lane.b32.xlu0 %v1416, 28
    %v2337 = vpop.permute.xlu0 %2336
    %2338 = vrot.lane.b32.xlu0 %v2211, 28
    %v2339 = vpop.permute.xlu0 %2338
    %2340 = vrot.lane.b32.xlu0 %v2213, 28
    %v2341 = vpop.permute.xlu0 %2340
    %vm2406 = vcmask 261344
    %2407 = vst.msk [vmem:[#allocation2] sm:$0xff] %vm2406, %v2215
    %2408 = vst.msk [vmem:[#allocation2 + $0x8] sm:$0xff] %vm2406, %v2217
    %2409 = vst.msk [vmem:[#allocation2 + $0x10] sm:$0xff] %vm2406, %v2219
    %2410 = vst.msk [vmem:[#allocation2 + $0x18] sm:$0xff] %vm2406, %v2221
    %2411 = vst.msk [vmem:[#allocation2 + $0x20] sm:$0xff] %vm2406, %v2223
    %2412 = vst.msk [vmem:[#allocation2 + $0x28] sm:$0xff] %vm2406, %v2225
    %2413 = vst.msk [vmem:[#allocation2 + $0x30] sm:$0xff] %vm2406, %v2227
    %2414 = vst.msk [vmem:[#allocation2 + $0x38] sm:$0xff] %vm2406, %v2229
    %2415 = vst.msk [vmem:[#allocation2 + $0x40] sm:$0xff] %vm2406, %v2231
    %2416 = vst.msk [vmem:[#allocation2 + $0x48] sm:$0xff] %vm2406, %v2233
    %2417 = vst.msk [vmem:[#allocation2 + $0x50] sm:$0xff] %vm2406, %v2235
    %2418 = vst.msk [vmem:[#allocation2 + $0x58] sm:$0xff] %vm2406, %v2237
    %2419 = vst.msk [vmem:[#allocation2 + $0x60] sm:$0xff] %vm2406, %v2239
    %2420 = vst.msk [vmem:[#allocation2 + $0x68] sm:$0xff] %vm2406, %v2241
    %2421 = vst.msk [vmem:[#allocation2 + $0x70] sm:$0xff] %vm2406, %v2243
    %2422 = vst.msk [vmem:[#allocation2 + $0x78] sm:$0xff] %vm2406, %v2245
    %2423 = vst.msk [vmem:[#allocation2 + $0x80] sm:$0xff] %vm2406, %v2247
    %2424 = vst.msk [vmem:[#allocation2 + $0x88] sm:$0xff] %vm2406, %v2249
    %2425 = vst.msk [vmem:[#allocation2 + $0x90] sm:$0xff] %vm2406, %v2251
    %2426 = vst.msk [vmem:[#allocation2 + $0x98] sm:$0xff] %vm2406, %v2253
    %2427 = vst.msk [vmem:[#allocation2 + $0xa0] sm:$0xff] %vm2406, %v2255
    %2428 = vst.msk [vmem:[#allocation2 + $0xa8] sm:$0xff] %vm2406, %v2257
    %2429 = vst.msk [vmem:[#allocation2 + $0xb0] sm:$0xff] %vm2406, %v2259
    %2430 = vst.msk [vmem:[#allocation2 + $0xb8] sm:$0xff] %vm2406, %v2261
    %2431 = vst.msk [vmem:[#allocation2 + $0xc0] sm:$0xff] %vm2406, %v2263
    %2432 = vst.msk [vmem:[#allocation2 + $0xc8] sm:$0xff] %vm2406, %v2265
    %2433 = vst.msk [vmem:[#allocation2 + $0xd0] sm:$0xff] %vm2406, %v2267
    %2434 = vst.msk [vmem:[#allocation2 + $0xd8] sm:$0xff] %vm2406, %v2269
    %2435 = vst.msk [vmem:[#allocation2 + $0xe0] sm:$0xff] %vm2406, %v2271
    %2436 = vst.msk [vmem:[#allocation2 + $0xe8] sm:$0xff] %vm2406, %v2273
    %2437 = vst.msk [vmem:[#allocation2 + $0xf0] sm:$0xff] %vm2406, %v2275
    %2438 = vst.msk [vmem:[#allocation2 + $0xf8] sm:$0xff] %vm2406, %v2277
    %2439 = vst.msk [vmem:[#allocation2 + $0x100] sm:$0xff] %vm2406, %v2279
    %2440 = vst.msk [vmem:[#allocation2 + $0x108] sm:$0xff] %vm2406, %v2281
    %2441 = vst.msk [vmem:[#allocation2 + $0x110] sm:$0xff] %vm2406, %v2283
    %2442 = vst.msk [vmem:[#allocation2 + $0x118] sm:$0xff] %vm2406, %v2285
    %2443 = vst.msk [vmem:[#allocation2 + $0x120] sm:$0xff] %vm2406, %v2287
    %2444 = vst.msk [vmem:[#allocation2 + $0x128] sm:$0xff] %vm2406, %v2289
    %2445 = vst.msk [vmem:[#allocation2 + $0x130] sm:$0xff] %vm2406, %v2291
    %2446 = vst.msk [vmem:[#allocation2 + $0x138] sm:$0xff] %vm2406, %v2293
    %2447 = vst.msk [vmem:[#allocation2 + $0x140] sm:$0xff] %vm2406, %v2295
    %2448 = vst.msk [vmem:[#allocation2 + $0x148] sm:$0xff] %vm2406, %v2297
    %2449 = vst.msk [vmem:[#allocation2 + $0x150] sm:$0xff] %vm2406, %v2299
    %2450 = vst.msk [vmem:[#allocation2 + $0x158] sm:$0xff] %vm2406, %v2301
    %2451 = vst.msk [vmem:[#allocation2 + $0x160] sm:$0xff] %vm2406, %v2303
    %2452 = vst.msk [vmem:[#allocation2 + $0x168] sm:$0xff] %vm2406, %v2305
    %2453 = vst.msk [vmem:[#allocation2 + $0x170] sm:$0xff] %vm2406, %v2307
    %2454 = vst.msk [vmem:[#allocation2 + $0x178] sm:$0xff] %vm2406, %v2309
    %2455 = vst.msk [vmem:[#allocation2 + $0x180] sm:$0xff] %vm2406, %v2311
    %2456 = vst.msk [vmem:[#allocation2 + $0x188] sm:$0xff] %vm2406, %v2313
    %2457 = vst.msk [vmem:[#allocation2 + $0x190] sm:$0xff] %vm2406, %v2315
    %2458 = vst.msk [vmem:[#allocation2 + $0x198] sm:$0xff] %vm2406, %v2317
    %2459 = vst.msk [vmem:[#allocation2 + $0x1a0] sm:$0xff] %vm2406, %v2319
    %2460 = vst.msk [vmem:[#allocation2 + $0x1a8] sm:$0xff] %vm2406, %v2321
    %2461 = vst.msk [vmem:[#allocation2 + $0x1b0] sm:$0xff] %vm2406, %v2323
    %2462 = vst.msk [vmem:[#allocation2 + $0x1b8] sm:$0xff] %vm2406, %v2325
    %2463 = vst.msk [vmem:[#allocation2 + $0x1c0] sm:$0xff] %vm2406, %v2327
    %2464 = vst.msk [vmem:[#allocation2 + $0x1c8] sm:$0xff] %vm2406, %v2329
    %2465 = vst.msk [vmem:[#allocation2 + $0x1d0] sm:$0xff] %vm2406, %v2331
    %2466 = vst.msk [vmem:[#allocation2 + $0x1d8] sm:$0xff] %vm2406, %v2333
    %2467 = vst.msk [vmem:[#allocation2 + $0x1e0] sm:$0xff] %vm2406, %v2335
    %2468 = vst.msk [vmem:[#allocation2 + $0x1e8] sm:$0xff] %vm2406, %v2337
    %2469 = vst.msk [vmem:[#allocation2 + $0x1f0] sm:$0xff] %vm2406, %v2339
    %2470 = vst.msk [vmem:[#allocation2 + $0x1f8] sm:$0xff] %vm2406, %v2341
    %v2471 = vrot.slane %v90, 2
    %v2472 = vrot.slane %v91, 2
    %v2473 = vsel %vm726, %v2471, %v2472
    %v2474 = vrot.slane %v92, 2
    %v2475 = vsel %vm726, %v2472, %v2474
    %v2476 = vrot.slane %v144, 2
    %v2477 = vrot.slane %v145, 2
    %v2478 = vsel %vm726, %v2476, %v2477
    %v2479 = vrot.slane %v146, 2
    %v2480 = vsel %vm726, %v2477, %v2479
    %2481 = vrot.lane.b32.xlu0 %v739, 32
    %v2482 = vpop.permute.xlu0 %2481
    %2483 = vrot.lane.b32.xlu0 %v741, 32
    %v2484 = vpop.permute.xlu0 %2483
    %2485 = vrot.lane.b32.xlu0 %v744, 32
    %v2486 = vpop.permute.xlu0 %2485
    %2487 = vrot.lane.b32.xlu0 %v746, 32
    %v2488 = vpop.permute.xlu0 %2487
    %2489 = vrot.lane.b32.xlu0 %v749, 32
    %v2490 = vpop.permute.xlu0 %2489
    %2491 = vrot.lane.b32.xlu0 %v751, 32
    %v2492 = vpop.permute.xlu0 %2491
    %2493 = vrot.lane.b32.xlu0 %v754, 32
    %v2494 = vpop.permute.xlu0 %2493
    %2495 = vrot.lane.b32.xlu0 %v756, 32
    %v2496 = vpop.permute.xlu0 %2495
    %2497 = vrot.lane.b32.xlu0 %v759, 32
    %v2498 = vpop.permute.xlu0 %2497
    %2499 = vrot.lane.b32.xlu0 %v761, 32
    %v2500 = vpop.permute.xlu0 %2499
    %2501 = vrot.lane.b32.xlu0 %v764, 32
    %v2502 = vpop.permute.xlu0 %2501
    %2503 = vrot.lane.b32.xlu0 %v766, 32
    %v2504 = vpop.permute.xlu0 %2503
    %2505 = vrot.lane.b32.xlu0 %v769, 32
    %v2506 = vpop.permute.xlu0 %2505
    %2507 = vrot.lane.b32.xlu0 %v771, 32
    %v2508 = vpop.permute.xlu0 %2507
    %2509 = vrot.lane.b32.xlu0 %v774, 32
    %v2510 = vpop.permute.xlu0 %2509
    %2511 = vrot.lane.b32.xlu0 %v776, 32
    %v2512 = vpop.permute.xlu0 %2511
    %2513 = vrot.lane.b32.xlu0 %v779, 32
    %v2514 = vpop.permute.xlu0 %2513
    %2515 = vrot.lane.b32.xlu0 %v781, 32
    %v2516 = vpop.permute.xlu0 %2515
    %2517 = vrot.lane.b32.xlu0 %v784, 32
    %v2518 = vpop.permute.xlu0 %2517
    %2519 = vrot.lane.b32.xlu0 %v786, 32
    %v2520 = vpop.permute.xlu0 %2519
    %2521 = vrot.lane.b32.xlu0 %v789, 32
    %v2522 = vpop.permute.xlu0 %2521
    %2523 = vrot.lane.b32.xlu0 %v791, 32
    %v2524 = vpop.permute.xlu0 %2523
    %2525 = vrot.lane.b32.xlu0 %v794, 32
    %v2526 = vpop.permute.xlu0 %2525
    %2527 = vrot.lane.b32.xlu0 %v796, 32
    %v2528 = vpop.permute.xlu0 %2527
    %2529 = vrot.lane.b32.xlu0 %v799, 32
    %v2530 = vpop.permute.xlu0 %2529
    %2531 = vrot.lane.b32.xlu0 %v801, 32
    %v2532 = vpop.permute.xlu0 %2531
    %2533 = vrot.lane.b32.xlu0 %v804, 32
    %v2534 = vpop.permute.xlu0 %2533
    %2535 = vrot.lane.b32.xlu0 %v806, 32
    %v2536 = vpop.permute.xlu0 %2535
    %2537 = vrot.lane.b32.xlu0 %v1676, 32
    %v2538 = vpop.permute.xlu0 %2537
    %2539 = vrot.lane.b32.xlu0 %v1678, 32
    %v2540 = vpop.permute.xlu0 %2539
    %2541 = vrot.lane.b32.xlu0 %v2473, 32
    %v2542 = vpop.permute.xlu0 %2541
    %2543 = vrot.lane.b32.xlu0 %v2475, 32
    %v2544 = vpop.permute.xlu0 %2543
    %2545 = vrot.lane.b32.xlu0 %v819, 32
    %v2546 = vpop.permute.xlu0 %2545
    %2547 = vrot.lane.b32.xlu0 %v821, 32
    %v2548 = vpop.permute.xlu0 %2547
    %2549 = vrot.lane.b32.xlu0 %v824, 32
    %v2550 = vpop.permute.xlu0 %2549
    %2551 = vrot.lane.b32.xlu0 %v826, 32
    %v2552 = vpop.permute.xlu0 %2551
    %2553 = vrot.lane.b32.xlu0 %v829, 32
    %v2554 = vpop.permute.xlu0 %2553
    %2555 = vrot.lane.b32.xlu0 %v831, 32
    %v2556 = vpop.permute.xlu0 %2555
    %2557 = vrot.lane.b32.xlu0 %v834, 32
    %v2558 = vpop.permute.xlu0 %2557
    %2559 = vrot.lane.b32.xlu0 %v836, 32
    %v2560 = vpop.permute.xlu0 %2559
    %2561 = vrot.lane.b32.xlu0 %v839, 32
    %v2562 = vpop.permute.xlu0 %2561
    %2563 = vrot.lane.b32.xlu0 %v841, 32
    %v2564 = vpop.permute.xlu0 %2563
    %2565 = vrot.lane.b32.xlu0 %v844, 32
    %v2566 = vpop.permute.xlu0 %2565
    %2567 = vrot.lane.b32.xlu0 %v846, 32
    %v2568 = vpop.permute.xlu0 %2567
    %2569 = vrot.lane.b32.xlu0 %v849, 32
    %v2570 = vpop.permute.xlu0 %2569
    %2571 = vrot.lane.b32.xlu0 %v851, 32
    %v2572 = vpop.permute.xlu0 %2571
    %2573 = vrot.lane.b32.xlu0 %v854, 32
    %v2574 = vpop.permute.xlu0 %2573
    %2575 = vrot.lane.b32.xlu0 %v856, 32
    %v2576 = vpop.permute.xlu0 %2575
    %2577 = vrot.lane.b32.xlu0 %v859, 32
    %v2578 = vpop.permute.xlu0 %2577
    %2579 = vrot.lane.b32.xlu0 %v861, 32
    %v2580 = vpop.permute.xlu0 %2579
    %2581 = vrot.lane.b32.xlu0 %v864, 32
    %v2582 = vpop.permute.xlu0 %2581
    %2583 = vrot.lane.b32.xlu0 %v866, 32
    %v2584 = vpop.permute.xlu0 %2583
    %2585 = vrot.lane.b32.xlu0 %v869, 32
    %v2586 = vpop.permute.xlu0 %2585
    %2587 = vrot.lane.b32.xlu0 %v871, 32
    %v2588 = vpop.permute.xlu0 %2587
    %2589 = vrot.lane.b32.xlu0 %v874, 32
    %v2590 = vpop.permute.xlu0 %2589
    %2591 = vrot.lane.b32.xlu0 %v876, 32
    %v2592 = vpop.permute.xlu0 %2591
    %2593 = vrot.lane.b32.xlu0 %v879, 32
    %v2594 = vpop.permute.xlu0 %2593
    %2595 = vrot.lane.b32.xlu0 %v881, 32
    %v2596 = vpop.permute.xlu0 %2595
    %2597 = vrot.lane.b32.xlu0 %v884, 32
    %v2598 = vpop.permute.xlu0 %2597
    %2599 = vrot.lane.b32.xlu0 %v886, 32
    %v2600 = vpop.permute.xlu0 %2599
    %2601 = vrot.lane.b32.xlu0 %v1681, 32
    %v2602 = vpop.permute.xlu0 %2601
    %2603 = vrot.lane.b32.xlu0 %v1683, 32
    %v2604 = vpop.permute.xlu0 %2603
    %2605 = vrot.lane.b32.xlu0 %v2478, 32
    %v2606 = vpop.permute.xlu0 %2605
    %2607 = vrot.lane.b32.xlu0 %v2480, 32
    %v2608 = vpop.permute.xlu0 %2607
    %vm2673 = vcmask 294144
    %2674 = vst.msk [vmem:[#allocation2] sm:$0xff] %vm2673, %v2482
    %2675 = vst.msk [vmem:[#allocation2 + $0x8] sm:$0xff] %vm2673, %v2484
    %2676 = vst.msk [vmem:[#allocation2 + $0x10] sm:$0xff] %vm2673, %v2486
    %2677 = vst.msk [vmem:[#allocation2 + $0x18] sm:$0xff] %vm2673, %v2488
    %2678 = vst.msk [vmem:[#allocation2 + $0x20] sm:$0xff] %vm2673, %v2490
    %2679 = vst.msk [vmem:[#allocation2 + $0x28] sm:$0xff] %vm2673, %v2492
    %2680 = vst.msk [vmem:[#allocation2 + $0x30] sm:$0xff] %vm2673, %v2494
    %2681 = vst.msk [vmem:[#allocation2 + $0x38] sm:$0xff] %vm2673, %v2496
    %2682 = vst.msk [vmem:[#allocation2 + $0x40] sm:$0xff] %vm2673, %v2498
    %2683 = vst.msk [vmem:[#allocation2 + $0x48] sm:$0xff] %vm2673, %v2500
    %2684 = vst.msk [vmem:[#allocation2 + $0x50] sm:$0xff] %vm2673, %v2502
    %2685 = vst.msk [vmem:[#allocation2 + $0x58] sm:$0xff] %vm2673, %v2504
    %2686 = vst.msk [vmem:[#allocation2 + $0x60] sm:$0xff] %vm2673, %v2506
    %2687 = vst.msk [vmem:[#allocation2 + $0x68] sm:$0xff] %vm2673, %v2508
    %2688 = vst.msk [vmem:[#allocation2 + $0x70] sm:$0xff] %vm2673, %v2510
    %2689 = vst.msk [vmem:[#allocation2 + $0x78] sm:$0xff] %vm2673, %v2512
    %2690 = vst.msk [vmem:[#allocation2 + $0x80] sm:$0xff] %vm2673, %v2514
    %2691 = vst.msk [vmem:[#allocation2 + $0x88] sm:$0xff] %vm2673, %v2516
    %2692 = vst.msk [vmem:[#allocation2 + $0x90] sm:$0xff] %vm2673, %v2518
    %2693 = vst.msk [vmem:[#allocation2 + $0x98] sm:$0xff] %vm2673, %v2520
    %2694 = vst.msk [vmem:[#allocation2 + $0xa0] sm:$0xff] %vm2673, %v2522
    %2695 = vst.msk [vmem:[#allocation2 + $0xa8] sm:$0xff] %vm2673, %v2524
    %2696 = vst.msk [vmem:[#allocation2 + $0xb0] sm:$0xff] %vm2673, %v2526
    %2697 = vst.msk [vmem:[#allocation2 + $0xb8] sm:$0xff] %vm2673, %v2528
    %2698 = vst.msk [vmem:[#allocation2 + $0xc0] sm:$0xff] %vm2673, %v2530
    %2699 = vst.msk [vmem:[#allocation2 + $0xc8] sm:$0xff] %vm2673, %v2532
    %2700 = vst.msk [vmem:[#allocation2 + $0xd0] sm:$0xff] %vm2673, %v2534
    %2701 = vst.msk [vmem:[#allocation2 + $0xd8] sm:$0xff] %vm2673, %v2536
    %2702 = vst.msk [vmem:[#allocation2 + $0xe0] sm:$0xff] %vm2673, %v2538
    %2703 = vst.msk [vmem:[#allocation2 + $0xe8] sm:$0xff] %vm2673, %v2540
    %2704 = vst.msk [vmem:[#allocation2 + $0xf0] sm:$0xff] %vm2673, %v2542
    %2705 = vst.msk [vmem:[#allocation2 + $0xf8] sm:$0xff] %vm2673, %v2544
    %2706 = vst.msk [vmem:[#allocation2 + $0x100] sm:$0xff] %vm2673, %v2546
    %2707 = vst.msk [vmem:[#allocation2 + $0x108] sm:$0xff] %vm2673, %v2548
    %2708 = vst.msk [vmem:[#allocation2 + $0x110] sm:$0xff] %vm2673, %v2550
    %2709 = vst.msk [vmem:[#allocation2 + $0x118] sm:$0xff] %vm2673, %v2552
    %2710 = vst.msk [vmem:[#allocation2 + $0x120] sm:$0xff] %vm2673, %v2554
    %2711 = vst.msk [vmem:[#allocation2 + $0x128] sm:$0xff] %vm2673, %v2556
    %2712 = vst.msk [vmem:[#allocation2 + $0x130] sm:$0xff] %vm2673, %v2558
    %2713 = vst.msk [vmem:[#allocation2 + $0x138] sm:$0xff] %vm2673, %v2560
    %2714 = vst.msk [vmem:[#allocation2 + $0x140] sm:$0xff] %vm2673, %v2562
    %2715 = vst.msk [vmem:[#allocation2 + $0x148] sm:$0xff] %vm2673, %v2564
    %2716 = vst.msk [vmem:[#allocation2 + $0x150] sm:$0xff] %vm2673, %v2566
    %2717 = vst.msk [vmem:[#allocation2 + $0x158] sm:$0xff] %vm2673, %v2568
    %2718 = vst.msk [vmem:[#allocation2 + $0x160] sm:$0xff] %vm2673, %v2570
    %2719 = vst.msk [vmem:[#allocation2 + $0x168] sm:$0xff] %vm2673, %v2572
    %2720 = vst.msk [vmem:[#allocation2 + $0x170] sm:$0xff] %vm2673, %v2574
    %2721 = vst.msk [vmem:[#allocation2 + $0x178] sm:$0xff] %vm2673, %v2576
    %2722 = vst.msk [vmem:[#allocation2 + $0x180] sm:$0xff] %vm2673, %v2578
    %2723 = vst.msk [vmem:[#allocation2 + $0x188] sm:$0xff] %vm2673, %v2580
    %2724 = vst.msk [vmem:[#allocation2 + $0x190] sm:$0xff] %vm2673, %v2582
    %2725 = vst.msk [vmem:[#allocation2 + $0x198] sm:$0xff] %vm2673, %v2584
    %2726 = vst.msk [vmem:[#allocation2 + $0x1a0] sm:$0xff] %vm2673, %v2586
    %2727 = vst.msk [vmem:[#allocation2 + $0x1a8] sm:$0xff] %vm2673, %v2588
    %2728 = vst.msk [vmem:[#allocation2 + $0x1b0] sm:$0xff] %vm2673, %v2590
    %2729 = vst.msk [vmem:[#allocation2 + $0x1b8] sm:$0xff] %vm2673, %v2592
    %2730 = vst.msk [vmem:[#allocation2 + $0x1c0] sm:$0xff] %vm2673, %v2594
    %2731 = vst.msk [vmem:[#allocation2 + $0x1c8] sm:$0xff] %vm2673, %v2596
    %2732 = vst.msk [vmem:[#allocation2 + $0x1d0] sm:$0xff] %vm2673, %v2598
    %2733 = vst.msk [vmem:[#allocation2 + $0x1d8] sm:$0xff] %vm2673, %v2600
    %2734 = vst.msk [vmem:[#allocation2 + $0x1e0] sm:$0xff] %vm2673, %v2602
    %2735 = vst.msk [vmem:[#allocation2 + $0x1e8] sm:$0xff] %vm2673, %v2604
    %2736 = vst.msk [vmem:[#allocation2 + $0x1f0] sm:$0xff] %vm2673, %v2606
    %2737 = vst.msk [vmem:[#allocation2 + $0x1f8] sm:$0xff] %vm2673, %v2608
    %v2738 = vld [vmem:[#allocation2] sm:$0xff]
    %v2739 = vld [vmem:[#allocation2 + $0x8] sm:$0xff]
    %v2740 = vld [vmem:[#allocation2 + $0x10] sm:$0xff]
    %v2741 = vld [vmem:[#allocation2 + $0x18] sm:$0xff]
    %v2742 = vld [vmem:[#allocation2 + $0x20] sm:$0xff]
    %v2743 = vld [vmem:[#allocation2 + $0x28] sm:$0xff]
    %v2744 = vld [vmem:[#allocation2 + $0x30] sm:$0xff]
    %v2745 = vld [vmem:[#allocation2 + $0x38] sm:$0xff]
    %v2746 = vld [vmem:[#allocation2 + $0x40] sm:$0xff]
    %v2747 = vld [vmem:[#allocation2 + $0x48] sm:$0xff]
    %v2748 = vld [vmem:[#allocation2 + $0x50] sm:$0xff]
    %v2749 = vld [vmem:[#allocation2 + $0x58] sm:$0xff]
    %v2750 = vld [vmem:[#allocation2 + $0x60] sm:$0xff]
    %v2751 = vld [vmem:[#allocation2 + $0x68] sm:$0xff]
    %v2752 = vld [vmem:[#allocation2 + $0x70] sm:$0xff]
    %v2753 = vld [vmem:[#allocation2 + $0x78] sm:$0xff]
    %v2754 = vld [vmem:[#allocation2 + $0x80] sm:$0xff]
    %v2755 = vld [vmem:[#allocation2 + $0x88] sm:$0xff]
    %v2756 = vld [vmem:[#allocation2 + $0x90] sm:$0xff]
    %v2757 = vld [vmem:[#allocation2 + $0x98] sm:$0xff]
    %v2758 = vld [vmem:[#allocation2 + $0xa0] sm:$0xff]
    %v2759 = vld [vmem:[#allocation2 + $0xa8] sm:$0xff]
    %v2760 = vld [vmem:[#allocation2 + $0xb0] sm:$0xff]
    %v2761 = vld [vmem:[#allocation2 + $0xb8] sm:$0xff]
    %v2762 = vld [vmem:[#allocation2 + $0xc0] sm:$0xff]
    %v2763 = vld [vmem:[#allocation2 + $0xc8] sm:$0xff]
    %v2764 = vld [vmem:[#allocation2 + $0xd0] sm:$0xff]
    %v2765 = vld [vmem:[#allocation2 + $0xd8] sm:$0xff]
    %v2766 = vld [vmem:[#allocation2 + $0xe0] sm:$0xff]
    %v2767 = vld [vmem:[#allocation2 + $0xe8] sm:$0xff]
    %v2768 = vld [vmem:[#allocation2 + $0xf0] sm:$0xff]
    %v2769 = vld [vmem:[#allocation2 + $0xf8] sm:$0xff]
    %v2770 = vld [vmem:[#allocation2 + $0x100] sm:$0xff]
    %v2771 = vld [vmem:[#allocation2 + $0x108] sm:$0xff]
    %v2772 = vld [vmem:[#allocation2 + $0x110] sm:$0xff]
    %v2773 = vld [vmem:[#allocation2 + $0x118] sm:$0xff]
    %v2774 = vld [vmem:[#allocation2 + $0x120] sm:$0xff]
    %v2775 = vld [vmem:[#allocation2 + $0x128] sm:$0xff]
    %v2776 = vld [vmem:[#allocation2 + $0x130] sm:$0xff]
    %v2777 = vld [vmem:[#allocation2 + $0x138] sm:$0xff]
    %v2778 = vld [vmem:[#allocation2 + $0x140] sm:$0xff]
    %v2779 = vld [vmem:[#allocation2 + $0x148] sm:$0xff]
    %v2780 = vld [vmem:[#allocation2 + $0x150] sm:$0xff]
    %v2781 = vld [vmem:[#allocation2 + $0x158] sm:$0xff]
    %v2782 = vld [vmem:[#allocation2 + $0x160] sm:$0xff]
    %v2783 = vld [vmem:[#allocation2 + $0x168] sm:$0xff]
    %v2784 = vld [vmem:[#allocation2 + $0x170] sm:$0xff]
    %v2785 = vld [vmem:[#allocation2 + $0x178] sm:$0xff]
    %v2786 = vld [vmem:[#allocation2 + $0x180] sm:$0xff]
    %v2787 = vld [vmem:[#allocation2 + $0x188] sm:$0xff]
    %v2788 = vld [vmem:[#allocation2 + $0x190] sm:$0xff]
    %v2789 = vld [vmem:[#allocation2 + $0x198] sm:$0xff]
    %v2790 = vld [vmem:[#allocation2 + $0x1a0] sm:$0xff]
    %v2791 = vld [vmem:[#allocation2 + $0x1a8] sm:$0xff]
    %v2792 = vld [vmem:[#allocation2 + $0x1b0] sm:$0xff]
    %v2793 = vld [vmem:[#allocation2 + $0x1b8] sm:$0xff]
    %v2794 = vld [vmem:[#allocation2 + $0x1c0] sm:$0xff]
    %v2795 = vld [vmem:[#allocation2 + $0x1c8] sm:$0xff]
    %v2796 = vld [vmem:[#allocation2 + $0x1d0] sm:$0xff]
    %v2797 = vld [vmem:[#allocation2 + $0x1d8] sm:$0xff]
    %v2798 = vld [vmem:[#allocation2 + $0x1e0] sm:$0xff]
    %v2799 = vld [vmem:[#allocation2 + $0x1e8] sm:$0xff]
    %v2800 = vld [vmem:[#allocation2 + $0x1f0] sm:$0xff]
    %v2801 = vld [vmem:[#allocation2 + $0x1f8] sm:$0xff]
    %v2802 = vld [vmem:[%s2] sm:$0xff]
    %v2803 = vld [vmem:[%s2 + $0x8] sm:$0xff]
    %v2804 = vld [vmem:[%s2 + $0x10] sm:$0xff]
    %v2805 = vld [vmem:[%s2 + $0x18] sm:$0xff]
    %v2806 = vld [vmem:[%s2 + $0x20] sm:$0xf]
    %vm2807 = vcmask 293888
    %v2809 = vsel %vm2807, %v2738, 0
    %v2812 = vsel %vm2807, %v2739, 0
    %v2815 = vsel %vm2807, %v2740, 0
    %v2818 = vsel %vm2807, %v2741, 0
    %v2821 = vsel %vm2807, %v2742, 0
    %v2824 = vsel %vm2807, %v2743, 0
    %v2827 = vsel %vm2807, %v2744, 0
    %v2830 = vsel %vm2807, %v2745, 0
    %v2833 = vsel %vm2807, %v2746, 0
    %v2836 = vsel %vm2807, %v2747, 0
    %v2839 = vsel %vm2807, %v2748, 0
    %v2842 = vsel %vm2807, %v2749, 0
    %v2845 = vsel %vm2807, %v2750, 0
    %v2848 = vsel %vm2807, %v2751, 0
    %v2851 = vsel %vm2807, %v2752, 0
    %v2854 = vsel %vm2807, %v2753, 0
    %v2857 = vsel %vm2807, %v2754, 0
    %v2860 = vsel %vm2807, %v2755, 0
    %v2863 = vsel %vm2807, %v2756, 0
    %v2866 = vsel %vm2807, %v2757, 0
    %v2869 = vsel %vm2807, %v2758, 0
    %v2872 = vsel %vm2807, %v2759, 0
    %v2875 = vsel %vm2807, %v2760, 0
    %v2878 = vsel %vm2807, %v2761, 0
    %v2881 = vsel %vm2807, %v2762, 0
    %v2884 = vsel %vm2807, %v2763, 0
    %v2887 = vsel %vm2807, %v2764, 0
    %v2890 = vsel %vm2807, %v2765, 0
    %v2893 = vsel %vm2807, %v2766, 0
    %v2896 = vsel %vm2807, %v2767, 0
    %v2899 = vsel %vm2807, %v2768, 0
    %v2902 = vsel %vm2807, %v2769, 0
    %v2905 = vsel %vm2807, %v2770, 0
    %v2908 = vsel %vm2807, %v2771, 0
    %v2911 = vsel %vm2807, %v2772, 0
    %v2914 = vsel %vm2807, %v2773, 0
    %v2917 = vsel %vm2807, %v2774, 0
    %v2920 = vsel %vm2807, %v2775, 0
    %v2923 = vsel %vm2807, %v2776, 0
    %v2926 = vsel %vm2807, %v2777, 0
    %v2929 = vsel %vm2807, %v2778, 0
    %v2932 = vsel %vm2807, %v2779, 0
    %v2935 = vsel %vm2807, %v2780, 0
    %v2938 = vsel %vm2807, %v2781, 0
    %v2941 = vsel %vm2807, %v2782, 0
    %v2944 = vsel %vm2807, %v2783, 0
    %v2947 = vsel %vm2807, %v2784, 0
    %v2950 = vsel %vm2807, %v2785, 0
    %v2953 = vsel %vm2807, %v2786, 0
    %v2956 = vsel %vm2807, %v2787, 0
    %v2959 = vsel %vm2807, %v2788, 0
    %v2962 = vsel %vm2807, %v2789, 0
    %v2965 = vsel %vm2807, %v2790, 0
    %v2968 = vsel %vm2807, %v2791, 0
    %v2971 = vsel %vm2807, %v2792, 0
    %v2974 = vsel %vm2807, %v2793, 0
    %v2977 = vsel %vm2807, %v2794, 0
    %v2980 = vsel %vm2807, %v2795, 0
    %v2983 = vsel %vm2807, %v2796, 0
    %v2986 = vsel %vm2807, %v2797, 0
    %v2989 = vsel %vm2807, %v2798, 0
    %v2992 = vsel %vm2807, %v2799, 0
    %v2995 = vsel %vm2807, %v2800, 0
    %v2998 = vsel %vm2807, %v2801, 0
    %vm3000 = vcmask 1043456
    %v3002 = vsel %vm3000, %v2806, 0
    %3004 = vmatpush.msra.mxu0 0.0
    %3005 = vmatpush.msra.mxu0 0.0
    %3006 = vmatpush.msra.mxu0 0.0
    %3007 = vmatpush.msra.mxu0 0.0
    %3008 = vmatpush.msra.mxu0 0.0
    %3009 = vmatpush.msra.mxu0 0.0
    %3010 = vmatpush.msra.mxu0 0.0
    %3011 = vmatpush.msra.mxu0 0.0
    %3012 = vmatpush.msra.mxu0 0.0
    %3013 = vmatpush.msra.mxu0 0.0
    %3014 = vmatpush.msra.mxu0 0.0
    %3015 = vmatpush.msra.mxu0 %v3002
    %3016 = vmatpush.msra.mxu0 %v2805
    %3017 = vmatpush.msra.mxu0 %v2804
    %3018 = vmatpush.msra.mxu0 %v2803
    %3019 = vmatpush.msra.mxu0 %v2802
    %3020 = vmatmul.f32.gmra.mxu0 %v2809
    %v3021 = vpop.f32.mrf.mxu0
    %v3022 = vadd.f32 0.0, %v3021
    %3023 = vmatmul.f32.gmra.mxu0 %v2812
    %v3024 = vpop.f32.mrf.mxu0
    %v3025 = vadd.f32 0.0, %v3024
    %3026 = vmatmul.f32.gmra.mxu0 %v2815
    %v3027 = vpop.f32.mrf.mxu0
    %v3028 = vadd.f32 0.0, %v3027
    %3029 = vmatmul.f32.gmra.mxu0 %v2818
    %v3030 = vpop.f32.mrf.mxu0
    %v3031 = vadd.f32 0.0, %v3030
    %3032 = vmatmul.f32.gmra.mxu0 %v2821
    %v3033 = vpop.f32.mrf.mxu0
    %v3034 = vadd.f32 0.0, %v3033
    %3035 = vmatmul.f32.gmra.mxu0 %v2824
    %v3036 = vpop.f32.mrf.mxu0
    %v3037 = vadd.f32 0.0, %v3036
    %3038 = vmatmul.f32.gmra.mxu0 %v2827
    %v3039 = vpop.f32.mrf.mxu0
    %v3040 = vadd.f32 0.0, %v3039
    %3041 = vmatmul.f32.gmra.mxu0 %v2830
    %v3042 = vpop.f32.mrf.mxu0
    %v3043 = vadd.f32 0.0, %v3042
    %3044 = vmatmul.f32.gmra.mxu0 %v2833
    %v3045 = vpop.f32.mrf.mxu0
    %v3046 = vadd.f32 0.0, %v3045
    %3047 = vmatmul.f32.gmra.mxu0 %v2836
    %v3048 = vpop.f32.mrf.mxu0
    %v3049 = vadd.f32 0.0, %v3048
    %3050 = vmatmul.f32.gmra.mxu0 %v2839
    %v3051 = vpop.f32.mrf.mxu0
    %v3052 = vadd.f32 0.0, %v3051
    %3053 = vmatmul.f32.gmra.mxu0 %v2842
    %v3054 = vpop.f32.mrf.mxu0
    %v3055 = vadd.f32 0.0, %v3054
    %3056 = vmatmul.f32.gmra.mxu0 %v2845
    %v3057 = vpop.f32.mrf.mxu0
    %v3058 = vadd.f32 0.0, %v3057
    %3059 = vmatmul.f32.gmra.mxu0 %v2848
    %v3060 = vpop.f32.mrf.mxu0
    %v3061 = vadd.f32 0.0, %v3060
    %3062 = vmatmul.f32.gmra.mxu0 %v2851
    %v3063 = vpop.f32.mrf.mxu0
    %v3064 = vadd.f32 0.0, %v3063
    %3065 = vmatmul.f32.gmra.mxu0 %v2854
    %v3066 = vpop.f32.mrf.mxu0
    %v3067 = vadd.f32 0.0, %v3066
    %3068 = vmatmul.f32.gmra.mxu0 %v2857
    %v3069 = vpop.f32.mrf.mxu0
    %v3070 = vadd.f32 0.0, %v3069
    %3071 = vmatmul.f32.gmra.mxu0 %v2860
    %v3072 = vpop.f32.mrf.mxu0
    %v3073 = vadd.f32 0.0, %v3072
    %3074 = vmatmul.f32.gmra.mxu0 %v2863
    %v3075 = vpop.f32.mrf.mxu0
    %v3076 = vadd.f32 0.0, %v3075
    %3077 = vmatmul.f32.gmra.mxu0 %v2866
    %v3078 = vpop.f32.mrf.mxu0
    %v3079 = vadd.f32 0.0, %v3078
    %3080 = vmatmul.f32.gmra.mxu0 %v2869
    %v3081 = vpop.f32.mrf.mxu0
    %v3082 = vadd.f32 0.0, %v3081
    %3083 = vmatmul.f32.gmra.mxu0 %v2872
    %v3084 = vpop.f32.mrf.mxu0
    %v3085 = vadd.f32 0.0, %v3084
    %3086 = vmatmul.f32.gmra.mxu0 %v2875
    %v3087 = vpop.f32.mrf.mxu0
    %v3088 = vadd.f32 0.0, %v3087
    %3089 = vmatmul.f32.gmra.mxu0 %v2878
    %v3090 = vpop.f32.mrf.mxu0
    %v3091 = vadd.f32 0.0, %v3090
    %3092 = vmatmul.f32.gmra.mxu0 %v2881
    %v3093 = vpop.f32.mrf.mxu0
    %v3094 = vadd.f32 0.0, %v3093
    %3095 = vmatmul.f32.gmra.mxu0 %v2884
    %v3096 = vpop.f32.mrf.mxu0
    %v3097 = vadd.f32 0.0, %v3096
    %3098 = vmatmul.f32.gmra.mxu0 %v2887
    %v3099 = vpop.f32.mrf.mxu0
    %v3100 = vadd.f32 0.0, %v3099
    %3101 = vmatmul.f32.gmra.mxu0 %v2890
    %v3102 = vpop.f32.mrf.mxu0
    %v3103 = vadd.f32 0.0, %v3102
    %3104 = vmatmul.f32.gmra.mxu0 %v2893
    %v3105 = vpop.f32.mrf.mxu0
    %v3106 = vadd.f32 0.0, %v3105
    %3107 = vmatmul.f32.gmra.mxu0 %v2896
    %v3108 = vpop.f32.mrf.mxu0
    %v3109 = vadd.f32 0.0, %v3108
    %3110 = vmatmul.f32.gmra.mxu0 %v2899
    %v3111 = vpop.f32.mrf.mxu0
    %v3112 = vadd.f32 0.0, %v3111
    %3113 = vmatmul.f32.gmra.mxu0 %v2902
    %v3114 = vpop.f32.mrf.mxu0
    %v3115 = vadd.f32 0.0, %v3114
    %3116 = vmatmul.f32.gmra.mxu0 %v2905
    %v3117 = vpop.f32.mrf.mxu0
    %v3118 = vadd.f32 0.0, %v3117
    %3119 = vmatmul.f32.gmra.mxu0 %v2908
    %v3120 = vpop.f32.mrf.mxu0
    %v3121 = vadd.f32 0.0, %v3120
    %3122 = vmatmul.f32.gmra.mxu0 %v2911
    %v3123 = vpop.f32.mrf.mxu0
    %v3124 = vadd.f32 0.0, %v3123
    %3125 = vmatmul.f32.gmra.mxu0 %v2914
    %v3126 = vpop.f32.mrf.mxu0
    %v3127 = vadd.f32 0.0, %v3126
    %3128 = vmatmul.f32.gmra.mxu0 %v2917
    %v3129 = vpop.f32.mrf.mxu0
    %v3130 = vadd.f32 0.0, %v3129
    %3131 = vmatmul.f32.gmra.mxu0 %v2920
    %v3132 = vpop.f32.mrf.mxu0
    %v3133 = vadd.f32 0.0, %v3132
    %3134 = vmatmul.f32.gmra.mxu0 %v2923
    %v3135 = vpop.f32.mrf.mxu0
    %v3136 = vadd.f32 0.0, %v3135
    %3137 = vmatmul.f32.gmra.mxu0 %v2926
    %v3138 = vpop.f32.mrf.mxu0
    %v3139 = vadd.f32 0.0, %v3138
    %3140 = vmatmul.f32.gmra.mxu0 %v2929
    %v3141 = vpop.f32.mrf.mxu0
    %v3142 = vadd.f32 0.0, %v3141
    %3143 = vmatmul.f32.gmra.mxu0 %v2932
    %v3144 = vpop.f32.mrf.mxu0
    %v3145 = vadd.f32 0.0, %v3144
    %3146 = vmatmul.f32.gmra.mxu0 %v2935
    %v3147 = vpop.f32.mrf.mxu0
    %v3148 = vadd.f32 0.0, %v3147
    %3149 = vmatmul.f32.gmra.mxu0 %v2938
    %v3150 = vpop.f32.mrf.mxu0
    %v3151 = vadd.f32 0.0, %v3150
    %3152 = vmatmul.f32.gmra.mxu0 %v2941
    %v3153 = vpop.f32.mrf.mxu0
    %v3154 = vadd.f32 0.0, %v3153
    %3155 = vmatmul.f32.gmra.mxu0 %v2944
    %v3156 = vpop.f32.mrf.mxu0
    %v3157 = vadd.f32 0.0, %v3156
    %3158 = vmatmul.f32.gmra.mxu0 %v2947
    %v3159 = vpop.f32.mrf.mxu0
    %v3160 = vadd.f32 0.0, %v3159
    %3161 = vmatmul.f32.gmra.mxu0 %v2950
    %v3162 = vpop.f32.mrf.mxu0
    %v3163 = vadd.f32 0.0, %v3162
    %3164 = vmatmul.f32.gmra.mxu0 %v2953
    %v3165 = vpop.f32.mrf.mxu0
    %v3166 = vadd.f32 0.0, %v3165
    %3167 = vmatmul.f32.gmra.mxu0 %v2956
    %v3168 = vpop.f32.mrf.mxu0
    %v3169 = vadd.f32 0.0, %v3168
    %3170 = vmatmul.f32.gmra.mxu0 %v2959
    %v3171 = vpop.f32.mrf.mxu0
    %v3172 = vadd.f32 0.0, %v3171
    %3173 = vmatmul.f32.gmra.mxu0 %v2962
    %v3174 = vpop.f32.mrf.mxu0
    %v3175 = vadd.f32 0.0, %v3174
    %3176 = vmatmul.f32.gmra.mxu0 %v2965
    %v3177 = vpop.f32.mrf.mxu0
    %v3178 = vadd.f32 0.0, %v3177
    %3179 = vmatmul.f32.gmra.mxu0 %v2968
    %v3180 = vpop.f32.mrf.mxu0
    %v3181 = vadd.f32 0.0, %v3180
    %3182 = vmatmul.f32.gmra.mxu0 %v2971
    %v3183 = vpop.f32.mrf.mxu0
    %v3184 = vadd.f32 0.0, %v3183
    %3185 = vmatmul.f32.gmra.mxu0 %v2974
    %v3186 = vpop.f32.mrf.mxu0
    %v3187 = vadd.f32 0.0, %v3186
    %3188 = vmatmul.f32.gmra.mxu0 %v2977
    %v3189 = vpop.f32.mrf.mxu0
    %v3190 = vadd.f32 0.0, %v3189
    %3191 = vmatmul.f32.gmra.mxu0 %v2980
    %v3192 = vpop.f32.mrf.mxu0
    %v3193 = vadd.f32 0.0, %v3192
    %3194 = vmatmul.f32.gmra.mxu0 %v2983
    %v3195 = vpop.f32.mrf.mxu0
    %v3196 = vadd.f32 0.0, %v3195
    %3197 = vmatmul.f32.gmra.mxu0 %v2986
    %v3198 = vpop.f32.mrf.mxu0
    %v3199 = vadd.f32 0.0, %v3198
    %3200 = vmatmul.f32.gmra.mxu0 %v2989
    %v3201 = vpop.f32.mrf.mxu0
    %v3202 = vadd.f32 0.0, %v3201
    %3203 = vmatmul.f32.gmra.mxu0 %v2992
    %v3204 = vpop.f32.mrf.mxu0
    %v3205 = vadd.f32 0.0, %v3204
    %3206 = vmatmul.f32.gmra.mxu0 %v2995
    %v3207 = vpop.f32.mrf.mxu0
    %v3208 = vadd.f32 0.0, %v3207
    %3209 = vmatmul.f32.gmra.mxu0 %v2998
    %v3210 = vpop.f32.mrf.mxu0
    %v3211 = vadd.f32 0.0, %v3210
    %3212 = vdwg.mxu0
    %v3213 = vld [vmem:[%s3] sm:$0x1]
    %v3214 = vld [vmem:[%s4] sm:$0x1]
    %vm3215 = vcmask 195584
    %v3216 = vsel %vm3215, %v3022, 0.0
    %v3217 = vsel %vm3215, %v3025, 0.0
    %v3218 = vadd.f32 %v3216, %v3217
    %v3219 = vsel %vm3215, %v3028, 0.0
    %v3220 = vadd.f32 %v3218, %v3219
    %v3221 = vsel %vm3215, %v3031, 0.0
    %v3222 = vadd.f32 %v3220, %v3221
    %v3223 = vsel %vm3215, %v3034, 0.0
    %v3224 = vadd.f32 %v3222, %v3223
    %v3225 = vsel %vm3215, %v3037, 0.0
    %v3226 = vadd.f32 %v3224, %v3225
    %v3227 = vsel %vm3215, %v3040, 0.0
    %v3228 = vadd.f32 %v3226, %v3227
    %v3229 = vsel %vm3215, %v3043, 0.0
    %v3230 = vadd.f32 %v3228, %v3229
    %v3231 = vsel %vm3215, %v3046, 0.0
    %v3232 = vadd.f32 %v3230, %v3231
    %v3233 = vsel %vm3215, %v3049, 0.0
    %v3234 = vadd.f32 %v3232, %v3233
    %v3235 = vsel %vm3215, %v3052, 0.0
    %v3236 = vadd.f32 %v3234, %v3235
    %v3237 = vsel %vm3215, %v3055, 0.0
    %v3238 = vadd.f32 %v3236, %v3237
    %v3239 = vsel %vm3215, %v3058, 0.0
    %v3240 = vadd.f32 %v3238, %v3239
    %v3241 = vsel %vm3215, %v3061, 0.0
    %v3242 = vadd.f32 %v3240, %v3241
    %v3243 = vsel %vm3215, %v3064, 0.0
    %v3244 = vadd.f32 %v3242, %v3243
    %v3245 = vsel %vm3215, %v3067, 0.0
    %v3246 = vadd.f32 %v3244, %v3245
    %v3247 = vsel %vm3215, %v3070, 0.0
    %v3248 = vadd.f32 %v3246, %v3247
    %v3249 = vsel %vm3215, %v3073, 0.0
    %v3250 = vadd.f32 %v3248, %v3249
    %v3251 = vsel %vm3215, %v3076, 0.0
    %v3252 = vadd.f32 %v3250, %v3251
    %v3253 = vsel %vm3215, %v3079, 0.0
    %v3254 = vadd.f32 %v3252, %v3253
    %v3255 = vsel %vm3215, %v3082, 0.0
    %v3256 = vadd.f32 %v3254, %v3255
    %v3257 = vsel %vm3215, %v3085, 0.0
    %v3258 = vadd.f32 %v3256, %v3257
    %v3259 = vsel %vm3215, %v3088, 0.0
    %v3260 = vadd.f32 %v3258, %v3259
    %v3261 = vsel %vm3215, %v3091, 0.0
    %v3262 = vadd.f32 %v3260, %v3261
    %v3263 = vsel %vm3215, %v3094, 0.0
    %v3264 = vadd.f32 %v3262, %v3263
    %v3265 = vsel %vm3215, %v3097, 0.0
    %v3266 = vadd.f32 %v3264, %v3265
    %v3267 = vsel %vm3215, %v3100, 0.0
    %v3268 = vadd.f32 %v3266, %v3267
    %v3269 = vsel %vm3215, %v3103, 0.0
    %v3270 = vadd.f32 %v3268, %v3269
    %v3271 = vsel %vm3215, %v3106, 0.0
    %v3272 = vadd.f32 %v3270, %v3271
    %v3273 = vsel %vm3215, %v3109, 0.0
    %v3274 = vadd.f32 %v3272, %v3273
    %v3275 = vsel %vm3215, %v3112, 0.0
    %v3276 = vadd.f32 %v3274, %v3275
    %v3277 = vsel %vm3215, %v3115, 0.0
    %v3278 = vadd.f32 %v3276, %v3277
    %v3279 = vsel %vm3215, %v3118, 0.0
    %v3280 = vadd.f32 %v3278, %v3279
    %v3281 = vsel %vm3215, %v3121, 0.0
    %v3282 = vadd.f32 %v3280, %v3281
    %v3283 = vsel %vm3215, %v3124, 0.0
    %v3284 = vadd.f32 %v3282, %v3283
    %v3285 = vsel %vm3215, %v3127, 0.0
    %v3286 = vadd.f32 %v3284, %v3285
    %v3287 = vsel %vm3215, %v3130, 0.0
    %v3288 = vadd.f32 %v3286, %v3287
    %v3289 = vsel %vm3215, %v3133, 0.0
    %v3290 = vadd.f32 %v3288, %v3289
    %v3291 = vsel %vm3215, %v3136, 0.0
    %v3292 = vadd.f32 %v3290, %v3291
    %v3293 = vsel %vm3215, %v3139, 0.0
    %v3294 = vadd.f32 %v3292, %v3293
    %v3295 = vsel %vm3215, %v3142, 0.0
    %v3296 = vadd.f32 %v3294, %v3295
    %v3297 = vsel %vm3215, %v3145, 0.0
    %v3298 = vadd.f32 %v3296, %v3297
    %v3299 = vsel %vm3215, %v3148, 0.0
    %v3300 = vadd.f32 %v3298, %v3299
    %v3301 = vsel %vm3215, %v3151, 0.0
    %v3302 = vadd.f32 %v3300, %v3301
    %v3303 = vsel %vm3215, %v3154, 0.0
    %v3304 = vadd.f32 %v3302, %v3303
    %v3305 = vsel %vm3215, %v3157, 0.0
    %v3306 = vadd.f32 %v3304, %v3305
    %v3307 = vsel %vm3215, %v3160, 0.0
    %v3308 = vadd.f32 %v3306, %v3307
    %v3309 = vsel %vm3215, %v3163, 0.0
    %v3310 = vadd.f32 %v3308, %v3309
    %v3311 = vsel %vm3215, %v3166, 0.0
    %v3312 = vadd.f32 %v3310, %v3311
    %v3313 = vsel %vm3215, %v3169, 0.0
    %v3314 = vadd.f32 %v3312, %v3313
    %v3315 = vsel %vm3215, %v3172, 0.0
    %v3316 = vadd.f32 %v3314, %v3315
    %v3317 = vsel %vm3215, %v3175, 0.0
    %v3318 = vadd.f32 %v3316, %v3317
    %v3319 = vsel %vm3215, %v3178, 0.0
    %v3320 = vadd.f32 %v3318, %v3319
    %v3321 = vsel %vm3215, %v3181, 0.0
    %v3322 = vadd.f32 %v3320, %v3321
    %v3323 = vsel %vm3215, %v3184, 0.0
    %v3324 = vadd.f32 %v3322, %v3323
    %v3325 = vsel %vm3215, %v3187, 0.0
    %v3326 = vadd.f32 %v3324, %v3325
    %v3327 = vsel %vm3215, %v3190, 0.0
    %v3328 = vadd.f32 %v3326, %v3327
    %v3329 = vsel %vm3215, %v3193, 0.0
    %v3330 = vadd.f32 %v3328, %v3329
    %v3331 = vsel %vm3215, %v3196, 0.0
    %v3332 = vadd.f32 %v3330, %v3331
    %v3333 = vsel %vm3215, %v3199, 0.0
    %v3334 = vadd.f32 %v3332, %v3333
    %v3335 = vsel %vm3215, %v3202, 0.0
    %v3336 = vadd.f32 %v3334, %v3335
    %v3337 = vsel %vm3215, %v3205, 0.0
    %v3338 = vadd.f32 %v3336, %v3337
    %v3339 = vsel %vm3215, %v3208, 0.0
    %v3340 = vadd.f32 %v3338, %v3339
    %v3341 = vsel %vm3215, %v3211, 0.0
    %v3342 = vadd.f32 %v3340, %v3341
    %v3343 = vrot.slane %v3342, 4
    %v3344 = vadd.f32 %v3342, %v3343
    %v3345 = vrot.slane %v3344, 2
    %v3346 = vadd.f32 %v3344, %v3345
    %v3347 = vrot.slane %v3346, 1
    %v3348 = vadd.f32 %v3346, %v3347
    %v3349 = vmul.f32 %v3022, %v3022
    %v3350 = vmul.f32 %v3025, %v3025
    %v3351 = vmul.f32 %v3028, %v3028
    %v3352 = vmul.f32 %v3031, %v3031
    %v3353 = vmul.f32 %v3034, %v3034
    %v3354 = vmul.f32 %v3037, %v3037
    %v3355 = vmul.f32 %v3040, %v3040
    %v3356 = vmul.f32 %v3043, %v3043
    %v3357 = vmul.f32 %v3046, %v3046
    %v3358 = vmul.f32 %v3049, %v3049
    %v3359 = vmul.f32 %v3052, %v3052
    %v3360 = vmul.f32 %v3055, %v3055
    %v3361 = vmul.f32 %v3058, %v3058
    %v3362 = vmul.f32 %v3061, %v3061
    %v3363 = vmul.f32 %v3064, %v3064
    %v3364 = vmul.f32 %v3067, %v3067
    %v3365 = vmul.f32 %v3070, %v3070
    %v3366 = vmul.f32 %v3073, %v3073
    %v3367 = vmul.f32 %v3076, %v3076
    %v3368 = vmul.f32 %v3079, %v3079
    %v3369 = vmul.f32 %v3082, %v3082
    %v3370 = vmul.f32 %v3085, %v3085
    %v3371 = vmul.f32 %v3088, %v3088
    %v3372 = vmul.f32 %v3091, %v3091
    %v3373 = vmul.f32 %v3094, %v3094
    %v3374 = vmul.f32 %v3097, %v3097
    %v3375 = vmul.f32 %v3100, %v3100
    %v3376 = vmul.f32 %v3103, %v3103
    %v3377 = vmul.f32 %v3106, %v3106
    %v3378 = vmul.f32 %v3109, %v3109
    %v3379 = vmul.f32 %v3112, %v3112
    %v3380 = vmul.f32 %v3115, %v3115
    %v3381 = vmul.f32 %v3118, %v3118
    %v3382 = vmul.f32 %v3121, %v3121
    %v3383 = vmul.f32 %v3124, %v3124
    %v3384 = vmul.f32 %v3127, %v3127
    %v3385 = vmul.f32 %v3130, %v3130
    %v3386 = vmul.f32 %v3133, %v3133
    %v3387 = vmul.f32 %v3136, %v3136
    %v3388 = vmul.f32 %v3139, %v3139
    %v3389 = vmul.f32 %v3142, %v3142
    %v3390 = vmul.f32 %v3145, %v3145
    %v3391 = vmul.f32 %v3148, %v3148
    %v3392 = vmul.f32 %v3151, %v3151
    %v3393 = vmul.f32 %v3154, %v3154
    %v3394 = vmul.f32 %v3157, %v3157
    %v3395 = vmul.f32 %v3160, %v3160
    %v3396 = vmul.f32 %v3163, %v3163
    %v3397 = vmul.f32 %v3166, %v3166
    %v3398 = vmul.f32 %v3169, %v3169
    %v3399 = vmul.f32 %v3172, %v3172
    %v3400 = vmul.f32 %v3175, %v3175
    %v3401 = vmul.f32 %v3178, %v3178
    %v3402 = vmul.f32 %v3181, %v3181
    %v3403 = vmul.f32 %v3184, %v3184
    %v3404 = vmul.f32 %v3187, %v3187
    %v3405 = vmul.f32 %v3190, %v3190
    %v3406 = vmul.f32 %v3193, %v3193
    %v3407 = vmul.f32 %v3196, %v3196
    %v3408 = vmul.f32 %v3199, %v3199
    %v3409 = vmul.f32 %v3202, %v3202
    %v3410 = vmul.f32 %v3205, %v3205
    %v3411 = vmul.f32 %v3208, %v3208
    %v3412 = vmul.f32 %v3211, %v3211
    %v3413 = vsel %vm3215, %v3349, 0.0
    %v3414 = vsel %vm3215, %v3350, 0.0
    %v3415 = vadd.f32 %v3413, %v3414
    %v3416 = vsel %vm3215, %v3351, 0.0
    %v3417 = vadd.f32 %v3415, %v3416
    %v3418 = vsel %vm3215, %v3352, 0.0
    %v3419 = vadd.f32 %v3417, %v3418
    %v3420 = vsel %vm3215, %v3353, 0.0
    %v3421 = vadd.f32 %v3419, %v3420
    %v3422 = vsel %vm3215, %v3354, 0.0
    %v3423 = vadd.f32 %v3421, %v3422
    %v3424 = vsel %vm3215, %v3355, 0.0
    %v3425 = vadd.f32 %v3423, %v3424
    %v3426 = vsel %vm3215, %v3356, 0.0
    %v3427 = vadd.f32 %v3425, %v3426
    %v3428 = vsel %vm3215, %v3357, 0.0
    %v3429 = vadd.f32 %v3427, %v3428
    %v3430 = vsel %vm3215, %v3358, 0.0
    %v3431 = vadd.f32 %v3429, %v3430
    %v3432 = vsel %vm3215, %v3359, 0.0
    %v3433 = vadd.f32 %v3431, %v3432
    %v3434 = vsel %vm3215, %v3360, 0.0
    %v3435 = vadd.f32 %v3433, %v3434
    %v3436 = vsel %vm3215, %v3361, 0.0
    %v3437 = vadd.f32 %v3435, %v3436
    %v3438 = vsel %vm3215, %v3362, 0.0
    %v3439 = vadd.f32 %v3437, %v3438
    %v3440 = vsel %vm3215, %v3363, 0.0
    %v3441 = vadd.f32 %v3439, %v3440
    %v3442 = vsel %vm3215, %v3364, 0.0
    %v3443 = vadd.f32 %v3441, %v3442
    %v3444 = vsel %vm3215, %v3365, 0.0
    %v3445 = vadd.f32 %v3443, %v3444
    %v3446 = vsel %vm3215, %v3366, 0.0
    %v3447 = vadd.f32 %v3445, %v3446
    %v3448 = vsel %vm3215, %v3367, 0.0
    %v3449 = vadd.f32 %v3447, %v3448
    %v3450 = vsel %vm3215, %v3368, 0.0
    %v3451 = vadd.f32 %v3449, %v3450
    %v3452 = vsel %vm3215, %v3369, 0.0
    %v3453 = vadd.f32 %v3451, %v3452
    %v3454 = vsel %vm3215, %v3370, 0.0
    %v3455 = vadd.f32 %v3453, %v3454
    %v3456 = vsel %vm3215, %v3371, 0.0
    %v3457 = vadd.f32 %v3455, %v3456
    %v3458 = vsel %vm3215, %v3372, 0.0
    %v3459 = vadd.f32 %v3457, %v3458
    %v3460 = vsel %vm3215, %v3373, 0.0
    %v3461 = vadd.f32 %v3459, %v3460
    %v3462 = vsel %vm3215, %v3374, 0.0
    %v3463 = vadd.f32 %v3461, %v3462
    %v3464 = vsel %vm3215, %v3375, 0.0
    %v3465 = vadd.f32 %v3463, %v3464
    %v3466 = vsel %vm3215, %v3376, 0.0
    %v3467 = vadd.f32 %v3465, %v3466
    %v3468 = vsel %vm3215, %v3377, 0.0
    %v3469 = vadd.f32 %v3467, %v3468
    %v3470 = vsel %vm3215, %v3378, 0.0
    %v3471 = vadd.f32 %v3469, %v3470
    %v3472 = vsel %vm3215, %v3379, 0.0
    %v3473 = vadd.f32 %v3471, %v3472
    %v3474 = vsel %vm3215, %v3380, 0.0
    %v3475 = vadd.f32 %v3473, %v3474
    %v3476 = vsel %vm3215, %v3381, 0.0
    %v3477 = vadd.f32 %v3475, %v3476
    %v3478 = vsel %vm3215, %v3382, 0.0
    %v3479 = vadd.f32 %v3477, %v3478
    %v3480 = vsel %vm3215, %v3383, 0.0
    %v3481 = vadd.f32 %v3479, %v3480
    %v3482 = vsel %vm3215, %v3384, 0.0
    %v3483 = vadd.f32 %v3481, %v3482
    %v3484 = vsel %vm3215, %v3385, 0.0
    %v3485 = vadd.f32 %v3483, %v3484
    %v3486 = vsel %vm3215, %v3386, 0.0
    %v3487 = vadd.f32 %v3485, %v3486
    %v3488 = vsel %vm3215, %v3387, 0.0
    %v3489 = vadd.f32 %v3487, %v3488
    %v3490 = vsel %vm3215, %v3388, 0.0
    %v3491 = vadd.f32 %v3489, %v3490
    %v3492 = vsel %vm3215, %v3389, 0.0
    %v3493 = vadd.f32 %v3491, %v3492
    %v3494 = vsel %vm3215, %v3390, 0.0
    %v3495 = vadd.f32 %v3493, %v3494
    %v3496 = vsel %vm3215, %v3391, 0.0
    %v3497 = vadd.f32 %v3495, %v3496
    %v3498 = vsel %vm3215, %v3392, 0.0
    %v3499 = vadd.f32 %v3497, %v3498
    %v3500 = vsel %vm3215, %v3393, 0.0
    %v3501 = vadd.f32 %v3499, %v3500
    %v3502 = vsel %vm3215, %v3394, 0.0
    %v3503 = vadd.f32 %v3501, %v3502
    %v3504 = vsel %vm3215, %v3395, 0.0
    %v3505 = vadd.f32 %v3503, %v3504
    %v3506 = vsel %vm3215, %v3396, 0.0
    %v3507 = vadd.f32 %v3505, %v3506
    %v3508 = vsel %vm3215, %v3397, 0.0
    %v3509 = vadd.f32 %v3507, %v3508
    %v3510 = vsel %vm3215, %v3398, 0.0
    %v3511 = vadd.f32 %v3509, %v3510
    %v3512 = vsel %vm3215, %v3399, 0.0
    %v3513 = vadd.f32 %v3511, %v3512
    %v3514 = vsel %vm3215, %v3400, 0.0
    %v3515 = vadd.f32 %v3513, %v3514
    %v3516 = vsel %vm3215, %v3401, 0.0
    %v3517 = vadd.f32 %v3515, %v3516
    %v3518 = vsel %vm3215, %v3402, 0.0
    %v3519 = vadd.f32 %v3517, %v3518
    %v3520 = vsel %vm3215, %v3403, 0.0
    %v3521 = vadd.f32 %v3519, %v3520
    %v3522 = vsel %vm3215, %v3404, 0.0
    %v3523 = vadd.f32 %v3521, %v3522
    %v3524 = vsel %vm3215, %v3405, 0.0
    %v3525 = vadd.f32 %v3523, %v3524
    %v3526 = vsel %vm3215, %v3406, 0.0
    %v3527 = vadd.f32 %v3525, %v3526
    %v3528 = vsel %vm3215, %v3407, 0.0
    %v3529 = vadd.f32 %v3527, %v3528
    %v3530 = vsel %vm3215, %v3408, 0.0
    %v3531 = vadd.f32 %v3529, %v3530
    %v3532 = vsel %vm3215, %v3409, 0.0
    %v3533 = vadd.f32 %v3531, %v3532
    %v3534 = vsel %vm3215, %v3410, 0.0
    %v3535 = vadd.f32 %v3533, %v3534
    %v3536 = vsel %vm3215, %v3411, 0.0
    %v3537 = vadd.f32 %v3535, %v3536
    %v3538 = vsel %vm3215, %v3412, 0.0
    %v3539 = vadd.f32 %v3537, %v3538
    %v3540 = vrot.slane %v3539, 4
    %v3541 = vadd.f32 %v3539, %v3540
    %v3542 = vrot.slane %v3541, 2
    %v3543 = vadd.f32 %v3541, %v3542
    %v3544 = vrot.slane %v3543, 1
    %v3545 = vadd.f32 %v3543, %v3544
    %v3546 = vmul.f32 %v3348, 0.001953125
    %v3547 = vmul.f32 %v3545, 0.001953125
    %v3548 = vmul.f32 %v3546, %v3546
    %v3549 = vsub.f32 %v3547, %v3548
    %v3550 = vmax.f32 %v3549, 0.0
    %v3551 = vadd.f32 %v3550, 1e-05
    %v3552 = vrsqrt.pop %v3551
    %v3553 = vmul.f32 %v3552, %v3551
    %v3554 = vmul.f32 %v3553, %v3552
    %v3555 = vmul.f32 0.5, %v3554
    %v3556 = vsub.f32 1.5, %v3555
    %v3557 = vmul.f32 %v3552, %v3556
    %vm3558 = vweird.f32 %v3551
    %vm3559 = vweird.f32 %v3552
    %vm3560 = vmor %vm3558, %vm3559
    %v3561 = vsel %vm3560, %v3552, %v3557
    %v3562 = vmul.f32 %v3213, %v3561
    %v3564 = vperm.slane %v3562, 0
    %v3566 = vmul.f32 %v3022, %v3564
    %v3567 = vmul.f32 %v3025, %v3564
    %v3568 = vmul.f32 %v3028, %v3564
    %v3569 = vmul.f32 %v3031, %v3564
    %v3570 = vmul.f32 %v3034, %v3564
    %v3571 = vmul.f32 %v3037, %v3564
    %v3572 = vmul.f32 %v3040, %v3564
    %v3573 = vmul.f32 %v3043, %v3564
    %v3574 = vmul.f32 %v3046, %v3564
    %v3575 = vmul.f32 %v3049, %v3564
    %v3576 = vmul.f32 %v3052, %v3564
    %v3577 = vmul.f32 %v3055, %v3564
    %v3578 = vmul.f32 %v3058, %v3564
    %v3579 = vmul.f32 %v3061, %v3564
    %v3580 = vmul.f32 %v3064, %v3564
    %v3581 = vmul.f32 %v3067, %v3564
    %v3582 = vmul.f32 %v3070, %v3564
    %v3583 = vmul.f32 %v3073, %v3564
    %v3584 = vmul.f32 %v3076, %v3564
    %v3585 = vmul.f32 %v3079, %v3564
    %v3586 = vmul.f32 %v3082, %v3564
    %v3587 = vmul.f32 %v3085, %v3564
    %v3588 = vmul.f32 %v3088, %v3564
    %v3589 = vmul.f32 %v3091, %v3564
    %v3590 = vmul.f32 %v3094, %v3564
    %v3591 = vmul.f32 %v3097, %v3564
    %v3592 = vmul.f32 %v3100, %v3564
    %v3593 = vmul.f32 %v3103, %v3564
    %v3594 = vmul.f32 %v3106, %v3564
    %v3595 = vmul.f32 %v3109, %v3564
    %v3596 = vmul.f32 %v3112, %v3564
    %v3597 = vmul.f32 %v3115, %v3564
    %v3598 = vmul.f32 %v3118, %v3564
    %v3599 = vmul.f32 %v3121, %v3564
    %v3600 = vmul.f32 %v3124, %v3564
    %v3601 = vmul.f32 %v3127, %v3564
    %v3602 = vmul.f32 %v3130, %v3564
    %v3603 = vmul.f32 %v3133, %v3564
    %v3604 = vmul.f32 %v3136, %v3564
    %v3605 = vmul.f32 %v3139, %v3564
    %v3606 = vmul.f32 %v3142, %v3564
    %v3607 = vmul.f32 %v3145, %v3564
    %v3608 = vmul.f32 %v3148, %v3564
    %v3609 = vmul.f32 %v3151, %v3564
    %v3610 = vmul.f32 %v3154, %v3564
    %v3611 = vmul.f32 %v3157, %v3564
    %v3612 = vmul.f32 %v3160, %v3564
    %v3613 = vmul.f32 %v3163, %v3564
    %v3614 = vmul.f32 %v3166, %v3564
    %v3615 = vmul.f32 %v3169, %v3564
    %v3616 = vmul.f32 %v3172, %v3564
    %v3617 = vmul.f32 %v3175, %v3564
    %v3618 = vmul.f32 %v3178, %v3564
    %v3619 = vmul.f32 %v3181, %v3564
    %v3620 = vmul.f32 %v3184, %v3564
    %v3621 = vmul.f32 %v3187, %v3564
    %v3622 = vmul.f32 %v3190, %v3564
    %v3623 = vmul.f32 %v3193, %v3564
    %v3624 = vmul.f32 %v3196, %v3564
    %v3625 = vmul.f32 %v3199, %v3564
    %v3626 = vmul.f32 %v3202, %v3564
    %v3627 = vmul.f32 %v3205, %v3564
    %v3628 = vmul.f32 %v3208, %v3564
    %v3629 = vmul.f32 %v3211, %v3564
    %v3630 = vmul.f32 %v3546, %v3562
    %v3631 = vsub.f32 %v3214, %v3630
    %v3633 = vperm.slane %v3631, 0
    %v3635 = vadd.f32 %v3566, %v3633
    %v3636 = vadd.f32 %v3567, %v3633
    %v3637 = vadd.f32 %v3568, %v3633
    %v3638 = vadd.f32 %v3569, %v3633
    %v3639 = vadd.f32 %v3570, %v3633
    %v3640 = vadd.f32 %v3571, %v3633
    %v3641 = vadd.f32 %v3572, %v3633
    %v3642 = vadd.f32 %v3573, %v3633
    %v3643 = vadd.f32 %v3574, %v3633
    %v3644 = vadd.f32 %v3575, %v3633
    %v3645 = vadd.f32 %v3576, %v3633
    %v3646 = vadd.f32 %v3577, %v3633
    %v3647 = vadd.f32 %v3578, %v3633
    %v3648 = vadd.f32 %v3579, %v3633
    %v3649 = vadd.f32 %v3580, %v3633
    %v3650 = vadd.f32 %v3581, %v3633
    %v3651 = vadd.f32 %v3582, %v3633
    %v3652 = vadd.f32 %v3583, %v3633
    %v3653 = vadd.f32 %v3584, %v3633
    %v3654 = vadd.f32 %v3585, %v3633
    %v3655 = vadd.f32 %v3586, %v3633
    %v3656 = vadd.f32 %v3587, %v3633
    %v3657 = vadd.f32 %v3588, %v3633
    %v3658 = vadd.f32 %v3589, %v3633
    %v3659 = vadd.f32 %v3590, %v3633
    %v3660 = vadd.f32 %v3591, %v3633
    %v3661 = vadd.f32 %v3592, %v3633
    %v3662 = vadd.f32 %v3593, %v3633
    %v3663 = vadd.f32 %v3594, %v3633
    %v3664 = vadd.f32 %v3595, %v3633
    %v3665 = vadd.f32 %v3596, %v3633
    %v3666 = vadd.f32 %v3597, %v3633
    %v3667 = vadd.f32 %v3598, %v3633
    %v3668 = vadd.f32 %v3599, %v3633
    %v3669 = vadd.f32 %v3600, %v3633
    %v3670 = vadd.f32 %v3601, %v3633
    %v3671 = vadd.f32 %v3602, %v3633
    %v3672 = vadd.f32 %v3603, %v3633
    %v3673 = vadd.f32 %v3604, %v3633
    %v3674 = vadd.f32 %v3605, %v3633
    %v3675 = vadd.f32 %v3606, %v3633
    %v3676 = vadd.f32 %v3607, %v3633
    %v3677 = vadd.f32 %v3608, %v3633
    %v3678 = vadd.f32 %v3609, %v3633
    %v3679 = vadd.f32 %v3610, %v3633
    %v3680 = vadd.f32 %v3611, %v3633
    %v3681 = vadd.f32 %v3612, %v3633
    %v3682 = vadd.f32 %v3613, %v3633
    %v3683 = vadd.f32 %v3614, %v3633
    %v3684 = vadd.f32 %v3615, %v3633
    %v3685 = vadd.f32 %v3616, %v3633
    %v3686 = vadd.f32 %v3617, %v3633
    %v3687 = vadd.f32 %v3618, %v3633
    %v3688 = vadd.f32 %v3619, %v3633
    %v3689 = vadd.f32 %v3620, %v3633
    %v3690 = vadd.f32 %v3621, %v3633
    %v3691 = vadd.f32 %v3622, %v3633
    %v3692 = vadd.f32 %v3623, %v3633
    %v3693 = vadd.f32 %v3624, %v3633
    %v3694 = vadd.f32 %v3625, %v3633
    %v3695 = vadd.f32 %v3626, %v3633
    %v3696 = vadd.f32 %v3627, %v3633
    %v3697 = vadd.f32 %v3628, %v3633
    %v3698 = vadd.f32 %v3629, %v3633
    %v3699 = vmax.f32 %v3635, 0.0
    %v3700 = vmax.f32 %v3636, 0.0
    %v3701 = vmax.f32 %v3637, 0.0
    %v3702 = vmax.f32 %v3638, 0.0
    %v3703 = vmax.f32 %v3639, 0.0
    %v3704 = vmax.f32 %v3640, 0.0
    %v3705 = vmax.f32 %v3641, 0.0
    %v3706 = vmax.f32 %v3642, 0.0
    %v3707 = vmax.f32 %v3643, 0.0
    %v3708 = vmax.f32 %v3644, 0.0
    %v3709 = vmax.f32 %v3645, 0.0
    %v3710 = vmax.f32 %v3646, 0.0
    %v3711 = vmax.f32 %v3647, 0.0
    %v3712 = vmax.f32 %v3648, 0.0
    %v3713 = vmax.f32 %v3649, 0.0
    %v3714 = vmax.f32 %v3650, 0.0
    %v3715 = vmax.f32 %v3651, 0.0
    %v3716 = vmax.f32 %v3652, 0.0
    %v3717 = vmax.f32 %v3653, 0.0
    %v3718 = vmax.f32 %v3654, 0.0
    %v3719 = vmax.f32 %v3655, 0.0
    %v3720 = vmax.f32 %v3656, 0.0
    %v3721 = vmax.f32 %v3657, 0.0
    %v3722 = vmax.f32 %v3658, 0.0
    %v3723 = vmax.f32 %v3659, 0.0
    %v3724 = vmax.f32 %v3660, 0.0
    %v3725 = vmax.f32 %v3661, 0.0
    %v3726 = vmax.f32 %v3662, 0.0
    %v3727 = vmax.f32 %v3663, 0.0
    %v3728 = vmax.f32 %v3664, 0.0
    %v3729 = vmax.f32 %v3665, 0.0
    %v3730 = vmax.f32 %v3666, 0.0
    %v3731 = vmax.f32 %v3667, 0.0
    %v3732 = vmax.f32 %v3668, 0.0
    %v3733 = vmax.f32 %v3669, 0.0
    %v3734 = vmax.f32 %v3670, 0.0
    %v3735 = vmax.f32 %v3671, 0.0
    %v3736 = vmax.f32 %v3672, 0.0
    %v3737 = vmax.f32 %v3673, 0.0
    %v3738 = vmax.f32 %v3674, 0.0
    %v3739 = vmax.f32 %v3675, 0.0
    %v3740 = vmax.f32 %v3676, 0.0
    %v3741 = vmax.f32 %v3677, 0.0
    %v3742 = vmax.f32 %v3678, 0.0
    %v3743 = vmax.f32 %v3679, 0.0
    %v3744 = vmax.f32 %v3680, 0.0
    %v3745 = vmax.f32 %v3681, 0.0
    %v3746 = vmax.f32 %v3682, 0.0
    %v3747 = vmax.f32 %v3683, 0.0
    %v3748 = vmax.f32 %v3684, 0.0
    %v3749 = vmax.f32 %v3685, 0.0
    %v3750 = vmax.f32 %v3686, 0.0
    %v3751 = vmax.f32 %v3687, 0.0
    %v3752 = vmax.f32 %v3688, 0.0
    %v3753 = vmax.f32 %v3689, 0.0
    %v3754 = vmax.f32 %v3690, 0.0
    %v3755 = vmax.f32 %v3691, 0.0
    %v3756 = vmax.f32 %v3692, 0.0
    %v3757 = vmax.f32 %v3693, 0.0
    %v3758 = vmax.f32 %v3694, 0.0
    %v3759 = vmax.f32 %v3695, 0.0
    %v3760 = vmax.f32 %v3696, 0.0
    %v3761 = vmax.f32 %v3697, 0.0
    %v3762 = vmax.f32 %v3698, 0.0
    %3763 = vst.msk [vmem:[#allocation3] sm:$0xff] %vm3215, 0.0
    %3764 = vst.msk [vmem:[#allocation3 + $0x8] sm:$0xff] %vm3215, 0.0
    %vm3765 = vcmask 189440
    %3766 = vst.msk [vmem:[#allocation3 + $0x10] sm:$0x3] %vm3765, 0.0
    %3767 = vst.msk [vmem:[#allocation3 + $0x1b0] sm:$0xff] %vm3215, 0.0
    %3768 = vst.msk [vmem:[#allocation3 + $0x1b8] sm:$0xff] %vm3215, 0.0
    %3769 = vst.msk [vmem:[#allocation3 + $0x1c0] sm:$0x3] %vm3765, 0.0
    %s3770 = scalar_lea.vmem [#allocation3], 408
    %3771 = vst.msk [vmem:[%s3770] sm:$0xff] %vm3215, 0.0
    %3772 = vst.msk [vmem:[%s3770 + $0x8] sm:$0xff] %vm3215, 0.0
    %3773 = vst.msk [vmem:[%s3770 + $0x10] sm:$0x3] %vm3765, 0.0
    %3774 = vst.msk [vmem:[%s3770 + $0x1b0] sm:$0xff] %vm3215, 0.0
    %3775 = vst.msk [vmem:[%s3770 + $0x1b8] sm:$0xff] %vm3215, 0.0
    %3776 = vst.msk [vmem:[%s3770 + $0x1c0] sm:$0x3] %vm3765, 0.0
    %s3777 = scalar_lea.vmem [#allocation3], 24
    %vm3778 = vcmask 188416
    %3779 = vst.msk [vmem:[%s3777] sm:$0x1] %vm3778, 0.0
    %3780 = vst.msk [vmem:[%s3777 + $0x18] sm:$0x1] %vm3778, 0.0
    %3781 = vst.msk [vmem:[%s3777 + $0x30] sm:$0x1] %vm3778, 0.0
    %3782 = vst.msk [vmem:[%s3777 + $0x48] sm:$0x1] %vm3778, 0.0
    %3783 = vst.msk [vmem:[%s3777 + $0x60] sm:$0x1] %vm3778, 0.0
    %3784 = vst.msk [vmem:[%s3777 + $0x78] sm:$0x1] %vm3778, 0.0
    %3785 = vst.msk [vmem:[%s3777 + $0x90] sm:$0x1] %vm3778, 0.0
    %3786 = vst.msk [vmem:[%s3777 + $0xa8] sm:$0x1] %vm3778, 0.0
    %3787 = vst.msk [vmem:[%s3777 + $0xc0] sm:$0x1] %vm3778, 0.0
    %3788 = vst.msk [vmem:[%s3777 + $0xd8] sm:$0x1] %vm3778, 0.0
    %3789 = vst.msk [vmem:[%s3777 + $0xf0] sm:$0x1] %vm3778, 0.0
    %3790 = vst.msk [vmem:[%s3777 + $0x108] sm:$0x1] %vm3778, 0.0
    %3791 = vst.msk [vmem:[%s3777 + $0x120] sm:$0x1] %vm3778, 0.0
    %3792 = vst.msk [vmem:[%s3777 + $0x138] sm:$0x1] %vm3778, 0.0
    %3793 = vst.msk [vmem:[%s3777 + $0x150] sm:$0x1] %vm3778, 0.0
    %3794 = vst.msk [vmem:[%s3777 + $0x168] sm:$0x1] %vm3778, 0.0
    %3795 = vst.msk [vmem:[%s3777 + $0x1b0] sm:$0x1] %vm3778, 0.0
    %3796 = vst.msk [vmem:[%s3777 + $0x1c8] sm:$0x1] %vm3778, 0.0
    %3797 = vst.msk [vmem:[%s3777 + $0x1e0] sm:$0x1] %vm3778, 0.0
    %3798 = vst.msk [vmem:[%s3777 + $0x1f8] sm:$0x1] %vm3778, 0.0
    %3799 = vst.msk [vmem:[%s3777 + $0x210] sm:$0x1] %vm3778, 0.0
    %3800 = vst.msk [vmem:[%s3777 + $0x228] sm:$0x1] %vm3778, 0.0
    %3801 = vst.msk [vmem:[%s3777 + $0x240] sm:$0x1] %vm3778, 0.0
    %3802 = vst.msk [vmem:[%s3777 + $0x258] sm:$0x1] %vm3778, 0.0
    %3803 = vst.msk [vmem:[%s3777 + $0x270] sm:$0x1] %vm3778, 0.0
    %3804 = vst.msk [vmem:[%s3777 + $0x288] sm:$0x1] %vm3778, 0.0
    %3805 = vst.msk [vmem:[%s3777 + $0x2a0] sm:$0x1] %vm3778, 0.0
    %3806 = vst.msk [vmem:[%s3777 + $0x2b8] sm:$0x1] %vm3778, 0.0
    %3807 = vst.msk [vmem:[%s3777 + $0x2d0] sm:$0x1] %vm3778, 0.0
    %3808 = vst.msk [vmem:[%s3777 + $0x2e8] sm:$0x1] %vm3778, 0.0
    %3809 = vst.msk [vmem:[%s3777 + $0x300] sm:$0x1] %vm3778, 0.0
    %3810 = vst.msk [vmem:[%s3777 + $0x318] sm:$0x1] %vm3778, 0.0
    %3811 = vst.msk [vmem:[%s3777 + $0x11] sm:$0x1] %vm3778, 0.0
    %3812 = vst.msk [vmem:[%s3777 + $0x29] sm:$0x1] %vm3778, 0.0
    %3813 = vst.msk [vmem:[%s3777 + $0x41] sm:$0x1] %vm3778, 0.0
    %3814 = vst.msk [vmem:[%s3777 + $0x59] sm:$0x1] %vm3778, 0.0
    %3815 = vst.msk [vmem:[%s3777 + $0x71] sm:$0x1] %vm3778, 0.0
    %3816 = vst.msk [vmem:[%s3777 + $0x89] sm:$0x1] %vm3778, 0.0
    %3817 = vst.msk [vmem:[%s3777 + $0xa1] sm:$0x1] %vm3778, 0.0
    %3818 = vst.msk [vmem:[%s3777 + $0xb9] sm:$0x1] %vm3778, 0.0
    %3819 = vst.msk [vmem:[%s3777 + $0xd1] sm:$0x1] %vm3778, 0.0
    %3820 = vst.msk [vmem:[%s3777 + $0xe9] sm:$0x1] %vm3778, 0.0
    %3821 = vst.msk [vmem:[%s3777 + $0x101] sm:$0x1] %vm3778, 0.0
    %3822 = vst.msk [vmem:[%s3777 + $0x119] sm:$0x1] %vm3778, 0.0
    %3823 = vst.msk [vmem:[%s3777 + $0x131] sm:$0x1] %vm3778, 0.0
    %3824 = vst.msk [vmem:[%s3777 + $0x149] sm:$0x1] %vm3778, 0.0
    %3825 = vst.msk [vmem:[%s3777 + $0x161] sm:$0x1] %vm3778, 0.0
    %3826 = vst.msk [vmem:[%s3777 + $0x179] sm:$0x1] %vm3778, 0.0
    %3827 = vst.msk [vmem:[%s3777 + $0x1c1] sm:$0x1] %vm3778, 0.0
    %3828 = vst.msk [vmem:[%s3777 + $0x1d9] sm:$0x1] %vm3778, 0.0
    %3829 = vst.msk [vmem:[%s3777 + $0x1f1] sm:$0x1] %vm3778, 0.0
    %3830 = vst.msk [vmem:[%s3777 + $0x209] sm:$0x1] %vm3778, 0.0
    %3831 = vst.msk [vmem:[%s3777 + $0x221] sm:$0x1] %vm3778, 0.0
    %3832 = vst.msk [vmem:[%s3777 + $0x239] sm:$0x1] %vm3778, 0.0
    %3833 = vst.msk [vmem:[%s3777 + $0x251] sm:$0x1] %vm3778, 0.0
    %3834 = vst.msk [vmem:[%s3777 + $0x269] sm:$0x1] %vm3778, 0.0
    %3835 = vst.msk [vmem:[%s3777 + $0x281] sm:$0x1] %vm3778, 0.0
    %3836 = vst.msk [vmem:[%s3777 + $0x299] sm:$0x1] %vm3778, 0.0
    %3837 = vst.msk [vmem:[%s3777 + $0x2b1] sm:$0x1] %vm3778, 0.0
    %3838 = vst.msk [vmem:[%s3777 + $0x2c9] sm:$0x1] %vm3778, 0.0
    %3839 = vst.msk [vmem:[%s3777 + $0x2e1] sm:$0x1] %vm3778, 0.0
    %3840 = vst.msk [vmem:[%s3777 + $0x2f9] sm:$0x1] %vm3778, 0.0
    %3841 = vst.msk [vmem:[%s3777 + $0x311] sm:$0x1] %vm3778, 0.0
    %3842 = vst.msk [vmem:[%s3777 + $0x329] sm:$0x1] %vm3778, 0.0
    %3843 = vst.msk [vmem:[%s3777 + $0x1] sm:$0xff] %vm3215, %v3699
    %3844 = vst.msk [vmem:[%s3777 + $0x9] sm:$0xff] %vm3215, %v3700
    %3845 = vst.msk [vmem:[%s3777 + $0x19] sm:$0xff] %vm3215, %v3701
    %3846 = vst.msk [vmem:[%s3777 + $0x21] sm:$0xff] %vm3215, %v3702
    %3847 = vst.msk [vmem:[%s3777 + $0x31] sm:$0xff] %vm3215, %v3703
    %3848 = vst.msk [vmem:[%s3777 + $0x39] sm:$0xff] %vm3215, %v3704
    %3849 = vst.msk [vmem:[%s3777 + $0x49] sm:$0xff] %vm3215, %v3705
    %3850 = vst.msk [vmem:[%s3777 + $0x51] sm:$0xff] %vm3215, %v3706
    %3851 = vst.msk [vmem:[%s3777 + $0x61] sm:$0xff] %vm3215, %v3707
    %3852 = vst.msk [vmem:[%s3777 + $0x69] sm:$0xff] %vm3215, %v3708
    %3853 = vst.msk [vmem:[%s3777 + $0x79] sm:$0xff] %vm3215, %v3709
    %3854 = vst.msk [vmem:[%s3777 + $0x81] sm:$0xff] %vm3215, %v3710
    %3855 = vst.msk [vmem:[%s3777 + $0x91] sm:$0xff] %vm3215, %v3711
    %3856 = vst.msk [vmem:[%s3777 + $0x99] sm:$0xff] %vm3215, %v3712
    %3857 = vst.msk [vmem:[%s3777 + $0xa9] sm:$0xff] %vm3215, %v3713
    %3858 = vst.msk [vmem:[%s3777 + $0xb1] sm:$0xff] %vm3215, %v3714
    %3859 = vst.msk [vmem:[%s3777 + $0xc1] sm:$0xff] %vm3215, %v3715
    %3860 = vst.msk [vmem:[%s3777 + $0xc9] sm:$0xff] %vm3215, %v3716
    %3861 = vst.msk [vmem:[%s3777 + $0xd9] sm:$0xff] %vm3215, %v3717
    %3862 = vst.msk [vmem:[%s3777 + $0xe1] sm:$0xff] %vm3215, %v3718
    %3863 = vst.msk [vmem:[%s3777 + $0xf1] sm:$0xff] %vm3215, %v3719
    %3864 = vst.msk [vmem:[%s3777 + $0xf9] sm:$0xff] %vm3215, %v3720
    %3865 = vst.msk [vmem:[%s3777 + $0x109] sm:$0xff] %vm3215, %v3721
    %3866 = vst.msk [vmem:[%s3777 + $0x111] sm:$0xff] %vm3215, %v3722
    %3867 = vst.msk [vmem:[%s3777 + $0x121] sm:$0xff] %vm3215, %v3723
    %3868 = vst.msk [vmem:[%s3777 + $0x129] sm:$0xff] %vm3215, %v3724
    %3869 = vst.msk [vmem:[%s3777 + $0x139] sm:$0xff] %vm3215, %v3725
    %3870 = vst.msk [vmem:[%s3777 + $0x141] sm:$0xff] %vm3215, %v3726
    %3871 = vst.msk [vmem:[%s3777 + $0x151] sm:$0xff] %vm3215, %v3727
    %3872 = vst.msk [vmem:[%s3777 + $0x159] sm:$0xff] %vm3215, %v3728
    %3873 = vst.msk [vmem:[%s3777 + $0x169] sm:$0xff] %vm3215, %v3729
    %3874 = vst.msk [vmem:[%s3777 + $0x171] sm:$0xff] %vm3215, %v3730
    %3875 = vst.msk [vmem:[%s3777 + $0x1b1] sm:$0xff] %vm3215, %v3731
    %3876 = vst.msk [vmem:[%s3777 + $0x1b9] sm:$0xff] %vm3215, %v3732
    %3877 = vst.msk [vmem:[%s3777 + $0x1c9] sm:$0xff] %vm3215, %v3733
    %3878 = vst.msk [vmem:[%s3777 + $0x1d1] sm:$0xff] %vm3215, %v3734
    %3879 = vst.msk [vmem:[%s3777 + $0x1e1] sm:$0xff] %vm3215, %v3735
    %3880 = vst.msk [vmem:[%s3777 + $0x1e9] sm:$0xff] %vm3215, %v3736
    %3881 = vst.msk [vmem:[%s3777 + $0x1f9] sm:$0xff] %vm3215, %v3737
    %3882 = vst.msk [vmem:[%s3777 + $0x201] sm:$0xff] %vm3215, %v3738
    %3883 = vst.msk [vmem:[%s3777 + $0x211] sm:$0xff] %vm3215, %v3739
    %3884 = vst.msk [vmem:[%s3777 + $0x219] sm:$0xff] %vm3215, %v3740
    %3885 = vst.msk [vmem:[%s3777 + $0x229] sm:$0xff] %vm3215, %v3741
    %3886 = vst.msk [vmem:[%s3777 + $0x231] sm:$0xff] %vm3215, %v3742
    %3887 = vst.msk [vmem:[%s3777 + $0x241] sm:$0xff] %vm3215, %v3743
    %3888 = vst.msk [vmem:[%s3777 + $0x249] sm:$0xff] %vm3215, %v3744
    %3889 = vst.msk [vmem:[%s3777 + $0x259] sm:$0xff] %vm3215, %v3745
    %3890 = vst.msk [vmem:[%s3777 + $0x261] sm:$0xff] %vm3215, %v3746
    %3891 = vst.msk [vmem:[%s3777 + $0x271] sm:$0xff] %vm3215, %v3747
    %3892 = vst.msk [vmem:[%s3777 + $0x279] sm:$0xff] %vm3215, %v3748
    %3893 = vst.msk [vmem:[%s3777 + $0x289] sm:$0xff] %vm3215, %v3749
    %3894 = vst.msk [vmem:[%s3777 + $0x291] sm:$0xff] %vm3215, %v3750
    %3895 = vst.msk [vmem:[%s3777 + $0x2a1] sm:$0xff] %vm3215, %v3751
    %3896 = vst.msk [vmem:[%s3777 + $0x2a9] sm:$0xff] %vm3215, %v3752
    %3897 = vst.msk [vmem:[%s3777 + $0x2b9] sm:$0xff] %vm3215, %v3753
    %3898 = vst.msk [vmem:[%s3777 + $0x2c1] sm:$0xff] %vm3215, %v3754
    %3899 = vst.msk [vmem:[%s3777 + $0x2d1] sm:$0xff] %vm3215, %v3755
    %3900 = vst.msk [vmem:[%s3777 + $0x2d9] sm:$0xff] %vm3215, %v3756
    %3901 = vst.msk [vmem:[%s3777 + $0x2e9] sm:$0xff] %vm3215, %v3757
    %3902 = vst.msk [vmem:[%s3777 + $0x2f1] sm:$0xff] %vm3215, %v3758
    %3903 = vst.msk [vmem:[%s3777 + $0x301] sm:$0xff] %vm3215, %v3759
    %3904 = vst.msk [vmem:[%s3777 + $0x309] sm:$0xff] %vm3215, %v3760
    %3905 = vst.msk [vmem:[%s3777 + $0x319] sm:$0xff] %vm3215, %v3761
    %3906 = vst.msk [vmem:[%s3777 + $0x321] sm:$0xff] %vm3215, %v3762
    %v3907 = vld [vmem:[%s5] sm:$0x1]
    %v3908 = vld [vmem:[%s5 + $0x1] sm:$0x1]
    %v3909 = vld [vmem:[%s5 + $0x2] sm:$0x1]
    %v3910 = vld [vmem:[%s5 + $0x3] sm:$0x1]
    %v3911 = vld [vmem:[%s5 + $0x4] sm:$0x1]
    %v3912 = vld [vmem:[%s5 + $0x5] sm:$0x1]
    %v3913 = vld [vmem:[%s5 + $0x6] sm:$0x1]
    %v3914 = vld [vmem:[%s5 + $0x7] sm:$0x1]
    %v3915 = vld [vmem:[%s5 + $0x8] sm:$0x1]
    %v3916 = vld [vmem:[#allocation3] sm:$0xff]
    %v3917 = vld [vmem:[#allocation3 + $0x8] sm:$0xff]
    %v3918 = vld [vmem:[#allocation3 + $0x18] sm:$0xff]
    %v3919 = vld [vmem:[#allocation3 + $0x20] sm:$0xff]
    %v3920 = vld [vmem:[#allocation3 + $0x30] sm:$0xff]
    %v3921 = vld [vmem:[#allocation3 + $0x38] sm:$0xff]
    %v3922 = vld [vmem:[#allocation3 + $0x48] sm:$0xff]
    %v3923 = vld [vmem:[#allocation3 + $0x50] sm:$0xff]
    %v3924 = vld [vmem:[#allocation3 + $0x60] sm:$0xff]
    %v3925 = vld [vmem:[#allocation3 + $0x68] sm:$0xff]
    %v3926 = vld [vmem:[#allocation3 + $0x78] sm:$0xff]
    %v3927 = vld [vmem:[#allocation3 + $0x80] sm:$0xff]
    %v3928 = vld [vmem:[#allocation3 + $0x90] sm:$0xff]
    %v3929 = vld [vmem:[#allocation3 + $0x98] sm:$0xff]
    %v3930 = vld [vmem:[#allocation3 + $0xa8] sm:$0xff]
    %v3931 = vld [vmem:[#allocation3 + $0xb0] sm:$0xff]
    %v3932 = vld [vmem:[#allocation3 + $0xc0] sm:$0xff]
    %v3933 = vld [vmem:[#allocation3 + $0xc8] sm:$0xff]
    %v3934 = vld [vmem:[#allocation3 + $0xd8] sm:$0xff]
    %v3935 = vld [vmem:[#allocation3 + $0xe0] sm:$0xff]
    %v3936 = vld [vmem:[#allocation3 + $0xf0] sm:$0xff]
    %v3937 = vld [vmem:[#allocation3 + $0xf8] sm:$0xff]
    %v3938 = vld [vmem:[#allocation3 + $0x108] sm:$0xff]
    %v3939 = vld [vmem:[#allocation3 + $0x110] sm:$0xff]
    %v3940 = vld [vmem:[#allocation3 + $0x120] sm:$0xff]
    %v3941 = vld [vmem:[#allocation3 + $0x128] sm:$0xff]
    %v3942 = vld [vmem:[#allocation3 + $0x138] sm:$0xff]
    %v3943 = vld [vmem:[#allocation3 + $0x140] sm:$0xff]
    %v3944 = vld [vmem:[#allocation3 + $0x150] sm:$0xff]
    %v3945 = vld [vmem:[#allocation3 + $0x158] sm:$0xff]
    %v3946 = vld [vmem:[#allocation3 + $0x168] sm:$0xff]
    %v3947 = vld [vmem:[#allocation3 + $0x170] sm:$0xff]
    %v3948 = vld [vmem:[#allocation3 + $0x1b0] sm:$0xff]
    %v3949 = vld [vmem:[#allocation3 + $0x1b8] sm:$0xff]
    %v3950 = vld [vmem:[#allocation3 + $0x1c8] sm:$0xff]
    %v3951 = vld [vmem:[#allocation3 + $0x1d0] sm:$0xff]
    %v3952 = vld [vmem:[#allocation3 + $0x1e0] sm:$0xff]
    %v3953 = vld [vmem:[#allocation3 + $0x1e8] sm:$0xff]
    %v3954 = vld [vmem:[#allocation3 + $0x1f8] sm:$0xff]
    %v3955 = vld [vmem:[#allocation3 + $0x200] sm:$0xff]
    %v3956 = vld [vmem:[#allocation3 + $0x210] sm:$0xff]
    %v3957 = vld [vmem:[#allocation3 + $0x218] sm:$0xff]
    %v3958 = vld [vmem:[#allocation3 + $0x228] sm:$0xff]
    %v3959 = vld [vmem:[#allocation3 + $0x230] sm:$0xff]
    %v3960 = vld [vmem:[#allocation3 + $0x240] sm:$0xff]
    %v3961 = vld [vmem:[#allocation3 + $0x248] sm:$0xff]
    %v3962 = vld [vmem:[#allocation3 + $0x258] sm:$0xff]
    %v3963 = vld [vmem:[#allocation3 + $0x260] sm:$0xff]
    %v3964 = vld [vmem:[#allocation3 + $0x270] sm:$0xff]
    %v3965 = vld [vmem:[#allocation3 + $0x278] sm:$0xff]
    %v3966 = vld [vmem:[#allocation3 + $0x288] sm:$0xff]
    %v3967 = vld [vmem:[#allocation3 + $0x290] sm:$0xff]
    %v3968 = vld [vmem:[#allocation3 + $0x2a0] sm:$0xff]
    %v3969 = vld [vmem:[#allocation3 + $0x2a8] sm:$0xff]
    %v3970 = vld [vmem:[#allocation3 + $0x2b8] sm:$0xff]
    %v3971 = vld [vmem:[#allocation3 + $0x2c0] sm:$0xff]
    %v3972 = vld [vmem:[#allocation3 + $0x2d0] sm:$0xff]
    %v3973 = vld [vmem:[#allocation3 + $0x2d8] sm:$0xff]
    %v3974 = vld [vmem:[#allocation3 + $0x2e8] sm:$0xff]
    %v3975 = vld [vmem:[#allocation3 + $0x2f0] sm:$0xff]
    %v3976 = vld [vmem:[#allocation3 + $0x300] sm:$0xff]
    %v3977 = vld [vmem:[#allocation3 + $0x308] sm:$0xff]
    %v3978 = vld [vmem:[#allocation3 + $0x318] sm:$0xff]
    %v3979 = vld [vmem:[#allocation3 + $0x320] sm:$0xff]
    %v3981 = vperm.slane %v3907, 0
    %v3983 = vmul.f32 %v3916, %v3981
    %v3984 = vmul.f32 %v3917, %v3981
    %v3985 = vmul.f32 %v3918, %v3981
    %v3986 = vmul.f32 %v3919, %v3981
    %v3987 = vmul.f32 %v3920, %v3981
    %v3988 = vmul.f32 %v3921, %v3981
    %v3989 = vmul.f32 %v3922, %v3981
    %v3990 = vmul.f32 %v3923, %v3981
    %v3991 = vmul.f32 %v3924, %v3981
    %v3992 = vmul.f32 %v3925, %v3981
    %v3993 = vmul.f32 %v3926, %v3981
    %v3994 = vmul.f32 %v3927, %v3981
    %v3995 = vmul.f32 %v3928, %v3981
    %v3996 = vmul.f32 %v3929, %v3981
    %v3997 = vmul.f32 %v3930, %v3981
    %v3998 = vmul.f32 %v3931, %v3981
    %v3999 = vmul.f32 %v3932, %v3981
    %v4000 = vmul.f32 %v3933, %v3981
    %v4001 = vmul.f32 %v3934, %v3981
    %v4002 = vmul.f32 %v3935, %v3981
    %v4003 = vmul.f32 %v3936, %v3981
    %v4004 = vmul.f32 %v3937, %v3981
    %v4005 = vmul.f32 %v3938, %v3981
    %v4006 = vmul.f32 %v3939, %v3981
    %v4007 = vmul.f32 %v3940, %v3981
    %v4008 = vmul.f32 %v3941, %v3981
    %v4009 = vmul.f32 %v3942, %v3981
    %v4010 = vmul.f32 %v3943, %v3981
    %v4011 = vmul.f32 %v3944, %v3981
    %v4012 = vmul.f32 %v3945, %v3981
    %v4013 = vmul.f32 %v3946, %v3981
    %v4014 = vmul.f32 %v3947, %v3981
    %v4015 = vmul.f32 %v3948, %v3981
    %v4016 = vmul.f32 %v3949, %v3981
    %v4017 = vmul.f32 %v3950, %v3981
    %v4018 = vmul.f32 %v3951, %v3981
    %v4019 = vmul.f32 %v3952, %v3981
    %v4020 = vmul.f32 %v3953, %v3981
    %v4021 = vmul.f32 %v3954, %v3981
    %v4022 = vmul.f32 %v3955, %v3981
    %v4023 = vmul.f32 %v3956, %v3981
    %v4024 = vmul.f32 %v3957, %v3981
    %v4025 = vmul.f32 %v3958, %v3981
    %v4026 = vmul.f32 %v3959, %v3981
    %v4027 = vmul.f32 %v3960, %v3981
    %v4028 = vmul.f32 %v3961, %v3981
    %v4029 = vmul.f32 %v3962, %v3981
    %v4030 = vmul.f32 %v3963, %v3981
    %v4031 = vmul.f32 %v3964, %v3981
    %v4032 = vmul.f32 %v3965, %v3981
    %v4033 = vmul.f32 %v3966, %v3981
    %v4034 = vmul.f32 %v3967, %v3981
    %v4035 = vmul.f32 %v3968, %v3981
    %v4036 = vmul.f32 %v3969, %v3981
    %v4037 = vmul.f32 %v3970, %v3981
    %v4038 = vmul.f32 %v3971, %v3981
    %v4039 = vmul.f32 %v3972, %v3981
    %v4040 = vmul.f32 %v3973, %v3981
    %v4041 = vmul.f32 %v3974, %v3981
    %v4042 = vmul.f32 %v3975, %v3981
    %v4043 = vmul.f32 %v3976, %v3981
    %v4044 = vmul.f32 %v3977, %v3981
    %v4045 = vmul.f32 %v3978, %v3981
    %v4046 = vmul.f32 %v3979, %v3981
    %v4047 = vadd.f32 %v3983, 0.0
    %v4048 = vadd.f32 %v3984, 0.0
    %v4049 = vadd.f32 %v3985, 0.0
    %v4050 = vadd.f32 %v3986, 0.0
    %v4051 = vadd.f32 %v3987, 0.0
    %v4052 = vadd.f32 %v3988, 0.0
    %v4053 = vadd.f32 %v3989, 0.0
    %v4054 = vadd.f32 %v3990, 0.0
    %v4055 = vadd.f32 %v3991, 0.0
    %v4056 = vadd.f32 %v3992, 0.0
    %v4057 = vadd.f32 %v3993, 0.0
    %v4058 = vadd.f32 %v3994, 0.0
    %v4059 = vadd.f32 %v3995, 0.0
    %v4060 = vadd.f32 %v3996, 0.0
    %v4061 = vadd.f32 %v3997, 0.0
    %v4062 = vadd.f32 %v3998, 0.0
    %v4063 = vadd.f32 %v3999, 0.0
    %v4064 = vadd.f32 %v4000, 0.0
    %v4065 = vadd.f32 %v4001, 0.0
    %v4066 = vadd.f32 %v4002, 0.0
    %v4067 = vadd.f32 %v4003, 0.0
    %v4068 = vadd.f32 %v4004, 0.0
    %v4069 = vadd.f32 %v4005, 0.0
    %v4070 = vadd.f32 %v4006, 0.0
    %v4071 = vadd.f32 %v4007, 0.0
    %v4072 = vadd.f32 %v4008, 0.0
    %v4073 = vadd.f32 %v4009, 0.0
    %v4074 = vadd.f32 %v4010, 0.0
    %v4075 = vadd.f32 %v4011, 0.0
    %v4076 = vadd.f32 %v4012, 0.0
    %v4077 = vadd.f32 %v4013, 0.0
    %v4078 = vadd.f32 %v4014, 0.0
    %v4079 = vadd.f32 %v4015, 0.0
    %v4080 = vadd.f32 %v4016, 0.0
    %v4081 = vadd.f32 %v4017, 0.0
    %v4082 = vadd.f32 %v4018, 0.0
    %v4083 = vadd.f32 %v4019, 0.0
    %v4084 = vadd.f32 %v4020, 0.0
    %v4085 = vadd.f32 %v4021, 0.0
    %v4086 = vadd.f32 %v4022, 0.0
    %v4087 = vadd.f32 %v4023, 0.0
    %v4088 = vadd.f32 %v4024, 0.0
    %v4089 = vadd.f32 %v4025, 0.0
    %v4090 = vadd.f32 %v4026, 0.0
    %v4091 = vadd.f32 %v4027, 0.0
    %v4092 = vadd.f32 %v4028, 0.0
    %v4093 = vadd.f32 %v4029, 0.0
    %v4094 = vadd.f32 %v4030, 0.0
    %v4095 = vadd.f32 %v4031, 0.0
    %v4096 = vadd.f32 %v4032, 0.0
    %v4097 = vadd.f32 %v4033, 0.0
    %v4098 = vadd.f32 %v4034, 0.0
    %v4099 = vadd.f32 %v4035, 0.0
    %v4100 = vadd.f32 %v4036, 0.0
    %v4101 = vadd.f32 %v4037, 0.0
    %v4102 = vadd.f32 %v4038, 0.0
    %v4103 = vadd.f32 %v4039, 0.0
    %v4104 = vadd.f32 %v4040, 0.0
    %v4105 = vadd.f32 %v4041, 0.0
    %v4106 = vadd.f32 %v4042, 0.0
    %v4107 = vadd.f32 %v4043, 0.0
    %v4108 = vadd.f32 %v4044, 0.0
    %v4109 = vadd.f32 %v4045, 0.0
    %v4110 = vadd.f32 %v4046, 0.0
    %v4111 = vld [vmem:[#allocation3 + $0x1] sm:$0xff]
    %v4112 = vld [vmem:[#allocation3 + $0x9] sm:$0xff]
    %v4113 = vld [vmem:[#allocation3 + $0x19] sm:$0xff]
    %v4114 = vld [vmem:[#allocation3 + $0x21] sm:$0xff]
    %v4115 = vld [vmem:[#allocation3 + $0x31] sm:$0xff]
    %v4116 = vld [vmem:[#allocation3 + $0x39] sm:$0xff]
    %v4117 = vld [vmem:[#allocation3 + $0x49] sm:$0xff]
    %v4118 = vld [vmem:[#allocation3 + $0x51] sm:$0xff]
    %v4119 = vld [vmem:[#allocation3 + $0x61] sm:$0xff]
    %v4120 = vld [vmem:[#allocation3 + $0x69] sm:$0xff]
    %v4121 = vld [vmem:[#allocation3 + $0x79] sm:$0xff]
    %v4122 = vld [vmem:[#allocation3 + $0x81] sm:$0xff]
    %v4123 = vld [vmem:[#allocation3 + $0x91] sm:$0xff]
    %v4124 = vld [vmem:[#allocation3 + $0x99] sm:$0xff]
    %v4125 = vld [vmem:[#allocation3 + $0xa9] sm:$0xff]
    %v4126 = vld [vmem:[#allocation3 + $0xb1] sm:$0xff]
    %v4127 = vld [vmem:[#allocation3 + $0xc1] sm:$0xff]
    %v4128 = vld [vmem:[#allocation3 + $0xc9] sm:$0xff]
    %v4129 = vld [vmem:[#allocation3 + $0xd9] sm:$0xff]
    %v4130 = vld [vmem:[#allocation3 + $0xe1] sm:$0xff]
    %v4131 = vld [vmem:[#allocation3 + $0xf1] sm:$0xff]
    %v4132 = vld [vmem:[#allocation3 + $0xf9] sm:$0xff]
    %v4133 = vld [vmem:[#allocation3 + $0x109] sm:$0xff]
    %v4134 = vld [vmem:[#allocation3 + $0x111] sm:$0xff]
    %v4135 = vld [vmem:[#allocation3 + $0x121] sm:$0xff]
    %v4136 = vld [vmem:[#allocation3 + $0x129] sm:$0xff]
    %v4137 = vld [vmem:[#allocation3 + $0x139] sm:$0xff]
    %v4138 = vld [vmem:[#allocation3 + $0x141] sm:$0xff]
    %v4139 = vld [vmem:[#allocation3 + $0x151] sm:$0xff]
    %v4140 = vld [vmem:[#allocation3 + $0x159] sm:$0xff]
    %v4141 = vld [vmem:[#allocation3 + $0x169] sm:$0xff]
    %v4142 = vld [vmem:[#allocation3 + $0x171] sm:$0xff]
    %v4143 = vld [vmem:[#allocation3 + $0x1b1] sm:$0xff]
    %v4144 = vld [vmem:[#allocation3 + $0x1b9] sm:$0xff]
    %v4145 = vld [vmem:[#allocation3 + $0x1c9] sm:$0xff]
    %v4146 = vld [vmem:[#allocation3 + $0x1d1] sm:$0xff]
    %v4147 = vld [vmem:[#allocation3 + $0x1e1] sm:$0xff]
    %v4148 = vld [vmem:[#allocation3 + $0x1e9] sm:$0xff]
    %v4149 = vld [vmem:[#allocation3 + $0x1f9] sm:$0xff]
    %v4150 = vld [vmem:[#allocation3 + $0x201] sm:$0xff]
    %v4151 = vld [vmem:[#allocation3 + $0x211] sm:$0xff]
    %v4152 = vld [vmem:[#allocation3 + $0x219] sm:$0xff]
    %v4153 = vld [vmem:[#allocation3 + $0x229] sm:$0xff]
    %v4154 = vld [vmem:[#allocation3 + $0x231] sm:$0xff]
    %v4155 = vld [vmem:[#allocation3 + $0x241] sm:$0xff]
    %v4156 = vld [vmem:[#allocation3 + $0x249] sm:$0xff]
    %v4157 = vld [vmem:[#allocation3 + $0x259] sm:$0xff]
    %v4158 = vld [vmem:[#allocation3 + $0x261] sm:$0xff]
    %v4159 = vld [vmem:[#allocation3 + $0x271] sm:$0xff]
    %v4160 = vld [vmem:[#allocation3 + $0x279] sm:$0xff]
    %v4161 = vld [vmem:[#allocation3 + $0x289] sm:$0xff]
    %v4162 = vld [vmem:[#allocation3 + $0x291] sm:$0xff]
    %v4163 = vld [vmem:[#allocation3 + $0x2a1] sm:$0xff]
    %v4164 = vld [vmem:[#allocation3 + $0x2a9] sm:$0xff]
    %v4165 = vld [vmem:[#allocation3 + $0x2b9] sm:$0xff]
    %v4166 = vld [vmem:[#allocation3 + $0x2c1] sm:$0xff]
    %v4167 = vld [vmem:[#allocation3 + $0x2d1] sm:$0xff]
    %v4168 = vld [vmem:[#allocation3 + $0x2d9] sm:$0xff]
    %v4169 = vld [vmem:[#allocation3 + $0x2e9] sm:$0xff]
    %v4170 = vld [vmem:[#allocation3 + $0x2f1] sm:$0xff]
    %v4171 = vld [vmem:[#allocation3 + $0x301] sm:$0xff]
    %v4172 = vld [vmem:[#allocation3 + $0x309] sm:$0xff]
    %v4173 = vld [vmem:[#allocation3 + $0x319] sm:$0xff]
    %v4174 = vld [vmem:[#allocation3 + $0x321] sm:$0xff]
    %v4176 = vperm.slane %v3908, 0
    %v4178 = vmul.f32 %v4111, %v4176
    %v4179 = vmul.f32 %v4112, %v4176
    %v4180 = vmul.f32 %v4113, %v4176
    %v4181 = vmul.f32 %v4114, %v4176
    %v4182 = vmul.f32 %v4115, %v4176
    %v4183 = vmul.f32 %v4116, %v4176
    %v4184 = vmul.f32 %v4117, %v4176
    %v4185 = vmul.f32 %v4118, %v4176
    %v4186 = vmul.f32 %v4119, %v4176
    %v4187 = vmul.f32 %v4120, %v4176
    %v4188 = vmul.f32 %v4121, %v4176
    %v4189 = vmul.f32 %v4122, %v4176
    %v4190 = vmul.f32 %v4123, %v4176
    %v4191 = vmul.f32 %v4124, %v4176
    %v4192 = vmul.f32 %v4125, %v4176
    %v4193 = vmul.f32 %v4126, %v4176
    %v4194 = vmul.f32 %v4127, %v4176
    %v4195 = vmul.f32 %v4128, %v4176
    %v4196 = vmul.f32 %v4129, %v4176
    %v4197 = vmul.f32 %v4130, %v4176
    %v4198 = vmul.f32 %v4131, %v4176
    %v4199 = vmul.f32 %v4132, %v4176
    %v4200 = vmul.f32 %v4133, %v4176
    %v4201 = vmul.f32 %v4134, %v4176
    %v4202 = vmul.f32 %v4135, %v4176
    %v4203 = vmul.f32 %v4136, %v4176
    %v4204 = vmul.f32 %v4137, %v4176
    %v4205 = vmul.f32 %v4138, %v4176
    %v4206 = vmul.f32 %v4139, %v4176
    %v4207 = vmul.f32 %v4140, %v4176
    %v4208 = vmul.f32 %v4141, %v4176
    %v4209 = vmul.f32 %v4142, %v4176
    %v4210 = vmul.f32 %v4143, %v4176
    %v4211 = vmul.f32 %v4144, %v4176
    %v4212 = vmul.f32 %v4145, %v4176
    %v4213 = vmul.f32 %v4146, %v4176
    %v4214 = vmul.f32 %v4147, %v4176
    %v4215 = vmul.f32 %v4148, %v4176
    %v4216 = vmul.f32 %v4149, %v4176
    %v4217 = vmul.f32 %v4150, %v4176
    %v4218 = vmul.f32 %v4151, %v4176
    %v4219 = vmul.f32 %v4152, %v4176
    %v4220 = vmul.f32 %v4153, %v4176
    %v4221 = vmul.f32 %v4154, %v4176
    %v4222 = vmul.f32 %v4155, %v4176
    %v4223 = vmul.f32 %v4156, %v4176
    %v4224 = vmul.f32 %v4157, %v4176
    %v4225 = vmul.f32 %v4158, %v4176
    %v4226 = vmul.f32 %v4159, %v4176
    %v4227 = vmul.f32 %v4160, %v4176
    %v4228 = vmul.f32 %v4161, %v4176
    %v4229 = vmul.f32 %v4162, %v4176
    %v4230 = vmul.f32 %v4163, %v4176
    %v4231 = vmul.f32 %v4164, %v4176
    %v4232 = vmul.f32 %v4165, %v4176
    %v4233 = vmul.f32 %v4166, %v4176
    %v4234 = vmul.f32 %v4167, %v4176
    %v4235 = vmul.f32 %v4168, %v4176
    %v4236 = vmul.f32 %v4169, %v4176
    %v4237 = vmul.f32 %v4170, %v4176
    %v4238 = vmul.f32 %v4171, %v4176
    %v4239 = vmul.f32 %v4172, %v4176
    %v4240 = vmul.f32 %v4173, %v4176
    %v4241 = vmul.f32 %v4174, %v4176
    %v4242 = vadd.f32 %v4047, %v4178
    %v4243 = vadd.f32 %v4048, %v4179
    %v4244 = vadd.f32 %v4049, %v4180
    %v4245 = vadd.f32 %v4050, %v4181
    %v4246 = vadd.f32 %v4051, %v4182
    %v4247 = vadd.f32 %v4052, %v4183
    %v4248 = vadd.f32 %v4053, %v4184
    %v4249 = vadd.f32 %v4054, %v4185
    %v4250 = vadd.f32 %v4055, %v4186
    %v4251 = vadd.f32 %v4056, %v4187
    %v4252 = vadd.f32 %v4057, %v4188
    %v4253 = vadd.f32 %v4058, %v4189
    %v4254 = vadd.f32 %v4059, %v4190
    %v4255 = vadd.f32 %v4060, %v4191
    %v4256 = vadd.f32 %v4061, %v4192
    %v4257 = vadd.f32 %v4062, %v4193
    %v4258 = vadd.f32 %v4063, %v4194
    %v4259 = vadd.f32 %v4064, %v4195
    %v4260 = vadd.f32 %v4065, %v4196
    %v4261 = vadd.f32 %v4066, %v4197
    %v4262 = vadd.f32 %v4067, %v4198
    %v4263 = vadd.f32 %v4068, %v4199
    %v4264 = vadd.f32 %v4069, %v4200
    %v4265 = vadd.f32 %v4070, %v4201
    %v4266 = vadd.f32 %v4071, %v4202
    %v4267 = vadd.f32 %v4072, %v4203
    %v4268 = vadd.f32 %v4073, %v4204
    %v4269 = vadd.f32 %v4074, %v4205
    %v4270 = vadd.f32 %v4075, %v4206
    %v4271 = vadd.f32 %v4076, %v4207
    %v4272 = vadd.f32 %v4077, %v4208
    %v4273 = vadd.f32 %v4078, %v4209
    %v4274 = vadd.f32 %v4079, %v4210
    %v4275 = vadd.f32 %v4080, %v4211
    %v4276 = vadd.f32 %v4081, %v4212
    %v4277 = vadd.f32 %v4082, %v4213
    %v4278 = vadd.f32 %v4083, %v4214
    %v4279 = vadd.f32 %v4084, %v4215
    %v4280 = vadd.f32 %v4085, %v4216
    %v4281 = vadd.f32 %v4086, %v4217
    %v4282 = vadd.f32 %v4087, %v4218
    %v4283 = vadd.f32 %v4088, %v4219
    %v4284 = vadd.f32 %v4089, %v4220
    %v4285 = vadd.f32 %v4090, %v4221
    %v4286 = vadd.f32 %v4091, %v4222
    %v4287 = vadd.f32 %v4092, %v4223
    %v4288 = vadd.f32 %v4093, %v4224
    %v4289 = vadd.f32 %v4094, %v4225
    %v4290 = vadd.f32 %v4095, %v4226
    %v4291 = vadd.f32 %v4096, %v4227
    %v4292 = vadd.f32 %v4097, %v4228
    %v4293 = vadd.f32 %v4098, %v4229
    %v4294 = vadd.f32 %v4099, %v4230
    %v4295 = vadd.f32 %v4100, %v4231
    %v4296 = vadd.f32 %v4101, %v4232
    %v4297 = vadd.f32 %v4102, %v4233
    %v4298 = vadd.f32 %v4103, %v4234
    %v4299 = vadd.f32 %v4104, %v4235
    %v4300 = vadd.f32 %v4105, %v4236
    %v4301 = vadd.f32 %v4106, %v4237
    %v4302 = vadd.f32 %v4107, %v4238
    %v4303 = vadd.f32 %v4108, %v4239
    %v4304 = vadd.f32 %v4109, %v4240
    %v4305 = vadd.f32 %v4110, %v4241
    %v4306 = vld [vmem:[#allocation3 + $0x2] sm:$0xff]
    %v4307 = vld [vmem:[#allocation3 + $0xa] sm:$0xff]
    %v4308 = vld [vmem:[#allocation3 + $0x1a] sm:$0xff]
    %v4309 = vld [vmem:[#allocation3 + $0x22] sm:$0xff]
    %v4310 = vld [vmem:[#allocation3 + $0x32] sm:$0xff]
    %v4311 = vld [vmem:[#allocation3 + $0x3a] sm:$0xff]
    %v4312 = vld [vmem:[#allocation3 + $0x4a] sm:$0xff]
    %v4313 = vld [vmem:[#allocation3 + $0x52] sm:$0xff]
    %v4314 = vld [vmem:[#allocation3 + $0x62] sm:$0xff]
    %v4315 = vld [vmem:[#allocation3 + $0x6a] sm:$0xff]
    %v4316 = vld [vmem:[#allocation3 + $0x7a] sm:$0xff]
    %v4317 = vld [vmem:[#allocation3 + $0x82] sm:$0xff]
    %v4318 = vld [vmem:[#allocation3 + $0x92] sm:$0xff]
    %v4319 = vld [vmem:[#allocation3 + $0x9a] sm:$0xff]
    %v4320 = vld [vmem:[#allocation3 + $0xaa] sm:$0xff]
    %v4321 = vld [vmem:[#allocation3 + $0xb2] sm:$0xff]
    %v4322 = vld [vmem:[#allocation3 + $0xc2] sm:$0xff]
    %v4323 = vld [vmem:[#allocation3 + $0xca] sm:$0xff]
    %v4324 = vld [vmem:[#allocation3 + $0xda] sm:$0xff]
    %v4325 = vld [vmem:[#allocation3 + $0xe2] sm:$0xff]
    %v4326 = vld [vmem:[#allocation3 + $0xf2] sm:$0xff]
    %v4327 = vld [vmem:[#allocation3 + $0xfa] sm:$0xff]
    %v4328 = vld [vmem:[#allocation3 + $0x10a] sm:$0xff]
    %v4329 = vld [vmem:[#allocation3 + $0x112] sm:$0xff]
    %v4330 = vld [vmem:[#allocation3 + $0x122] sm:$0xff]
    %v4331 = vld [vmem:[#allocation3 + $0x12a] sm:$0xff]
    %v4332 = vld [vmem:[#allocation3 + $0x13a] sm:$0xff]
    %v4333 = vld [vmem:[#allocation3 + $0x142] sm:$0xff]
    %v4334 = vld [vmem:[#allocation3 + $0x152] sm:$0xff]
    %v4335 = vld [vmem:[#allocation3 + $0x15a] sm:$0xff]
    %v4336 = vld [vmem:[#allocation3 + $0x16a] sm:$0xff]
    %v4337 = vld [vmem:[#allocation3 + $0x172] sm:$0xff]
    %v4338 = vld [vmem:[#allocation3 + $0x1b2] sm:$0xff]
    %v4339 = vld [vmem:[#allocation3 + $0x1ba] sm:$0xff]
    %v4340 = vld [vmem:[#allocation3 + $0x1ca] sm:$0xff]
    %v4341 = vld [vmem:[#allocation3 + $0x1d2] sm:$0xff]
    %v4342 = vld [vmem:[#allocation3 + $0x1e2] sm:$0xff]
    %v4343 = vld [vmem:[#allocation3 + $0x1ea] sm:$0xff]
    %v4344 = vld [vmem:[#allocation3 + $0x1fa] sm:$0xff]
    %v4345 = vld [vmem:[#allocation3 + $0x202] sm:$0xff]
    %v4346 = vld [vmem:[#allocation3 + $0x212] sm:$0xff]
    %v4347 = vld [vmem:[#allocation3 + $0x21a] sm:$0xff]
    %v4348 = vld [vmem:[#allocation3 + $0x22a] sm:$0xff]
    %v4349 = vld [vmem:[#allocation3 + $0x232] sm:$0xff]
    %v4350 = vld [vmem:[#allocation3 + $0x242] sm:$0xff]
    %v4351 = vld [vmem:[#allocation3 + $0x24a] sm:$0xff]
    %v4352 = vld [vmem:[#allocation3 + $0x25a] sm:$0xff]
    %v4353 = vld [vmem:[#allocation3 + $0x262] sm:$0xff]
    %v4354 = vld [vmem:[#allocation3 + $0x272] sm:$0xff]
    %v4355 = vld [vmem:[#allocation3 + $0x27a] sm:$0xff]
    %v4356 = vld [vmem:[#allocation3 + $0x28a] sm:$0xff]
    %v4357 = vld [vmem:[#allocation3 + $0x292] sm:$0xff]
    %v4358 = vld [vmem:[#allocation3 + $0x2a2] sm:$0xff]
    %v4359 = vld [vmem:[#allocation3 + $0x2aa] sm:$0xff]
    %v4360 = vld [vmem:[#allocation3 + $0x2ba] sm:$0xff]
    %v4361 = vld [vmem:[#allocation3 + $0x2c2] sm:$0xff]
    %v4362 = vld [vmem:[#allocation3 + $0x2d2] sm:$0xff]
    %v4363 = vld [vmem:[#allocation3 + $0x2da] sm:$0xff]
    %v4364 = vld [vmem:[#allocation3 + $0x2ea] sm:$0xff]
    %v4365 = vld [vmem:[#allocation3 + $0x2f2] sm:$0xff]
    %v4366 = vld [vmem:[#allocation3 + $0x302] sm:$0xff]
    %v4367 = vld [vmem:[#allocation3 + $0x30a] sm:$0xff]
    %v4368 = vld [vmem:[#allocation3 + $0x31a] sm:$0xff]
    %v4369 = vld [vmem:[#allocation3 + $0x322] sm:$0xff]
    %v4371 = vperm.slane %v3909, 0
    %v4373 = vmul.f32 %v4306, %v4371
    %v4374 = vmul.f32 %v4307, %v4371
    %v4375 = vmul.f32 %v4308, %v4371
    %v4376 = vmul.f32 %v4309, %v4371
    %v4377 = vmul.f32 %v4310, %v4371
    %v4378 = vmul.f32 %v4311, %v4371
    %v4379 = vmul.f32 %v4312, %v4371
    %v4380 = vmul.f32 %v4313, %v4371
    %v4381 = vmul.f32 %v4314, %v4371
    %v4382 = vmul.f32 %v4315, %v4371
    %v4383 = vmul.f32 %v4316, %v4371
    %v4384 = vmul.f32 %v4317, %v4371
    %v4385 = vmul.f32 %v4318, %v4371
    %v4386 = vmul.f32 %v4319, %v4371
    %v4387 = vmul.f32 %v4320, %v4371
    %v4388 = vmul.f32 %v4321, %v4371
    %v4389 = vmul.f32 %v4322, %v4371
    %v4390 = vmul.f32 %v4323, %v4371
    %v4391 = vmul.f32 %v4324, %v4371
    %v4392 = vmul.f32 %v4325, %v4371
    %v4393 = vmul.f32 %v4326, %v4371
    %v4394 = vmul.f32 %v4327, %v4371
    %v4395 = vmul.f32 %v4328, %v4371
    %v4396 = vmul.f32 %v4329, %v4371
    %v4397 = vmul.f32 %v4330, %v4371
    %v4398 = vmul.f32 %v4331, %v4371
    %v4399 = vmul.f32 %v4332, %v4371
    %v4400 = vmul.f32 %v4333, %v4371
    %v4401 = vmul.f32 %v4334, %v4371
    %v4402 = vmul.f32 %v4335, %v4371
    %v4403 = vmul.f32 %v4336, %v4371
    %v4404 = vmul.f32 %v4337, %v4371
    %v4405 = vmul.f32 %v4338, %v4371
    %v4406 = vmul.f32 %v4339, %v4371
    %v4407 = vmul.f32 %v4340, %v4371
    %v4408 = vmul.f32 %v4341, %v4371
    %v4409 = vmul.f32 %v4342, %v4371
    %v4410 = vmul.f32 %v4343, %v4371
    %v4411 = vmul.f32 %v4344, %v4371
    %v4412 = vmul.f32 %v4345, %v4371
    %v4413 = vmul.f32 %v4346, %v4371
    %v4414 = vmul.f32 %v4347, %v4371
    %v4415 = vmul.f32 %v4348, %v4371
    %v4416 = vmul.f32 %v4349, %v4371
    %v4417 = vmul.f32 %v4350, %v4371
    %v4418 = vmul.f32 %v4351, %v4371
    %v4419 = vmul.f32 %v4352, %v4371
    %v4420 = vmul.f32 %v4353, %v4371
    %v4421 = vmul.f32 %v4354, %v4371
    %v4422 = vmul.f32 %v4355, %v4371
    %v4423 = vmul.f32 %v4356, %v4371
    %v4424 = vmul.f32 %v4357, %v4371
    %v4425 = vmul.f32 %v4358, %v4371
    %v4426 = vmul.f32 %v4359, %v4371
    %v4427 = vmul.f32 %v4360, %v4371
    %v4428 = vmul.f32 %v4361, %v4371
    %v4429 = vmul.f32 %v4362, %v4371
    %v4430 = vmul.f32 %v4363, %v4371
    %v4431 = vmul.f32 %v4364, %v4371
    %v4432 = vmul.f32 %v4365, %v4371
    %v4433 = vmul.f32 %v4366, %v4371
    %v4434 = vmul.f32 %v4367, %v4371
    %v4435 = vmul.f32 %v4368, %v4371
    %v4436 = vmul.f32 %v4369, %v4371
    %v4437 = vadd.f32 %v4242, %v4373
    %v4438 = vadd.f32 %v4243, %v4374
    %v4439 = vadd.f32 %v4244, %v4375
    %v4440 = vadd.f32 %v4245, %v4376
    %v4441 = vadd.f32 %v4246, %v4377
    %v4442 = vadd.f32 %v4247, %v4378
    %v4443 = vadd.f32 %v4248, %v4379
    %v4444 = vadd.f32 %v4249, %v4380
    %v4445 = vadd.f32 %v4250, %v4381
    %v4446 = vadd.f32 %v4251, %v4382
    %v4447 = vadd.f32 %v4252, %v4383
    %v4448 = vadd.f32 %v4253, %v4384
    %v4449 = vadd.f32 %v4254, %v4385
    %v4450 = vadd.f32 %v4255, %v4386
    %v4451 = vadd.f32 %v4256, %v4387
    %v4452 = vadd.f32 %v4257, %v4388
    %v4453 = vadd.f32 %v4258, %v4389
    %v4454 = vadd.f32 %v4259, %v4390
    %v4455 = vadd.f32 %v4260, %v4391
    %v4456 = vadd.f32 %v4261, %v4392
    %v4457 = vadd.f32 %v4262, %v4393
    %v4458 = vadd.f32 %v4263, %v4394
    %v4459 = vadd.f32 %v4264, %v4395
    %v4460 = vadd.f32 %v4265, %v4396
    %v4461 = vadd.f32 %v4266, %v4397
    %v4462 = vadd.f32 %v4267, %v4398
    %v4463 = vadd.f32 %v4268, %v4399
    %v4464 = vadd.f32 %v4269, %v4400
    %v4465 = vadd.f32 %v4270, %v4401
    %v4466 = vadd.f32 %v4271, %v4402
    %v4467 = vadd.f32 %v4272, %v4403
    %v4468 = vadd.f32 %v4273, %v4404
    %v4469 = vadd.f32 %v4274, %v4405
    %v4470 = vadd.f32 %v4275, %v4406
    %v4471 = vadd.f32 %v4276, %v4407
    %v4472 = vadd.f32 %v4277, %v4408
    %v4473 = vadd.f32 %v4278, %v4409
    %v4474 = vadd.f32 %v4279, %v4410
    %v4475 = vadd.f32 %v4280, %v4411
    %v4476 = vadd.f32 %v4281, %v4412
    %v4477 = vadd.f32 %v4282, %v4413
    %v4478 = vadd.f32 %v4283, %v4414
    %v4479 = vadd.f32 %v4284, %v4415
    %v4480 = vadd.f32 %v4285, %v4416
    %v4481 = vadd.f32 %v4286, %v4417
    %v4482 = vadd.f32 %v4287, %v4418
    %v4483 = vadd.f32 %v4288, %v4419
    %v4484 = vadd.f32 %v4289, %v4420
    %v4485 = vadd.f32 %v4290, %v4421
    %v4486 = vadd.f32 %v4291, %v4422
    %v4487 = vadd.f32 %v4292, %v4423
    %v4488 = vadd.f32 %v4293, %v4424
    %v4489 = vadd.f32 %v4294, %v4425
    %v4490 = vadd.f32 %v4295, %v4426
    %v4491 = vadd.f32 %v4296, %v4427
    %v4492 = vadd.f32 %v4297, %v4428
    %v4493 = vadd.f32 %v4298, %v4429
    %v4494 = vadd.f32 %v4299, %v4430
    %v4495 = vadd.f32 %v4300, %v4431
    %v4496 = vadd.f32 %v4301, %v4432
    %v4497 = vadd.f32 %v4302, %v4433
    %v4498 = vadd.f32 %v4303, %v4434
    %v4499 = vadd.f32 %v4304, %v4435
    %v4500 = vadd.f32 %v4305, %v4436
    %v4501 = vld [vmem:[%s3777] sm:$0xff]
    %v4502 = vld [vmem:[%s3777 + $0x8] sm:$0xff]
    %v4503 = vld [vmem:[%s3777 + $0x18] sm:$0xff]
    %v4504 = vld [vmem:[%s3777 + $0x20] sm:$0xff]
    %v4505 = vld [vmem:[%s3777 + $0x30] sm:$0xff]
    %v4506 = vld [vmem:[%s3777 + $0x38] sm:$0xff]
    %v4507 = vld [vmem:[%s3777 + $0x48] sm:$0xff]
    %v4508 = vld [vmem:[%s3777 + $0x50] sm:$0xff]
    %v4509 = vld [vmem:[%s3777 + $0x60] sm:$0xff]
    %v4510 = vld [vmem:[%s3777 + $0x68] sm:$0xff]
    %v4511 = vld [vmem:[%s3777 + $0x78] sm:$0xff]
    %v4512 = vld [vmem:[%s3777 + $0x80] sm:$0xff]
    %v4513 = vld [vmem:[%s3777 + $0x90] sm:$0xff]
    %v4514 = vld [vmem:[%s3777 + $0x98] sm:$0xff]
    %v4515 = vld [vmem:[%s3777 + $0xa8] sm:$0xff]
    %v4516 = vld [vmem:[%s3777 + $0xb0] sm:$0xff]
    %v4517 = vld [vmem:[%s3777 + $0xc0] sm:$0xff]
    %v4518 = vld [vmem:[%s3777 + $0xc8] sm:$0xff]
    %v4519 = vld [vmem:[%s3777 + $0xd8] sm:$0xff]
    %v4520 = vld [vmem:[%s3777 + $0xe0] sm:$0xff]
    %v4521 = vld [vmem:[%s3777 + $0xf0] sm:$0xff]
    %v4522 = vld [vmem:[%s3777 + $0xf8] sm:$0xff]
    %v4523 = vld [vmem:[%s3777 + $0x108] sm:$0xff]
    %v4524 = vld [vmem:[%s3777 + $0x110] sm:$0xff]
    %v4525 = vld [vmem:[%s3777 + $0x120] sm:$0xff]
    %v4526 = vld [vmem:[%s3777 + $0x128] sm:$0xff]
    %v4527 = vld [vmem:[%s3777 + $0x138] sm:$0xff]
    %v4528 = vld [vmem:[%s3777 + $0x140] sm:$0xff]
    %v4529 = vld [vmem:[%s3777 + $0x150] sm:$0xff]
    %v4530 = vld [vmem:[%s3777 + $0x158] sm:$0xff]
    %v4531 = vld [vmem:[%s3777 + $0x168] sm:$0xff]
    %v4532 = vld [vmem:[%s3777 + $0x170] sm:$0xff]
    %v4533 = vld [vmem:[%s3777 + $0x1b0] sm:$0xff]
    %v4534 = vld [vmem:[%s3777 + $0x1b8] sm:$0xff]
    %v4535 = vld [vmem:[%s3777 + $0x1c8] sm:$0xff]
    %v4536 = vld [vmem:[%s3777 + $0x1d0] sm:$0xff]
    %v4537 = vld [vmem:[%s3777 + $0x1e0] sm:$0xff]
    %v4538 = vld [vmem:[%s3777 + $0x1e8] sm:$0xff]
    %v4539 = vld [vmem:[%s3777 + $0x1f8] sm:$0xff]
    %v4540 = vld [vmem:[%s3777 + $0x200] sm:$0xff]
    %v4541 = vld [vmem:[%s3777 + $0x210] sm:$0xff]
    %v4542 = vld [vmem:[%s3777 + $0x218] sm:$0xff]
    %v4543 = vld [vmem:[%s3777 + $0x228] sm:$0xff]
    %v4544 = vld [vmem:[%s3777 + $0x230] sm:$0xff]
    %v4545 = vld [vmem:[%s3777 + $0x240] sm:$0xff]
    %v4546 = vld [vmem:[%s3777 + $0x248] sm:$0xff]
    %v4547 = vld [vmem:[%s3777 + $0x258] sm:$0xff]
    %v4548 = vld [vmem:[%s3777 + $0x260] sm:$0xff]
    %v4549 = vld [vmem:[%s3777 + $0x270] sm:$0xff]
    %v4550 = vld [vmem:[%s3777 + $0x278] sm:$0xff]
    %v4551 = vld [vmem:[%s3777 + $0x288] sm:$0xff]
    %v4552 = vld [vmem:[%s3777 + $0x290] sm:$0xff]
    %v4553 = vld [vmem:[%s3777 + $0x2a0] sm:$0xff]
    %v4554 = vld [vmem:[%s3777 + $0x2a8] sm:$0xff]
    %v4555 = vld [vmem:[%s3777 + $0x2b8] sm:$0xff]
    %v4556 = vld [vmem:[%s3777 + $0x2c0] sm:$0xff]
    %v4557 = vld [vmem:[%s3777 + $0x2d0] sm:$0xff]
    %v4558 = vld [vmem:[%s3777 + $0x2d8] sm:$0xff]
    %v4559 = vld [vmem:[%s3777 + $0x2e8] sm:$0xff]
    %v4560 = vld [vmem:[%s3777 + $0x2f0] sm:$0xff]
    %v4561 = vld [vmem:[%s3777 + $0x300] sm:$0xff]
    %v4562 = vld [vmem:[%s3777 + $0x308] sm:$0xff]
    %v4563 = vld [vmem:[%s3777 + $0x318] sm:$0xff]
    %v4564 = vld [vmem:[%s3777 + $0x320] sm:$0xff]
    %v4566 = vperm.slane %v3910, 0
    %v4568 = vmul.f32 %v4501, %v4566
    %v4569 = vmul.f32 %v4502, %v4566
    %v4570 = vmul.f32 %v4503, %v4566
    %v4571 = vmul.f32 %v4504, %v4566
    %v4572 = vmul.f32 %v4505, %v4566
    %v4573 = vmul.f32 %v4506, %v4566
    %v4574 = vmul.f32 %v4507, %v4566
    %v4575 = vmul.f32 %v4508, %v4566
    %v4576 = vmul.f32 %v4509, %v4566
    %v4577 = vmul.f32 %v4510, %v4566
    %v4578 = vmul.f32 %v4511, %v4566
    %v4579 = vmul.f32 %v4512, %v4566
    %v4580 = vmul.f32 %v4513, %v4566
    %v4581 = vmul.f32 %v4514, %v4566
    %v4582 = vmul.f32 %v4515, %v4566
    %v4583 = vmul.f32 %v4516, %v4566
    %v4584 = vmul.f32 %v4517, %v4566
    %v4585 = vmul.f32 %v4518, %v4566
    %v4586 = vmul.f32 %v4519, %v4566
    %v4587 = vmul.f32 %v4520, %v4566
    %v4588 = vmul.f32 %v4521, %v4566
    %v4589 = vmul.f32 %v4522, %v4566
    %v4590 = vmul.f32 %v4523, %v4566
    %v4591 = vmul.f32 %v4524, %v4566
    %v4592 = vmul.f32 %v4525, %v4566
    %v4593 = vmul.f32 %v4526, %v4566
    %v4594 = vmul.f32 %v4527, %v4566
    %v4595 = vmul.f32 %v4528, %v4566
    %v4596 = vmul.f32 %v4529, %v4566
    %v4597 = vmul.f32 %v4530, %v4566
    %v4598 = vmul.f32 %v4531, %v4566
    %v4599 = vmul.f32 %v4532, %v4566
    %v4600 = vmul.f32 %v4533, %v4566
    %v4601 = vmul.f32 %v4534, %v4566
    %v4602 = vmul.f32 %v4535, %v4566
    %v4603 = vmul.f32 %v4536, %v4566
    %v4604 = vmul.f32 %v4537, %v4566
    %v4605 = vmul.f32 %v4538, %v4566
    %v4606 = vmul.f32 %v4539, %v4566
    %v4607 = vmul.f32 %v4540, %v4566
    %v4608 = vmul.f32 %v4541, %v4566
    %v4609 = vmul.f32 %v4542, %v4566
    %v4610 = vmul.f32 %v4543, %v4566
    %v4611 = vmul.f32 %v4544, %v4566
    %v4612 = vmul.f32 %v4545, %v4566
    %v4613 = vmul.f32 %v4546, %v4566
    %v4614 = vmul.f32 %v4547, %v4566
    %v4615 = vmul.f32 %v4548, %v4566
    %v4616 = vmul.f32 %v4549, %v4566
    %v4617 = vmul.f32 %v4550, %v4566
    %v4618 = vmul.f32 %v4551, %v4566
    %v4619 = vmul.f32 %v4552, %v4566
    %v4620 = vmul.f32 %v4553, %v4566
    %v4621 = vmul.f32 %v4554, %v4566
    %v4622 = vmul.f32 %v4555, %v4566
    %v4623 = vmul.f32 %v4556, %v4566
    %v4624 = vmul.f32 %v4557, %v4566
    %v4625 = vmul.f32 %v4558, %v4566
    %v4626 = vmul.f32 %v4559, %v4566
    %v4627 = vmul.f32 %v4560, %v4566
    %v4628 = vmul.f32 %v4561, %v4566
    %v4629 = vmul.f32 %v4562, %v4566
    %v4630 = vmul.f32 %v4563, %v4566
    %v4631 = vmul.f32 %v4564, %v4566
    %v4632 = vadd.f32 %v4437, %v4568
    %v4633 = vadd.f32 %v4438, %v4569
    %v4634 = vadd.f32 %v4439, %v4570
    %v4635 = vadd.f32 %v4440, %v4571
    %v4636 = vadd.f32 %v4441, %v4572
    %v4637 = vadd.f32 %v4442, %v4573
    %v4638 = vadd.f32 %v4443, %v4574
    %v4639 = vadd.f32 %v4444, %v4575
    %v4640 = vadd.f32 %v4445, %v4576
    %v4641 = vadd.f32 %v4446, %v4577
    %v4642 = vadd.f32 %v4447, %v4578
    %v4643 = vadd.f32 %v4448, %v4579
    %v4644 = vadd.f32 %v4449, %v4580
    %v4645 = vadd.f32 %v4450, %v4581
    %v4646 = vadd.f32 %v4451, %v4582
    %v4647 = vadd.f32 %v4452, %v4583
    %v4648 = vadd.f32 %v4453, %v4584
    %v4649 = vadd.f32 %v4454, %v4585
    %v4650 = vadd.f32 %v4455, %v4586
    %v4651 = vadd.f32 %v4456, %v4587
    %v4652 = vadd.f32 %v4457, %v4588
    %v4653 = vadd.f32 %v4458, %v4589
    %v4654 = vadd.f32 %v4459, %v4590
    %v4655 = vadd.f32 %v4460, %v4591
    %v4656 = vadd.f32 %v4461, %v4592
    %v4657 = vadd.f32 %v4462, %v4593
    %v4658 = vadd.f32 %v4463, %v4594
    %v4659 = vadd.f32 %v4464, %v4595
    %v4660 = vadd.f32 %v4465, %v4596
    %v4661 = vadd.f32 %v4466, %v4597
    %v4662 = vadd.f32 %v4467, %v4598
    %v4663 = vadd.f32 %v4468, %v4599
    %v4664 = vadd.f32 %v4469, %v4600
    %v4665 = vadd.f32 %v4470, %v4601
    %v4666 = vadd.f32 %v4471, %v4602
    %v4667 = vadd.f32 %v4472, %v4603
    %v4668 = vadd.f32 %v4473, %v4604
    %v4669 = vadd.f32 %v4474, %v4605
    %v4670 = vadd.f32 %v4475, %v4606
    %v4671 = vadd.f32 %v4476, %v4607
    %v4672 = vadd.f32 %v4477, %v4608
    %v4673 = vadd.f32 %v4478, %v4609
    %v4674 = vadd.f32 %v4479, %v4610
    %v4675 = vadd.f32 %v4480, %v4611
    %v4676 = vadd.f32 %v4481, %v4612
    %v4677 = vadd.f32 %v4482, %v4613
    %v4678 = vadd.f32 %v4483, %v4614
    %v4679 = vadd.f32 %v4484, %v4615
    %v4680 = vadd.f32 %v4485, %v4616
    %v4681 = vadd.f32 %v4486, %v4617
    %v4682 = vadd.f32 %v4487, %v4618
    %v4683 = vadd.f32 %v4488, %v4619
    %v4684 = vadd.f32 %v4489, %v4620
    %v4685 = vadd.f32 %v4490, %v4621
    %v4686 = vadd.f32 %v4491, %v4622
    %v4687 = vadd.f32 %v4492, %v4623
    %v4688 = vadd.f32 %v4493, %v4624
    %v4689 = vadd.f32 %v4494, %v4625
    %v4690 = vadd.f32 %v4495, %v4626
    %v4691 = vadd.f32 %v4496, %v4627
    %v4692 = vadd.f32 %v4497, %v4628
    %v4693 = vadd.f32 %v4498, %v4629
    %v4694 = vadd.f32 %v4499, %v4630
    %v4695 = vadd.f32 %v4500, %v4631
    %v4696 = vld [vmem:[%s3777 + $0x1] sm:$0xff]
    %v4697 = vld [vmem:[%s3777 + $0x9] sm:$0xff]
    %v4698 = vld [vmem:[%s3777 + $0x19] sm:$0xff]
    %v4699 = vld [vmem:[%s3777 + $0x21] sm:$0xff]
    %v4700 = vld [vmem:[%s3777 + $0x31] sm:$0xff]
    %v4701 = vld [vmem:[%s3777 + $0x39] sm:$0xff]
    %v4702 = vld [vmem:[%s3777 + $0x49] sm:$0xff]
    %v4703 = vld [vmem:[%s3777 + $0x51] sm:$0xff]
    %v4704 = vld [vmem:[%s3777 + $0x61] sm:$0xff]
    %v4705 = vld [vmem:[%s3777 + $0x69] sm:$0xff]
    %v4706 = vld [vmem:[%s3777 + $0x79] sm:$0xff]
    %v4707 = vld [vmem:[%s3777 + $0x81] sm:$0xff]
    %v4708 = vld [vmem:[%s3777 + $0x91] sm:$0xff]
    %v4709 = vld [vmem:[%s3777 + $0x99] sm:$0xff]
    %v4710 = vld [vmem:[%s3777 + $0xa9] sm:$0xff]
    %v4711 = vld [vmem:[%s3777 + $0xb1] sm:$0xff]
    %v4712 = vld [vmem:[%s3777 + $0xc1] sm:$0xff]
    %v4713 = vld [vmem:[%s3777 + $0xc9] sm:$0xff]
    %v4714 = vld [vmem:[%s3777 + $0xd9] sm:$0xff]
    %v4715 = vld [vmem:[%s3777 + $0xe1] sm:$0xff]
    %v4716 = vld [vmem:[%s3777 + $0xf1] sm:$0xff]
    %v4717 = vld [vmem:[%s3777 + $0xf9] sm:$0xff]
    %v4718 = vld [vmem:[%s3777 + $0x109] sm:$0xff]
    %v4719 = vld [vmem:[%s3777 + $0x111] sm:$0xff]
    %v4720 = vld [vmem:[%s3777 + $0x121] sm:$0xff]
    %v4721 = vld [vmem:[%s3777 + $0x129] sm:$0xff]
    %v4722 = vld [vmem:[%s3777 + $0x139] sm:$0xff]
    %v4723 = vld [vmem:[%s3777 + $0x141] sm:$0xff]
    %v4724 = vld [vmem:[%s3777 + $0x151] sm:$0xff]
    %v4725 = vld [vmem:[%s3777 + $0x159] sm:$0xff]
    %v4726 = vld [vmem:[%s3777 + $0x169] sm:$0xff]
    %v4727 = vld [vmem:[%s3777 + $0x171] sm:$0xff]
    %v4728 = vld [vmem:[%s3777 + $0x1b1] sm:$0xff]
    %v4729 = vld [vmem:[%s3777 + $0x1b9] sm:$0xff]
    %v4730 = vld [vmem:[%s3777 + $0x1c9] sm:$0xff]
    %v4731 = vld [vmem:[%s3777 + $0x1d1] sm:$0xff]
    %v4732 = vld [vmem:[%s3777 + $0x1e1] sm:$0xff]
    %v4733 = vld [vmem:[%s3777 + $0x1e9] sm:$0xff]
    %v4734 = vld [vmem:[%s3777 + $0x1f9] sm:$0xff]
    %v4735 = vld [vmem:[%s3777 + $0x201] sm:$0xff]
    %v4736 = vld [vmem:[%s3777 + $0x211] sm:$0xff]
    %v4737 = vld [vmem:[%s3777 + $0x219] sm:$0xff]
    %v4738 = vld [vmem:[%s3777 + $0x229] sm:$0xff]
    %v4739 = vld [vmem:[%s3777 + $0x231] sm:$0xff]
    %v4740 = vld [vmem:[%s3777 + $0x241] sm:$0xff]
    %v4741 = vld [vmem:[%s3777 + $0x249] sm:$0xff]
    %v4742 = vld [vmem:[%s3777 + $0x259] sm:$0xff]
    %v4743 = vld [vmem:[%s3777 + $0x261] sm:$0xff]
    %v4744 = vld [vmem:[%s3777 + $0x271] sm:$0xff]
    %v4745 = vld [vmem:[%s3777 + $0x279] sm:$0xff]
    %v4746 = vld [vmem:[%s3777 + $0x289] sm:$0xff]
    %v4747 = vld [vmem:[%s3777 + $0x291] sm:$0xff]
    %v4748 = vld [vmem:[%s3777 + $0x2a1] sm:$0xff]
    %v4749 = vld [vmem:[%s3777 + $0x2a9] sm:$0xff]
    %v4750 = vld [vmem:[%s3777 + $0x2b9] sm:$0xff]
    %v4751 = vld [vmem:[%s3777 + $0x2c1] sm:$0xff]
    %v4752 = vld [vmem:[%s3777 + $0x2d1] sm:$0xff]
    %v4753 = vld [vmem:[%s3777 + $0x2d9] sm:$0xff]
    %v4754 = vld [vmem:[%s3777 + $0x2e9] sm:$0xff]
    %v4755 = vld [vmem:[%s3777 + $0x2f1] sm:$0xff]
    %v4756 = vld [vmem:[%s3777 + $0x301] sm:$0xff]
    %v4757 = vld [vmem:[%s3777 + $0x309] sm:$0xff]
    %v4758 = vld [vmem:[%s3777 + $0x319] sm:$0xff]
    %v4759 = vld [vmem:[%s3777 + $0x321] sm:$0xff]
    %v4761 = vperm.slane %v3911, 0
    %v4763 = vmul.f32 %v4696, %v4761
    %v4764 = vmul.f32 %v4697, %v4761
    %v4765 = vmul.f32 %v4698, %v4761
    %v4766 = vmul.f32 %v4699, %v4761
    %v4767 = vmul.f32 %v4700, %v4761
    %v4768 = vmul.f32 %v4701, %v4761
    %v4769 = vmul.f32 %v4702, %v4761
    %v4770 = vmul.f32 %v4703, %v4761
    %v4771 = vmul.f32 %v4704, %v4761
    %v4772 = vmul.f32 %v4705, %v4761
    %v4773 = vmul.f32 %v4706, %v4761
    %v4774 = vmul.f32 %v4707, %v4761
    %v4775 = vmul.f32 %v4708, %v4761
    %v4776 = vmul.f32 %v4709, %v4761
    %v4777 = vmul.f32 %v4710, %v4761
    %v4778 = vmul.f32 %v4711, %v4761
    %v4779 = vmul.f32 %v4712, %v4761
    %v4780 = vmul.f32 %v4713, %v4761
    %v4781 = vmul.f32 %v4714, %v4761
    %v4782 = vmul.f32 %v4715, %v4761
    %v4783 = vmul.f32 %v4716, %v4761
    %v4784 = vmul.f32 %v4717, %v4761
    %v4785 = vmul.f32 %v4718, %v4761
    %v4786 = vmul.f32 %v4719, %v4761
    %v4787 = vmul.f32 %v4720, %v4761
    %v4788 = vmul.f32 %v4721, %v4761
    %v4789 = vmul.f32 %v4722, %v4761
    %v4790 = vmul.f32 %v4723, %v4761
    %v4791 = vmul.f32 %v4724, %v4761
    %v4792 = vmul.f32 %v4725, %v4761
    %v4793 = vmul.f32 %v4726, %v4761
    %v4794 = vmul.f32 %v4727, %v4761
    %v4795 = vmul.f32 %v4728, %v4761
    %v4796 = vmul.f32 %v4729, %v4761
    %v4797 = vmul.f32 %v4730, %v4761
    %v4798 = vmul.f32 %v4731, %v4761
    %v4799 = vmul.f32 %v4732, %v4761
    %v4800 = vmul.f32 %v4733, %v4761
    %v4801 = vmul.f32 %v4734, %v4761
    %v4802 = vmul.f32 %v4735, %v4761
    %v4803 = vmul.f32 %v4736, %v4761
    %v4804 = vmul.f32 %v4737, %v4761
    %v4805 = vmul.f32 %v4738, %v4761
    %v4806 = vmul.f32 %v4739, %v4761
    %v4807 = vmul.f32 %v4740, %v4761
    %v4808 = vmul.f32 %v4741, %v4761
    %v4809 = vmul.f32 %v4742, %v4761
    %v4810 = vmul.f32 %v4743, %v4761
    %v4811 = vmul.f32 %v4744, %v4761
    %v4812 = vmul.f32 %v4745, %v4761
    %v4813 = vmul.f32 %v4746, %v4761
    %v4814 = vmul.f32 %v4747, %v4761
    %v4815 = vmul.f32 %v4748, %v4761
    %v4816 = vmul.f32 %v4749, %v4761
    %v4817 = vmul.f32 %v4750, %v4761
    %v4818 = vmul.f32 %v4751, %v4761
    %v4819 = vmul.f32 %v4752, %v4761
    %v4820 = vmul.f32 %v4753, %v4761
    %v4821 = vmul.f32 %v4754, %v4761
    %v4822 = vmul.f32 %v4755, %v4761
    %v4823 = vmul.f32 %v4756, %v4761
    %v4824 = vmul.f32 %v4757, %v4761
    %v4825 = vmul.f32 %v4758, %v4761
    %v4826 = vmul.f32 %v4759, %v4761
    %v4827 = vadd.f32 %v4632, %v4763
    %v4828 = vadd.f32 %v4633, %v4764
    %v4829 = vadd.f32 %v4634, %v4765
    %v4830 = vadd.f32 %v4635, %v4766
    %v4831 = vadd.f32 %v4636, %v4767
    %v4832 = vadd.f32 %v4637, %v4768
    %v4833 = vadd.f32 %v4638, %v4769
    %v4834 = vadd.f32 %v4639, %v4770
    %v4835 = vadd.f32 %v4640, %v4771
    %v4836 = vadd.f32 %v4641, %v4772
    %v4837 = vadd.f32 %v4642, %v4773
    %v4838 = vadd.f32 %v4643, %v4774
    %v4839 = vadd.f32 %v4644, %v4775
    %v4840 = vadd.f32 %v4645, %v4776
    %v4841 = vadd.f32 %v4646, %v4777
    %v4842 = vadd.f32 %v4647, %v4778
    %v4843 = vadd.f32 %v4648, %v4779
    %v4844 = vadd.f32 %v4649, %v4780
    %v4845 = vadd.f32 %v4650, %v4781
    %v4846 = vadd.f32 %v4651, %v4782
    %v4847 = vadd.f32 %v4652, %v4783
    %v4848 = vadd.f32 %v4653, %v4784
    %v4849 = vadd.f32 %v4654, %v4785
    %v4850 = vadd.f32 %v4655, %v4786
    %v4851 = vadd.f32 %v4656, %v4787
    %v4852 = vadd.f32 %v4657, %v4788
    %v4853 = vadd.f32 %v4658, %v4789
    %v4854 = vadd.f32 %v4659, %v4790
    %v4855 = vadd.f32 %v4660, %v4791
    %v4856 = vadd.f32 %v4661, %v4792
    %v4857 = vadd.f32 %v4662, %v4793
    %v4858 = vadd.f32 %v4663, %v4794
    %v4859 = vadd.f32 %v4664, %v4795
    %v4860 = vadd.f32 %v4665, %v4796
    %v4861 = vadd.f32 %v4666, %v4797
    %v4862 = vadd.f32 %v4667, %v4798
    %v4863 = vadd.f32 %v4668, %v4799
    %v4864 = vadd.f32 %v4669, %v4800
    %v4865 = vadd.f32 %v4670, %v4801
    %v4866 = vadd.f32 %v4671, %v4802
    %v4867 = vadd.f32 %v4672, %v4803
    %v4868 = vadd.f32 %v4673, %v4804
    %v4869 = vadd.f32 %v4674, %v4805
    %v4870 = vadd.f32 %v4675, %v4806
    %v4871 = vadd.f32 %v4676, %v4807
    %v4872 = vadd.f32 %v4677, %v4808
    %v4873 = vadd.f32 %v4678, %v4809
    %v4874 = vadd.f32 %v4679, %v4810
    %v4875 = vadd.f32 %v4680, %v4811
    %v4876 = vadd.f32 %v4681, %v4812
    %v4877 = vadd.f32 %v4682, %v4813
    %v4878 = vadd.f32 %v4683, %v4814
    %v4879 = vadd.f32 %v4684, %v4815
    %v4880 = vadd.f32 %v4685, %v4816
    %v4881 = vadd.f32 %v4686, %v4817
    %v4882 = vadd.f32 %v4687, %v4818
    %v4883 = vadd.f32 %v4688, %v4819
    %v4884 = vadd.f32 %v4689, %v4820
    %v4885 = vadd.f32 %v4690, %v4821
    %v4886 = vadd.f32 %v4691, %v4822
    %v4887 = vadd.f32 %v4692, %v4823
    %v4888 = vadd.f32 %v4693, %v4824
    %v4889 = vadd.f32 %v4694, %v4825
    %v4890 = vadd.f32 %v4695, %v4826
    %v4891 = vld [vmem:[%s3777 + $0x2] sm:$0xff]
    %v4892 = vld [vmem:[%s3777 + $0xa] sm:$0xff]
    %v4893 = vld [vmem:[%s3777 + $0x1a] sm:$0xff]
    %v4894 = vld [vmem:[%s3777 + $0x22] sm:$0xff]
    %v4895 = vld [vmem:[%s3777 + $0x32] sm:$0xff]
    %v4896 = vld [vmem:[%s3777 + $0x3a] sm:$0xff]
    %v4897 = vld [vmem:[%s3777 + $0x4a] sm:$0xff]
    %v4898 = vld [vmem:[%s3777 + $0x52] sm:$0xff]
    %v4899 = vld [vmem:[%s3777 + $0x62] sm:$0xff]
    %v4900 = vld [vmem:[%s3777 + $0x6a] sm:$0xff]
    %v4901 = vld [vmem:[%s3777 + $0x7a] sm:$0xff]
    %v4902 = vld [vmem:[%s3777 + $0x82] sm:$0xff]
    %v4903 = vld [vmem:[%s3777 + $0x92] sm:$0xff]
    %v4904 = vld [vmem:[%s3777 + $0x9a] sm:$0xff]
    %v4905 = vld [vmem:[%s3777 + $0xaa] sm:$0xff]
    %v4906 = vld [vmem:[%s3777 + $0xb2] sm:$0xff]
    %v4907 = vld [vmem:[%s3777 + $0xc2] sm:$0xff]
    %v4908 = vld [vmem:[%s3777 + $0xca] sm:$0xff]
    %v4909 = vld [vmem:[%s3777 + $0xda] sm:$0xff]
    %v4910 = vld [vmem:[%s3777 + $0xe2] sm:$0xff]
    %v4911 = vld [vmem:[%s3777 + $0xf2] sm:$0xff]
    %v4912 = vld [vmem:[%s3777 + $0xfa] sm:$0xff]
    %v4913 = vld [vmem:[%s3777 + $0x10a] sm:$0xff]
    %v4914 = vld [vmem:[%s3777 + $0x112] sm:$0xff]
    %v4915 = vld [vmem:[%s3777 + $0x122] sm:$0xff]
    %v4916 = vld [vmem:[%s3777 + $0x12a] sm:$0xff]
    %v4917 = vld [vmem:[%s3777 + $0x13a] sm:$0xff]
    %v4918 = vld [vmem:[%s3777 + $0x142] sm:$0xff]
    %v4919 = vld [vmem:[%s3777 + $0x152] sm:$0xff]
    %v4920 = vld [vmem:[%s3777 + $0x15a] sm:$0xff]
    %v4921 = vld [vmem:[%s3777 + $0x16a] sm:$0xff]
    %v4922 = vld [vmem:[%s3777 + $0x172] sm:$0xff]
    %v4923 = vld [vmem:[%s3777 + $0x1b2] sm:$0xff]
    %v4924 = vld [vmem:[%s3777 + $0x1ba] sm:$0xff]
    %v4925 = vld [vmem:[%s3777 + $0x1ca] sm:$0xff]
    %v4926 = vld [vmem:[%s3777 + $0x1d2] sm:$0xff]
    %v4927 = vld [vmem:[%s3777 + $0x1e2] sm:$0xff]
    %v4928 = vld [vmem:[%s3777 + $0x1ea] sm:$0xff]
    %v4929 = vld [vmem:[%s3777 + $0x1fa] sm:$0xff]
    %v4930 = vld [vmem:[%s3777 + $0x202] sm:$0xff]
    %v4931 = vld [vmem:[%s3777 + $0x212] sm:$0xff]
    %v4932 = vld [vmem:[%s3777 + $0x21a] sm:$0xff]
    %v4933 = vld [vmem:[%s3777 + $0x22a] sm:$0xff]
    %v4934 = vld [vmem:[%s3777 + $0x232] sm:$0xff]
    %v4935 = vld [vmem:[%s3777 + $0x242] sm:$0xff]
    %v4936 = vld [vmem:[%s3777 + $0x24a] sm:$0xff]
    %v4937 = vld [vmem:[%s3777 + $0x25a] sm:$0xff]
    %v4938 = vld [vmem:[%s3777 + $0x262] sm:$0xff]
    %v4939 = vld [vmem:[%s3777 + $0x272] sm:$0xff]
    %v4940 = vld [vmem:[%s3777 + $0x27a] sm:$0xff]
    %v4941 = vld [vmem:[%s3777 + $0x28a] sm:$0xff]
    %v4942 = vld [vmem:[%s3777 + $0x292] sm:$0xff]
    %v4943 = vld [vmem:[%s3777 + $0x2a2] sm:$0xff]
    %v4944 = vld [vmem:[%s3777 + $0x2aa] sm:$0xff]
    %v4945 = vld [vmem:[%s3777 + $0x2ba] sm:$0xff]
    %v4946 = vld [vmem:[%s3777 + $0x2c2] sm:$0xff]
    %v4947 = vld [vmem:[%s3777 + $0x2d2] sm:$0xff]
    %v4948 = vld [vmem:[%s3777 + $0x2da] sm:$0xff]
    %v4949 = vld [vmem:[%s3777 + $0x2ea] sm:$0xff]
    %v4950 = vld [vmem:[%s3777 + $0x2f2] sm:$0xff]
    %v4951 = vld [vmem:[%s3777 + $0x302] sm:$0xff]
    %v4952 = vld [vmem:[%s3777 + $0x30a] sm:$0xff]
    %v4953 = vld [vmem:[%s3777 + $0x31a] sm:$0xff]
    %v4954 = vld [vmem:[%s3777 + $0x322] sm:$0xff]
    %v4956 = vperm.slane %v3912, 0
    %v4958 = vmul.f32 %v4891, %v4956
    %v4959 = vmul.f32 %v4892, %v4956
    %v4960 = vmul.f32 %v4893, %v4956
    %v4961 = vmul.f32 %v4894, %v4956
    %v4962 = vmul.f32 %v4895, %v4956
    %v4963 = vmul.f32 %v4896, %v4956
    %v4964 = vmul.f32 %v4897, %v4956
    %v4965 = vmul.f32 %v4898, %v4956
    %v4966 = vmul.f32 %v4899, %v4956
    %v4967 = vmul.f32 %v4900, %v4956
    %v4968 = vmul.f32 %v4901, %v4956
    %v4969 = vmul.f32 %v4902, %v4956
    %v4970 = vmul.f32 %v4903, %v4956
    %v4971 = vmul.f32 %v4904, %v4956
    %v4972 = vmul.f32 %v4905, %v4956
    %v4973 = vmul.f32 %v4906, %v4956
    %v4974 = vmul.f32 %v4907, %v4956
    %v4975 = vmul.f32 %v4908, %v4956
    %v4976 = vmul.f32 %v4909, %v4956
    %v4977 = vmul.f32 %v4910, %v4956
    %v4978 = vmul.f32 %v4911, %v4956
    %v4979 = vmul.f32 %v4912, %v4956
    %v4980 = vmul.f32 %v4913, %v4956
    %v4981 = vmul.f32 %v4914, %v4956
    %v4982 = vmul.f32 %v4915, %v4956
    %v4983 = vmul.f32 %v4916, %v4956
    %v4984 = vmul.f32 %v4917, %v4956
    %v4985 = vmul.f32 %v4918, %v4956
    %v4986 = vmul.f32 %v4919, %v4956
    %v4987 = vmul.f32 %v4920, %v4956
    %v4988 = vmul.f32 %v4921, %v4956
    %v4989 = vmul.f32 %v4922, %v4956
    %v4990 = vmul.f32 %v4923, %v4956
    %v4991 = vmul.f32 %v4924, %v4956
    %v4992 = vmul.f32 %v4925, %v4956
    %v4993 = vmul.f32 %v4926, %v4956
    %v4994 = vmul.f32 %v4927, %v4956
    %v4995 = vmul.f32 %v4928, %v4956
    %v4996 = vmul.f32 %v4929, %v4956
    %v4997 = vmul.f32 %v4930, %v4956
    %v4998 = vmul.f32 %v4931, %v4956
    %v4999 = vmul.f32 %v4932, %v4956
    %v5000 = vmul.f32 %v4933, %v4956
    %v5001 = vmul.f32 %v4934, %v4956
    %v5002 = vmul.f32 %v4935, %v4956
    %v5003 = vmul.f32 %v4936, %v4956
    %v5004 = vmul.f32 %v4937, %v4956
    %v5005 = vmul.f32 %v4938, %v4956
    %v5006 = vmul.f32 %v4939, %v4956
    %v5007 = vmul.f32 %v4940, %v4956
    %v5008 = vmul.f32 %v4941, %v4956
    %v5009 = vmul.f32 %v4942, %v4956
    %v5010 = vmul.f32 %v4943, %v4956
    %v5011 = vmul.f32 %v4944, %v4956
    %v5012 = vmul.f32 %v4945, %v4956
    %v5013 = vmul.f32 %v4946, %v4956
    %v5014 = vmul.f32 %v4947, %v4956
    %v5015 = vmul.f32 %v4948, %v4956
    %v5016 = vmul.f32 %v4949, %v4956
    %v5017 = vmul.f32 %v4950, %v4956
    %v5018 = vmul.f32 %v4951, %v4956
    %v5019 = vmul.f32 %v4952, %v4956
    %v5020 = vmul.f32 %v4953, %v4956
    %v5021 = vmul.f32 %v4954, %v4956
    %v5022 = vadd.f32 %v4827, %v4958
    %v5023 = vadd.f32 %v4828, %v4959
    %v5024 = vadd.f32 %v4829, %v4960
    %v5025 = vadd.f32 %v4830, %v4961
    %v5026 = vadd.f32 %v4831, %v4962
    %v5027 = vadd.f32 %v4832, %v4963
    %v5028 = vadd.f32 %v4833, %v4964
    %v5029 = vadd.f32 %v4834, %v4965
    %v5030 = vadd.f32 %v4835, %v4966
    %v5031 = vadd.f32 %v4836, %v4967
    %v5032 = vadd.f32 %v4837, %v4968
    %v5033 = vadd.f32 %v4838, %v4969
    %v5034 = vadd.f32 %v4839, %v4970
    %v5035 = vadd.f32 %v4840, %v4971
    %v5036 = vadd.f32 %v4841, %v4972
    %v5037 = vadd.f32 %v4842, %v4973
    %v5038 = vadd.f32 %v4843, %v4974
    %v5039 = vadd.f32 %v4844, %v4975
    %v5040 = vadd.f32 %v4845, %v4976
    %v5041 = vadd.f32 %v4846, %v4977
    %v5042 = vadd.f32 %v4847, %v4978
    %v5043 = vadd.f32 %v4848, %v4979
    %v5044 = vadd.f32 %v4849, %v4980
    %v5045 = vadd.f32 %v4850, %v4981
    %v5046 = vadd.f32 %v4851, %v4982
    %v5047 = vadd.f32 %v4852, %v4983
    %v5048 = vadd.f32 %v4853, %v4984
    %v5049 = vadd.f32 %v4854, %v4985
    %v5050 = vadd.f32 %v4855, %v4986
    %v5051 = vadd.f32 %v4856, %v4987
    %v5052 = vadd.f32 %v4857, %v4988
    %v5053 = vadd.f32 %v4858, %v4989
    %v5054 = vadd.f32 %v4859, %v4990
    %v5055 = vadd.f32 %v4860, %v4991
    %v5056 = vadd.f32 %v4861, %v4992
    %v5057 = vadd.f32 %v4862, %v4993
    %v5058 = vadd.f32 %v4863, %v4994
    %v5059 = vadd.f32 %v4864, %v4995
    %v5060 = vadd.f32 %v4865, %v4996
    %v5061 = vadd.f32 %v4866, %v4997
    %v5062 = vadd.f32 %v4867, %v4998
    %v5063 = vadd.f32 %v4868, %v4999
    %v5064 = vadd.f32 %v4869, %v5000
    %v5065 = vadd.f32 %v4870, %v5001
    %v5066 = vadd.f32 %v4871, %v5002
    %v5067 = vadd.f32 %v4872, %v5003
    %v5068 = vadd.f32 %v4873, %v5004
    %v5069 = vadd.f32 %v4874, %v5005
    %v5070 = vadd.f32 %v4875, %v5006
    %v5071 = vadd.f32 %v4876, %v5007
    %v5072 = vadd.f32 %v4877, %v5008
    %v5073 = vadd.f32 %v4878, %v5009
    %v5074 = vadd.f32 %v4879, %v5010
    %v5075 = vadd.f32 %v4880, %v5011
    %v5076 = vadd.f32 %v4881, %v5012
    %v5077 = vadd.f32 %v4882, %v5013
    %v5078 = vadd.f32 %v4883, %v5014
    %v5079 = vadd.f32 %v4884, %v5015
    %v5080 = vadd.f32 %v4885, %v5016
    %v5081 = vadd.f32 %v4886, %v5017
    %v5082 = vadd.f32 %v4887, %v5018
    %v5083 = vadd.f32 %v4888, %v5019
    %v5084 = vadd.f32 %v4889, %v5020
    %v5085 = vadd.f32 %v4890, %v5021
    %s5086 = scalar_lea.vmem [#allocation3], 48
    %v5087 = vld [vmem:[%s5086] sm:$0xff]
    %v5088 = vld [vmem:[%s5086 + $0x8] sm:$0xff]
    %v5089 = vld [vmem:[%s5086 + $0x18] sm:$0xff]
    %v5090 = vld [vmem:[%s5086 + $0x20] sm:$0xff]
    %v5091 = vld [vmem:[%s5086 + $0x30] sm:$0xff]
    %v5092 = vld [vmem:[%s5086 + $0x38] sm:$0xff]
    %v5093 = vld [vmem:[%s5086 + $0x48] sm:$0xff]
    %v5094 = vld [vmem:[%s5086 + $0x50] sm:$0xff]
    %v5095 = vld [vmem:[%s5086 + $0x60] sm:$0xff]
    %v5096 = vld [vmem:[%s5086 + $0x68] sm:$0xff]
    %v5097 = vld [vmem:[%s5086 + $0x78] sm:$0xff]
    %v5098 = vld [vmem:[%s5086 + $0x80] sm:$0xff]
    %v5099 = vld [vmem:[%s5086 + $0x90] sm:$0xff]
    %v5100 = vld [vmem:[%s5086 + $0x98] sm:$0xff]
    %v5101 = vld [vmem:[%s5086 + $0xa8] sm:$0xff]
    %v5102 = vld [vmem:[%s5086 + $0xb0] sm:$0xff]
    %v5103 = vld [vmem:[%s5086 + $0xc0] sm:$0xff]
    %v5104 = vld [vmem:[%s5086 + $0xc8] sm:$0xff]
    %v5105 = vld [vmem:[%s5086 + $0xd8] sm:$0xff]
    %v5106 = vld [vmem:[%s5086 + $0xe0] sm:$0xff]
    %v5107 = vld [vmem:[%s5086 + $0xf0] sm:$0xff]
    %v5108 = vld [vmem:[%s5086 + $0xf8] sm:$0xff]
    %v5109 = vld [vmem:[%s5086 + $0x108] sm:$0xff]
    %v5110 = vld [vmem:[%s5086 + $0x110] sm:$0xff]
    %v5111 = vld [vmem:[%s5086 + $0x120] sm:$0xff]
    %v5112 = vld [vmem:[%s5086 + $0x128] sm:$0xff]
    %v5113 = vld [vmem:[%s5086 + $0x138] sm:$0xff]
    %v5114 = vld [vmem:[%s5086 + $0x140] sm:$0xff]
    %v5115 = vld [vmem:[%s5086 + $0x150] sm:$0xff]
    %v5116 = vld [vmem:[%s5086 + $0x158] sm:$0xff]
    %v5117 = vld [vmem:[%s5086 + $0x168] sm:$0xff]
    %v5118 = vld [vmem:[%s5086 + $0x170] sm:$0xff]
    %v5119 = vld [vmem:[%s5086 + $0x1b0] sm:$0xff]
    %v5120 = vld [vmem:[%s5086 + $0x1b8] sm:$0xff]
    %v5121 = vld [vmem:[%s5086 + $0x1c8] sm:$0xff]
    %v5122 = vld [vmem:[%s5086 + $0x1d0] sm:$0xff]
    %v5123 = vld [vmem:[%s5086 + $0x1e0] sm:$0xff]
    %v5124 = vld [vmem:[%s5086 + $0x1e8] sm:$0xff]
    %v5125 = vld [vmem:[%s5086 + $0x1f8] sm:$0xff]
    %v5126 = vld [vmem:[%s5086 + $0x200] sm:$0xff]
    %v5127 = vld [vmem:[%s5086 + $0x210] sm:$0xff]
    %v5128 = vld [vmem:[%s5086 + $0x218] sm:$0xff]
    %v5129 = vld [vmem:[%s5086 + $0x228] sm:$0xff]
    %v5130 = vld [vmem:[%s5086 + $0x230] sm:$0xff]
    %v5131 = vld [vmem:[%s5086 + $0x240] sm:$0xff]
    %v5132 = vld [vmem:[%s5086 + $0x248] sm:$0xff]
    %v5133 = vld [vmem:[%s5086 + $0x258] sm:$0xff]
    %v5134 = vld [vmem:[%s5086 + $0x260] sm:$0xff]
    %v5135 = vld [vmem:[%s5086 + $0x270] sm:$0xff]
    %v5136 = vld [vmem:[%s5086 + $0x278] sm:$0xff]
    %v5137 = vld [vmem:[%s5086 + $0x288] sm:$0xff]
    %v5138 = vld [vmem:[%s5086 + $0x290] sm:$0xff]
    %v5139 = vld [vmem:[%s5086 + $0x2a0] sm:$0xff]
    %v5140 = vld [vmem:[%s5086 + $0x2a8] sm:$0xff]
    %v5141 = vld [vmem:[%s5086 + $0x2b8] sm:$0xff]
    %v5142 = vld [vmem:[%s5086 + $0x2c0] sm:$0xff]
    %v5143 = vld [vmem:[%s5086 + $0x2d0] sm:$0xff]
    %v5144 = vld [vmem:[%s5086 + $0x2d8] sm:$0xff]
    %v5145 = vld [vmem:[%s5086 + $0x2e8] sm:$0xff]
    %v5146 = vld [vmem:[%s5086 + $0x2f0] sm:$0xff]
    %v5147 = vld [vmem:[%s5086 + $0x300] sm:$0xff]
    %v5148 = vld [vmem:[%s5086 + $0x308] sm:$0xff]
    %v5149 = vld [vmem:[%s5086 + $0x318] sm:$0xff]
    %v5150 = vld [vmem:[%s5086 + $0x320] sm:$0xff]
    %v5152 = vperm.slane %v3913, 0
    %v5154 = vmul.f32 %v5087, %v5152
    %v5155 = vmul.f32 %v5088, %v5152
    %v5156 = vmul.f32 %v5089, %v5152
    %v5157 = vmul.f32 %v5090, %v5152
    %v5158 = vmul.f32 %v5091, %v5152
    %v5159 = vmul.f32 %v5092, %v5152
    %v5160 = vmul.f32 %v5093, %v5152
    %v5161 = vmul.f32 %v5094, %v5152
    %v5162 = vmul.f32 %v5095, %v5152
    %v5163 = vmul.f32 %v5096, %v5152
    %v5164 = vmul.f32 %v5097, %v5152
    %v5165 = vmul.f32 %v5098, %v5152
    %v5166 = vmul.f32 %v5099, %v5152
    %v5167 = vmul.f32 %v5100, %v5152
    %v5168 = vmul.f32 %v5101, %v5152
    %v5169 = vmul.f32 %v5102, %v5152
    %v5170 = vmul.f32 %v5103, %v5152
    %v5171 = vmul.f32 %v5104, %v5152
    %v5172 = vmul.f32 %v5105, %v5152
    %v5173 = vmul.f32 %v5106, %v5152
    %v5174 = vmul.f32 %v5107, %v5152
    %v5175 = vmul.f32 %v5108, %v5152
    %v5176 = vmul.f32 %v5109, %v5152
    %v5177 = vmul.f32 %v5110, %v5152
    %v5178 = vmul.f32 %v5111, %v5152
    %v5179 = vmul.f32 %v5112, %v5152
    %v5180 = vmul.f32 %v5113, %v5152
    %v5181 = vmul.f32 %v5114, %v5152
    %v5182 = vmul.f32 %v5115, %v5152
    %v5183 = vmul.f32 %v5116, %v5152
    %v5184 = vmul.f32 %v5117, %v5152
    %v5185 = vmul.f32 %v5118, %v5152
    %v5186 = vmul.f32 %v5119, %v5152
    %v5187 = vmul.f32 %v5120, %v5152
    %v5188 = vmul.f32 %v5121, %v5152
    %v5189 = vmul.f32 %v5122, %v5152
    %v5190 = vmul.f32 %v5123, %v5152
    %v5191 = vmul.f32 %v5124, %v5152
    %v5192 = vmul.f32 %v5125, %v5152
    %v5193 = vmul.f32 %v5126, %v5152
    %v5194 = vmul.f32 %v5127, %v5152
    %v5195 = vmul.f32 %v5128, %v5152
    %v5196 = vmul.f32 %v5129, %v5152
    %v5197 = vmul.f32 %v5130, %v5152
    %v5198 = vmul.f32 %v5131, %v5152
    %v5199 = vmul.f32 %v5132, %v5152
    %v5200 = vmul.f32 %v5133, %v5152
    %v5201 = vmul.f32 %v5134, %v5152
    %v5202 = vmul.f32 %v5135, %v5152
    %v5203 = vmul.f32 %v5136, %v5152
    %v5204 = vmul.f32 %v5137, %v5152
    %v5205 = vmul.f32 %v5138, %v5152
    %v5206 = vmul.f32 %v5139, %v5152
    %v5207 = vmul.f32 %v5140, %v5152
    %v5208 = vmul.f32 %v5141, %v5152
    %v5209 = vmul.f32 %v5142, %v5152
    %v5210 = vmul.f32 %v5143, %v5152
    %v5211 = vmul.f32 %v5144, %v5152
    %v5212 = vmul.f32 %v5145, %v5152
    %v5213 = vmul.f32 %v5146, %v5152
    %v5214 = vmul.f32 %v5147, %v5152
    %v5215 = vmul.f32 %v5148, %v5152
    %v5216 = vmul.f32 %v5149, %v5152
    %v5217 = vmul.f32 %v5150, %v5152
    %v5218 = vadd.f32 %v5022, %v5154
    %v5219 = vadd.f32 %v5023, %v5155
    %v5220 = vadd.f32 %v5024, %v5156
    %v5221 = vadd.f32 %v5025, %v5157
    %v5222 = vadd.f32 %v5026, %v5158
    %v5223 = vadd.f32 %v5027, %v5159
    %v5224 = vadd.f32 %v5028, %v5160
    %v5225 = vadd.f32 %v5029, %v5161
    %v5226 = vadd.f32 %v5030, %v5162
    %v5227 = vadd.f32 %v5031, %v5163
    %v5228 = vadd.f32 %v5032, %v5164
    %v5229 = vadd.f32 %v5033, %v5165
    %v5230 = vadd.f32 %v5034, %v5166
    %v5231 = vadd.f32 %v5035, %v5167
    %v5232 = vadd.f32 %v5036, %v5168
    %v5233 = vadd.f32 %v5037, %v5169
    %v5234 = vadd.f32 %v5038, %v5170
    %v5235 = vadd.f32 %v5039, %v5171
    %v5236 = vadd.f32 %v5040, %v5172
    %v5237 = vadd.f32 %v5041, %v5173
    %v5238 = vadd.f32 %v5042, %v5174
    %v5239 = vadd.f32 %v5043, %v5175
    %v5240 = vadd.f32 %v5044, %v5176
    %v5241 = vadd.f32 %v5045, %v5177
    %v5242 = vadd.f32 %v5046, %v5178
    %v5243 = vadd.f32 %v5047, %v5179
    %v5244 = vadd.f32 %v5048, %v5180
    %v5245 = vadd.f32 %v5049, %v5181
    %v5246 = vadd.f32 %v5050, %v5182
    %v5247 = vadd.f32 %v5051, %v5183
    %v5248 = vadd.f32 %v5052, %v5184
    %v5249 = vadd.f32 %v5053, %v5185
    %v5250 = vadd.f32 %v5054, %v5186
    %v5251 = vadd.f32 %v5055, %v5187
    %v5252 = vadd.f32 %v5056, %v5188
    %v5253 = vadd.f32 %v5057, %v5189
    %v5254 = vadd.f32 %v5058, %v5190
    %v5255 = vadd.f32 %v5059, %v5191
    %v5256 = vadd.f32 %v5060, %v5192
    %v5257 = vadd.f32 %v5061, %v5193
    %v5258 = vadd.f32 %v5062, %v5194
    %v5259 = vadd.f32 %v5063, %v5195
    %v5260 = vadd.f32 %v5064, %v5196
    %v5261 = vadd.f32 %v5065, %v5197
    %v5262 = vadd.f32 %v5066, %v5198
    %v5263 = vadd.f32 %v5067, %v5199
    %v5264 = vadd.f32 %v5068, %v5200
    %v5265 = vadd.f32 %v5069, %v5201
    %v5266 = vadd.f32 %v5070, %v5202
    %v5267 = vadd.f32 %v5071, %v5203
    %v5268 = vadd.f32 %v5072, %v5204
    %v5269 = vadd.f32 %v5073, %v5205
    %v5270 = vadd.f32 %v5074, %v5206
    %v5271 = vadd.f32 %v5075, %v5207
    %v5272 = vadd.f32 %v5076, %v5208
    %v5273 = vadd.f32 %v5077, %v5209
    %v5274 = vadd.f32 %v5078, %v5210
    %v5275 = vadd.f32 %v5079, %v5211
    %v5276 = vadd.f32 %v5080, %v5212
    %v5277 = vadd.f32 %v5081, %v5213
    %v5278 = vadd.f32 %v5082, %v5214
    %v5279 = vadd.f32 %v5083, %v5215
    %v5280 = vadd.f32 %v5084, %v5216
    %v5281 = vadd.f32 %v5085, %v5217
    %v5282 = vld [vmem:[%s5086 + $0x1] sm:$0xff]
    %v5283 = vld [vmem:[%s5086 + $0x9] sm:$0xff]
    %v5284 = vld [vmem:[%s5086 + $0x19] sm:$0xff]
    %v5285 = vld [vmem:[%s5086 + $0x21] sm:$0xff]
    %v5286 = vld [vmem:[%s5086 + $0x31] sm:$0xff]
    %v5287 = vld [vmem:[%s5086 + $0x39] sm:$0xff]
    %v5288 = vld [vmem:[%s5086 + $0x49] sm:$0xff]
    %v5289 = vld [vmem:[%s5086 + $0x51] sm:$0xff]
    %v5290 = vld [vmem:[%s5086 + $0x61] sm:$0xff]
    %v5291 = vld [vmem:[%s5086 + $0x69] sm:$0xff]
    %v5292 = vld [vmem:[%s5086 + $0x79] sm:$0xff]
    %v5293 = vld [vmem:[%s5086 + $0x81] sm:$0xff]
    %v5294 = vld [vmem:[%s5086 + $0x91] sm:$0xff]
    %v5295 = vld [vmem:[%s5086 + $0x99] sm:$0xff]
    %v5296 = vld [vmem:[%s5086 + $0xa9] sm:$0xff]
    %v5297 = vld [vmem:[%s5086 + $0xb1] sm:$0xff]
    %v5298 = vld [vmem:[%s5086 + $0xc1] sm:$0xff]
    %v5299 = vld [vmem:[%s5086 + $0xc9] sm:$0xff]
    %v5300 = vld [vmem:[%s5086 + $0xd9] sm:$0xff]
    %v5301 = vld [vmem:[%s5086 + $0xe1] sm:$0xff]
    %v5302 = vld [vmem:[%s5086 + $0xf1] sm:$0xff]
    %v5303 = vld [vmem:[%s5086 + $0xf9] sm:$0xff]
    %v5304 = vld [vmem:[%s5086 + $0x109] sm:$0xff]
    %v5305 = vld [vmem:[%s5086 + $0x111] sm:$0xff]
    %v5306 = vld [vmem:[%s5086 + $0x121] sm:$0xff]
    %v5307 = vld [vmem:[%s5086 + $0x129] sm:$0xff]
    %v5308 = vld [vmem:[%s5086 + $0x139] sm:$0xff]
    %v5309 = vld [vmem:[%s5086 + $0x141] sm:$0xff]
    %v5310 = vld [vmem:[%s5086 + $0x151] sm:$0xff]
    %v5311 = vld [vmem:[%s5086 + $0x159] sm:$0xff]
    %v5312 = vld [vmem:[%s5086 + $0x169] sm:$0xff]
    %v5313 = vld [vmem:[%s5086 + $0x171] sm:$0xff]
    %v5314 = vld [vmem:[%s5086 + $0x1b1] sm:$0xff]
    %v5315 = vld [vmem:[%s5086 + $0x1b9] sm:$0xff]
    %v5316 = vld [vmem:[%s5086 + $0x1c9] sm:$0xff]
    %v5317 = vld [vmem:[%s5086 + $0x1d1] sm:$0xff]
    %v5318 = vld [vmem:[%s5086 + $0x1e1] sm:$0xff]
    %v5319 = vld [vmem:[%s5086 + $0x1e9] sm:$0xff]
    %v5320 = vld [vmem:[%s5086 + $0x1f9] sm:$0xff]
    %v5321 = vld [vmem:[%s5086 + $0x201] sm:$0xff]
    %v5322 = vld [vmem:[%s5086 + $0x211] sm:$0xff]
    %v5323 = vld [vmem:[%s5086 + $0x219] sm:$0xff]
    %v5324 = vld [vmem:[%s5086 + $0x229] sm:$0xff]
    %v5325 = vld [vmem:[%s5086 + $0x231] sm:$0xff]
    %v5326 = vld [vmem:[%s5086 + $0x241] sm:$0xff]
    %v5327 = vld [vmem:[%s5086 + $0x249] sm:$0xff]
    %v5328 = vld [vmem:[%s5086 + $0x259] sm:$0xff]
    %v5329 = vld [vmem:[%s5086 + $0x261] sm:$0xff]
    %v5330 = vld [vmem:[%s5086 + $0x271] sm:$0xff]
    %v5331 = vld [vmem:[%s5086 + $0x279] sm:$0xff]
    %v5332 = vld [vmem:[%s5086 + $0x289] sm:$0xff]
    %v5333 = vld [vmem:[%s5086 + $0x291] sm:$0xff]
    %v5334 = vld [vmem:[%s5086 + $0x2a1] sm:$0xff]
    %v5335 = vld [vmem:[%s5086 + $0x2a9] sm:$0xff]
    %v5336 = vld [vmem:[%s5086 + $0x2b9] sm:$0xff]
    %v5337 = vld [vmem:[%s5086 + $0x2c1] sm:$0xff]
    %v5338 = vld [vmem:[%s5086 + $0x2d1] sm:$0xff]
    %v5339 = vld [vmem:[%s5086 + $0x2d9] sm:$0xff]
    %v5340 = vld [vmem:[%s5086 + $0x2e9] sm:$0xff]
    %v5341 = vld [vmem:[%s5086 + $0x2f1] sm:$0xff]
    %v5342 = vld [vmem:[%s5086 + $0x301] sm:$0xff]
    %v5343 = vld [vmem:[%s5086 + $0x309] sm:$0xff]
    %v5344 = vld [vmem:[%s5086 + $0x319] sm:$0xff]
    %v5345 = vld [vmem:[%s5086 + $0x321] sm:$0xff]
    %v5347 = vperm.slane %v3914, 0
    %v5349 = vmul.f32 %v5282, %v5347
    %v5350 = vmul.f32 %v5283, %v5347
    %v5351 = vmul.f32 %v5284, %v5347
    %v5352 = vmul.f32 %v5285, %v5347
    %v5353 = vmul.f32 %v5286, %v5347
    %v5354 = vmul.f32 %v5287, %v5347
    %v5355 = vmul.f32 %v5288, %v5347
    %v5356 = vmul.f32 %v5289, %v5347
    %v5357 = vmul.f32 %v5290, %v5347
    %v5358 = vmul.f32 %v5291, %v5347
    %v5359 = vmul.f32 %v5292, %v5347
    %v5360 = vmul.f32 %v5293, %v5347
    %v5361 = vmul.f32 %v5294, %v5347
    %v5362 = vmul.f32 %v5295, %v5347
    %v5363 = vmul.f32 %v5296, %v5347
    %v5364 = vmul.f32 %v5297, %v5347
    %v5365 = vmul.f32 %v5298, %v5347
    %v5366 = vmul.f32 %v5299, %v5347
    %v5367 = vmul.f32 %v5300, %v5347
    %v5368 = vmul.f32 %v5301, %v5347
    %v5369 = vmul.f32 %v5302, %v5347
    %v5370 = vmul.f32 %v5303, %v5347
    %v5371 = vmul.f32 %v5304, %v5347
    %v5372 = vmul.f32 %v5305, %v5347
    %v5373 = vmul.f32 %v5306, %v5347
    %v5374 = vmul.f32 %v5307, %v5347
    %v5375 = vmul.f32 %v5308, %v5347
    %v5376 = vmul.f32 %v5309, %v5347
    %v5377 = vmul.f32 %v5310, %v5347
    %v5378 = vmul.f32 %v5311, %v5347
    %v5379 = vmul.f32 %v5312, %v5347
    %v5380 = vmul.f32 %v5313, %v5347
    %v5381 = vmul.f32 %v5314, %v5347
    %v5382 = vmul.f32 %v5315, %v5347
    %v5383 = vmul.f32 %v5316, %v5347
    %v5384 = vmul.f32 %v5317, %v5347
    %v5385 = vmul.f32 %v5318, %v5347
    %v5386 = vmul.f32 %v5319, %v5347
    %v5387 = vmul.f32 %v5320, %v5347
    %v5388 = vmul.f32 %v5321, %v5347
    %v5389 = vmul.f32 %v5322, %v5347
    %v5390 = vmul.f32 %v5323, %v5347
    %v5391 = vmul.f32 %v5324, %v5347
    %v5392 = vmul.f32 %v5325, %v5347
    %v5393 = vmul.f32 %v5326, %v5347
    %v5394 = vmul.f32 %v5327, %v5347
    %v5395 = vmul.f32 %v5328, %v5347
    %v5396 = vmul.f32 %v5329, %v5347
    %v5397 = vmul.f32 %v5330, %v5347
    %v5398 = vmul.f32 %v5331, %v5347
    %v5399 = vmul.f32 %v5332, %v5347
    %v5400 = vmul.f32 %v5333, %v5347
    %v5401 = vmul.f32 %v5334, %v5347
    %v5402 = vmul.f32 %v5335, %v5347
    %v5403 = vmul.f32 %v5336, %v5347
    %v5404 = vmul.f32 %v5337, %v5347
    %v5405 = vmul.f32 %v5338, %v5347
    %v5406 = vmul.f32 %v5339, %v5347
    %v5407 = vmul.f32 %v5340, %v5347
    %v5408 = vmul.f32 %v5341, %v5347
    %v5409 = vmul.f32 %v5342, %v5347
    %v5410 = vmul.f32 %v5343, %v5347
    %v5411 = vmul.f32 %v5344, %v5347
    %v5412 = vmul.f32 %v5345, %v5347
    %v5413 = vadd.f32 %v5218, %v5349
    %v5414 = vadd.f32 %v5219, %v5350
    %v5415 = vadd.f32 %v5220, %v5351
    %v5416 = vadd.f32 %v5221, %v5352
    %v5417 = vadd.f32 %v5222, %v5353
    %v5418 = vadd.f32 %v5223, %v5354
    %v5419 = vadd.f32 %v5224, %v5355
    %v5420 = vadd.f32 %v5225, %v5356
    %v5421 = vadd.f32 %v5226, %v5357
    %v5422 = vadd.f32 %v5227, %v5358
    %v5423 = vadd.f32 %v5228, %v5359
    %v5424 = vadd.f32 %v5229, %v5360
    %v5425 = vadd.f32 %v5230, %v5361
    %v5426 = vadd.f32 %v5231, %v5362
    %v5427 = vadd.f32 %v5232, %v5363
    %v5428 = vadd.f32 %v5233, %v5364
    %v5429 = vadd.f32 %v5234, %v5365
    %v5430 = vadd.f32 %v5235, %v5366
    %v5431 = vadd.f32 %v5236, %v5367
    %v5432 = vadd.f32 %v5237, %v5368
    %v5433 = vadd.f32 %v5238, %v5369
    %v5434 = vadd.f32 %v5239, %v5370
    %v5435 = vadd.f32 %v5240, %v5371
    %v5436 = vadd.f32 %v5241, %v5372
    %v5437 = vadd.f32 %v5242, %v5373
    %v5438 = vadd.f32 %v5243, %v5374
    %v5439 = vadd.f32 %v5244, %v5375
    %v5440 = vadd.f32 %v5245, %v5376
    %v5441 = vadd.f32 %v5246, %v5377
    %v5442 = vadd.f32 %v5247, %v5378
    %v5443 = vadd.f32 %v5248, %v5379
    %v5444 = vadd.f32 %v5249, %v5380
    %v5445 = vadd.f32 %v5250, %v5381
    %v5446 = vadd.f32 %v5251, %v5382
    %v5447 = vadd.f32 %v5252, %v5383
    %v5448 = vadd.f32 %v5253, %v5384
    %v5449 = vadd.f32 %v5254, %v5385
    %v5450 = vadd.f32 %v5255, %v5386
    %v5451 = vadd.f32 %v5256, %v5387
    %v5452 = vadd.f32 %v5257, %v5388
    %v5453 = vadd.f32 %v5258, %v5389
    %v5454 = vadd.f32 %v5259, %v5390
    %v5455 = vadd.f32 %v5260, %v5391
    %v5456 = vadd.f32 %v5261, %v5392
    %v5457 = vadd.f32 %v5262, %v5393
    %v5458 = vadd.f32 %v5263, %v5394
    %v5459 = vadd.f32 %v5264, %v5395
    %v5460 = vadd.f32 %v5265, %v5396
    %v5461 = vadd.f32 %v5266, %v5397
    %v5462 = vadd.f32 %v5267, %v5398
    %v5463 = vadd.f32 %v5268, %v5399
    %v5464 = vadd.f32 %v5269, %v5400
    %v5465 = vadd.f32 %v5270, %v5401
    %v5466 = vadd.f32 %v5271, %v5402
    %v5467 = vadd.f32 %v5272, %v5403
    %v5468 = vadd.f32 %v5273, %v5404
    %v5469 = vadd.f32 %v5274, %v5405
    %v5470 = vadd.f32 %v5275, %v5406
    %v5471 = vadd.f32 %v5276, %v5407
    %v5472 = vadd.f32 %v5277, %v5408
    %v5473 = vadd.f32 %v5278, %v5409
    %v5474 = vadd.f32 %v5279, %v5410
    %v5475 = vadd.f32 %v5280, %v5411
    %v5476 = vadd.f32 %v5281, %v5412
    %v5477 = vld [vmem:[%s5086 + $0x2] sm:$0xff]
    %v5478 = vld [vmem:[%s5086 + $0xa] sm:$0xff]
    %v5479 = vld [vmem:[%s5086 + $0x1a] sm:$0xff]
    %v5480 = vld [vmem:[%s5086 + $0x22] sm:$0xff]
    %v5481 = vld [vmem:[%s5086 + $0x32] sm:$0xff]
    %v5482 = vld [vmem:[%s5086 + $0x3a] sm:$0xff]
    %v5483 = vld [vmem:[%s5086 + $0x4a] sm:$0xff]
    %v5484 = vld [vmem:[%s5086 + $0x52] sm:$0xff]
    %v5485 = vld [vmem:[%s5086 + $0x62] sm:$0xff]
    %v5486 = vld [vmem:[%s5086 + $0x6a] sm:$0xff]
    %v5487 = vld [vmem:[%s5086 + $0x7a] sm:$0xff]
    %v5488 = vld [vmem:[%s5086 + $0x82] sm:$0xff]
    %v5489 = vld [vmem:[%s5086 + $0x92] sm:$0xff]
    %v5490 = vld [vmem:[%s5086 + $0x9a] sm:$0xff]
    %v5491 = vld [vmem:[%s5086 + $0xaa] sm:$0xff]
    %v5492 = vld [vmem:[%s5086 + $0xb2] sm:$0xff]
    %v5493 = vld [vmem:[%s5086 + $0xc2] sm:$0xff]
    %v5494 = vld [vmem:[%s5086 + $0xca] sm:$0xff]
    %v5495 = vld [vmem:[%s5086 + $0xda] sm:$0xff]
    %v5496 = vld [vmem:[%s5086 + $0xe2] sm:$0xff]
    %v5497 = vld [vmem:[%s5086 + $0xf2] sm:$0xff]
    %v5498 = vld [vmem:[%s5086 + $0xfa] sm:$0xff]
    %v5499 = vld [vmem:[%s5086 + $0x10a] sm:$0xff]
    %v5500 = vld [vmem:[%s5086 + $0x112] sm:$0xff]
    %v5501 = vld [vmem:[%s5086 + $0x122] sm:$0xff]
    %v5502 = vld [vmem:[%s5086 + $0x12a] sm:$0xff]
    %v5503 = vld [vmem:[%s5086 + $0x13a] sm:$0xff]
    %v5504 = vld [vmem:[%s5086 + $0x142] sm:$0xff]
    %v5505 = vld [vmem:[%s5086 + $0x152] sm:$0xff]
    %v5506 = vld [vmem:[%s5086 + $0x15a] sm:$0xff]
    %v5507 = vld [vmem:[%s5086 + $0x16a] sm:$0xff]
    %v5508 = vld [vmem:[%s5086 + $0x172] sm:$0xff]
    %v5509 = vld [vmem:[%s5086 + $0x1b2] sm:$0xff]
    %v5510 = vld [vmem:[%s5086 + $0x1ba] sm:$0xff]
    %v5511 = vld [vmem:[%s5086 + $0x1ca] sm:$0xff]
    %v5512 = vld [vmem:[%s5086 + $0x1d2] sm:$0xff]
    %v5513 = vld [vmem:[%s5086 + $0x1e2] sm:$0xff]
    %v5514 = vld [vmem:[%s5086 + $0x1ea] sm:$0xff]
    %v5515 = vld [vmem:[%s5086 + $0x1fa] sm:$0xff]
    %v5516 = vld [vmem:[%s5086 + $0x202] sm:$0xff]
    %v5517 = vld [vmem:[%s5086 + $0x212] sm:$0xff]
    %v5518 = vld [vmem:[%s5086 + $0x21a] sm:$0xff]
    %v5519 = vld [vmem:[%s5086 + $0x22a] sm:$0xff]
    %v5520 = vld [vmem:[%s5086 + $0x232] sm:$0xff]
    %v5521 = vld [vmem:[%s5086 + $0x242] sm:$0xff]
    %v5522 = vld [vmem:[%s5086 + $0x24a] sm:$0xff]
    %v5523 = vld [vmem:[%s5086 + $0x25a] sm:$0xff]
    %v5524 = vld [vmem:[%s5086 + $0x262] sm:$0xff]
    %v5525 = vld [vmem:[%s5086 + $0x272] sm:$0xff]
    %v5526 = vld [vmem:[%s5086 + $0x27a] sm:$0xff]
    %v5527 = vld [vmem:[%s5086 + $0x28a] sm:$0xff]
    %v5528 = vld [vmem:[%s5086 + $0x292] sm:$0xff]
    %v5529 = vld [vmem:[%s5086 + $0x2a2] sm:$0xff]
    %v5530 = vld [vmem:[%s5086 + $0x2aa] sm:$0xff]
    %v5531 = vld [vmem:[%s5086 + $0x2ba] sm:$0xff]
    %v5532 = vld [vmem:[%s5086 + $0x2c2] sm:$0xff]
    %v5533 = vld [vmem:[%s5086 + $0x2d2] sm:$0xff]
    %v5534 = vld [vmem:[%s5086 + $0x2da] sm:$0xff]
    %v5535 = vld [vmem:[%s5086 + $0x2ea] sm:$0xff]
    %v5536 = vld [vmem:[%s5086 + $0x2f2] sm:$0xff]
    %v5537 = vld [vmem:[%s5086 + $0x302] sm:$0xff]
    %v5538 = vld [vmem:[%s5086 + $0x30a] sm:$0xff]
    %v5539 = vld [vmem:[%s5086 + $0x31a] sm:$0xff]
    %v5540 = vld [vmem:[%s5086 + $0x322] sm:$0xff]
    %v5542 = vperm.slane %v3915, 0
    %v5544 = vmul.f32 %v5477, %v5542
    %v5545 = vmul.f32 %v5478, %v5542
    %v5546 = vmul.f32 %v5479, %v5542
    %v5547 = vmul.f32 %v5480, %v5542
    %v5548 = vmul.f32 %v5481, %v5542
    %v5549 = vmul.f32 %v5482, %v5542
    %v5550 = vmul.f32 %v5483, %v5542
    %v5551 = vmul.f32 %v5484, %v5542
    %v5552 = vmul.f32 %v5485, %v5542
    %v5553 = vmul.f32 %v5486, %v5542
    %v5554 = vmul.f32 %v5487, %v5542
    %v5555 = vmul.f32 %v5488, %v5542
    %v5556 = vmul.f32 %v5489, %v5542
    %v5557 = vmul.f32 %v5490, %v5542
    %v5558 = vmul.f32 %v5491, %v5542
    %v5559 = vmul.f32 %v5492, %v5542
    %v5560 = vmul.f32 %v5493, %v5542
    %v5561 = vmul.f32 %v5494, %v5542
    %v5562 = vmul.f32 %v5495, %v5542
    %v5563 = vmul.f32 %v5496, %v5542
    %v5564 = vmul.f32 %v5497, %v5542
    %v5565 = vmul.f32 %v5498, %v5542
    %v5566 = vmul.f32 %v5499, %v5542
    %v5567 = vmul.f32 %v5500, %v5542
    %v5568 = vmul.f32 %v5501, %v5542
    %v5569 = vmul.f32 %v5502, %v5542
    %v5570 = vmul.f32 %v5503, %v5542
    %v5571 = vmul.f32 %v5504, %v5542
    %v5572 = vmul.f32 %v5505, %v5542
    %v5573 = vmul.f32 %v5506, %v5542
    %v5574 = vmul.f32 %v5507, %v5542
    %v5575 = vmul.f32 %v5508, %v5542
    %v5576 = vmul.f32 %v5509, %v5542
    %v5577 = vmul.f32 %v5510, %v5542
    %v5578 = vmul.f32 %v5511, %v5542
    %v5579 = vmul.f32 %v5512, %v5542
    %v5580 = vmul.f32 %v5513, %v5542
    %v5581 = vmul.f32 %v5514, %v5542
    %v5582 = vmul.f32 %v5515, %v5542
    %v5583 = vmul.f32 %v5516, %v5542
    %v5584 = vmul.f32 %v5517, %v5542
    %v5585 = vmul.f32 %v5518, %v5542
    %v5586 = vmul.f32 %v5519, %v5542
    %v5587 = vmul.f32 %v5520, %v5542
    %v5588 = vmul.f32 %v5521, %v5542
    %v5589 = vmul.f32 %v5522, %v5542
    %v5590 = vmul.f32 %v5523, %v5542
    %v5591 = vmul.f32 %v5524, %v5542
    %v5592 = vmul.f32 %v5525, %v5542
    %v5593 = vmul.f32 %v5526, %v5542
    %v5594 = vmul.f32 %v5527, %v5542
    %v5595 = vmul.f32 %v5528, %v5542
    %v5596 = vmul.f32 %v5529, %v5542
    %v5597 = vmul.f32 %v5530, %v5542
    %v5598 = vmul.f32 %v5531, %v5542
    %v5599 = vmul.f32 %v5532, %v5542
    %v5600 = vmul.f32 %v5533, %v5542
    %v5601 = vmul.f32 %v5534, %v5542
    %v5602 = vmul.f32 %v5535, %v5542
    %v5603 = vmul.f32 %v5536, %v5542
    %v5604 = vmul.f32 %v5537, %v5542
    %v5605 = vmul.f32 %v5538, %v5542
    %v5606 = vmul.f32 %v5539, %v5542
    %v5607 = vmul.f32 %v5540, %v5542
    %v5608 = vadd.f32 %v5413, %v5544
    %v5609 = vadd.f32 %v5414, %v5545
    %v5610 = vadd.f32 %v5415, %v5546
    %v5611 = vadd.f32 %v5416, %v5547
    %v5612 = vadd.f32 %v5417, %v5548
    %v5613 = vadd.f32 %v5418, %v5549
    %v5614 = vadd.f32 %v5419, %v5550
    %v5615 = vadd.f32 %v5420, %v5551
    %v5616 = vadd.f32 %v5421, %v5552
    %v5617 = vadd.f32 %v5422, %v5553
    %v5618 = vadd.f32 %v5423, %v5554
    %v5619 = vadd.f32 %v5424, %v5555
    %v5620 = vadd.f32 %v5425, %v5556
    %v5621 = vadd.f32 %v5426, %v5557
    %v5622 = vadd.f32 %v5427, %v5558
    %v5623 = vadd.f32 %v5428, %v5559
    %v5624 = vadd.f32 %v5429, %v5560
    %v5625 = vadd.f32 %v5430, %v5561
    %v5626 = vadd.f32 %v5431, %v5562
    %v5627 = vadd.f32 %v5432, %v5563
    %v5628 = vadd.f32 %v5433, %v5564
    %v5629 = vadd.f32 %v5434, %v5565
    %v5630 = vadd.f32 %v5435, %v5566
    %v5631 = vadd.f32 %v5436, %v5567
    %v5632 = vadd.f32 %v5437, %v5568
    %v5633 = vadd.f32 %v5438, %v5569
    %v5634 = vadd.f32 %v5439, %v5570
    %v5635 = vadd.f32 %v5440, %v5571
    %v5636 = vadd.f32 %v5441, %v5572
    %v5637 = vadd.f32 %v5442, %v5573
    %v5638 = vadd.f32 %v5443, %v5574
    %v5639 = vadd.f32 %v5444, %v5575
    %v5640 = vadd.f32 %v5445, %v5576
    %v5641 = vadd.f32 %v5446, %v5577
    %v5642 = vadd.f32 %v5447, %v5578
    %v5643 = vadd.f32 %v5448, %v5579
    %v5644 = vadd.f32 %v5449, %v5580
    %v5645 = vadd.f32 %v5450, %v5581
    %v5646 = vadd.f32 %v5451, %v5582
    %v5647 = vadd.f32 %v5452, %v5583
    %v5648 = vadd.f32 %v5453, %v5584
    %v5649 = vadd.f32 %v5454, %v5585
    %v5650 = vadd.f32 %v5455, %v5586
    %v5651 = vadd.f32 %v5456, %v5587
    %v5652 = vadd.f32 %v5457, %v5588
    %v5653 = vadd.f32 %v5458, %v5589
    %v5654 = vadd.f32 %v5459, %v5590
    %v5655 = vadd.f32 %v5460, %v5591
    %v5656 = vadd.f32 %v5461, %v5592
    %v5657 = vadd.f32 %v5462, %v5593
    %v5658 = vadd.f32 %v5463, %v5594
    %v5659 = vadd.f32 %v5464, %v5595
    %v5660 = vadd.f32 %v5465, %v5596
    %v5661 = vadd.f32 %v5466, %v5597
    %v5662 = vadd.f32 %v5467, %v5598
    %v5663 = vadd.f32 %v5468, %v5599
    %v5664 = vadd.f32 %v5469, %v5600
    %v5665 = vadd.f32 %v5470, %v5601
    %v5666 = vadd.f32 %v5471, %v5602
    %v5667 = vadd.f32 %v5472, %v5603
    %v5668 = vadd.f32 %v5473, %v5604
    %v5669 = vadd.f32 %v5474, %v5605
    %v5670 = vadd.f32 %v5475, %v5606
    %v5671 = vadd.f32 %v5476, %v5607
    %v5672 = vld [vmem:[%s6] sm:$0x1]
    %v5673 = vld [vmem:[%s7] sm:$0x1]
    %v5674 = vsel %vm3215, %v5608, 0.0
    %v5675 = vsel %vm3215, %v5609, 0.0
    %v5676 = vadd.f32 %v5674, %v5675
    %v5677 = vsel %vm3215, %v5610, 0.0
    %v5678 = vadd.f32 %v5676, %v5677
    %v5679 = vsel %vm3215, %v5611, 0.0
    %v5680 = vadd.f32 %v5678, %v5679
    %v5681 = vsel %vm3215, %v5612, 0.0
    %v5682 = vadd.f32 %v5680, %v5681
    %v5683 = vsel %vm3215, %v5613, 0.0
    %v5684 = vadd.f32 %v5682, %v5683
    %v5685 = vsel %vm3215, %v5614, 0.0
    %v5686 = vadd.f32 %v5684, %v5685
    %v5687 = vsel %vm3215, %v5615, 0.0
    %v5688 = vadd.f32 %v5686, %v5687
    %v5689 = vsel %vm3215, %v5616, 0.0
    %v5690 = vadd.f32 %v5688, %v5689
    %v5691 = vsel %vm3215, %v5617, 0.0
    %v5692 = vadd.f32 %v5690, %v5691
    %v5693 = vsel %vm3215, %v5618, 0.0
    %v5694 = vadd.f32 %v5692, %v5693
    %v5695 = vsel %vm3215, %v5619, 0.0
    %v5696 = vadd.f32 %v5694, %v5695
    %v5697 = vsel %vm3215, %v5620, 0.0
    %v5698 = vadd.f32 %v5696, %v5697
    %v5699 = vsel %vm3215, %v5621, 0.0
    %v5700 = vadd.f32 %v5698, %v5699
    %v5701 = vsel %vm3215, %v5622, 0.0
    %v5702 = vadd.f32 %v5700, %v5701
    %v5703 = vsel %vm3215, %v5623, 0.0
    %v5704 = vadd.f32 %v5702, %v5703
    %v5705 = vsel %vm3215, %v5624, 0.0
    %v5706 = vadd.f32 %v5704, %v5705
    %v5707 = vsel %vm3215, %v5625, 0.0
    %v5708 = vadd.f32 %v5706, %v5707
    %v5709 = vsel %vm3215, %v5626, 0.0
    %v5710 = vadd.f32 %v5708, %v5709
    %v5711 = vsel %vm3215, %v5627, 0.0
    %v5712 = vadd.f32 %v5710, %v5711
    %v5713 = vsel %vm3215, %v5628, 0.0
    %v5714 = vadd.f32 %v5712, %v5713
    %v5715 = vsel %vm3215, %v5629, 0.0
    %v5716 = vadd.f32 %v5714, %v5715
    %v5717 = vsel %vm3215, %v5630, 0.0
    %v5718 = vadd.f32 %v5716, %v5717
    %v5719 = vsel %vm3215, %v5631, 0.0
    %v5720 = vadd.f32 %v5718, %v5719
    %v5721 = vsel %vm3215, %v5632, 0.0
    %v5722 = vadd.f32 %v5720, %v5721
    %v5723 = vsel %vm3215, %v5633, 0.0
    %v5724 = vadd.f32 %v5722, %v5723
    %v5725 = vsel %vm3215, %v5634, 0.0
    %v5726 = vadd.f32 %v5724, %v5725
    %v5727 = vsel %vm3215, %v5635, 0.0
    %v5728 = vadd.f32 %v5726, %v5727
    %v5729 = vsel %vm3215, %v5636, 0.0
    %v5730 = vadd.f32 %v5728, %v5729
    %v5731 = vsel %vm3215, %v5637, 0.0
    %v5732 = vadd.f32 %v5730, %v5731
    %v5733 = vsel %vm3215, %v5638, 0.0
    %v5734 = vadd.f32 %v5732, %v5733
    %v5735 = vsel %vm3215, %v5639, 0.0
    %v5736 = vadd.f32 %v5734, %v5735
    %v5737 = vsel %vm3215, %v5640, 0.0
    %v5738 = vadd.f32 %v5736, %v5737
    %v5739 = vsel %vm3215, %v5641, 0.0
    %v5740 = vadd.f32 %v5738, %v5739
    %v5741 = vsel %vm3215, %v5642, 0.0
    %v5742 = vadd.f32 %v5740, %v5741
    %v5743 = vsel %vm3215, %v5643, 0.0
    %v5744 = vadd.f32 %v5742, %v5743
    %v5745 = vsel %vm3215, %v5644, 0.0
    %v5746 = vadd.f32 %v5744, %v5745
    %v5747 = vsel %vm3215, %v5645, 0.0
    %v5748 = vadd.f32 %v5746, %v5747
    %v5749 = vsel %vm3215, %v5646, 0.0
    %v5750 = vadd.f32 %v5748, %v5749
    %v5751 = vsel %vm3215, %v5647, 0.0
    %v5752 = vadd.f32 %v5750, %v5751
    %v5753 = vsel %vm3215, %v5648, 0.0
    %v5754 = vadd.f32 %v5752, %v5753
    %v5755 = vsel %vm3215, %v5649, 0.0
    %v5756 = vadd.f32 %v5754, %v5755
    %v5757 = vsel %vm3215, %v5650, 0.0
    %v5758 = vadd.f32 %v5756, %v5757
    %v5759 = vsel %vm3215, %v5651, 0.0
    %v5760 = vadd.f32 %v5758, %v5759
    %v5761 = vsel %vm3215, %v5652, 0.0
    %v5762 = vadd.f32 %v5760, %v5761
    %v5763 = vsel %vm3215, %v5653, 0.0
    %v5764 = vadd.f32 %v5762, %v5763
    %v5765 = vsel %vm3215, %v5654, 0.0
    %v5766 = vadd.f32 %v5764, %v5765
    %v5767 = vsel %vm3215, %v5655, 0.0
    %v5768 = vadd.f32 %v5766, %v5767
    %v5769 = vsel %vm3215, %v5656, 0.0
    %v5770 = vadd.f32 %v5768, %v5769
    %v5771 = vsel %vm3215, %v5657, 0.0
    %v5772 = vadd.f32 %v5770, %v5771
    %v5773 = vsel %vm3215, %v5658, 0.0
    %v5774 = vadd.f32 %v5772, %v5773
    %v5775 = vsel %vm3215, %v5659, 0.0
    %v5776 = vadd.f32 %v5774, %v5775
    %v5777 = vsel %vm3215, %v5660, 0.0
    %v5778 = vadd.f32 %v5776, %v5777
    %v5779 = vsel %vm3215, %v5661, 0.0
    %v5780 = vadd.f32 %v5778, %v5779
    %v5781 = vsel %vm3215, %v5662, 0.0
    %v5782 = vadd.f32 %v5780, %v5781
    %v5783 = vsel %vm3215, %v5663, 0.0
    %v5784 = vadd.f32 %v5782, %v5783
    %v5785 = vsel %vm3215, %v5664, 0.0
    %v5786 = vadd.f32 %v5784, %v5785
    %v5787 = vsel %vm3215, %v5665, 0.0
    %v5788 = vadd.f32 %v5786, %v5787
    %v5789 = vsel %vm3215, %v5666, 0.0
    %v5790 = vadd.f32 %v5788, %v5789
    %v5791 = vsel %vm3215, %v5667, 0.0
    %v5792 = vadd.f32 %v5790, %v5791
    %v5793 = vsel %vm3215, %v5668, 0.0
    %v5794 = vadd.f32 %v5792, %v5793
    %v5795 = vsel %vm3215, %v5669, 0.0
    %v5796 = vadd.f32 %v5794, %v5795
    %v5797 = vsel %vm3215, %v5670, 0.0
    %v5798 = vadd.f32 %v5796, %v5797
    %v5799 = vsel %vm3215, %v5671, 0.0
    %v5800 = vadd.f32 %v5798, %v5799
    %v5801 = vrot.slane %v5800, 4
    %v5802 = vadd.f32 %v5800, %v5801
    %v5803 = vrot.slane %v5802, 2
    %v5804 = vadd.f32 %v5802, %v5803
    %v5805 = vrot.slane %v5804, 1
    %v5806 = vadd.f32 %v5804, %v5805
    %v5807 = vmul.f32 %v5608, %v5608
    %v5808 = vmul.f32 %v5609, %v5609
    %v5809 = vmul.f32 %v5610, %v5610
    %v5810 = vmul.f32 %v5611, %v5611
    %v5811 = vmul.f32 %v5612, %v5612
    %v5812 = vmul.f32 %v5613, %v5613
    %v5813 = vmul.f32 %v5614, %v5614
    %v5814 = vmul.f32 %v5615, %v5615
    %v5815 = vmul.f32 %v5616, %v5616
    %v5816 = vmul.f32 %v5617, %v5617
    %v5817 = vmul.f32 %v5618, %v5618
    %v5818 = vmul.f32 %v5619, %v5619
    %v5819 = vmul.f32 %v5620, %v5620
    %v5820 = vmul.f32 %v5621, %v5621
    %v5821 = vmul.f32 %v5622, %v5622
    %v5822 = vmul.f32 %v5623, %v5623
    %v5823 = vmul.f32 %v5624, %v5624
    %v5824 = vmul.f32 %v5625, %v5625
    %v5825 = vmul.f32 %v5626, %v5626
    %v5826 = vmul.f32 %v5627, %v5627
    %v5827 = vmul.f32 %v5628, %v5628
    %v5828 = vmul.f32 %v5629, %v5629
    %v5829 = vmul.f32 %v5630, %v5630
    %v5830 = vmul.f32 %v5631, %v5631
    %v5831 = vmul.f32 %v5632, %v5632
    %v5832 = vmul.f32 %v5633, %v5633
    %v5833 = vmul.f32 %v5634, %v5634
    %v5834 = vmul.f32 %v5635, %v5635
    %v5835 = vmul.f32 %v5636, %v5636
    %v5836 = vmul.f32 %v5637, %v5637
    %v5837 = vmul.f32 %v5638, %v5638
    %v5838 = vmul.f32 %v5639, %v5639
    %v5839 = vmul.f32 %v5640, %v5640
    %v5840 = vmul.f32 %v5641, %v5641
    %v5841 = vmul.f32 %v5642, %v5642
    %v5842 = vmul.f32 %v5643, %v5643
    %v5843 = vmul.f32 %v5644, %v5644
    %v5844 = vmul.f32 %v5645, %v5645
    %v5845 = vmul.f32 %v5646, %v5646
    %v5846 = vmul.f32 %v5647, %v5647
    %v5847 = vmul.f32 %v5648, %v5648
    %v5848 = vmul.f32 %v5649, %v5649
    %v5849 = vmul.f32 %v5650, %v5650
    %v5850 = vmul.f32 %v5651, %v5651
    %v5851 = vmul.f32 %v5652, %v5652
    %v5852 = vmul.f32 %v5653, %v5653
    %v5853 = vmul.f32 %v5654, %v5654
    %v5854 = vmul.f32 %v5655, %v5655
    %v5855 = vmul.f32 %v5656, %v5656
    %v5856 = vmul.f32 %v5657, %v5657
    %v5857 = vmul.f32 %v5658, %v5658
    %v5858 = vmul.f32 %v5659, %v5659
    %v5859 = vmul.f32 %v5660, %v5660
    %v5860 = vmul.f32 %v5661, %v5661
    %v5861 = vmul.f32 %v5662, %v5662
    %v5862 = vmul.f32 %v5663, %v5663
    %v5863 = vmul.f32 %v5664, %v5664
    %v5864 = vmul.f32 %v5665, %v5665
    %v5865 = vmul.f32 %v5666, %v5666
    %v5866 = vmul.f32 %v5667, %v5667
    %v5867 = vmul.f32 %v5668, %v5668
    %v5868 = vmul.f32 %v5669, %v5669
    %v5869 = vmul.f32 %v5670, %v5670
    %v5870 = vmul.f32 %v5671, %v5671
    %v5871 = vsel %vm3215, %v5807, 0.0
    %v5872 = vsel %vm3215, %v5808, 0.0
    %v5873 = vadd.f32 %v5871, %v5872
    %v5874 = vsel %vm3215, %v5809, 0.0
    %v5875 = vadd.f32 %v5873, %v5874
    %v5876 = vsel %vm3215, %v5810, 0.0
    %v5877 = vadd.f32 %v5875, %v5876
    %v5878 = vsel %vm3215, %v5811, 0.0
    %v5879 = vadd.f32 %v5877, %v5878
    %v5880 = vsel %vm3215, %v5812, 0.0
    %v5881 = vadd.f32 %v5879, %v5880
    %v5882 = vsel %vm3215, %v5813, 0.0
    %v5883 = vadd.f32 %v5881, %v5882
    %v5884 = vsel %vm3215, %v5814, 0.0
    %v5885 = vadd.f32 %v5883, %v5884
    %v5886 = vsel %vm3215, %v5815, 0.0
    %v5887 = vadd.f32 %v5885, %v5886
    %v5888 = vsel %vm3215, %v5816, 0.0
    %v5889 = vadd.f32 %v5887, %v5888
    %v5890 = vsel %vm3215, %v5817, 0.0
    %v5891 = vadd.f32 %v5889, %v5890
    %v5892 = vsel %vm3215, %v5818, 0.0
    %v5893 = vadd.f32 %v5891, %v5892
    %v5894 = vsel %vm3215, %v5819, 0.0
    %v5895 = vadd.f32 %v5893, %v5894
    %v5896 = vsel %vm3215, %v5820, 0.0
    %v5897 = vadd.f32 %v5895, %v5896
    %v5898 = vsel %vm3215, %v5821, 0.0
    %v5899 = vadd.f32 %v5897, %v5898
    %v5900 = vsel %vm3215, %v5822, 0.0
    %v5901 = vadd.f32 %v5899, %v5900
    %v5902 = vsel %vm3215, %v5823, 0.0
    %v5903 = vadd.f32 %v5901, %v5902
    %v5904 = vsel %vm3215, %v5824, 0.0
    %v5905 = vadd.f32 %v5903, %v5904
    %v5906 = vsel %vm3215, %v5825, 0.0
    %v5907 = vadd.f32 %v5905, %v5906
    %v5908 = vsel %vm3215, %v5826, 0.0
    %v5909 = vadd.f32 %v5907, %v5908
    %v5910 = vsel %vm3215, %v5827, 0.0
    %v5911 = vadd.f32 %v5909, %v5910
    %v5912 = vsel %vm3215, %v5828, 0.0
    %v5913 = vadd.f32 %v5911, %v5912
    %v5914 = vsel %vm3215, %v5829, 0.0
    %v5915 = vadd.f32 %v5913, %v5914
    %v5916 = vsel %vm3215, %v5830, 0.0
    %v5917 = vadd.f32 %v5915, %v5916
    %v5918 = vsel %vm3215, %v5831, 0.0
    %v5919 = vadd.f32 %v5917, %v5918
    %v5920 = vsel %vm3215, %v5832, 0.0
    %v5921 = vadd.f32 %v5919, %v5920
    %v5922 = vsel %vm3215, %v5833, 0.0
    %v5923 = vadd.f32 %v5921, %v5922
    %v5924 = vsel %vm3215, %v5834, 0.0
    %v5925 = vadd.f32 %v5923, %v5924
    %v5926 = vsel %vm3215, %v5835, 0.0
    %v5927 = vadd.f32 %v5925, %v5926
    %v5928 = vsel %vm3215, %v5836, 0.0
    %v5929 = vadd.f32 %v5927, %v5928
    %v5930 = vsel %vm3215, %v5837, 0.0
    %v5931 = vadd.f32 %v5929, %v5930
    %v5932 = vsel %vm3215, %v5838, 0.0
    %v5933 = vadd.f32 %v5931, %v5932
    %v5934 = vsel %vm3215, %v5839, 0.0
    %v5935 = vadd.f32 %v5933, %v5934
    %v5936 = vsel %vm3215, %v5840, 0.0
    %v5937 = vadd.f32 %v5935, %v5936
    %v5938 = vsel %vm3215, %v5841, 0.0
    %v5939 = vadd.f32 %v5937, %v5938
    %v5940 = vsel %vm3215, %v5842, 0.0
    %v5941 = vadd.f32 %v5939, %v5940
    %v5942 = vsel %vm3215, %v5843, 0.0
    %v5943 = vadd.f32 %v5941, %v5942
    %v5944 = vsel %vm3215, %v5844, 0.0
    %v5945 = vadd.f32 %v5943, %v5944
    %v5946 = vsel %vm3215, %v5845, 0.0
    %v5947 = vadd.f32 %v5945, %v5946
    %v5948 = vsel %vm3215, %v5846, 0.0
    %v5949 = vadd.f32 %v5947, %v5948
    %v5950 = vsel %vm3215, %v5847, 0.0
    %v5951 = vadd.f32 %v5949, %v5950
    %v5952 = vsel %vm3215, %v5848, 0.0
    %v5953 = vadd.f32 %v5951, %v5952
    %v5954 = vsel %vm3215, %v5849, 0.0
    %v5955 = vadd.f32 %v5953, %v5954
    %v5956 = vsel %vm3215, %v5850, 0.0
    %v5957 = vadd.f32 %v5955, %v5956
    %v5958 = vsel %vm3215, %v5851, 0.0
    %v5959 = vadd.f32 %v5957, %v5958
    %v5960 = vsel %vm3215, %v5852, 0.0
    %v5961 = vadd.f32 %v5959, %v5960
    %v5962 = vsel %vm3215, %v5853, 0.0
    %v5963 = vadd.f32 %v5961, %v5962
    %v5964 = vsel %vm3215, %v5854, 0.0
    %v5965 = vadd.f32 %v5963, %v5964
    %v5966 = vsel %vm3215, %v5855, 0.0
    %v5967 = vadd.f32 %v5965, %v5966
    %v5968 = vsel %vm3215, %v5856, 0.0
    %v5969 = vadd.f32 %v5967, %v5968
    %v5970 = vsel %vm3215, %v5857, 0.0
    %v5971 = vadd.f32 %v5969, %v5970
    %v5972 = vsel %vm3215, %v5858, 0.0
    %v5973 = vadd.f32 %v5971, %v5972
    %v5974 = vsel %vm3215, %v5859, 0.0
    %v5975 = vadd.f32 %v5973, %v5974
    %v5976 = vsel %vm3215, %v5860, 0.0
    %v5977 = vadd.f32 %v5975, %v5976
    %v5978 = vsel %vm3215, %v5861, 0.0
    %v5979 = vadd.f32 %v5977, %v5978
    %v5980 = vsel %vm3215, %v5862, 0.0
    %v5981 = vadd.f32 %v5979, %v5980
    %v5982 = vsel %vm3215, %v5863, 0.0
    %v5983 = vadd.f32 %v5981, %v5982
    %v5984 = vsel %vm3215, %v5864, 0.0
    %v5985 = vadd.f32 %v5983, %v5984
    %v5986 = vsel %vm3215, %v5865, 0.0
    %v5987 = vadd.f32 %v5985, %v5986
    %v5988 = vsel %vm3215, %v5866, 0.0
    %v5989 = vadd.f32 %v5987, %v5988
    %v5990 = vsel %vm3215, %v5867, 0.0
    %v5991 = vadd.f32 %v5989, %v5990
    %v5992 = vsel %vm3215, %v5868, 0.0
    %v5993 = vadd.f32 %v5991, %v5992
    %v5994 = vsel %vm3215, %v5869, 0.0
    %v5995 = vadd.f32 %v5993, %v5994
    %v5996 = vsel %vm3215, %v5870, 0.0
    %v5997 = vadd.f32 %v5995, %v5996
    %v5998 = vrot.slane %v5997, 4
    %v5999 = vadd.f32 %v5997, %v5998
    %v6000 = vrot.slane %v5999, 2
    %v6001 = vadd.f32 %v5999, %v6000
    %v6002 = vrot.slane %v6001, 1
    %v6003 = vadd.f32 %v6001, %v6002
    %v6004 = vmul.f32 %v5806, 0.001953125
    %v6005 = vmul.f32 %v6003, 0.001953125
    %v6006 = vmul.f32 %v6004, %v6004
    %v6007 = vsub.f32 %v6005, %v6006
    %v6008 = vmax.f32 %v6007, 0.0
    %v6009 = vadd.f32 %v6008, 1e-05
    %v6010 = vrsqrt.pop %v6009
    %v6011 = vmul.f32 %v6010, %v6009
    %v6012 = vmul.f32 %v6011, %v6010
    %v6013 = vmul.f32 0.5, %v6012
    %v6014 = vsub.f32 1.5, %v6013
    %v6015 = vmul.f32 %v6010, %v6014
    %vm6016 = vweird.f32 %v6009
    %vm6017 = vweird.f32 %v6010
    %vm6018 = vmor %vm6016, %vm6017
    %v6019 = vsel %vm6018, %v6010, %v6015
    %v6020 = vmul.f32 %v5672, %v6019
    %v6022 = vperm.slane %v6020, 0
    %v6024 = vmul.f32 %v5608, %v6022
    %v6025 = vmul.f32 %v5609, %v6022
    %v6026 = vmul.f32 %v5610, %v6022
    %v6027 = vmul.f32 %v5611, %v6022
    %v6028 = vmul.f32 %v5612, %v6022
    %v6029 = vmul.f32 %v5613, %v6022
    %v6030 = vmul.f32 %v5614, %v6022
    %v6031 = vmul.f32 %v5615, %v6022
    %v6032 = vmul.f32 %v5616, %v6022
    %v6033 = vmul.f32 %v5617, %v6022
    %v6034 = vmul.f32 %v5618, %v6022
    %v6035 = vmul.f32 %v5619, %v6022
    %v6036 = vmul.f32 %v5620, %v6022
    %v6037 = vmul.f32 %v5621, %v6022
    %v6038 = vmul.f32 %v5622, %v6022
    %v6039 = vmul.f32 %v5623, %v6022
    %v6040 = vmul.f32 %v5624, %v6022
    %v6041 = vmul.f32 %v5625, %v6022
    %v6042 = vmul.f32 %v5626, %v6022
    %v6043 = vmul.f32 %v5627, %v6022
    %v6044 = vmul.f32 %v5628, %v6022
    %v6045 = vmul.f32 %v5629, %v6022
    %v6046 = vmul.f32 %v5630, %v6022
    %v6047 = vmul.f32 %v5631, %v6022
    %v6048 = vmul.f32 %v5632, %v6022
    %v6049 = vmul.f32 %v5633, %v6022
    %v6050 = vmul.f32 %v5634, %v6022
    %v6051 = vmul.f32 %v5635, %v6022
    %v6052 = vmul.f32 %v5636, %v6022
    %v6053 = vmul.f32 %v5637, %v6022
    %v6054 = vmul.f32 %v5638, %v6022
    %v6055 = vmul.f32 %v5639, %v6022
    %v6056 = vmul.f32 %v5640, %v6022
    %v6057 = vmul.f32 %v5641, %v6022
    %v6058 = vmul.f32 %v5642, %v6022
    %v6059 = vmul.f32 %v5643, %v6022
    %v6060 = vmul.f32 %v5644, %v6022
    %v6061 = vmul.f32 %v5645, %v6022
    %v6062 = vmul.f32 %v5646, %v6022
    %v6063 = vmul.f32 %v5647, %v6022
    %v6064 = vmul.f32 %v5648, %v6022
    %v6065 = vmul.f32 %v5649, %v6022
    %v6066 = vmul.f32 %v5650, %v6022
    %v6067 = vmul.f32 %v5651, %v6022
    %v6068 = vmul.f32 %v5652, %v6022
    %v6069 = vmul.f32 %v5653, %v6022
    %v6070 = vmul.f32 %v5654, %v6022
    %v6071 = vmul.f32 %v5655, %v6022
    %v6072 = vmul.f32 %v5656, %v6022
    %v6073 = vmul.f32 %v5657, %v6022
    %v6074 = vmul.f32 %v5658, %v6022
    %v6075 = vmul.f32 %v5659, %v6022
    %v6076 = vmul.f32 %v5660, %v6022
    %v6077 = vmul.f32 %v5661, %v6022
    %v6078 = vmul.f32 %v5662, %v6022
    %v6079 = vmul.f32 %v5663, %v6022
    %v6080 = vmul.f32 %v5664, %v6022
    %v6081 = vmul.f32 %v5665, %v6022
    %v6082 = vmul.f32 %v5666, %v6022
    %v6083 = vmul.f32 %v5667, %v6022
    %v6084 = vmul.f32 %v5668, %v6022
    %v6085 = vmul.f32 %v5669, %v6022
    %v6086 = vmul.f32 %v5670, %v6022
    %v6087 = vmul.f32 %v5671, %v6022
    %v6088 = vmul.f32 %v6004, %v6020
    %v6089 = vsub.f32 %v5673, %v6088
    %v6091 = vperm.slane %v6089, 0
    %v6093 = vadd.f32 %v6024, %v6091
    %v6094 = vadd.f32 %v6025, %v6091
    %v6095 = vadd.f32 %v6026, %v6091
    %v6096 = vadd.f32 %v6027, %v6091
    %v6097 = vadd.f32 %v6028, %v6091
    %v6098 = vadd.f32 %v6029, %v6091
    %v6099 = vadd.f32 %v6030, %v6091
    %v6100 = vadd.f32 %v6031, %v6091
    %v6101 = vadd.f32 %v6032, %v6091
    %v6102 = vadd.f32 %v6033, %v6091
    %v6103 = vadd.f32 %v6034, %v6091
    %v6104 = vadd.f32 %v6035, %v6091
    %v6105 = vadd.f32 %v6036, %v6091
    %v6106 = vadd.f32 %v6037, %v6091
    %v6107 = vadd.f32 %v6038, %v6091
    %v6108 = vadd.f32 %v6039, %v6091
    %v6109 = vadd.f32 %v6040, %v6091
    %v6110 = vadd.f32 %v6041, %v6091
    %v6111 = vadd.f32 %v6042, %v6091
    %v6112 = vadd.f32 %v6043, %v6091
    %v6113 = vadd.f32 %v6044, %v6091
    %v6114 = vadd.f32 %v6045, %v6091
    %v6115 = vadd.f32 %v6046, %v6091
    %v6116 = vadd.f32 %v6047, %v6091
    %v6117 = vadd.f32 %v6048, %v6091
    %v6118 = vadd.f32 %v6049, %v6091
    %v6119 = vadd.f32 %v6050, %v6091
    %v6120 = vadd.f32 %v6051, %v6091
    %v6121 = vadd.f32 %v6052, %v6091
    %v6122 = vadd.f32 %v6053, %v6091
    %v6123 = vadd.f32 %v6054, %v6091
    %v6124 = vadd.f32 %v6055, %v6091
    %v6125 = vadd.f32 %v6056, %v6091
    %v6126 = vadd.f32 %v6057, %v6091
    %v6127 = vadd.f32 %v6058, %v6091
    %v6128 = vadd.f32 %v6059, %v6091
    %v6129 = vadd.f32 %v6060, %v6091
    %v6130 = vadd.f32 %v6061, %v6091
    %v6131 = vadd.f32 %v6062, %v6091
    %v6132 = vadd.f32 %v6063, %v6091
    %v6133 = vadd.f32 %v6064, %v6091
    %v6134 = vadd.f32 %v6065, %v6091
    %v6135 = vadd.f32 %v6066, %v6091
    %v6136 = vadd.f32 %v6067, %v6091
    %v6137 = vadd.f32 %v6068, %v6091
    %v6138 = vadd.f32 %v6069, %v6091
    %v6139 = vadd.f32 %v6070, %v6091
    %v6140 = vadd.f32 %v6071, %v6091
    %v6141 = vadd.f32 %v6072, %v6091
    %v6142 = vadd.f32 %v6073, %v6091
    %v6143 = vadd.f32 %v6074, %v6091
    %v6144 = vadd.f32 %v6075, %v6091
    %v6145 = vadd.f32 %v6076, %v6091
    %v6146 = vadd.f32 %v6077, %v6091
    %v6147 = vadd.f32 %v6078, %v6091
    %v6148 = vadd.f32 %v6079, %v6091
    %v6149 = vadd.f32 %v6080, %v6091
    %v6150 = vadd.f32 %v6081, %v6091
    %v6151 = vadd.f32 %v6082, %v6091
    %v6152 = vadd.f32 %v6083, %v6091
    %v6153 = vadd.f32 %v6084, %v6091
    %v6154 = vadd.f32 %v6085, %v6091
    %v6155 = vadd.f32 %v6086, %v6091
    %v6156 = vadd.f32 %v6087, %v6091
    %v6157 = vmax.f32 %v6093, 0.0
    %v6158 = vmax.f32 %v6094, 0.0
    %v6159 = vmax.f32 %v6095, 0.0
    %v6160 = vmax.f32 %v6096, 0.0
    %v6161 = vmax.f32 %v6097, 0.0
    %v6162 = vmax.f32 %v6098, 0.0
    %v6163 = vmax.f32 %v6099, 0.0
    %v6164 = vmax.f32 %v6100, 0.0
    %v6165 = vmax.f32 %v6101, 0.0
    %v6166 = vmax.f32 %v6102, 0.0
    %v6167 = vmax.f32 %v6103, 0.0
    %v6168 = vmax.f32 %v6104, 0.0
    %v6169 = vmax.f32 %v6105, 0.0
    %v6170 = vmax.f32 %v6106, 0.0
    %v6171 = vmax.f32 %v6107, 0.0
    %v6172 = vmax.f32 %v6108, 0.0
    %v6173 = vmax.f32 %v6109, 0.0
    %v6174 = vmax.f32 %v6110, 0.0
    %v6175 = vmax.f32 %v6111, 0.0
    %v6176 = vmax.f32 %v6112, 0.0
    %v6177 = vmax.f32 %v6113, 0.0
    %v6178 = vmax.f32 %v6114, 0.0
    %v6179 = vmax.f32 %v6115, 0.0
    %v6180 = vmax.f32 %v6116, 0.0
    %v6181 = vmax.f32 %v6117, 0.0
    %v6182 = vmax.f32 %v6118, 0.0
    %v6183 = vmax.f32 %v6119, 0.0
    %v6184 = vmax.f32 %v6120, 0.0
    %v6185 = vmax.f32 %v6121, 0.0
    %v6186 = vmax.f32 %v6122, 0.0
    %v6187 = vmax.f32 %v6123, 0.0
    %v6188 = vmax.f32 %v6124, 0.0
    %v6189 = vmax.f32 %v6125, 0.0
    %v6190 = vmax.f32 %v6126, 0.0
    %v6191 = vmax.f32 %v6127, 0.0
    %v6192 = vmax.f32 %v6128, 0.0
    %v6193 = vmax.f32 %v6129, 0.0
    %v6194 = vmax.f32 %v6130, 0.0
    %v6195 = vmax.f32 %v6131, 0.0
    %v6196 = vmax.f32 %v6132, 0.0
    %v6197 = vmax.f32 %v6133, 0.0
    %v6198 = vmax.f32 %v6134, 0.0
    %v6199 = vmax.f32 %v6135, 0.0
    %v6200 = vmax.f32 %v6136, 0.0
    %v6201 = vmax.f32 %v6137, 0.0
    %v6202 = vmax.f32 %v6138, 0.0
    %v6203 = vmax.f32 %v6139, 0.0
    %v6204 = vmax.f32 %v6140, 0.0
    %v6205 = vmax.f32 %v6141, 0.0
    %v6206 = vmax.f32 %v6142, 0.0
    %v6207 = vmax.f32 %v6143, 0.0
    %v6208 = vmax.f32 %v6144, 0.0
    %v6209 = vmax.f32 %v6145, 0.0
    %v6210 = vmax.f32 %v6146, 0.0
    %v6211 = vmax.f32 %v6147, 0.0
    %v6212 = vmax.f32 %v6148, 0.0
    %v6213 = vmax.f32 %v6149, 0.0
    %v6214 = vmax.f32 %v6150, 0.0
    %v6215 = vmax.f32 %v6151, 0.0
    %v6216 = vmax.f32 %v6152, 0.0
    %v6217 = vmax.f32 %v6153, 0.0
    %v6218 = vmax.f32 %v6154, 0.0
    %v6219 = vmax.f32 %v6155, 0.0
    %v6220 = vmax.f32 %v6156, 0.0
    %v6221 = vld [vmem:[%s8] sm:$0xf]
    %v6223 = vsel %vm3215, %v6221, 0
    %v6226 = vsel %vm3215, %v6157, 0
    %v6229 = vsel %vm3215, %v6158, 0
    %v6232 = vsel %vm3215, %v6159, 0
    %v6235 = vsel %vm3215, %v6160, 0
    %v6238 = vsel %vm3215, %v6161, 0
    %v6241 = vsel %vm3215, %v6162, 0
    %v6244 = vsel %vm3215, %v6163, 0
    %v6247 = vsel %vm3215, %v6164, 0
    %v6250 = vsel %vm3215, %v6165, 0
    %v6253 = vsel %vm3215, %v6166, 0
    %v6256 = vsel %vm3215, %v6167, 0
    %v6259 = vsel %vm3215, %v6168, 0
    %v6262 = vsel %vm3215, %v6169, 0
    %v6265 = vsel %vm3215, %v6170, 0
    %v6268 = vsel %vm3215, %v6171, 0
    %v6271 = vsel %vm3215, %v6172, 0
    %v6274 = vsel %vm3215, %v6173, 0
    %v6277 = vsel %vm3215, %v6174, 0
    %v6280 = vsel %vm3215, %v6175, 0
    %v6283 = vsel %vm3215, %v6176, 0
    %v6286 = vsel %vm3215, %v6177, 0
    %v6289 = vsel %vm3215, %v6178, 0
    %v6292 = vsel %vm3215, %v6179, 0
    %v6295 = vsel %vm3215, %v6180, 0
    %v6298 = vsel %vm3215, %v6181, 0
    %v6301 = vsel %vm3215, %v6182, 0
    %v6304 = vsel %vm3215, %v6183, 0
    %v6307 = vsel %vm3215, %v6184, 0
    %v6310 = vsel %vm3215, %v6185, 0
    %v6313 = vsel %vm3215, %v6186, 0
    %v6316 = vsel %vm3215, %v6187, 0
    %v6319 = vsel %vm3215, %v6188, 0
    %v6322 = vsel %vm3215, %v6189, 0
    %v6325 = vsel %vm3215, %v6190, 0
    %v6328 = vsel %vm3215, %v6191, 0
    %v6331 = vsel %vm3215, %v6192, 0
    %v6334 = vsel %vm3215, %v6193, 0
    %v6337 = vsel %vm3215, %v6194, 0
    %v6340 = vsel %vm3215, %v6195, 0
    %v6343 = vsel %vm3215, %v6196, 0
    %v6346 = vsel %vm3215, %v6197, 0
    %v6349 = vsel %vm3215, %v6198, 0
    %v6352 = vsel %vm3215, %v6199, 0
    %v6355 = vsel %vm3215, %v6200, 0
    %v6358 = vsel %vm3215, %v6201, 0
    %v6361 = vsel %vm3215, %v6202, 0
    %v6364 = vsel %vm3215, %v6203, 0
    %v6367 = vsel %vm3215, %v6204, 0
    %v6370 = vsel %vm3215, %v6205, 0
    %v6373 = vsel %vm3215, %v6206, 0
    %v6376 = vsel %vm3215, %v6207, 0
    %v6379 = vsel %vm3215, %v6208, 0
    %v6382 = vsel %vm3215, %v6209, 0
    %v6385 = vsel %vm3215, %v6210, 0
    %v6388 = vsel %vm3215, %v6211, 0
    %v6391 = vsel %vm3215, %v6212, 0
    %v6394 = vsel %vm3215, %v6213, 0
    %v6397 = vsel %vm3215, %v6214, 0
    %v6400 = vsel %vm3215, %v6215, 0
    %v6403 = vsel %vm3215, %v6216, 0
    %v6406 = vsel %vm3215, %v6217, 0
    %v6409 = vsel %vm3215, %v6218, 0
    %v6412 = vsel %vm3215, %v6219, 0
    %v6415 = vsel %vm3215, %v6220, 0
    %6417 = vmatpush.xpose.msra.mxu0 %v6271
    %6418 = vmatpush.xpose.msra.mxu0 %v6268
    %6419 = vmatpush.xpose.msra.mxu0 %v6265
    %6420 = vmatpush.xpose.msra.mxu0 %v6262
    %6421 = vmatpush.xpose.msra.mxu0 %v6259
    %6422 = vmatpush.xpose.msra.mxu0 %v6256
    %6423 = vmatpush.xpose.msra.mxu0 %v6253
    %6424 = vmatpush.xpose.msra.mxu0 %v6250
    %6425 = vmatpush.xpose.msra.mxu0 %v6247
    %6426 = vmatpush.xpose.msra.mxu0 %v6244
    %6427 = vmatpush.xpose.msra.mxu0 %v6241
    %6428 = vmatpush.xpose.msra.mxu0 %v6238
    %6429 = vmatpush.xpose.msra.mxu0 %v6235
    %6430 = vmatpush.xpose.msra.mxu0 %v6232
    %6431 = vmatpush.xpose.msra.mxu0 %v6229
    %6432 = vmatpush.xpose.msra.mxu0 %v6226
    %6433 = vmatmul.f32.gmra.mxu0 %v6223
    %v6434 = vpop.f32.mrf.mxu0
    %v6435 = vadd.f32 0.0, %v6434
    %6436 = vdwg.mxu0
    %6437 = vmatpush.xpose.msra.mxu0 %v6319
    %6438 = vmatpush.xpose.msra.mxu0 %v6316
    %6439 = vmatpush.xpose.msra.mxu0 %v6313
    %6440 = vmatpush.xpose.msra.mxu0 %v6310
    %6441 = vmatpush.xpose.msra.mxu0 %v6307
    %6442 = vmatpush.xpose.msra.mxu0 %v6304
    %6443 = vmatpush.xpose.msra.mxu0 %v6301
    %6444 = vmatpush.xpose.msra.mxu0 %v6298
    %6445 = vmatpush.xpose.msra.mxu0 %v6295
    %6446 = vmatpush.xpose.msra.mxu0 %v6292
    %6447 = vmatpush.xpose.msra.mxu0 %v6289
    %6448 = vmatpush.xpose.msra.mxu0 %v6286
    %6449 = vmatpush.xpose.msra.mxu0 %v6283
    %6450 = vmatpush.xpose.msra.mxu0 %v6280
    %6451 = vmatpush.xpose.msra.mxu0 %v6277
    %6452 = vmatpush.xpose.msra.mxu0 %v6274
    %6453 = vmatmul.f32.gmra.mxu0 %v6223
    %v6454 = vpop.f32.mrf.mxu0
    %v6455 = vadd.f32 0.0, %v6454
    %6456 = vdwg.mxu0
    %6457 = vmatpush.xpose.msra.mxu0 %v6367
    %6458 = vmatpush.xpose.msra.mxu0 %v6364
    %6459 = vmatpush.xpose.msra.mxu0 %v6361
    %6460 = vmatpush.xpose.msra.mxu0 %v6358
    %6461 = vmatpush.xpose.msra.mxu0 %v6355
    %6462 = vmatpush.xpose.msra.mxu0 %v6352
    %6463 = vmatpush.xpose.msra.mxu0 %v6349
    %6464 = vmatpush.xpose.msra.mxu0 %v6346
    %6465 = vmatpush.xpose.msra.mxu0 %v6343
    %6466 = vmatpush.xpose.msra.mxu0 %v6340
    %6467 = vmatpush.xpose.msra.mxu0 %v6337
    %6468 = vmatpush.xpose.msra.mxu0 %v6334
    %6469 = vmatpush.xpose.msra.mxu0 %v6331
    %6470 = vmatpush.xpose.msra.mxu0 %v6328
    %6471 = vmatpush.xpose.msra.mxu0 %v6325
    %6472 = vmatpush.xpose.msra.mxu0 %v6322
    %6473 = vmatmul.f32.gmra.mxu0 %v6223
    %v6474 = vpop.f32.mrf.mxu0
    %v6475 = vadd.f32 0.0, %v6474
    %6476 = vdwg.mxu0
    %6477 = vmatpush.xpose.msra.mxu0 %v6415
    %6478 = vmatpush.xpose.msra.mxu0 %v6412
    %6479 = vmatpush.xpose.msra.mxu0 %v6409
    %6480 = vmatpush.xpose.msra.mxu0 %v6406
    %6481 = vmatpush.xpose.msra.mxu0 %v6403
    %6482 = vmatpush.xpose.msra.mxu0 %v6400
    %6483 = vmatpush.xpose.msra.mxu0 %v6397
    %6484 = vmatpush.xpose.msra.mxu0 %v6394
    %6485 = vmatpush.xpose.msra.mxu0 %v6391
    %6486 = vmatpush.xpose.msra.mxu0 %v6388
    %6487 = vmatpush.xpose.msra.mxu0 %v6385
    %6488 = vmatpush.xpose.msra.mxu0 %v6382
    %6489 = vmatpush.xpose.msra.mxu0 %v6379
    %6490 = vmatpush.xpose.msra.mxu0 %v6376
    %6491 = vmatpush.xpose.msra.mxu0 %v6373
    %6492 = vmatpush.xpose.msra.mxu0 %v6370
    %6493 = vmatmul.f32.gmra.mxu0 %v6223
    %v6494 = vpop.f32.mrf.mxu0
    %v6495 = vadd.f32 0.0, %v6494
    %6496 = vdwg.mxu0
    %v6497 = vld [vmem:[%s9] sm:$0xf]
    %v6498 = vld [vmem:[%s10] sm:$0xf]
    %v6499 = vsel %vm3000, %v6435, 0.0
    %v6500 = vsel %vm3000, %v6455, 0.0
    %v6501 = vadd.f32 %v6499, %v6500
    %v6502 = vsel %vm3000, %v6475, 0.0
    %v6503 = vadd.f32 %v6501, %v6502
    %v6504 = vsel %vm3000, %v6495, 0.0
    %v6505 = vadd.f32 %v6503, %v6504
    %6506 = vadd.xlane.f32.xlu0 %v6505
    %v6507 = vpop.xlane.xlu0 %6506
    %v6508 = vmul.f32 %v6435, %v6435
    %v6509 = vmul.f32 %v6455, %v6455
    %v6510 = vmul.f32 %v6475, %v6475
    %v6511 = vmul.f32 %v6495, %v6495
    %v6512 = vsel %vm3000, %v6508, 0.0
    %v6513 = vsel %vm3000, %v6509, 0.0
    %v6514 = vadd.f32 %v6512, %v6513
    %v6515 = vsel %vm3000, %v6510, 0.0
    %v6516 = vadd.f32 %v6514, %v6515
    %v6517 = vsel %vm3000, %v6511, 0.0
    %v6518 = vadd.f32 %v6516, %v6517
    %6519 = vadd.xlane.f32.xlu0 %v6518
    %v6520 = vpop.xlane.xlu0 %6519
    %v6521 = vmul.f32 %v6507, 0.001953125
    %v6522 = vmul.f32 %v6520, 0.001953125
    %v6523 = vmul.f32 %v6521, %v6521
    %v6524 = vsub.f32 %v6522, %v6523
    %v6525 = vmax.f32 %v6524, 0.0
    %v6526 = vadd.f32 %v6525, 1e-05
    %v6527 = vrsqrt.pop %v6526
    %v6528 = vmul.f32 %v6527, %v6526
    %v6529 = vmul.f32 %v6528, %v6527
    %v6530 = vmul.f32 0.5, %v6529
    %v6531 = vsub.f32 1.5, %v6530
    %v6532 = vmul.f32 %v6527, %v6531
    %vm6533 = vweird.f32 %v6526
    %vm6534 = vweird.f32 %v6527
    %vm6535 = vmor %vm6533, %vm6534
    %v6536 = vsel %vm6535, %v6527, %v6532
    %v6537 = vmul.f32 %v6497, %v6536
    %6539 = vset.pattern.permute.xlu0 0
    %6540 = vperm.xlu0 %6539, %v6537
    %v6541 = vpop.permute.xlu0 %6540
    %v6543 = vmul.f32 %v6435, %v6541
    %v6544 = vmul.f32 %v6455, %v6541
    %v6545 = vmul.f32 %v6475, %v6541
    %v6546 = vmul.f32 %v6495, %v6541
    %v6547 = vmul.f32 %v6521, %v6537
    %v6548 = vsub.f32 %v6498, %v6547
    %6550 = vset.pattern.permute.xlu0 0
    %6551 = vperm.xlu0 %6550, %v6548
    %v6552 = vpop.permute.xlu0 %6551
    %v6554 = vadd.f32 %v6543, %v6552
    %v6555 = vadd.f32 %v6544, %v6552
    %v6556 = vadd.f32 %v6545, %v6552
    %v6557 = vadd.f32 %v6546, %v6552
    %v6558 = vld [vmem:[%s1] sm:$0xff]
    %v6559 = vld [vmem:[%s1 + $0x8] sm:$0xff]
    %6562 = vst [vmem:[#allocation1] ss:$2 sm:$0xff] %v6558
    %s6563 = scalar_lea.vmem [#allocation1], 16
    %6564 = vst [vmem:[%s6563] ss:$2 sm:$0xff] %v6559
    %v6565 = vld.sshfl [vmem:[#allocation1] sm:$0xff pattern:$0x75316420]
    %v6566 = vld.sshfl [vmem:[#allocation1 + $0x8] sm:$0xff pattern:$0x75316420]
    %v6567 = vld.sshfl [vmem:[#allocation1 + $0x10] sm:$0xff pattern:$0x75316420]
    %v6568 = vld.sshfl [vmem:[#allocation1 + $0x18] sm:$0xff pattern:$0x75316420]
    %v6573 = vadd.f32 %v6554, %v6565
    %v6574 = vadd.f32 %v6555, %v6566
    %v6575 = vadd.f32 %v6556, %v6567
    %v6576 = vadd.f32 %v6557, %v6568
    %v6577 = vmax.f32 %v6573, 0.0
    %v6578 = vmax.f32 %v6574, 0.0
    %v6579 = vmax.f32 %v6575, 0.0
    %v6580 = vmax.f32 %v6576, 0.0
    %v6585 = vrot.slane %v6578, 4
    %v6586 = vrot.slane %v6580, 4
    %v6587 = vsel %vm3000, %v6577, %v6585
    %v6588 = vsel %vm3000, %v6579, %v6586
    %6591 = vst [vmem:[#allocation4] sm:$0xff] %v6587
    %6592 = vst [vmem:[#allocation4 + $0x8] sm:$0xff] %v6588
    // Predicated region
    $region46: #{tpu_custom_call.1} parent=1 // pred_check
      _
    $region47: #{tpu_custom_call.1} parent=1 // pred_check_branch
      %6594 = sbr.rel (0) target = $region49
    $region48: #{tpu_custom_call.1} parent=1 // pred_region
      %6596 = vsyncadd [#allocation5], 0
      %s6598 = sshll.u32 [#allocation4], 4
      %s6599 = int_to_ptr.vmem [resolvable:$true] %s6598
      %s6600 = sshll.u32 %s11, 4
      %s6601 = int_to_ptr.hbm [resolvable:$true] %s6600
      %6603 = dma.vmem_to_hbm [thread:$0]  %s6599, 256, %s6601, [#allocation5]
    $region49: #{tpu_custom_call.1} parent=1 // pred_fallthru
      _
    // Predicated region
    $region50: #{tpu_custom_call.1} parent=1 // pred_check
      _
    $region51: #{tpu_custom_call.1} parent=1 // pred_check_branch
      %6605 = sbr.rel (0) target = $region53
    $region52: #{tpu_custom_call.1} parent=1 // pred_region
      %6607 = dma.done [#allocation5], 256
    $region53: #{tpu_custom_call.1} parent=1 // pred_fallthru
      _
    %6608 = vsyncpa [#allocation5], 1

</llo_original>
